<compile_context>
chip_gen: v7x
topology: tpu7x:2x2x1
jax: 0.10.0
libtpu: 0.0.40
codegen_flags: <defaults>
</compile_context>

<pallas_src>
import jax
import jax.numpy as jnp
from jax import lax
from jax.experimental import pallas as pl
from jax.experimental.pallas import tpu as pltpu


NZ, NGF, NC = 16, 8, 3
BN_EPS = 1e-5
LANE = 128
VMEM_LIMIT = 32 * 1024 * 1024

# (CI, CO, (KH, KW), (sh, sw), (ph, pw)) — mirrors the nn.Sequential in __init__
LAYER_CFG = [
    (NZ,       NGF * 16, (4, 4), (1, 1), (0, 0)),
    (NGF * 16, NGF * 16, (2, 4), (2, 2), (1, 1)),
    (NGF * 16, NGF * 8,  (2, 4), (2, 2), (1, 1)),
    (NGF * 8,  NGF * 4,  (2, 4), (2, 2), (1, 1)),
    (NGF * 4,  NGF * 2,  (4, 4), (2, 2), (1, 1)),
    (NGF * 2,  NGF,      (4, 4), (2, 2), (1, 1)),
    (NGF,      NC,       (4, 4), (2, 2), (1, 1)),
]


# ----------------------------------------------------------------------------
# Pallas kernels
# ----------------------------------------------------------------------------

def _convt_bn_stats_kernel(wt_ref, at_ref, act_ref, stats_ref):
    """Channel-major bf16 matmul tile (CO, tm) with BatchNorm batch statistics
    (per-channel sum / sum-of-squares of this tile) fused as an epilogue."""
    acc = jnp.dot(wt_ref[...], at_ref[...], preferred_element_type=jnp.float32)
    act_ref[...] = acc.astype(act_ref.dtype)
    s = jnp.sum(acc, axis=1, keepdims=True)           # (CO, 1)
    ss = jnp.sum(acc * acc, axis=1, keepdims=True)    # (CO, 1)
    stats_ref[...] = jnp.broadcast_to(jnp.concatenate([s, ss], axis=0),
                                      stats_ref.shape)


def _convt_tanh_kernel(wt_ref, at_ref, out_ref):
    """Final layer: channel-major matmul with tanh fused into the epilogue."""
    acc = jnp.dot(wt_ref[...], at_ref[...], preferred_element_type=jnp.float32)
    out_ref[...] = jnp.tanh(acc).astype(out_ref.dtype)


def _matmul_f32_kernel(a_ref, b_ref, o_ref):
    """Tiny first layer (1x1 input): plain bf16 matmul, f32 out."""
    o_ref[...] = jnp.dot(a_ref[...], b_ref[...], preferred_element_type=jnp.float32)


# ----------------------------------------------------------------------------
# Pallas wrappers
# ----------------------------------------------------------------------------

def _rup(x, m):
    return ((x + m - 1) // m) * m


def _pick_tm(mp, k):
    """Largest M tile (multiple of 128, exact divisor of mp) whose bf16 A_T tile
    stays under ~2 MiB so double-buffering fits every TPU generation's VMEM."""
    budget = 2 * 1024 * 1024
    nb = mp // LANE
    for d in range(1, nb + 1):
        if nb % d == 0:
            tm = mp // d
            if tm * k * 2 <= budget:
                return tm
    return LANE


def pallas_convt_phases_bn(wt, at):
    """wt: (4, CO, K) bf16 per-phase weights; at: (4, K, Mp) bf16 per-phase patches.
    Returns act (4, CO, Mp) bf16, plus per-channel f32 sum and sum-of-squares."""
    nph, co_pad, k = wt.shape
    mp = at.shape[2]
    tm = _pick_tm(mp, k)
    nblk = mp // tm

    act, stats = pl.pallas_call(
        _convt_bn_stats_kernel,
        out_shape=(jax.ShapeDtypeStruct((nph, co_pad, mp), jnp.bfloat16),
                   jax.ShapeDtypeStruct((nph, nblk, 2 * co_pad, LANE), jnp.float32)),
        grid_spec=pltpu.PrefetchScalarGridSpec(
            num_scalar_prefetch=0,
            grid=(nph, nblk),
            in_specs=[pl.BlockSpec((None, co_pad, k), lambda p, i: (p, 0, 0)),
                      pl.BlockSpec((None, k, tm), lambda p, i: (p, 0, i))],
            out_specs=(pl.BlockSpec((None, co_pad, tm), lambda p, i: (p, 0, i)),
                       pl.BlockSpec((None, None, 2 * co_pad, LANE),
                                    lambda p, i: (p, i, 0, 0)))),
        compiler_params=pltpu.CompilerParams(
            dimension_semantics=("parallel", "parallel"),
            vmem_limit_bytes=VMEM_LIMIT),
    )(wt, at)

    # Lane 0 of each stats block: rows [:CO] = sum, rows [CO:] = sum of squares.
    st = jnp.sum(stats[..., 0], axis=(0, 1))
    return act, st[:co_pad], st[co_pad:]


def pallas_convt_phases_tanh(wt, at):
    """Final layer: channel-major matmul with fused tanh, f32 (4, CO, Mp) output."""
    nph, co_pad, k = wt.shape
    mp = at.shape[2]
    tm = _pick_tm(mp, k)
    return pl.pallas_call(
        _convt_tanh_kernel,
        out_shape=jax.ShapeDtypeStruct((nph, co_pad, mp), jnp.float32),
        grid_spec=pltpu.PrefetchScalarGridSpec(
            num_scalar_prefetch=0,
            grid=(nph, mp // tm),
            in_specs=[pl.BlockSpec((None, co_pad, k), lambda p, i: (p, 0, 0)),
                      pl.BlockSpec((None, k, tm), lambda p, i: (p, 0, i))],
            out_specs=pl.BlockSpec((None, co_pad, tm), lambda p, i: (p, 0, i))),
        compiler_params=pltpu.CompilerParams(
            dimension_semantics=("parallel", "parallel"),
            vmem_limit_bytes=VMEM_LIMIT),
    )(wt, at)


def pallas_matmul_f32(a, b):
    m, k = a.shape
    n = b.shape[1]
    return pl.pallas_call(
        _matmul_f32_kernel,
        out_shape=jax.ShapeDtypeStruct((m, n), jnp.float32),
        grid_spec=pltpu.PrefetchScalarGridSpec(
            num_scalar_prefetch=0,
            grid=(1,),
            in_specs=[pl.BlockSpec((m, k), lambda i: (0, 0)),
                      pl.BlockSpec((k, n), lambda i: (0, 0))],
            out_specs=pl.BlockSpec((m, n), lambda i: (0, 0))),
        compiler_params=pltpu.CompilerParams(
            dimension_semantics=("arbitrary",),
            vmem_limit_bytes=VMEM_LIMIT),
    )(a, b)


# ----------------------------------------------------------------------------
# 4-phase (sub-pixel) decomposition of stride-2 ConvTranspose2d, padding 1
# ----------------------------------------------------------------------------

def _axis_taps(ksize, parity):
    """Taps along one spatial axis of a stride-2, pad-1 ConvTranspose, for output
    positions of the given parity.  Each tap is (shift_mode, kernel_index)."""
    if ksize == 4:
        # out[2y]   = in[y-1]*W[3] + in[y]*W[1];  out[2y+1] = in[y]*W[2] + in[y+1]*W[0]
        return [("m1", 3), ("id", 1)] if parity == 0 else [("id", 2), ("p1", 0)]
    if ksize == 2:
        # out[2y] = in[y]*W[1] (y < L-1);  out[2y+1] = in[y+1]*W[0]
        return [("last", 1)] if parity == 0 else [("first", 0)]
    raise ValueError(ksize)


def _apply_tap(x, mode, axis):
    ln = x.shape[axis]
    idx = [slice(None)] * x.ndim
    if mode == "id":
        return x
    if mode == "m1":                       # x[..., y-1, ...], zero at y == 0
        pad = [(0, 0)] * x.ndim
        pad[axis] = (1, 0)
        idx[axis] = slice(0, ln)
        return jnp.pad(x, pad)[tuple(idx)]
    if mode == "p1":                       # x[..., y+1, ...], zero at y == L-1
        pad = [(0, 0)] * x.ndim
        pad[axis] = (0, 1)
        idx[axis] = slice(1, ln + 1)
        return jnp.pad(x, pad)[tuple(idx)]
    if mode == "last":                     # drop last row (per-phase length L-1)
        idx[axis] = slice(0, ln - 1)
        return x[tuple(idx)]
    if mode == "first":                    # drop first row
        idx[axis] = slice(1, ln)
        return x[tuple(idx)]
    raise ValueError(mode)


def build_phase_patches(act, kh, kw):
    """act: (CI, N, IH, IW) post-BN/ReLU activation (bf16).
    Returns at: (4, K, Mp) bf16 phase patches (K = taps*CI, channel-major K,
    Mp = rup(N*OHp*OWp, 128)) and the per-phase output spatial dims."""
    ci, n, ih, iw = act.shape
    ohp = ih if kh == 4 else ih - 1
    owp = iw if kw == 4 else iw - 1
    m = n * ohp * owp
    mp = _rup(m, LANE)
    phases = []
    for a in range(2):
        for b in range(2):
            taps = []
            for hmode, _ in _axis_taps(kh, a):
                xh = _apply_tap(act, hmode, 2)
                for wmode, _ in _axis_taps(kw, b):
                    taps.append(_apply_tap(xh, wmode, 3))    # (CI, N, OHp, OWp)
            phases.append(jnp.stack(taps, axis=0).reshape(-1, m))
    at = jnp.stack(phases, axis=0)                            # (4, K, M)
    if mp != m:
        at = jnp.pad(at, ((0, 0), (0, 0), (0, mp - m)))
    return at, (ohp, owp)


def _build_phase_weights(w, kh, kw, co_pad):
    """w: (CI, CO, KH, KW) PyTorch ConvTranspose2d weight.
    Returns (4, co_pad, taps*CI) bf16, matching build_phase_patches' ordering."""
    ci, co = w.shape[0], w.shape[1]
    phases = []
    for a in range(2):
        for b in range(2):
            blocks = []
            for _, ki in _axis_taps(kh, a):
                for _, kj in _axis_taps(kw, b):
                    blocks.append(w[:, :, ki, kj].T)          # (CO, CI)
            wt = jnp.concatenate(blocks, axis=1)              # (CO, T*CI)
            if co_pad != co:
                wt = jnp.pad(wt, ((0, co_pad - co), (0, 0)))
            phases.append(wt)
    return jnp.stack(phases, axis=0).astype(jnp.bfloat16)


# ----------------------------------------------------------------------------
# Parameters
# ----------------------------------------------------------------------------

def init_params(key):
    """PyTorch-layout params: ConvTranspose2d weights (CI, CO, KH, KW) (bias=False),
    BatchNorm2d gamma/beta."""
    convs, gammas, betas = [], [], []
    for li, (ci, co, (kh, kw), _, _) in enumerate(LAYER_CFG):
        key, k1, k2, k3 = jax.random.split(key, 4)
        convs.append(0.02 * jax.random.normal(k1, (ci, co, kh, kw), jnp.float32))
        if li < len(LAYER_CFG) - 1:
            gammas.append(1.0 + 0.1 * jax.random.normal(k2, (co,), jnp.float32))
            betas.append(0.1 * jax.random.normal(k3, (co,), jnp.float32))
    return {"convs": convs, "gammas": gammas, "betas": betas}


def prepare_params(params):
    """One-time (outside jit): split weights into per-phase bf16 matmul matrices."""
    w0 = params["convs"][0].astype(jnp.bfloat16).reshape(NZ, -1)  # (NZ, CO*KH*KW)
    wts = []
    for li in range(1, len(LAYER_CFG)):
        _, co, (kh, kw), _, _ = LAYER_CFG[li]
        wts.append(_build_phase_weights(params["convs"][li], kh, kw, _rup(co, 8)))
    return {"w0": w0, "wt": wts,
            "gamma": params["gammas"], "beta": params["betas"]}


def _bn_scale_shift(s, ss, count, gamma, beta):
    # BatchNorm2d in training mode (module default): biased batch statistics.
    mean = s / count
    var = jnp.maximum(ss / count - mean * mean, 0.0)   # clamp f32 cancellation
    scale = gamma * lax.rsqrt(var + BN_EPS)
    return scale, beta - mean * scale


# ----------------------------------------------------------------------------
# Generator forward
# ----------------------------------------------------------------------------

@jax.jit
def generator_forward(z_nchw, prepared):
    n = z_nchw.shape[0]

    # ---- Layer 0: ConvTranspose(nz -> ngf*16, 4, 1, 0) on a 1x1 input = matmul ----
    co0 = LAYER_CFG[0][1]
    z2 = jnp.zeros((8, NZ), jnp.bfloat16).at[:n].set(
        z_nchw.reshape(n, NZ).astype(jnp.bfloat16))
    out0 = pallas_matmul_f32(z2, prepared["w0"])[:n]          # (N, CO*4*4) f32
    act = out0.reshape(n, co0, 4, 4).transpose(1, 0, 2, 3)    # (C, N, H, W)
    s = jnp.sum(act, axis=(1, 2, 3))
    ss = jnp.sum(act * act, axis=(1, 2, 3))
    scale, shift = _bn_scale_shift(s, ss, n * 16,
                                   prepared["gamma"][0], prepared["beta"][0])

    # ---- Layers 1..6: phase-decomposed channel-major ConvTranspose ----
    img = None
    for li in range(1, len(LAYER_CFG)):
        _, co, (kh, kw), _, _ = LAYER_CFG[li]
        # BN affine + ReLU folded into the (XLA-fused) patch construction; it is
        # applied to the raw activation *before* the structural zero padding.
        act = jnp.maximum(act * scale[:, None, None, None]
                          + shift[:, None, None, None], 0.0).astype(jnp.bfloat16)
        at, (ohp, owp) = build_phase_patches(act, kh, kw)
        wt = prepared["wt"][li - 1]
        mph = n * ohp * owp

        if li < len(LAYER_CFG) - 1:
            out_ph, s, ss = pallas_convt_phases_bn(wt, at)
            s, ss = s[:co], ss[:co]
            scale, shift = _bn_scale_shift(s, ss, 4 * mph,
                                           prepared["gamma"][li], prepared["beta"][li])
            act = (out_ph[:, :co, :mph]
                   .reshape(2, 2, co, n, ohp, owp)
                   .transpose(2, 3, 4, 0, 5, 1)               # (co, n, y, a, x, b)
                   .reshape(co, n, 2 * ohp, 2 * owp))
        else:
            out_ph = pallas_convt_phases_tanh(wt, at)         # (4, 8, Mp) f32, tanh'd
            img = (out_ph[:, :co, :mph]
                   .reshape(2, 2, co, n, ohp, owp)
                   .transpose(3, 2, 4, 0, 5, 1)               # (n, co, y, a, x, b)
                   .reshape(n, co, 2 * ohp, 2 * owp))
    return img


# ----------------------------------------------------------------------------
# Pure-JAX reference (XLA, float32) for validation
# ----------------------------------------------------------------------------

@jax.jit
def reference_forward(z, params):
    x = z.astype(jnp.float32)
    n_layers = len(LAYER_CFG)
    for li, (_, _, (kh, kw), (sh, sw), (ph, pw)) in enumerate(LAYER_CFG):
        w = params["convs"][li]
        k = jnp.flip(w, (2, 3)).transpose(1, 0, 2, 3)         # (CO, CI, KH, KW)
        x = lax.conv_general_dilated(
            x, k, window_strides=(1, 1),
            padding=[(kh - 1 - ph, kh - 1 - ph), (kw - 1 - pw, kw - 1 - pw)],
            lhs_dilation=(sh, sw),
            dimension_numbers=("NCHW", "OIHW", "NCHW"))
        if li < n_layers - 1:
            mean = jnp.mean(x, axis=(0, 2, 3), keepdims=True)
            var = jnp.mean((x - mean) ** 2, axis=(0, 2, 3), keepdims=True)
            g = params["gammas"][li].reshape(1, -1, 1, 1)
            b = params["betas"][li].reshape(1, -1, 1, 1)
            x = jnp.maximum(g * (x - mean) * lax.rsqrt(var + BN_EPS) + b, 0.0)
        else:
            x = jnp.tanh(x)
    return x


if __name__ == "__main__":
    key = jax.random.PRNGKey(0)
    pkey, zkey = jax.random.split(key)
    params = init_params(pkey)
    prepared = prepare_params(params)          # hoisted out of the forward path

    batch = 2
    z = jax.random.normal(zkey, (batch, NZ, 1, 1), jnp.float32)

    out = generator_forward(z, prepared)
    out = jax.block_until_ready(out)

    assert out.shape == (batch, NC, 144, 256), out.shape
    assert bool(jnp.all(jnp.isfinite(out)))
    assert bool(jnp.all(jnp.abs(out) <= 1.0 + 1e-6))  # tanh range

    ref = jax.block_until_ready(reference_forward(z, params))
    err = float(jnp.max(jnp.abs(out - ref)))
    assert err < 6e-2, err

    print("KERNEL_OK")
</pallas_src>

<mosaic_0001>
module attributes {stable_mosaic.version = 11 : i64} {
  func.func @_matmul_f32_kernel(%arg0: i32, %arg1: memref<8x16xbf16, #tpu.memory_space<vmem>>, %arg2: memref<16x2048xbf16, #tpu.memory_space<vmem>>, %arg3: memref<8x2048xf32, #tpu.memory_space<vmem>>) attributes {dimension_semantics = [#tpu.dimension_semantics<arbitrary>], iteration_bounds = array<i64: 1>, scalar_prefetch = 0 : i64, scratch_operands = 0 : i64, tpu.core_type = #tpu.core_type<tc>, window_params = [{pipeline_mode = #tpu.pipeline_mode<synchronous>, transform_indices = @transform_0, window_bounds = array<i64: 8, 16>}, {pipeline_mode = #tpu.pipeline_mode<synchronous>, transform_indices = @transform_1, window_bounds = array<i64: 16, 2048>}, {pipeline_mode = #tpu.pipeline_mode<synchronous>, transform_indices = @transform_2, window_bounds = array<i64: 8, 2048>}]} {
    %c0 = arith.constant 0 : index
    %c0_0 = arith.constant 0 : index
    %0 = vector.load %arg1[%c0, %c0_0] : memref<8x16xbf16, #tpu.memory_space<vmem>>, vector<8x16xbf16>
    %c0_1 = arith.constant 0 : index
    %c0_2 = arith.constant 0 : index
    %1 = vector.load %arg2[%c0_1, %c0_2] : memref<16x2048xbf16, #tpu.memory_space<vmem>>, vector<16x2048xbf16>
    %cst = arith.constant dense<0.000000e+00> : vector<8x2048xf32>
    %2 = tpu.matmul %0, %1, %cst {dimension_numbers = #tpu.dot_dimension_numbers<[1], [0], [0], [1], [0, 0, 1, 1], [], []>} : vector<8x16xbf16>, vector<16x2048xbf16>, vector<8x2048xf32> -> vector<8x2048xf32>
    %c0_3 = arith.constant 0 : index
    %c0_4 = arith.constant 0 : index
    %3 = vector.load %arg3[%c0_3, %c0_4] : memref<8x2048xf32, #tpu.memory_space<vmem>>, vector<8x2048xf32>
    tpu.vector_store %arg3[%c0_3, %c0_4], %2 {strides = array<i32>} : memref<8x2048xf32, #tpu.memory_space<vmem>>, vector<8x2048xf32>,
    return
  }
  func.func @transform_0(%arg0: i32) -> (i32, i32) {
    %c0_i32 = arith.constant 0 : i32
    %c0_i32_0 = arith.constant 0 : i32
    %c0_i32_1 = arith.constant 0 : i32
    return %c0_i32, %c0_i32_0 : i32, i32
  }
  func.func @transform_1(%arg0: i32) -> (i32, i32) {
    %c0_i32 = arith.constant 0 : i32
    %c0_i32_0 = arith.constant 0 : i32
    %c0_i32_1 = arith.constant 0 : i32
    return %c0_i32, %c0_i32_0 : i32, i32
  }
  func.func @transform_2(%arg0: i32) -> (i32, i32) {
    %c0_i32 = arith.constant 0 : i32
    %c0_i32_0 = arith.constant 0 : i32
    %c0_i32_1 = arith.constant 0 : i32
    return %c0_i32, %c0_i32_0 : i32, i32
  }
}

module attributes {stable_mosaic.version = 11 : i64} {
  func.func @_convt_bn_stats_kernel(%arg0: i32, %arg1: i32, %arg2: memref<1x128x256xbf16, #tpu.memory_space<vmem>>, %arg3: memref<1x256x128xbf16, #tpu.memory_space<vmem>>, %arg4: memref<1x128x128xbf16, #tpu.memory_space<vmem>>, %arg5: memref<1x1x256x128xf32, #tpu.memory_space<vmem>>) attributes {dimension_semantics = [#tpu.dimension_semantics<parallel>, #tpu.dimension_semantics<parallel>], iteration_bounds = array<i64: 4, 1>, scalar_prefetch = 0 : i64, scratch_operands = 0 : i64, tpu.core_type = #tpu.core_type<tc>, window_params = [{transform_indices = @transform_0, window_bounds = array<i64: 1, 128, 256>}, {transform_indices = @transform_1, window_bounds = array<i64: 1, 256, 128>}, {transform_indices = @transform_2, window_bounds = array<i64: 1, 128, 128>}, {transform_indices = @transform_3, window_bounds = array<i64: 1, 1, 256, 128>}]} {
    %c0 = arith.constant 0 : index
    %c0_0 = arith.constant 0 : index
    %c0_1 = arith.constant 0 : index
    %0 = vector.load %arg2[%c0, %c0_0, %c0_1] : memref<1x128x256xbf16, #tpu.memory_space<vmem>>, vector<1x128x256xbf16>
    %1 = vector.shape_cast %0 : vector<1x128x256xbf16> to vector<128x256xbf16>
    %c0_2 = arith.constant 0 : index
    %c0_3 = arith.constant 0 : index
    %c0_4 = arith.constant 0 : index
    %2 = vector.load %arg3[%c0_2, %c0_3, %c0_4] : memref<1x256x128xbf16, #tpu.memory_space<vmem>>, vector<1x256x128xbf16>
    %3 = vector.shape_cast %2 : vector<1x256x128xbf16> to vector<256x128xbf16>
    %cst = arith.constant dense<0.000000e+00> : vector<128x128xf32>
    %4 = tpu.matmul %1, %3, %cst {dimension_numbers = #tpu.dot_dimension_numbers<[1], [0], [0], [1], [0, 0, 1, 1], [], []>} : vector<128x256xbf16>, vector<256x128xbf16>, vector<128x128xf32> -> vector<128x128xf32>
    %5 = arith.truncf %4 : vector<128x128xf32> to vector<128x128xbf16>
    %c0_5 = arith.constant 0 : index
    %c0_6 = arith.constant 0 : index
    %c0_7 = arith.constant 0 : index
    %6 = vector.load %arg4[%c0_5, %c0_6, %c0_7] : memref<1x128x128xbf16, #tpu.memory_space<vmem>>, vector<1x128x128xbf16>
    %7 = vector.shape_cast %6 : vector<1x128x128xbf16> to vector<128x128xbf16>
    %8 = vector.shape_cast %5 : vector<128x128xbf16> to vector<1x128x128xbf16>
    tpu.vector_store %arg4[%c0_5, %c0_6, %c0_7], %8 {strides = array<i32>} : memref<1x128x128xbf16, #tpu.memory_space<vmem>>, vector<1x128x128xbf16>,
    %cst_8 = arith.constant dense<0.000000e+00> : vector<128xf32>
    %9 = vector.multi_reduction <add>, %4, %cst_8 [1] : vector<128x128xf32> to vector<128xf32>
    %10 = vector.shape_cast %9 : vector<128xf32> to vector<128x1xf32>
    %11 = arith.mulf %4, %4 : vector<128x128xf32>
    %cst_9 = arith.constant dense<0.000000e+00> : vector<128xf32>
    %12 = vector.multi_reduction <add>, %11, %cst_9 [1] : vector<128x128xf32> to vector<128xf32>
    %13 = vector.shape_cast %12 : vector<128xf32> to vector<128x1xf32>
    %14 = tpu.concatenate %10, %13 in 0 : vector<128x1xf32>, vector<128x1xf32> -> vector<256x1xf32>
    %15 = vector.shape_cast %14 : vector<256x1xf32> to vector<256x1xf32>
    %16 = vector.broadcast %15 : vector<256x1xf32> to vector<256x128xf32>
    %c0_10 = arith.constant 0 : index
    %c0_11 = arith.constant 0 : index
    %c0_12 = arith.constant 0 : index
    %c0_13 = arith.constant 0 : index
    %17 = vector.load %arg5[%c0_10, %c0_11, %c0_12, %c0_13] : memref<1x1x256x128xf32, #tpu.memory_space<vmem>>, vector<1x1x256x128xf32>
    %18 = vector.shape_cast %17 : vector<1x1x256x128xf32> to vector<256x128xf32>
    %19 = vector.shape_cast %16 : vector<256x128xf32> to vector<1x1x256x128xf32>
    tpu.vector_store %arg5[%c0_10, %c0_11, %c0_12, %c0_13], %19 {strides = array<i32>} : memref<1x1x256x128xf32, #tpu.memory_space<vmem>>, vector<1x1x256x128xf32>,
    return
  }
  func.func @transform_0(%arg0: i32, %arg1: i32) -> (i32, i32, i32) {
    %c0_i32 = arith.constant 0 : i32
    %c0_i32_0 = arith.constant 0 : i32
    %c0_i32_1 = arith.constant 0 : i32
    return %arg0, %c0_i32, %c0_i32_0 : i32, i32, i32
  }
  func.func @transform_1(%arg0: i32, %arg1: i32) -> (i32, i32, i32) {
    %c0_i32 = arith.constant 0 : i32
    %c0_i32_0 = arith.constant 0 : i32
    return %arg0, %c0_i32, %arg1 : i32, i32, i32
  }
  func.func @transform_2(%arg0: i32, %arg1: i32) -> (i32, i32, i32) {
    %c0_i32 = arith.constant 0 : i32
    %c0_i32_0 = arith.constant 0 : i32
    return %arg0, %c0_i32, %arg1 : i32, i32, i32
  }
  func.func @transform_3(%arg0: i32, %arg1: i32) -> (i32, i32, i32, i32) {
    %c0_i32 = arith.constant 0 : i32
    %c0_i32_0 = arith.constant 0 : i32
    %c0_i32_1 = arith.constant 0 : i32
    return %arg0, %arg1, %c0_i32, %c0_i32_0 : i32, i32, i32, i32
  }
}

module attributes {stable_mosaic.version = 11 : i64} {
  func.func @_convt_bn_stats_kernel(%arg0: i32, %arg1: i32, %arg2: memref<1x64x256xbf16, #tpu.memory_space<vmem>>, %arg3: memref<1x256x128xbf16, #tpu.memory_space<vmem>>, %arg4: memref<1x64x128xbf16, #tpu.memory_space<vmem>>, %arg5: memref<1x1x128x128xf32, #tpu.memory_space<vmem>>) attributes {dimension_semantics = [#tpu.dimension_semantics<parallel>, #tpu.dimension_semantics<parallel>], iteration_bounds = array<i64: 4, 1>, scalar_prefetch = 0 : i64, scratch_operands = 0 : i64, tpu.core_type = #tpu.core_type<tc>, window_params = [{transform_indices = @transform_0, window_bounds = array<i64: 1, 64, 256>}, {transform_indices = @transform_1, window_bounds = array<i64: 1, 256, 128>}, {transform_indices = @transform_2, window_bounds = array<i64: 1, 64, 128>}, {transform_indices = @transform_3, window_bounds = array<i64: 1, 1, 128, 128>}]} {
    %c0 = arith.constant 0 : index
    %c0_0 = arith.constant 0 : index
    %c0_1 = arith.constant 0 : index
    %0 = vector.load %arg2[%c0, %c0_0, %c0_1] : memref<1x64x256xbf16, #tpu.memory_space<vmem>>, vector<1x64x256xbf16>
    %1 = vector.shape_cast %0 : vector<1x64x256xbf16> to vector<64x256xbf16>
    %c0_2 = arith.constant 0 : index
    %c0_3 = arith.constant 0 : index
    %c0_4 = arith.constant 0 : index
    %2 = vector.load %arg3[%c0_2, %c0_3, %c0_4] : memref<1x256x128xbf16, #tpu.memory_space<vmem>>, vector<1x256x128xbf16>
    %3 = vector.shape_cast %2 : vector<1x256x128xbf16> to vector<256x128xbf16>
    %cst = arith.constant dense<0.000000e+00> : vector<64x128xf32>
    %4 = tpu.matmul %1, %3, %cst {dimension_numbers = #tpu.dot_dimension_numbers<[1], [0], [0], [1], [0, 0, 1, 1], [], []>} : vector<64x256xbf16>, vector<256x128xbf16>, vector<64x128xf32> -> vector<64x128xf32>
    %5 = arith.truncf %4 : vector<64x128xf32> to vector<64x128xbf16>
    %c0_5 = arith.constant 0 : index
    %c0_6 = arith.constant 0 : index
    %c0_7 = arith.constant 0 : index
    %6 = vector.load %arg4[%c0_5, %c0_6, %c0_7] : memref<1x64x128xbf16, #tpu.memory_space<vmem>>, vector<1x64x128xbf16>
    %7 = vector.shape_cast %6 : vector<1x64x128xbf16> to vector<64x128xbf16>
    %8 = vector.shape_cast %5 : vector<64x128xbf16> to vector<1x64x128xbf16>
    tpu.vector_store %arg4[%c0_5, %c0_6, %c0_7], %8 {strides = array<i32>} : memref<1x64x128xbf16, #tpu.memory_space<vmem>>, vector<1x64x128xbf16>,
    %cst_8 = arith.constant dense<0.000000e+00> : vector<64xf32>
    %9 = vector.multi_reduction <add>, %4, %cst_8 [1] : vector<64x128xf32> to vector<64xf32>
    %10 = vector.shape_cast %9 : vector<64xf32> to vector<64x1xf32>
    %11 = arith.mulf %4, %4 : vector<64x128xf32>
    %cst_9 = arith.constant dense<0.000000e+00> : vector<64xf32>
    %12 = vector.multi_reduction <add>, %11, %cst_9 [1] : vector<64x128xf32> to vector<64xf32>
    %13 = vector.shape_cast %12 : vector<64xf32> to vector<64x1xf32>
    %14 = tpu.concatenate %10, %13 in 0 : vector<64x1xf32>, vector<64x1xf32> -> vector<128x1xf32>
    %15 = vector.shape_cast %14 : vector<128x1xf32> to vector<128x1xf32>
    %16 = vector.broadcast %15 : vector<128x1xf32> to vector<128x128xf32>
    %c0_10 = arith.constant 0 : index
    %c0_11 = arith.constant 0 : index
    %c0_12 = arith.constant 0 : index
    %c0_13 = arith.constant 0 : index
    %17 = vector.load %arg5[%c0_10, %c0_11, %c0_12, %c0_13] : memref<1x1x128x128xf32, #tpu.memory_space<vmem>>, vector<1x1x128x128xf32>
    %18 = vector.shape_cast %17 : vector<1x1x128x128xf32> to vector<128x128xf32>
    %19 = vector.shape_cast %16 : vector<128x128xf32> to vector<1x1x128x128xf32>
    tpu.vector_store %arg5[%c0_10, %c0_11, %c0_12, %c0_13], %19 {strides = array<i32>} : memref<1x1x128x128xf32, #tpu.memory_space<vmem>>, vector<1x1x128x128xf32>,
    return
  }
  func.func @transform_0(%arg0: i32, %arg1: i32) -> (i32, i32, i32) {
    %c0_i32 = arith.constant 0 : i32
    %c0_i32_0 = arith.constant 0 : i32
    %c0_i32_1 = arith.constant 0 : i32
    return %arg0, %c0_i32, %c0_i32_0 : i32, i32, i32
  }
  func.func @transform_1(%arg0: i32, %arg1: i32) -> (i32, i32, i32) {
    %c0_i32 = arith.constant 0 : i32
    %c0_i32_0 = arith.constant 0 : i32
    return %arg0, %c0_i32, %arg1 : i32, i32, i32
  }
  func.func @transform_2(%arg0: i32, %arg1: i32) -> (i32, i32, i32) {
    %c0_i32 = arith.constant 0 : i32
    %c0_i32_0 = arith.constant 0 : i32
    return %arg0, %c0_i32, %arg1 : i32, i32, i32
  }
  func.func @transform_3(%arg0: i32, %arg1: i32) -> (i32, i32, i32, i32) {
    %c0_i32 = arith.constant 0 : i32
    %c0_i32_0 = arith.constant 0 : i32
    %c0_i32_1 = arith.constant 0 : i32
    return %arg0, %arg1, %c0_i32, %c0_i32_0 : i32, i32, i32, i32
  }
}

module attributes {stable_mosaic.version = 11 : i64} {
  func.func @_convt_bn_stats_kernel(%arg0: i32, %arg1: i32, %arg2: memref<1x32x128xbf16, #tpu.memory_space<vmem>>, %arg3: memref<1x128x384xbf16, #tpu.memory_space<vmem>>, %arg4: memref<1x32x384xbf16, #tpu.memory_space<vmem>>, %arg5: memref<1x1x64x128xf32, #tpu.memory_space<vmem>>) attributes {dimension_semantics = [#tpu.dimension_semantics<parallel>, #tpu.dimension_semantics<parallel>], iteration_bounds = array<i64: 4, 1>, scalar_prefetch = 0 : i64, scratch_operands = 0 : i64, tpu.core_type = #tpu.core_type<tc>, window_params = [{transform_indices = @transform_0, window_bounds = array<i64: 1, 32, 128>}, {transform_indices = @transform_1, window_bounds = array<i64: 1, 128, 384>}, {transform_indices = @transform_2, window_bounds = array<i64: 1, 32, 384>}, {transform_indices = @transform_3, window_bounds = array<i64: 1, 1, 64, 128>}]} {
    %c0 = arith.constant 0 : index
    %c0_0 = arith.constant 0 : index
    %c0_1 = arith.constant 0 : index
    %0 = vector.load %arg2[%c0, %c0_0, %c0_1] : memref<1x32x128xbf16, #tpu.memory_space<vmem>>, vector<1x32x128xbf16>
    %1 = vector.shape_cast %0 : vector<1x32x128xbf16> to vector<32x128xbf16>
    %c0_2 = arith.constant 0 : index
    %c0_3 = arith.constant 0 : index
    %c0_4 = arith.constant 0 : index
    %2 = vector.load %arg3[%c0_2, %c0_3, %c0_4] : memref<1x128x384xbf16, #tpu.memory_space<vmem>>, vector<1x128x384xbf16>
    %3 = vector.shape_cast %2 : vector<1x128x384xbf16> to vector<128x384xbf16>
    %cst = arith.constant dense<0.000000e+00> : vector<32x384xf32>
    %4 = tpu.matmul %1, %3, %cst {dimension_numbers = #tpu.dot_dimension_numbers<[1], [0], [0], [1], [0, 0, 1, 1], [], []>} : vector<32x128xbf16>, vector<128x384xbf16>, vector<32x384xf32> -> vector<32x384xf32>
    %5 = arith.truncf %4 : vector<32x384xf32> to vector<32x384xbf16>
    %c0_5 = arith.constant 0 : index
    %c0_6 = arith.constant 0 : index
    %c0_7 = arith.constant 0 : index
    %6 = vector.load %arg4[%c0_5, %c0_6, %c0_7] : memref<1x32x384xbf16, #tpu.memory_space<vmem>>, vector<1x32x384xbf16>
    %7 = vector.shape_cast %6 : vector<1x32x384xbf16> to vector<32x384xbf16>
    %8 = vector.shape_cast %5 : vector<32x384xbf16> to vector<1x32x384xbf16>
    tpu.vector_store %arg4[%c0_5, %c0_6, %c0_7], %8 {strides = array<i32>} : memref<1x32x384xbf16, #tpu.memory_space<vmem>>, vector<1x32x384xbf16>,
    %cst_8 = arith.constant dense<0.000000e+00> : vector<32xf32>
    %9 = vector.multi_reduction <add>, %4, %cst_8 [1] : vector<32x384xf32> to vector<32xf32>
    %10 = vector.shape_cast %9 : vector<32xf32> to vector<32x1xf32>
    %11 = arith.mulf %4, %4 : vector<32x384xf32>
    %cst_9 = arith.constant dense<0.000000e+00> : vector<32xf32>
    %12 = vector.multi_reduction <add>, %11, %cst_9 [1] : vector<32x384xf32> to vector<32xf32>
    %13 = vector.shape_cast %12 : vector<32xf32> to vector<32x1xf32>
    %14 = tpu.concatenate %10, %13 in 0 : vector<32x1xf32>, vector<32x1xf32> -> vector<64x1xf32>
    %15 = vector.shape_cast %14 : vector<64x1xf32> to vector<64x1xf32>
    %16 = vector.broadcast %15 : vector<64x1xf32> to vector<64x128xf32>
    %c0_10 = arith.constant 0 : index
    %c0_11 = arith.constant 0 : index
    %c0_12 = arith.constant 0 : index
    %c0_13 = arith.constant 0 : index
    %17 = vector.load %arg5[%c0_10, %c0_11, %c0_12, %c0_13] : memref<1x1x64x128xf32, #tpu.memory_space<vmem>>, vector<1x1x64x128xf32>
    %18 = vector.shape_cast %17 : vector<1x1x64x128xf32> to vector<64x128xf32>
    %19 = vector.shape_cast %16 : vector<64x128xf32> to vector<1x1x64x128xf32>
    tpu.vector_store %arg5[%c0_10, %c0_11, %c0_12, %c0_13], %19 {strides = array<i32>} : memref<1x1x64x128xf32, #tpu.memory_space<vmem>>, vector<1x1x64x128xf32>,
    return
  }
  func.func @transform_0(%arg0: i32, %arg1: i32) -> (i32, i32, i32) {
    %c0_i32 = arith.constant 0 : i32
    %c0_i32_0 = arith.constant 0 : i32
    %c0_i32_1 = arith.constant 0 : i32
    return %arg0, %c0_i32, %c0_i32_0 : i32, i32, i32
  }
  func.func @transform_1(%arg0: i32, %arg1: i32) -> (i32, i32, i32) {
    %c0_i32 = arith.constant 0 : i32
    %c0_i32_0 = arith.constant 0 : i32
    return %arg0, %c0_i32, %arg1 : i32, i32, i32
  }
  func.func @transform_2(%arg0: i32, %arg1: i32) -> (i32, i32, i32) {
    %c0_i32 = arith.constant 0 : i32
    %c0_i32_0 = arith.constant 0 : i32
    return %arg0, %c0_i32, %arg1 : i32, i32, i32
  }
  func.func @transform_3(%arg0: i32, %arg1: i32) -> (i32, i32, i32, i32) {
    %c0_i32 = arith.constant 0 : i32
    %c0_i32_0 = arith.constant 0 : i32
    %c0_i32_1 = arith.constant 0 : i32
    return %arg0, %arg1, %c0_i32, %c0_i32_0 : i32, i32, i32, i32
  }
}

module attributes {stable_mosaic.version = 11 : i64} {
  func.func @_convt_bn_stats_kernel(%arg0: i32, %arg1: i32, %arg2: memref<1x16x128xbf16, #tpu.memory_space<vmem>>, %arg3: memref<1x128x1152xbf16, #tpu.memory_space<vmem>>, %arg4: memref<1x16x1152xbf16, #tpu.memory_space<vmem>>, %arg5: memref<1x1x32x128xf32, #tpu.memory_space<vmem>>) attributes {dimension_semantics = [#tpu.dimension_semantics<parallel>, #tpu.dimension_semantics<parallel>], iteration_bounds = array<i64: 4, 1>, scalar_prefetch = 0 : i64, scratch_operands = 0 : i64, tpu.core_type = #tpu.core_type<tc>, window_params = [{transform_indices = @transform_0, window_bounds = array<i64: 1, 16, 128>}, {transform_indices = @transform_1, window_bounds = array<i64: 1, 128, 1152>}, {transform_indices = @transform_2, window_bounds = array<i64: 1, 16, 1152>}, {transform_indices = @transform_3, window_bounds = array<i64: 1, 1, 32, 128>}]} {
    %c0 = arith.constant 0 : index
    %c0_0 = arith.constant 0 : index
    %c0_1 = arith.constant 0 : index
    %0 = vector.load %arg2[%c0, %c0_0, %c0_1] : memref<1x16x128xbf16, #tpu.memory_space<vmem>>, vector<1x16x128xbf16>
    %1 = vector.shape_cast %0 : vector<1x16x128xbf16> to vector<16x128xbf16>
    %c0_2 = arith.constant 0 : index
    %c0_3 = arith.constant 0 : index
    %c0_4 = arith.constant 0 : index
    %2 = vector.load %arg3[%c0_2, %c0_3, %c0_4] : memref<1x128x1152xbf16, #tpu.memory_space<vmem>>, vector<1x128x1152xbf16>
    %3 = vector.shape_cast %2 : vector<1x128x1152xbf16> to vector<128x1152xbf16>
    %cst = arith.constant dense<0.000000e+00> : vector<16x1152xf32>
    %4 = tpu.matmul %1, %3, %cst {dimension_numbers = #tpu.dot_dimension_numbers<[1], [0], [0], [1], [0, 0, 1, 1], [], []>} : vector<16x128xbf16>, vector<128x1152xbf16>, vector<16x1152xf32> -> vector<16x1152xf32>
    %5 = arith.truncf %4 : vector<16x1152xf32> to vector<16x1152xbf16>
    %c0_5 = arith.constant 0 : index
    %c0_6 = arith.constant 0 : index
    %c0_7 = arith.constant 0 : index
    %6 = vector.load %arg4[%c0_5, %c0_6, %c0_7] : memref<1x16x1152xbf16, #tpu.memory_space<vmem>>, vector<1x16x1152xbf16>
    %7 = vector.shape_cast %6 : vector<1x16x1152xbf16> to vector<16x1152xbf16>
    %8 = vector.shape_cast %5 : vector<16x1152xbf16> to vector<1x16x1152xbf16>
    tpu.vector_store %arg4[%c0_5, %c0_6, %c0_7], %8 {strides = array<i32>} : memref<1x16x1152xbf16, #tpu.memory_space<vmem>>, vector<1x16x1152xbf16>,
    %cst_8 = arith.constant dense<0.000000e+00> : vector<16xf32>
    %9 = vector.multi_reduction <add>, %4, %cst_8 [1] : vector<16x1152xf32> to vector<16xf32>
    %10 = vector.shape_cast %9 : vector<16xf32> to vector<16x1xf32>
    %11 = arith.mulf %4, %4 : vector<16x1152xf32>
    %cst_9 = arith.constant dense<0.000000e+00> : vector<16xf32>
    %12 = vector.multi_reduction <add>, %11, %cst_9 [1] : vector<16x1152xf32> to vector<16xf32>
    %13 = vector.shape_cast %12 : vector<16xf32> to vector<16x1xf32>
    %14 = tpu.concatenate %10, %13 in 0 : vector<16x1xf32>, vector<16x1xf32> -> vector<32x1xf32>
    %15 = vector.shape_cast %14 : vector<32x1xf32> to vector<32x1xf32>
    %16 = vector.broadcast %15 : vector<32x1xf32> to vector<32x128xf32>
    %c0_10 = arith.constant 0 : index
    %c0_11 = arith.constant 0 : index
    %c0_12 = arith.constant 0 : index
    %c0_13 = arith.constant 0 : index
    %17 = vector.load %arg5[%c0_10, %c0_11, %c0_12, %c0_13] : memref<1x1x32x128xf32, #tpu.memory_space<vmem>>, vector<1x1x32x128xf32>
    %18 = vector.shape_cast %17 : vector<1x1x32x128xf32> to vector<32x128xf32>
    %19 = vector.shape_cast %16 : vector<32x128xf32> to vector<1x1x32x128xf32>
    tpu.vector_store %arg5[%c0_10, %c0_11, %c0_12, %c0_13], %19 {strides = array<i32>} : memref<1x1x32x128xf32, #tpu.memory_space<vmem>>, vector<1x1x32x128xf32>,
    return
  }
  func.func @transform_0(%arg0: i32, %arg1: i32) -> (i32, i32, i32) {
    %c0_i32 = arith.constant 0 : i32
    %c0_i32_0 = arith.constant 0 : i32
    %c0_i32_1 = arith.constant 0 : i32
    return %arg0, %c0_i32, %c0_i32_0 : i32, i32, i32
  }
  func.func @transform_1(%arg0: i32, %arg1: i32) -> (i32, i32, i32) {
    %c0_i32 = arith.constant 0 : i32
    %c0_i32_0 = arith.constant 0 : i32
    return %arg0, %c0_i32, %arg1 : i32, i32, i32
  }
  func.func @transform_2(%arg0: i32, %arg1: i32) -> (i32, i32, i32) {
    %c0_i32 = arith.constant 0 : i32
    %c0_i32_0 = arith.constant 0 : i32
    return %arg0, %c0_i32, %arg1 : i32, i32, i32
  }
  func.func @transform_3(%arg0: i32, %arg1: i32) -> (i32, i32, i32, i32) {
    %c0_i32 = arith.constant 0 : i32
    %c0_i32_0 = arith.constant 0 : i32
    %c0_i32_1 = arith.constant 0 : i32
    return %arg0, %arg1, %c0_i32, %c0_i32_0 : i32, i32, i32, i32
  }
}

module attributes {stable_mosaic.version = 11 : i64} {
  func.func @_convt_bn_stats_kernel(%arg0: i32, %arg1: i32, %arg2: memref<1x8x64xbf16, #tpu.memory_space<vmem>>, %arg3: memref<1x64x4608xbf16, #tpu.memory_space<vmem>>, %arg4: memref<1x8x4608xbf16, #tpu.memory_space<vmem>>, %arg5: memref<1x1x16x128xf32, #tpu.memory_space<vmem>>) attributes {dimension_semantics = [#tpu.dimension_semantics<parallel>, #tpu.dimension_semantics<parallel>], iteration_bounds = array<i64: 4, 1>, scalar_prefetch = 0 : i64, scratch_operands = 0 : i64, tpu.core_type = #tpu.core_type<tc>, window_params = [{transform_indices = @transform_0, window_bounds = array<i64: 1, 8, 64>}, {transform_indices = @transform_1, window_bounds = array<i64: 1, 64, 4608>}, {transform_indices = @transform_2, window_bounds = array<i64: 1, 8, 4608>}, {transform_indices = @transform_3, window_bounds = array<i64: 1, 1, 16, 128>}]} {
    %c0 = arith.constant 0 : index
    %c0_0 = arith.constant 0 : index
    %c0_1 = arith.constant 0 : index
    %0 = vector.load %arg2[%c0, %c0_0, %c0_1] : memref<1x8x64xbf16, #tpu.memory_space<vmem>>, vector<1x8x64xbf16>
    %1 = vector.shape_cast %0 : vector<1x8x64xbf16> to vector<8x64xbf16>
    %c0_2 = arith.constant 0 : index
    %c0_3 = arith.constant 0 : index
    %c0_4 = arith.constant 0 : index
    %2 = vector.load %arg3[%c0_2, %c0_3, %c0_4] : memref<1x64x4608xbf16, #tpu.memory_space<vmem>>, vector<1x64x4608xbf16>
    %3 = vector.shape_cast %2 : vector<1x64x4608xbf16> to vector<64x4608xbf16>
    %cst = arith.constant dense<0.000000e+00> : vector<8x4608xf32>
    %4 = tpu.matmul %1, %3, %cst {dimension_numbers = #tpu.dot_dimension_numbers<[1], [0], [0], [1], [0, 0, 1, 1], [], []>} : vector<8x64xbf16>, vector<64x4608xbf16>, vector<8x4608xf32> -> vector<8x4608xf32>
    %5 = arith.truncf %4 : vector<8x4608xf32> to vector<8x4608xbf16>
    %c0_5 = arith.constant 0 : index
    %c0_6 = arith.constant 0 : index
    %c0_7 = arith.constant 0 : index
    %6 = vector.load %arg4[%c0_5, %c0_6, %c0_7] : memref<1x8x4608xbf16, #tpu.memory_space<vmem>>, vector<1x8x4608xbf16>
    %7 = vector.shape_cast %6 : vector<1x8x4608xbf16> to vector<8x4608xbf16>
    %8 = vector.shape_cast %5 : vector<8x4608xbf16> to vector<1x8x4608xbf16>
    tpu.vector_store %arg4[%c0_5, %c0_6, %c0_7], %8 {strides = array<i32>} : memref<1x8x4608xbf16, #tpu.memory_space<vmem>>, vector<1x8x4608xbf16>,
    %cst_8 = arith.constant dense<0.000000e+00> : vector<8xf32>
    %9 = vector.multi_reduction <add>, %4, %cst_8 [1] : vector<8x4608xf32> to vector<8xf32>
    %10 = vector.shape_cast %9 : vector<8xf32> to vector<8x1xf32>
    %11 = arith.mulf %4, %4 : vector<8x4608xf32>
    %cst_9 = arith.constant dense<0.000000e+00> : vector<8xf32>
    %12 = vector.multi_reduction <add>, %11, %cst_9 [1] : vector<8x4608xf32> to vector<8xf32>
    %13 = vector.shape_cast %12 : vector<8xf32> to vector<8x1xf32>
    %14 = tpu.concatenate %10, %13 in 0 : vector<8x1xf32>, vector<8x1xf32> -> vector<16x1xf32>
    %15 = vector.shape_cast %14 : vector<16x1xf32> to vector<16x1xf32>
    %16 = vector.broadcast %15 : vector<16x1xf32> to vector<16x128xf32>
    %c0_10 = arith.constant 0 : index
    %c0_11 = arith.constant 0 : index
    %c0_12 = arith.constant 0 : index
    %c0_13 = arith.constant 0 : index
    %17 = vector.load %arg5[%c0_10, %c0_11, %c0_12, %c0_13] : memref<1x1x16x128xf32, #tpu.memory_space<vmem>>, vector<1x1x16x128xf32>
    %18 = vector.shape_cast %17 : vector<1x1x16x128xf32> to vector<16x128xf32>
    %19 = vector.shape_cast %16 : vector<16x128xf32> to vector<1x1x16x128xf32>
    tpu.vector_store %arg5[%c0_10, %c0_11, %c0_12, %c0_13], %19 {strides = array<i32>} : memref<1x1x16x128xf32, #tpu.memory_space<vmem>>, vector<1x1x16x128xf32>,
    return
  }
  func.func @transform_0(%arg0: i32, %arg1: i32) -> (i32, i32, i32) {
    %c0_i32 = arith.constant 0 : i32
    %c0_i32_0 = arith.constant 0 : i32
    %c0_i32_1 = arith.constant 0 : i32
    return %arg0, %c0_i32, %c0_i32_0 : i32, i32, i32
  }
  func.func @transform_1(%arg0: i32, %arg1: i32) -> (i32, i32, i32) {
    %c0_i32 = arith.constant 0 : i32
    %c0_i32_0 = arith.constant 0 : i32
    return %arg0, %c0_i32, %arg1 : i32, i32, i32
  }
  func.func @transform_2(%arg0: i32, %arg1: i32) -> (i32, i32, i32) {
    %c0_i32 = arith.constant 0 : i32
    %c0_i32_0 = arith.constant 0 : i32
    return %arg0, %c0_i32, %arg1 : i32, i32, i32
  }
  func.func @transform_3(%arg0: i32, %arg1: i32) -> (i32, i32, i32, i32) {
    %c0_i32 = arith.constant 0 : i32
    %c0_i32_0 = arith.constant 0 : i32
    %c0_i32_1 = arith.constant 0 : i32
    return %arg0, %arg1, %c0_i32, %c0_i32_0 : i32, i32, i32, i32
  }
}

module attributes {stable_mosaic.version = 11 : i64} {
  func.func @_convt_tanh_kernel(%arg0: i32, %arg1: i32, %arg2: memref<1x8x32xbf16, #tpu.memory_space<vmem>>, %arg3: memref<1x32x18432xbf16, #tpu.memory_space<vmem>>, %arg4: memref<1x8x18432xf32, #tpu.memory_space<vmem>>) attributes {dimension_semantics = [#tpu.dimension_semantics<parallel>, #tpu.dimension_semantics<parallel>], iteration_bounds = array<i64: 4, 1>, scalar_prefetch = 0 : i64, scratch_operands = 0 : i64, tpu.core_type = #tpu.core_type<tc>, window_params = [{transform_indices = @transform_0, window_bounds = array<i64: 1, 8, 32>}, {transform_indices = @transform_1, window_bounds = array<i64: 1, 32, 18432>}, {transform_indices = @transform_2, window_bounds = array<i64: 1, 8, 18432>}]} {
    %c0 = arith.constant 0 : index
    %c0_0 = arith.constant 0 : index
    %c0_1 = arith.constant 0 : index
    %0 = vector.load %arg2[%c0, %c0_0, %c0_1] : memref<1x8x32xbf16, #tpu.memory_space<vmem>>, vector<1x8x32xbf16>
    %1 = vector.shape_cast %0 : vector<1x8x32xbf16> to vector<8x32xbf16>
    %c0_2 = arith.constant 0 : index
    %c0_3 = arith.constant 0 : index
    %c0_4 = arith.constant 0 : index
    %2 = vector.load %arg3[%c0_2, %c0_3, %c0_4] : memref<1x32x18432xbf16, #tpu.memory_space<vmem>>, vector<1x32x18432xbf16>
    %3 = vector.shape_cast %2 : vector<1x32x18432xbf16> to vector<32x18432xbf16>
    %cst = arith.constant dense<0.000000e+00> : vector<8x18432xf32>
    %4 = tpu.matmul %1, %3, %cst {dimension_numbers = #tpu.dot_dimension_numbers<[1], [0], [0], [1], [0, 0, 1, 1], [], []>} : vector<8x32xbf16>, vector<32x18432xbf16>, vector<8x18432xf32> -> vector<8x18432xf32>
    %5 = math.tanh %4 : vector<8x18432xf32>
    %c0_5 = arith.constant 0 : index
    %c0_6 = arith.constant 0 : index
    %c0_7 = arith.constant 0 : index
    %6 = vector.load %arg4[%c0_5, %c0_6, %c0_7] : memref<1x8x18432xf32, #tpu.memory_space<vmem>>, vector<1x8x18432xf32>
    %7 = vector.shape_cast %6 : vector<1x8x18432xf32> to vector<8x18432xf32>
    %8 = vector.shape_cast %5 : vector<8x18432xf32> to vector<1x8x18432xf32>
    tpu.vector_store %arg4[%c0_5, %c0_6, %c0_7], %8 {strides = array<i32>} : memref<1x8x18432xf32, #tpu.memory_space<vmem>>, vector<1x8x18432xf32>,
    return
  }
  func.func @transform_0(%arg0: i32, %arg1: i32) -> (i32, i32, i32) {
    %c0_i32 = arith.constant 0 : i32
    %c0_i32_0 = arith.constant 0 : i32
    %c0_i32_1 = arith.constant 0 : i32
    return %arg0, %c0_i32, %c0_i32_0 : i32, i32, i32
  }
  func.func @transform_1(%arg0: i32, %arg1: i32) -> (i32, i32, i32) {
    %c0_i32 = arith.constant 0 : i32
    %c0_i32_0 = arith.constant 0 : i32
    return %arg0, %c0_i32, %arg1 : i32, i32, i32
  }
  func.func @transform_2(%arg0: i32, %arg1: i32) -> (i32, i32, i32) {
    %c0_i32 = arith.constant 0 : i32
    %c0_i32_0 = arith.constant 0 : i32
    return %arg0, %c0_i32, %arg1 : i32, i32, i32
  }
}

</mosaic_0001>

<llo_original>
// kernel: generator_forward.7
$region0: #{generator_forward.7}
  #allocation0 [shape = 'u32[]', space=smem, size = 0x4, offset = 0x4, fixed_abs, tag = 'smem constant byte address 0x4 - core index']
  #allocation1 [shape = 'u32[144,128]{1,0:T(1,128)}', space=vmem, size = 0x12000, scoped, tag = 'internal scratch']
  %s0 = inlined_call_operand.vmem [shape: bf16[8,16], index: 0, kind: input, shape index: {}]
  %s1 = inlined_call_operand.hbm [shape: bf16[16,2048], index: 1, kind: input, shape index: {}]
  %s2 = inlined_call_operand.vmem [shape: f32[8,2048], index: 2, kind: output, shape index: {}]
  %s3 = sld [smem:[#allocation0]]
  $region22: #{generator_forward.7} parent=0
    _
  %s5 = ssub.s32 1, %s3
  %s6 = scalar_select 0, %s5, %s3
  $region1: #{generator_forward.7} parent=0
    #allocation2 [shape = 'u8[65536]{0}', space=vmem, size = 0x10000, scoped, tag = 'input window, operand 1, single buffered']
    #allocation3 [shape = 's32[1]{0}', space=sflag, size = 0x4, scoped, tag = 'scoped memory for generator_forward.7']
    %7 = vsyncpa [#allocation3], 0
    // Predicated region
    $region2: #{generator_forward.7} parent=1 // pred_check
      _
    $region3: #{generator_forward.7} parent=1 // pred_check_branch
      %9 = sbr.rel (0) target = $region5
    $region4: #{generator_forward.7} parent=1 // pred_region
      _
    $region5: #{generator_forward.7} parent=1 // pred_fallthru
      _
    // Predicated region
    $region6: #{generator_forward.7} parent=1 // pred_check
      _
    $region7: #{generator_forward.7} parent=1 // pred_check_branch
      %11 = sbr.rel (0) target = $region9
    $region8: #{generator_forward.7} parent=1 // pred_region
      %s13 = ssub.s32 2048, 2048
      %14 = vsyncadd [#allocation3], %s13
      %s15 = sshll.u32 [#allocation2], 4
      %s16 = int_to_ptr.vmem [resolvable:$true] %s15
      %21 = dma.hbm_to_vmem [thread:$0]  %s1, 2048, %s16, [#allocation3], 1024, 1024, 64
    $region9: #{generator_forward.7} parent=1 // pred_fallthru
      _
    // Predicated region
    $region10: #{generator_forward.7} parent=1 // pred_check
      _
    $region11: #{generator_forward.7} parent=1 // pred_check_branch
      %23 = sbr.rel (0) target = $region13
    $region12: #{generator_forward.7} parent=1 // pred_region
      %24 = dma.done [#allocation3], 2048
    $region13: #{generator_forward.7} parent=1 // pred_fallthru
      _
    %v26 = vld [vmem:[%s0] sm:$0xf]
    %v27 = vld [vmem:[#allocation2] sm:$0xff]
    %v28 = vld [vmem:[#allocation2 + $0x8] sm:$0xff]
    %v29 = vld [vmem:[#allocation2 + $0x10] sm:$0xff]
    %v30 = vld [vmem:[#allocation2 + $0x18] sm:$0xff]
    %v31 = vld [vmem:[#allocation2 + $0x20] sm:$0xff]
    %v32 = vld [vmem:[#allocation2 + $0x28] sm:$0xff]
    %v33 = vld [vmem:[#allocation2 + $0x30] sm:$0xff]
    %v34 = vld [vmem:[#allocation2 + $0x38] sm:$0xff]
    %v35 = vld [vmem:[#allocation2 + $0x40] sm:$0xff]
    %v36 = vld [vmem:[#allocation2 + $0x48] sm:$0xff]
    %v37 = vld [vmem:[#allocation2 + $0x50] sm:$0xff]
    %v38 = vld [vmem:[#allocation2 + $0x58] sm:$0xff]
    %v39 = vld [vmem:[#allocation2 + $0x60] sm:$0xff]
    %v40 = vld [vmem:[#allocation2 + $0x68] sm:$0xff]
    %v41 = vld [vmem:[#allocation2 + $0x70] sm:$0xff]
    %v42 = vld [vmem:[#allocation2 + $0x78] sm:$0xff]
    %v59 = vunpack.c.l.b16 %v27
    %v60 = vunpack.c.h.b16 %v27
    %v61 = vunpack.c.l.b16 %v28
    %v62 = vunpack.c.h.b16 %v28
    %v63 = vunpack.c.l.b16 %v29
    %v64 = vunpack.c.h.b16 %v29
    %v65 = vunpack.c.l.b16 %v30
    %v66 = vunpack.c.h.b16 %v30
    %v67 = vunpack.c.l.b16 %v31
    %v68 = vunpack.c.h.b16 %v31
    %v69 = vunpack.c.l.b16 %v32
    %v70 = vunpack.c.h.b16 %v32
    %v71 = vunpack.c.l.b16 %v33
    %v72 = vunpack.c.h.b16 %v33
    %v73 = vunpack.c.l.b16 %v34
    %v74 = vunpack.c.h.b16 %v34
    %v75 = vunpack.c.l.b16 %v35
    %v76 = vunpack.c.h.b16 %v35
    %v77 = vunpack.c.l.b16 %v36
    %v78 = vunpack.c.h.b16 %v36
    %v79 = vunpack.c.l.b16 %v37
    %v80 = vunpack.c.h.b16 %v37
    %v81 = vunpack.c.l.b16 %v38
    %v82 = vunpack.c.h.b16 %v38
    %v83 = vunpack.c.l.b16 %v39
    %v84 = vunpack.c.h.b16 %v39
    %v85 = vunpack.c.l.b16 %v40
    %v86 = vunpack.c.h.b16 %v40
    %v87 = vunpack.c.l.b16 %v41
    %v88 = vunpack.c.h.b16 %v41
    %v89 = vunpack.c.l.b16 %v42
    %v90 = vunpack.c.h.b16 %v42
    %v91 = vpack.c.b16 %v75, %v59
    %v92 = vpack.c.b16 %v76, %v60
    %v93 = vpack.c.b16 %v77, %v61
    %v94 = vpack.c.b16 %v78, %v62
    %v95 = vpack.c.b16 %v79, %v63
    %v96 = vpack.c.b16 %v80, %v64
    %v97 = vpack.c.b16 %v81, %v65
    %v98 = vpack.c.b16 %v82, %v66
    %v99 = vpack.c.b16 %v83, %v67
    %v100 = vpack.c.b16 %v84, %v68
    %v101 = vpack.c.b16 %v85, %v69
    %v102 = vpack.c.b16 %v86, %v70
    %v103 = vpack.c.b16 %v87, %v71
    %v104 = vpack.c.b16 %v88, %v72
    %v105 = vpack.c.b16 %v89, %v73
    %v106 = vpack.c.b16 %v90, %v74
    %vm123 = vcmask 130048
    %v125 = vsel %vm123, %v26, 0
    %127 = vmatprep.subr.bf16.mxu0 %v92
    %128 = vmatpush1.bf16.msra.mxu0 %v91
    %129 = vmatprep.subr.bf16.mxu0 0
    %130 = vmatpush1.bf16.msra.mxu0 0
    %131 = vmatprep.subr.bf16.mxu0 0
    %132 = vmatpush1.bf16.msra.mxu0 0
    %133 = vmatprep.subr.bf16.mxu0 0
    %134 = vmatpush1.bf16.msra.mxu0 0
    %135 = vmatprep.subr.bf16.mxu0 0
    %136 = vmatpush1.bf16.msra.mxu0 0
    %137 = vmatprep.subr.bf16.mxu0 0
    %138 = vmatpush1.bf16.msra.mxu0 0
    %139 = vmatprep.subr.bf16.mxu0 0
    %140 = vmatpush1.bf16.msra.mxu0 0
    %141 = vmatprep.subr.bf16.mxu0 0
    %142 = vmatpush1.bf16.msra.mxu0 0
    %143 = vmatprep.subr.bf16.mxu0 0
    %144 = vmatpush1.bf16.msra.mxu0 0
    %145 = vmatprep.subr.bf16.mxu0 0
    %146 = vmatpush1.bf16.msra.mxu0 0
    %147 = vmatprep.subr.bf16.mxu0 0
    %148 = vmatpush1.bf16.msra.mxu0 0
    %149 = vmatprep.subr.bf16.mxu0 0
    %150 = vmatpush1.bf16.msra.mxu0 0
    %151 = vmatprep.subr.bf16.mxu0 0
    %152 = vmatpush1.bf16.msra.mxu0 0
    %153 = vmatprep.subr.bf16.mxu0 0
    %154 = vmatpush1.bf16.msra.mxu0 0
    %155 = vmatprep.subr.bf16.mxu0 0
    %156 = vmatpush1.bf16.msra.mxu0 0
    %157 = vmatprep.subr.bf16.mxu0 0
    %158 = vmatpush1.bf16.msra.mxu0 0
    %159 = vmatprep.mubr.bf16.mxu0 0
    %160 = vmatmul.mubr.bf16.gmra.mrb[0].mxu0 %v125
    %v161 = vpop.f32.mrb[0].mxu0
    %v162 = vadd.f32 0.0, %v161
    %v163 = vpop.f32.mrb[0].mxu0
    %v164 = vadd.f32 0.0, %v163
    %v165 = vpop.f32.mrb[0].mxu0
    %v166 = vpop.f32.mrb[0].mxu0
    %167 = vdwg.mxu0
    %168 = vmatprep.subr.bf16.mxu0 %v94
    %169 = vmatpush1.bf16.msra.mxu0 %v93
    %170 = vmatprep.subr.bf16.mxu0 0
    %171 = vmatpush1.bf16.msra.mxu0 0
    %172 = vmatprep.subr.bf16.mxu0 0
    %173 = vmatpush1.bf16.msra.mxu0 0
    %174 = vmatprep.subr.bf16.mxu0 0
    %175 = vmatpush1.bf16.msra.mxu0 0
    %176 = vmatprep.subr.bf16.mxu0 0
    %177 = vmatpush1.bf16.msra.mxu0 0
    %178 = vmatprep.subr.bf16.mxu0 0
    %179 = vmatpush1.bf16.msra.mxu0 0
    %180 = vmatprep.subr.bf16.mxu0 0
    %181 = vmatpush1.bf16.msra.mxu0 0
    %182 = vmatprep.subr.bf16.mxu0 0
    %183 = vmatpush1.bf16.msra.mxu0 0
    %184 = vmatprep.subr.bf16.mxu0 0
    %185 = vmatpush1.bf16.msra.mxu0 0
    %186 = vmatprep.subr.bf16.mxu0 0
    %187 = vmatpush1.bf16.msra.mxu0 0
    %188 = vmatprep.subr.bf16.mxu0 0
    %189 = vmatpush1.bf16.msra.mxu0 0
    %190 = vmatprep.subr.bf16.mxu0 0
    %191 = vmatpush1.bf16.msra.mxu0 0
    %192 = vmatprep.subr.bf16.mxu0 0
    %193 = vmatpush1.bf16.msra.mxu0 0
    %194 = vmatprep.subr.bf16.mxu0 0
    %195 = vmatpush1.bf16.msra.mxu0 0
    %196 = vmatprep.subr.bf16.mxu0 0
    %197 = vmatpush1.bf16.msra.mxu0 0
    %198 = vmatprep.subr.bf16.mxu0 0
    %199 = vmatpush1.bf16.msra.mxu0 0
    %200 = vmatprep.mubr.bf16.mxu0 0
    %201 = vmatmul.mubr.bf16.gmra.mrb[0].mxu0 %v125
    %v202 = vpop.f32.mrb[0].mxu0
    %v203 = vadd.f32 0.0, %v202
    %v204 = vpop.f32.mrb[0].mxu0
    %v205 = vadd.f32 0.0, %v204
    %v206 = vpop.f32.mrb[0].mxu0
    %v207 = vpop.f32.mrb[0].mxu0
    %208 = vdwg.mxu0
    %209 = vmatprep.subr.bf16.mxu0 %v96
    %210 = vmatpush1.bf16.msra.mxu0 %v95
    %211 = vmatprep.subr.bf16.mxu0 0
    %212 = vmatpush1.bf16.msra.mxu0 0
    %213 = vmatprep.subr.bf16.mxu0 0
    %214 = vmatpush1.bf16.msra.mxu0 0
    %215 = vmatprep.subr.bf16.mxu0 0
    %216 = vmatpush1.bf16.msra.mxu0 0
    %217 = vmatprep.subr.bf16.mxu0 0
    %218 = vmatpush1.bf16.msra.mxu0 0
    %219 = vmatprep.subr.bf16.mxu0 0
    %220 = vmatpush1.bf16.msra.mxu0 0
    %221 = vmatprep.subr.bf16.mxu0 0
    %222 = vmatpush1.bf16.msra.mxu0 0
    %223 = vmatprep.subr.bf16.mxu0 0
    %224 = vmatpush1.bf16.msra.mxu0 0
    %225 = vmatprep.subr.bf16.mxu0 0
    %226 = vmatpush1.bf16.msra.mxu0 0
    %227 = vmatprep.subr.bf16.mxu0 0
    %228 = vmatpush1.bf16.msra.mxu0 0
    %229 = vmatprep.subr.bf16.mxu0 0
    %230 = vmatpush1.bf16.msra.mxu0 0
    %231 = vmatprep.subr.bf16.mxu0 0
    %232 = vmatpush1.bf16.msra.mxu0 0
    %233 = vmatprep.subr.bf16.mxu0 0
    %234 = vmatpush1.bf16.msra.mxu0 0
    %235 = vmatprep.subr.bf16.mxu0 0
    %236 = vmatpush1.bf16.msra.mxu0 0
    %237 = vmatprep.subr.bf16.mxu0 0
    %238 = vmatpush1.bf16.msra.mxu0 0
    %239 = vmatprep.subr.bf16.mxu0 0
    %240 = vmatpush1.bf16.msra.mxu0 0
    %241 = vmatprep.mubr.bf16.mxu0 0
    %242 = vmatmul.mubr.bf16.gmra.mrb[0].mxu0 %v125
    %v243 = vpop.f32.mrb[0].mxu0
    %v244 = vadd.f32 0.0, %v243
    %v245 = vpop.f32.mrb[0].mxu0
    %v246 = vadd.f32 0.0, %v245
    %v247 = vpop.f32.mrb[0].mxu0
    %v248 = vpop.f32.mrb[0].mxu0
    %249 = vdwg.mxu0
    %250 = vmatprep.subr.bf16.mxu0 %v98
    %251 = vmatpush1.bf16.msra.mxu0 %v97
    %252 = vmatprep.subr.bf16.mxu0 0
    %253 = vmatpush1.bf16.msra.mxu0 0
    %254 = vmatprep.subr.bf16.mxu0 0
    %255 = vmatpush1.bf16.msra.mxu0 0
    %256 = vmatprep.subr.bf16.mxu0 0
    %257 = vmatpush1.bf16.msra.mxu0 0
    %258 = vmatprep.subr.bf16.mxu0 0
    %259 = vmatpush1.bf16.msra.mxu0 0
    %260 = vmatprep.subr.bf16.mxu0 0
    %261 = vmatpush1.bf16.msra.mxu0 0
    %262 = vmatprep.subr.bf16.mxu0 0
    %263 = vmatpush1.bf16.msra.mxu0 0
    %264 = vmatprep.subr.bf16.mxu0 0
    %265 = vmatpush1.bf16.msra.mxu0 0
    %266 = vmatprep.subr.bf16.mxu0 0
    %267 = vmatpush1.bf16.msra.mxu0 0
    %268 = vmatprep.subr.bf16.mxu0 0
    %269 = vmatpush1.bf16.msra.mxu0 0
    %270 = vmatprep.subr.bf16.mxu0 0
    %271 = vmatpush1.bf16.msra.mxu0 0
    %272 = vmatprep.subr.bf16.mxu0 0
    %273 = vmatpush1.bf16.msra.mxu0 0
    %274 = vmatprep.subr.bf16.mxu0 0
    %275 = vmatpush1.bf16.msra.mxu0 0
    %276 = vmatprep.subr.bf16.mxu0 0
    %277 = vmatpush1.bf16.msra.mxu0 0
    %278 = vmatprep.subr.bf16.mxu0 0
    %279 = vmatpush1.bf16.msra.mxu0 0
    %280 = vmatprep.subr.bf16.mxu0 0
    %281 = vmatpush1.bf16.msra.mxu0 0
    %282 = vmatprep.mubr.bf16.mxu0 0
    %283 = vmatmul.mubr.bf16.gmra.mrb[0].mxu0 %v125
    %v284 = vpop.f32.mrb[0].mxu0
    %v285 = vadd.f32 0.0, %v284
    %v286 = vpop.f32.mrb[0].mxu0
    %v287 = vadd.f32 0.0, %v286
    %v288 = vpop.f32.mrb[0].mxu0
    %v289 = vpop.f32.mrb[0].mxu0
    %290 = vdwg.mxu0
    %291 = vmatprep.subr.bf16.mxu0 %v100
    %292 = vmatpush1.bf16.msra.mxu0 %v99
    %293 = vmatprep.subr.bf16.mxu0 0
    %294 = vmatpush1.bf16.msra.mxu0 0
    %295 = vmatprep.subr.bf16.mxu0 0
    %296 = vmatpush1.bf16.msra.mxu0 0
    %297 = vmatprep.subr.bf16.mxu0 0
    %298 = vmatpush1.bf16.msra.mxu0 0
    %299 = vmatprep.subr.bf16.mxu0 0
    %300 = vmatpush1.bf16.msra.mxu0 0
    %301 = vmatprep.subr.bf16.mxu0 0
    %302 = vmatpush1.bf16.msra.mxu0 0
    %303 = vmatprep.subr.bf16.mxu0 0
    %304 = vmatpush1.bf16.msra.mxu0 0
    %305 = vmatprep.subr.bf16.mxu0 0
    %306 = vmatpush1.bf16.msra.mxu0 0
    %307 = vmatprep.subr.bf16.mxu0 0
    %308 = vmatpush1.bf16.msra.mxu0 0
    %309 = vmatprep.subr.bf16.mxu0 0
    %310 = vmatpush1.bf16.msra.mxu0 0
    %311 = vmatprep.subr.bf16.mxu0 0
    %312 = vmatpush1.bf16.msra.mxu0 0
    %313 = vmatprep.subr.bf16.mxu0 0
    %314 = vmatpush1.bf16.msra.mxu0 0
    %315 = vmatprep.subr.bf16.mxu0 0
    %316 = vmatpush1.bf16.msra.mxu0 0
    %317 = vmatprep.subr.bf16.mxu0 0
    %318 = vmatpush1.bf16.msra.mxu0 0
    %319 = vmatprep.subr.bf16.mxu0 0
    %320 = vmatpush1.bf16.msra.mxu0 0
    %321 = vmatprep.subr.bf16.mxu0 0
    %322 = vmatpush1.bf16.msra.mxu0 0
    %323 = vmatprep.mubr.bf16.mxu0 0
    %324 = vmatmul.mubr.bf16.gmra.mrb[0].mxu0 %v125
    %v325 = vpop.f32.mrb[0].mxu0
    %v326 = vadd.f32 0.0, %v325
    %v327 = vpop.f32.mrb[0].mxu0
    %v328 = vadd.f32 0.0, %v327
    %v329 = vpop.f32.mrb[0].mxu0
    %v330 = vpop.f32.mrb[0].mxu0
    %331 = vdwg.mxu0
    %332 = vmatprep.subr.bf16.mxu0 %v102
    %333 = vmatpush1.bf16.msra.mxu0 %v101
    %334 = vmatprep.subr.bf16.mxu0 0
    %335 = vmatpush1.bf16.msra.mxu0 0
    %336 = vmatprep.subr.bf16.mxu0 0
    %337 = vmatpush1.bf16.msra.mxu0 0
    %338 = vmatprep.subr.bf16.mxu0 0
    %339 = vmatpush1.bf16.msra.mxu0 0
    %340 = vmatprep.subr.bf16.mxu0 0
    %341 = vmatpush1.bf16.msra.mxu0 0
    %342 = vmatprep.subr.bf16.mxu0 0
    %343 = vmatpush1.bf16.msra.mxu0 0
    %344 = vmatprep.subr.bf16.mxu0 0
    %345 = vmatpush1.bf16.msra.mxu0 0
    %346 = vmatprep.subr.bf16.mxu0 0
    %347 = vmatpush1.bf16.msra.mxu0 0
    %348 = vmatprep.subr.bf16.mxu0 0
    %349 = vmatpush1.bf16.msra.mxu0 0
    %350 = vmatprep.subr.bf16.mxu0 0
    %351 = vmatpush1.bf16.msra.mxu0 0
    %352 = vmatprep.subr.bf16.mxu0 0
    %353 = vmatpush1.bf16.msra.mxu0 0
    %354 = vmatprep.subr.bf16.mxu0 0
    %355 = vmatpush1.bf16.msra.mxu0 0
    %356 = vmatprep.subr.bf16.mxu0 0
    %357 = vmatpush1.bf16.msra.mxu0 0
    %358 = vmatprep.subr.bf16.mxu0 0
    %359 = vmatpush1.bf16.msra.mxu0 0
    %360 = vmatprep.subr.bf16.mxu0 0
    %361 = vmatpush1.bf16.msra.mxu0 0
    %362 = vmatprep.subr.bf16.mxu0 0
    %363 = vmatpush1.bf16.msra.mxu0 0
    %364 = vmatprep.mubr.bf16.mxu0 0
    %365 = vmatmul.mubr.bf16.gmra.mrb[0].mxu0 %v125
    %v366 = vpop.f32.mrb[0].mxu0
    %v367 = vadd.f32 0.0, %v366
    %v368 = vpop.f32.mrb[0].mxu0
    %v369 = vadd.f32 0.0, %v368
    %v370 = vpop.f32.mrb[0].mxu0
    %v371 = vpop.f32.mrb[0].mxu0
    %372 = vdwg.mxu0
    %373 = vmatprep.subr.bf16.mxu0 %v104
    %374 = vmatpush1.bf16.msra.mxu0 %v103
    %375 = vmatprep.subr.bf16.mxu0 0
    %376 = vmatpush1.bf16.msra.mxu0 0
    %377 = vmatprep.subr.bf16.mxu0 0
    %378 = vmatpush1.bf16.msra.mxu0 0
    %379 = vmatprep.subr.bf16.mxu0 0
    %380 = vmatpush1.bf16.msra.mxu0 0
    %381 = vmatprep.subr.bf16.mxu0 0
    %382 = vmatpush1.bf16.msra.mxu0 0
    %383 = vmatprep.subr.bf16.mxu0 0
    %384 = vmatpush1.bf16.msra.mxu0 0
    %385 = vmatprep.subr.bf16.mxu0 0
    %386 = vmatpush1.bf16.msra.mxu0 0
    %387 = vmatprep.subr.bf16.mxu0 0
    %388 = vmatpush1.bf16.msra.mxu0 0
    %389 = vmatprep.subr.bf16.mxu0 0
    %390 = vmatpush1.bf16.msra.mxu0 0
    %391 = vmatprep.subr.bf16.mxu0 0
    %392 = vmatpush1.bf16.msra.mxu0 0
    %393 = vmatprep.subr.bf16.mxu0 0
    %394 = vmatpush1.bf16.msra.mxu0 0
    %395 = vmatprep.subr.bf16.mxu0 0
    %396 = vmatpush1.bf16.msra.mxu0 0
    %397 = vmatprep.subr.bf16.mxu0 0
    %398 = vmatpush1.bf16.msra.mxu0 0
    %399 = vmatprep.subr.bf16.mxu0 0
    %400 = vmatpush1.bf16.msra.mxu0 0
    %401 = vmatprep.subr.bf16.mxu0 0
    %402 = vmatpush1.bf16.msra.mxu0 0
    %403 = vmatprep.subr.bf16.mxu0 0
    %404 = vmatpush1.bf16.msra.mxu0 0
    %405 = vmatprep.mubr.bf16.mxu0 0
    %406 = vmatmul.mubr.bf16.gmra.mrb[0].mxu0 %v125
    %v407 = vpop.f32.mrb[0].mxu0
    %v408 = vadd.f32 0.0, %v407
    %v409 = vpop.f32.mrb[0].mxu0
    %v410 = vadd.f32 0.0, %v409
    %v411 = vpop.f32.mrb[0].mxu0
    %v412 = vpop.f32.mrb[0].mxu0
    %413 = vdwg.mxu0
    %414 = vmatprep.subr.bf16.mxu0 %v106
    %415 = vmatpush1.bf16.msra.mxu0 %v105
    %416 = vmatprep.subr.bf16.mxu0 0
    %417 = vmatpush1.bf16.msra.mxu0 0
    %418 = vmatprep.subr.bf16.mxu0 0
    %419 = vmatpush1.bf16.msra.mxu0 0
    %420 = vmatprep.subr.bf16.mxu0 0
    %421 = vmatpush1.bf16.msra.mxu0 0
    %422 = vmatprep.subr.bf16.mxu0 0
    %423 = vmatpush1.bf16.msra.mxu0 0
    %424 = vmatprep.subr.bf16.mxu0 0
    %425 = vmatpush1.bf16.msra.mxu0 0
    %426 = vmatprep.subr.bf16.mxu0 0
    %427 = vmatpush1.bf16.msra.mxu0 0
    %428 = vmatprep.subr.bf16.mxu0 0
    %429 = vmatpush1.bf16.msra.mxu0 0
    %430 = vmatprep.subr.bf16.mxu0 0
    %431 = vmatpush1.bf16.msra.mxu0 0
    %432 = vmatprep.subr.bf16.mxu0 0
    %433 = vmatpush1.bf16.msra.mxu0 0
    %434 = vmatprep.subr.bf16.mxu0 0
    %435 = vmatpush1.bf16.msra.mxu0 0
    %436 = vmatprep.subr.bf16.mxu0 0
    %437 = vmatpush1.bf16.msra.mxu0 0
    %438 = vmatprep.subr.bf16.mxu0 0
    %439 = vmatpush1.bf16.msra.mxu0 0
    %440 = vmatprep.subr.bf16.mxu0 0
    %441 = vmatpush1.bf16.msra.mxu0 0
    %442 = vmatprep.subr.bf16.mxu0 0
    %443 = vmatpush1.bf16.msra.mxu0 0
    %444 = vmatprep.subr.bf16.mxu0 0
    %445 = vmatpush1.bf16.msra.mxu0 0
    %446 = vmatprep.mubr.bf16.mxu0 0
    %447 = vmatmul.mubr.bf16.gmra.mrb[0].mxu0 %v125
    %v448 = vpop.f32.mrb[0].mxu0
    %v449 = vadd.f32 0.0, %v448
    %v450 = vpop.f32.mrb[0].mxu0
    %v451 = vadd.f32 0.0, %v450
    %v452 = vpop.f32.mrb[0].mxu0
    %v453 = vpop.f32.mrb[0].mxu0
    %454 = vdwg.mxu0
    %455 = vst [vmem:[%s2] sm:$0xff] %v162
    %456 = vst [vmem:[%s2 + $0x8] sm:$0xff] %v164
    %457 = vst [vmem:[%s2 + $0x10] sm:$0xff] %v203
    %458 = vst [vmem:[%s2 + $0x18] sm:$0xff] %v205
    %459 = vst [vmem:[%s2 + $0x20] sm:$0xff] %v244
    %460 = vst [vmem:[%s2 + $0x28] sm:$0xff] %v246
    %461 = vst [vmem:[%s2 + $0x30] sm:$0xff] %v285
    %462 = vst [vmem:[%s2 + $0x38] sm:$0xff] %v287
    %463 = vst [vmem:[%s2 + $0x40] sm:$0xff] %v326
    %464 = vst [vmem:[%s2 + $0x48] sm:$0xff] %v328
    %465 = vst [vmem:[%s2 + $0x50] sm:$0xff] %v367
    %466 = vst [vmem:[%s2 + $0x58] sm:$0xff] %v369
    %467 = vst [vmem:[%s2 + $0x60] sm:$0xff] %v408
    %468 = vst [vmem:[%s2 + $0x68] sm:$0xff] %v410
    %469 = vst [vmem:[%s2 + $0x70] sm:$0xff] %v449
    %470 = vst [vmem:[%s2 + $0x78] sm:$0xff] %v451
    // Predicated region
    $region14: #{generator_forward.7} parent=1 // pred_check
      _
    $region15: #{generator_forward.7} parent=1 // pred_check_branch
      %472 = sbr.rel (0) target = $region17
    $region16: #{generator_forward.7} parent=1 // pred_region
      _
    $region17: #{generator_forward.7} parent=1 // pred_fallthru
      _
    // Predicated region
    $region18: #{generator_forward.7} parent=1 // pred_check
      _
    $region19: #{generator_forward.7} parent=1 // pred_check_branch
      %474 = sbr.rel (0) target = $region21
    $region20: #{generator_forward.7} parent=1 // pred_region
      _
    $region21: #{generator_forward.7} parent=1 // pred_fallthru
      _
    %475 = vsyncpa [#allocation3], 1

// kernel: generator_forward.8
$region0: #{generator_forward.8}
  #allocation0 [shape = 'u32[]', space=smem, size = 0x4, offset = 0x4, fixed_abs, tag = 'smem constant byte address 0x4 - core index']
  #allocation1 [shape = 'u32[144,128]{1,0:T(1,128)}', space=vmem, size = 0x12000, scoped, tag = 'internal scratch']
  %s0 = inlined_call_operand.vmem [shape: bf16[4,128,256], index: 0, kind: input, shape index: {}]
  %s1 = inlined_call_operand.vmem [shape: bf16[4,256,128], index: 1, kind: input, shape index: {}]
  %s2 = inlined_call_operand.vmem [shape: bf16[4,128,128], index: 2, kind: output, shape index: {0}]
  %s3 = inlined_call_operand.vmem [shape: f32[4,1,256,128], index: 3, kind: output, shape index: {1}]
  %4 = xla_tuple %s2, %s3
  %s5 = sld [smem:[#allocation0]]
  $region49: #{generator_forward.8} parent=0
    _
  %s7 = ssub.s32 1, %s5
  %s8 = scalar_select 0, %s7, %s5
  loop: start=0, step=1, limit=6
  $region2: #{generator_forward.8} parent=0 // loop_pre_header
    _
  $region3: #{generator_forward.8} parent=0 // loop_header
    %s10 = sphi 0, %s14
    %p11 = scmp.ge.s32.totalorder %s10, 6
    %s17 = sphi 0, %s29
    %s18 = sphi 0, %s25
    %s19 = sphi 0, %s17
    %s20 = sphi 0, %s18
    %s21 = sphi 0, %s19
    %s22 = sphi 0, %s20
    %s32 = sphi 0, %s34
    %s35 = sphi 0, %s32
    %s36 = sphi 0, %s35
    %s52 = sphi 0, %s36
    %s60 = sphi 0, %s62
    %s63 = sphi 0, %s60
    %s64 = sphi 0, %s63
    %s80 = sphi 0, %s64
    %s88 = sphi 0, %s90
    %s91 = sphi 0, %s88
    %s92 = sphi 0, %s91
    %s108 = sphi 0, %s92
    %s116 = sphi 0, %s118
    %s119 = sphi 0, %s116
    %s120 = sphi 0, %s119
    %s136 = sphi 0, %s120
  $region4: #{generator_forward.8} parent=0 // loop_header_branch
    %13 = sbr.rel (%p11) target = $region8
  $region5: #{generator_forward.8} parent=0 // loop_body
    %s15 = ssub.s32 %s10, 1
    %s16 = ssub.s32 %s10, 2
    %s23 = sadd.s32 1, %s18
    %p24 = scmp.ge.s32.totalorder %s23, 1
    %s25 = scalar_select %p24, 0, %s23
    %s26 = sadd.s32 1, %s17
    %s27 = scalar_select %p24, %s26, %s17
    %p28 = scmp.ge.s32.totalorder %s27, 4
    %s29 = scalar_select %p28, 0, %s27
    %s30 = ssub.s32 %s17, %s29
    %p31 = scmp.eq.s32.totalorder %s30, 0
    %s33 = sadd.s32 %s32, 1
    %s34 = scalar_select %p31, %s32, %s33
    %p37 = pneg %p31
    %p38 = scmp.eq.s32.totalorder %s10, 3
    %p39 = por %p37, %p38
    %p40 = scmp.ne.s32.totalorder %s32, %s35
    %p41 = scmp.eq.s32.totalorder %s10, 0
    %p42 = por %p40, %p41
    %p43 = scmp.ne.s32.totalorder %s32, %s35
    %p44 = scmp.eq.s32.totalorder %s15, 3
    %p45 = por %p43, %p44
    %p46 = scmp.ne.s32.totalorder %s35, %s36
    %p47 = scmp.eq.s32.totalorder %s15, 0
    %p48 = por %p46, %p47
    %p49 = scmp.ne.s32.totalorder %s35, %s36
    %p50 = scmp.eq.s32.totalorder %s16, 3
    %p51 = por %p49, %p50
    %p53 = scmp.ne.s32.totalorder %s36, %s52
    %p54 = scmp.eq.s32.totalorder %s16, 0
    %p55 = por %p53, %p54
    %s56 = ssub.s32 %s17, %s29
    %s57 = ssub.s32 %s18, %s25
    %s58 = sor.u32 %s56, %s57
    %p59 = scmp.eq.s32.totalorder %s58, 0
    %s61 = sadd.s32 %s60, 1
    %s62 = scalar_select %p59, %s60, %s61
    %p65 = pneg %p59
    %p66 = scmp.eq.s32.totalorder %s10, 3
    %p67 = por %p65, %p66
    %p68 = scmp.ne.s32.totalorder %s60, %s63
    %p69 = scmp.eq.s32.totalorder %s10, 0
    %p70 = por %p68, %p69
    %p71 = scmp.ne.s32.totalorder %s60, %s63
    %p72 = scmp.eq.s32.totalorder %s15, 3
    %p73 = por %p71, %p72
    %p74 = scmp.ne.s32.totalorder %s63, %s64
    %p75 = scmp.eq.s32.totalorder %s15, 0
    %p76 = por %p74, %p75
    %p77 = scmp.ne.s32.totalorder %s63, %s64
    %p78 = scmp.eq.s32.totalorder %s16, 3
    %p79 = por %p77, %p78
    %p81 = scmp.ne.s32.totalorder %s64, %s80
    %p82 = scmp.eq.s32.totalorder %s16, 0
    %p83 = por %p81, %p82
    %s84 = ssub.s32 %s17, %s29
    %s85 = ssub.s32 %s18, %s25
    %s86 = sor.u32 %s84, %s85
    %p87 = scmp.eq.s32.totalorder %s86, 0
    %s89 = sadd.s32 %s88, 1
    %s90 = scalar_select %p87, %s88, %s89
    %p93 = pneg %p87
    %p94 = scmp.eq.s32.totalorder %s10, 3
    %p95 = por %p93, %p94
    %p96 = scmp.ne.s32.totalorder %s88, %s91
    %p97 = scmp.eq.s32.totalorder %s10, 0
    %p98 = por %p96, %p97
    %p99 = scmp.ne.s32.totalorder %s88, %s91
    %p100 = scmp.eq.s32.totalorder %s15, 3
    %p101 = por %p99, %p100
    %p102 = scmp.ne.s32.totalorder %s91, %s92
    %p103 = scmp.eq.s32.totalorder %s15, 0
    %p104 = por %p102, %p103
    %p105 = scmp.ne.s32.totalorder %s91, %s92
    %p106 = scmp.eq.s32.totalorder %s16, 3
    %p107 = por %p105, %p106
    %p109 = scmp.ne.s32.totalorder %s92, %s108
    %p110 = scmp.eq.s32.totalorder %s16, 0
    %p111 = por %p109, %p110
    %s112 = ssub.s32 %s17, %s29
    %s113 = ssub.s32 %s18, %s25
    %s114 = sor.u32 %s112, %s113
    %p115 = scmp.eq.s32.totalorder %s114, 0
    %s117 = sadd.s32 %s116, 1
    %s118 = scalar_select %p115, %s116, %s117
    %p121 = pneg %p115
    %p122 = scmp.eq.s32.totalorder %s10, 3
    %p123 = por %p121, %p122
    %p124 = scmp.ne.s32.totalorder %s116, %s119
    %p125 = scmp.eq.s32.totalorder %s10, 0
    %p126 = por %p124, %p125
    %p127 = scmp.ne.s32.totalorder %s116, %s119
    %p128 = scmp.eq.s32.totalorder %s15, 3
    %p129 = por %p127, %p128
    %p130 = scmp.ne.s32.totalorder %s119, %s120
    %p131 = scmp.eq.s32.totalorder %s15, 0
    %p132 = por %p130, %p131
    %p133 = scmp.ne.s32.totalorder %s119, %s120
    %p134 = scmp.eq.s32.totalorder %s16, 3
    %p135 = por %p133, %p134
    %p137 = scmp.ne.s32.totalorder %s120, %s136
    %p138 = scmp.eq.s32.totalorder %s16, 0
    %p139 = por %p137, %p138
    %p140 = scmp.le.s32.totalorder 1, %s10
    %p141 = scmp.lt.s32.totalorder %s10, 5
    %p142 = pnand %p140, %p141
    %p143 = pneg %p142
    // Predicated region
    $region9: #{generator_forward.8} parent=5 // pred_check
      _
    $region10: #{generator_forward.8} parent=5 // pred_check_branch
      %145 = sbr.rel (%p142) target = $region12
    $region11: #{generator_forward.8} parent=5 // pred_region
      %s146 = ssub.s32 %s10, 1
    $region12: #{generator_forward.8} parent=5 // pred_fallthru
      _
    %p147 = scmp.lt.s32.totalorder %s10, 4
    // Predicated region
    $region13: #{generator_forward.8} parent=5 // pred_check
      %p148 = pneg %p147
    $region14: #{generator_forward.8} parent=5 // pred_check_branch
      %150 = sbr.rel (%p148) target = $region16
    $region15: #{generator_forward.8} parent=5 // pred_region
      // Predicated region
      $region17: #{generator_forward.8} parent=15 // pred_check
        %p151 = pneg %p42
      $region18: #{generator_forward.8} parent=15 // pred_check_branch
        %153 = sbr.rel (%p151) target = $region20
      $region19: #{generator_forward.8} parent=15 // pred_region
        %p154 = scmp.lt.s32.totalorder %s17, 3
        %s155 = scalar_select %p154, %s17, 3
        %s156 = smul.addr %s155, 32
        %s157 = smul.addr %s156, 4
        %s158 = scalar_lea.vmem %s0, %s157
      $region20: #{generator_forward.8} parent=15 // pred_fallthru
        _
      // Predicated region
      $region21: #{generator_forward.8} parent=15 // pred_check
        %p159 = pneg %p70
      $region22: #{generator_forward.8} parent=15 // pred_check_branch
        %161 = sbr.rel (%p159) target = $region24
      $region23: #{generator_forward.8} parent=15 // pred_region
        %p162 = scmp.lt.s32.totalorder %s17, 3
        %s163 = scalar_select %p162, %s17, 3
        %p164 = scmp.lt.s32.totalorder %s18, 0
        %s165 = scalar_select %p164, %s18, 0
        %s166 = smul.addr %s163, 32
        %s167 = sadd.s32 %s165, %s166
        %s168 = smul.addr %s167, 4
        %s169 = scalar_lea.vmem %s1, %s168
      $region24: #{generator_forward.8} parent=15 // pred_fallthru
        _
    $region16: #{generator_forward.8} parent=5 // pred_fallthru
      _
    %p170 = scmp.le.s32.totalorder 1, %s10
    %p171 = scmp.lt.s32.totalorder %s10, 5
    %p172 = pnand %p170, %p171
    %p173 = pneg %p172
    // Predicated region
    $region25: #{generator_forward.8} parent=5 // pred_check
      _
    $region26: #{generator_forward.8} parent=5 // pred_check_branch
      %175 = sbr.rel (%p172) target = $region28
    $region27: #{generator_forward.8} parent=5 // pred_region
      %s176 = ssub.s32 %s10, 1
      %p177 = scmp.lt.s32.totalorder %s19, 3
      %s178 = scalar_select %p177, %s19, 3
      %s179 = smul.addr %s178, 32
      %s180 = smul.addr %s179, 4
      %s181 = scalar_lea.vmem %s0, %s180
      %p182 = pneg %p48
      %p183 = pneg %p45
      %p184 = scmp.lt.s32.totalorder %s19, 3
      %s185 = scalar_select %p184, %s19, 3
      %p186 = scmp.lt.s32.totalorder %s20, 0
      %s187 = scalar_select %p186, %s20, 0
      %s188 = smul.addr %s185, 32
      %s189 = sadd.s32 %s187, %s188
      %s190 = smul.addr %s189, 4
      %s191 = scalar_lea.vmem %s1, %s190
      %p192 = pneg %p76
      %p193 = pneg %p73
      %p194 = pneg %p104
      %p195 = pneg %p101
      %p196 = scmp.lt.s32.totalorder %s19, 3
      %s197 = scalar_select %p196, %s19, 3
      %p198 = scmp.lt.s32.totalorder %s20, 0
      %s199 = scalar_select %p198, %s20, 0
      %s200 = smul.addr %s197, 16
      %s201 = sadd.s32 %s199, %s200
      %s202 = smul.addr %s201, 4
      %s203 = scalar_lea.vmem %s2, %s202
      %p204 = pneg %p132
      %p205 = pneg %p129
      %p206 = scmp.lt.s32.totalorder %s19, 3
      %s207 = scalar_select %p206, %s19, 3
      %p208 = scmp.lt.s32.totalorder %s20, 0
      %s209 = scalar_select %p208, %s20, 0
      %s210 = smul.addr %s209, 32
      %s211 = smul.addr %s207, 32
      %s212 = sadd.s32 %s210, %s211
      %s213 = smul.addr %s212, 8
      %s214 = scalar_lea.vmem %s3, %s213
      %p215 = scmp.lt.s32.totalorder %s19, 3
      %s216 = scalar_select %p215, %s19, 3
      %s217 = smul.addr %s216, 32
      %s218 = smul.addr %s217, 4
      %s219 = scalar_lea.vmem %s0, %s218
      %p220 = scmp.lt.s32.totalorder %s19, 3
      %s221 = scalar_select %p220, %s19, 3
      %p222 = scmp.lt.s32.totalorder %s20, 0
      %s223 = scalar_select %p222, %s20, 0
      %s224 = smul.addr %s221, 32
      %s225 = sadd.s32 %s223, %s224
      %s226 = smul.addr %s225, 4
      %s227 = scalar_lea.vmem %s1, %s226
      %p228 = scmp.lt.s32.totalorder %s19, 3
      %s229 = scalar_select %p228, %s19, 3
      %p230 = scmp.lt.s32.totalorder %s20, 0
      %s231 = scalar_select %p230, %s20, 0
      %s232 = smul.addr %s229, 16
      %s233 = sadd.s32 %s231, %s232
      %s234 = smul.addr %s233, 4
      %s235 = scalar_lea.vmem %s2, %s234
      %p236 = scmp.lt.s32.totalorder %s19, 3
      %s237 = scalar_select %p236, %s19, 3
      %p238 = scmp.lt.s32.totalorder %s20, 0
      %s239 = scalar_select %p238, %s20, 0
      %s240 = smul.addr %s239, 32
      %s241 = smul.addr %s237, 32
      %s242 = sadd.s32 %s240, %s241
      %s243 = smul.addr %s242, 8
      %s244 = scalar_lea.vmem %s3, %s243
      %v246 = vld [vmem:[%s219] sm:$0xff]
      %v247 = vld [vmem:[%s219 + $0x8] sm:$0xff]
      %v248 = vld [vmem:[%s219 + $0x10] sm:$0xff]
      %v249 = vld [vmem:[%s219 + $0x18] sm:$0xff]
      %v250 = vld [vmem:[%s219 + $0x20] sm:$0xff]
      %v251 = vld [vmem:[%s219 + $0x28] sm:$0xff]
      %v252 = vld [vmem:[%s219 + $0x30] sm:$0xff]
      %v253 = vld [vmem:[%s219 + $0x38] sm:$0xff]
      %v254 = vld [vmem:[%s219 + $0x40] sm:$0xff]
      %v255 = vld [vmem:[%s219 + $0x48] sm:$0xff]
      %v256 = vld [vmem:[%s219 + $0x50] sm:$0xff]
      %v257 = vld [vmem:[%s219 + $0x58] sm:$0xff]
      %v258 = vld [vmem:[%s219 + $0x60] sm:$0xff]
      %v259 = vld [vmem:[%s219 + $0x68] sm:$0xff]
      %v260 = vld [vmem:[%s219 + $0x70] sm:$0xff]
      %v261 = vld [vmem:[%s219 + $0x78] sm:$0xff]
      %v262 = vld [vmem:[%s227] sm:$0xf]
      %v263 = vld [vmem:[%s227 + $0x4] sm:$0xf]
      %v264 = vld [vmem:[%s227 + $0x8] sm:$0xf]
      %v265 = vld [vmem:[%s227 + $0xc] sm:$0xf]
      %v266 = vld [vmem:[%s227 + $0x10] sm:$0xf]
      %v267 = vld [vmem:[%s227 + $0x14] sm:$0xf]
      %v268 = vld [vmem:[%s227 + $0x18] sm:$0xf]
      %v269 = vld [vmem:[%s227 + $0x1c] sm:$0xf]
      %v270 = vld [vmem:[%s227 + $0x20] sm:$0xf]
      %v271 = vld [vmem:[%s227 + $0x24] sm:$0xf]
      %v272 = vld [vmem:[%s227 + $0x28] sm:$0xf]
      %v273 = vld [vmem:[%s227 + $0x2c] sm:$0xf]
      %v274 = vld [vmem:[%s227 + $0x30] sm:$0xf]
      %v275 = vld [vmem:[%s227 + $0x34] sm:$0xf]
      %v276 = vld [vmem:[%s227 + $0x38] sm:$0xf]
      %v277 = vld [vmem:[%s227 + $0x3c] sm:$0xf]
      %v278 = vld [vmem:[%s227 + $0x40] sm:$0xf]
      %v279 = vld [vmem:[%s227 + $0x44] sm:$0xf]
      %v280 = vld [vmem:[%s227 + $0x48] sm:$0xf]
      %v281 = vld [vmem:[%s227 + $0x4c] sm:$0xf]
      %v282 = vld [vmem:[%s227 + $0x50] sm:$0xf]
      %v283 = vld [vmem:[%s227 + $0x54] sm:$0xf]
      %v284 = vld [vmem:[%s227 + $0x58] sm:$0xf]
      %v285 = vld [vmem:[%s227 + $0x5c] sm:$0xf]
      %v286 = vld [vmem:[%s227 + $0x60] sm:$0xf]
      %v287 = vld [vmem:[%s227 + $0x64] sm:$0xf]
      %v288 = vld [vmem:[%s227 + $0x68] sm:$0xf]
      %v289 = vld [vmem:[%s227 + $0x6c] sm:$0xf]
      %v290 = vld [vmem:[%s227 + $0x70] sm:$0xf]
      %v291 = vld [vmem:[%s227 + $0x74] sm:$0xf]
      %v292 = vld [vmem:[%s227 + $0x78] sm:$0xf]
      %v293 = vld [vmem:[%s227 + $0x7c] sm:$0xf]
      %v310 = vunpack.c.l.b16 %v246
      %v311 = vunpack.c.h.b16 %v246
      %v312 = vunpack.c.l.b16 %v247
      %v313 = vunpack.c.h.b16 %v247
      %v314 = vunpack.c.l.b16 %v248
      %v315 = vunpack.c.h.b16 %v248
      %v316 = vunpack.c.l.b16 %v249
      %v317 = vunpack.c.h.b16 %v249
      %v318 = vunpack.c.l.b16 %v250
      %v319 = vunpack.c.h.b16 %v250
      %v320 = vunpack.c.l.b16 %v251
      %v321 = vunpack.c.h.b16 %v251
      %v322 = vunpack.c.l.b16 %v252
      %v323 = vunpack.c.h.b16 %v252
      %v324 = vunpack.c.l.b16 %v253
      %v325 = vunpack.c.h.b16 %v253
      %v326 = vunpack.c.l.b16 %v254
      %v327 = vunpack.c.h.b16 %v254
      %v328 = vunpack.c.l.b16 %v255
      %v329 = vunpack.c.h.b16 %v255
      %v330 = vunpack.c.l.b16 %v256
      %v331 = vunpack.c.h.b16 %v256
      %v332 = vunpack.c.l.b16 %v257
      %v333 = vunpack.c.h.b16 %v257
      %v334 = vunpack.c.l.b16 %v258
      %v335 = vunpack.c.h.b16 %v258
      %v336 = vunpack.c.l.b16 %v259
      %v337 = vunpack.c.h.b16 %v259
      %v338 = vunpack.c.l.b16 %v260
      %v339 = vunpack.c.h.b16 %v260
      %v340 = vunpack.c.l.b16 %v261
      %v341 = vunpack.c.h.b16 %v261
      %v342 = vpack.c.b16 %v312, %v310
      %v343 = vpack.c.b16 %v313, %v311
      %v344 = vpack.c.b16 %v316, %v314
      %v345 = vpack.c.b16 %v317, %v315
      %v346 = vpack.c.b16 %v320, %v318
      %v347 = vpack.c.b16 %v321, %v319
      %v348 = vpack.c.b16 %v324, %v322
      %v349 = vpack.c.b16 %v325, %v323
      %v350 = vpack.c.b16 %v328, %v326
      %v351 = vpack.c.b16 %v329, %v327
      %v352 = vpack.c.b16 %v332, %v330
      %v353 = vpack.c.b16 %v333, %v331
      %v354 = vpack.c.b16 %v336, %v334
      %v355 = vpack.c.b16 %v337, %v335
      %v356 = vpack.c.b16 %v340, %v338
      %v357 = vpack.c.b16 %v341, %v339
      %v406 = vunpack.c.l.b16 %v262
      %v407 = vunpack.c.l.b16 %v263
      %v408 = vunpack.c.l.b16 %v264
      %v409 = vunpack.c.l.b16 %v265
      %v410 = vunpack.c.l.b16 %v266
      %v411 = vunpack.c.l.b16 %v267
      %v412 = vunpack.c.l.b16 %v268
      %v413 = vunpack.c.l.b16 %v269
      %v414 = vunpack.c.l.b16 %v270
      %v415 = vunpack.c.l.b16 %v271
      %v416 = vunpack.c.l.b16 %v272
      %v417 = vunpack.c.l.b16 %v273
      %v418 = vunpack.c.l.b16 %v274
      %v419 = vunpack.c.l.b16 %v275
      %v420 = vunpack.c.l.b16 %v276
      %v421 = vunpack.c.l.b16 %v277
      %v422 = vunpack.c.l.b16 %v278
      %v423 = vunpack.c.l.b16 %v279
      %v424 = vunpack.c.l.b16 %v280
      %v425 = vunpack.c.l.b16 %v281
      %v426 = vunpack.c.l.b16 %v282
      %v427 = vunpack.c.l.b16 %v283
      %v428 = vunpack.c.l.b16 %v284
      %v429 = vunpack.c.l.b16 %v285
      %v430 = vunpack.c.l.b16 %v286
      %v431 = vunpack.c.l.b16 %v287
      %v432 = vunpack.c.l.b16 %v288
      %v433 = vunpack.c.l.b16 %v289
      %v434 = vunpack.c.l.b16 %v290
      %v435 = vunpack.c.l.b16 %v291
      %v436 = vunpack.c.l.b16 %v292
      %v437 = vunpack.c.l.b16 %v293
      %v438 = vpack.c.b16 %v407, %v406
      %v439 = vpack.c.b16 %v409, %v408
      %v440 = vpack.c.b16 %v411, %v410
      %v441 = vpack.c.b16 %v413, %v412
      %v442 = vpack.c.b16 %v415, %v414
      %v443 = vpack.c.b16 %v417, %v416
      %v444 = vpack.c.b16 %v419, %v418
      %v445 = vpack.c.b16 %v421, %v420
      %v446 = vpack.c.b16 %v423, %v422
      %v447 = vpack.c.b16 %v425, %v424
      %v448 = vpack.c.b16 %v427, %v426
      %v449 = vpack.c.b16 %v429, %v428
      %v450 = vpack.c.b16 %v431, %v430
      %v451 = vpack.c.b16 %v433, %v432
      %v452 = vpack.c.b16 %v435, %v434
      %v453 = vpack.c.b16 %v437, %v436
      %470 = vmatprep.subr.bf16.mxu0 0
      %471 = vmatpush1.bf16.msra.mxu0 %v438
      %472 = vmatprep.subr.bf16.mxu0 0
      %473 = vmatpush1.bf16.msra.mxu0 %v439
      %474 = vmatprep.subr.bf16.mxu0 0
      %475 = vmatpush1.bf16.msra.mxu0 %v440
      %476 = vmatprep.subr.bf16.mxu0 0
      %477 = vmatpush1.bf16.msra.mxu0 %v441
      %478 = vmatprep.subr.bf16.mxu0 0
      %479 = vmatpush1.bf16.msra.mxu0 %v442
      %480 = vmatprep.subr.bf16.mxu0 0
      %481 = vmatpush1.bf16.msra.mxu0 %v443
      %482 = vmatprep.subr.bf16.mxu0 0
      %483 = vmatpush1.bf16.msra.mxu0 %v444
      %484 = vmatprep.subr.bf16.mxu0 0
      %485 = vmatpush1.bf16.msra.mxu0 %v445
      %486 = vmatprep.subr.bf16.mxu0 0
      %487 = vmatpush1.bf16.msra.mxu0 %v446
      %488 = vmatprep.subr.bf16.mxu0 0
      %489 = vmatpush1.bf16.msra.mxu0 %v447
      %490 = vmatprep.subr.bf16.mxu0 0
      %491 = vmatpush1.bf16.msra.mxu0 %v448
      %492 = vmatprep.subr.bf16.mxu0 0
      %493 = vmatpush1.bf16.msra.mxu0 %v449
      %494 = vmatprep.subr.bf16.mxu0 0
      %495 = vmatpush1.bf16.msra.mxu0 %v450
      %496 = vmatprep.subr.bf16.mxu0 0
      %497 = vmatpush1.bf16.msra.mxu0 %v451
      %498 = vmatprep.subr.bf16.mxu0 0
      %499 = vmatpush1.bf16.msra.mxu0 %v452
      %500 = vmatprep.subr.bf16.mxu0 0
      %501 = vmatpush1.bf16.msra.mxu0 %v453
      %502 = vmatprep.mubr.bf16.mxu0 %v343
      %503 = vmatmul.mubr.bf16.gmra.mrb[0].mxu0 %v342
      %v504 = vpop.f32.mrb[0].mxu0
      %v505 = vadd.f32 0.0, %v504
      %v506 = vpop.f32.mrb[0].mxu0
      %v507 = vpop.f32.mrb[0].mxu0
      %v508 = vadd.f32 0.0, %v507
      %v509 = vpop.f32.mrb[0].mxu0
      %510 = vmatprep.mubr.bf16.mxu0 %v345
      %511 = vmatmul.mubr.bf16.gmra.mrb[0].mxu0 %v344
      %v512 = vpop.f32.mrb[0].mxu0
      %v513 = vadd.f32 0.0, %v512
      %v514 = vpop.f32.mrb[0].mxu0
      %v515 = vpop.f32.mrb[0].mxu0
      %v516 = vadd.f32 0.0, %v515
      %v517 = vpop.f32.mrb[0].mxu0
      %518 = vmatprep.mubr.bf16.mxu0 %v347
      %519 = vmatmul.mubr.bf16.gmra.mrb[0].mxu0 %v346
      %v520 = vpop.f32.mrb[0].mxu0
      %v521 = vadd.f32 0.0, %v520
      %v522 = vpop.f32.mrb[0].mxu0
      %v523 = vpop.f32.mrb[0].mxu0
      %v524 = vadd.f32 0.0, %v523
      %v525 = vpop.f32.mrb[0].mxu0
      %526 = vmatprep.mubr.bf16.mxu0 %v349
      %527 = vmatmul.mubr.bf16.gmra.mrb[0].mxu0 %v348
      %v528 = vpop.f32.mrb[0].mxu0
      %v529 = vadd.f32 0.0, %v528
      %v530 = vpop.f32.mrb[0].mxu0
      %v531 = vpop.f32.mrb[0].mxu0
      %v532 = vadd.f32 0.0, %v531
      %v533 = vpop.f32.mrb[0].mxu0
      %534 = vmatprep.mubr.bf16.mxu0 %v351
      %535 = vmatmul.mubr.bf16.gmra.mrb[0].mxu0 %v350
      %v536 = vpop.f32.mrb[0].mxu0
      %v537 = vadd.f32 0.0, %v536
      %v538 = vpop.f32.mrb[0].mxu0
      %v539 = vpop.f32.mrb[0].mxu0
      %v540 = vadd.f32 0.0, %v539
      %v541 = vpop.f32.mrb[0].mxu0
      %542 = vmatprep.mubr.bf16.mxu0 %v353
      %543 = vmatmul.mubr.bf16.gmra.mrb[0].mxu0 %v352
      %v544 = vpop.f32.mrb[0].mxu0
      %v545 = vadd.f32 0.0, %v544
      %v546 = vpop.f32.mrb[0].mxu0
      %v547 = vpop.f32.mrb[0].mxu0
      %v548 = vadd.f32 0.0, %v547
      %v549 = vpop.f32.mrb[0].mxu0
      %550 = vmatprep.mubr.bf16.mxu0 %v355
      %551 = vmatmul.mubr.bf16.gmra.mrb[0].mxu0 %v354
      %v552 = vpop.f32.mrb[0].mxu0
      %v553 = vadd.f32 0.0, %v552
      %v554 = vpop.f32.mrb[0].mxu0
      %v555 = vpop.f32.mrb[0].mxu0
      %v556 = vadd.f32 0.0, %v555
      %v557 = vpop.f32.mrb[0].mxu0
      %558 = vmatprep.mubr.bf16.mxu0 %v357
      %559 = vmatmul.mubr.bf16.gmra.mrb[0].mxu0 %v356
      %v560 = vpop.f32.mrb[0].mxu0
      %v561 = vadd.f32 0.0, %v560
      %v562 = vpop.f32.mrb[0].mxu0
      %v563 = vpop.f32.mrb[0].mxu0
      %v564 = vadd.f32 0.0, %v563
      %v565 = vpop.f32.mrb[0].mxu0
      %566 = vdwg.mxu0
      %v567 = vpack.c.bf16 %v508, %v505
      %v568 = vpack.c.bf16 %v516, %v513
      %v569 = vpack.c.bf16 %v524, %v521
      %v570 = vpack.c.bf16 %v532, %v529
      %v571 = vpack.c.bf16 %v540, %v537
      %v572 = vpack.c.bf16 %v548, %v545
      %v573 = vpack.c.bf16 %v556, %v553
      %v574 = vpack.c.bf16 %v564, %v561
      %v583 = vunpack.c.l.b16 %v567
      %v584 = vunpack.c.h.b16 %v567
      %v585 = vunpack.c.l.b16 %v568
      %v586 = vunpack.c.h.b16 %v568
      %v587 = vunpack.c.l.b16 %v569
      %v588 = vunpack.c.h.b16 %v569
      %v589 = vunpack.c.l.b16 %v570
      %v590 = vunpack.c.h.b16 %v570
      %v591 = vunpack.c.l.b16 %v571
      %v592 = vunpack.c.h.b16 %v571
      %v593 = vunpack.c.l.b16 %v572
      %v594 = vunpack.c.h.b16 %v572
      %v595 = vunpack.c.l.b16 %v573
      %v596 = vunpack.c.h.b16 %v573
      %v597 = vunpack.c.l.b16 %v574
      %v598 = vunpack.c.h.b16 %v574
      %v599 = vpack.c.b16 %v583, %v583
      %v600 = vpack.c.b16 %v584, %v584
      %v601 = vpack.c.b16 %v585, %v585
      %v602 = vpack.c.b16 %v586, %v586
      %v603 = vpack.c.b16 %v587, %v587
      %v604 = vpack.c.b16 %v588, %v588
      %v605 = vpack.c.b16 %v589, %v589
      %v606 = vpack.c.b16 %v590, %v590
      %v607 = vpack.c.b16 %v591, %v591
      %v608 = vpack.c.b16 %v592, %v592
      %v609 = vpack.c.b16 %v593, %v593
      %v610 = vpack.c.b16 %v594, %v594
      %v611 = vpack.c.b16 %v595, %v595
      %v612 = vpack.c.b16 %v596, %v596
      %v613 = vpack.c.b16 %v597, %v597
      %v614 = vpack.c.b16 %v598, %v598
      %631 = vst [vmem:[%s235] sm:$0xf] %v599
      %632 = vst [vmem:[%s235 + $0x4] sm:$0xf] %v600
      %633 = vst [vmem:[%s235 + $0x8] sm:$0xf] %v601
      %634 = vst [vmem:[%s235 + $0xc] sm:$0xf] %v602
      %635 = vst [vmem:[%s235 + $0x10] sm:$0xf] %v603
      %636 = vst [vmem:[%s235 + $0x14] sm:$0xf] %v604
      %637 = vst [vmem:[%s235 + $0x18] sm:$0xf] %v605
      %638 = vst [vmem:[%s235 + $0x1c] sm:$0xf] %v606
      %639 = vst [vmem:[%s235 + $0x20] sm:$0xf] %v607
      %640 = vst [vmem:[%s235 + $0x24] sm:$0xf] %v608
      %641 = vst [vmem:[%s235 + $0x28] sm:$0xf] %v609
      %642 = vst [vmem:[%s235 + $0x2c] sm:$0xf] %v610
      %643 = vst [vmem:[%s235 + $0x30] sm:$0xf] %v611
      %644 = vst [vmem:[%s235 + $0x34] sm:$0xf] %v612
      %645 = vst [vmem:[%s235 + $0x38] sm:$0xf] %v613
      %646 = vst [vmem:[%s235 + $0x3c] sm:$0xf] %v614
      %647 = vadd.xlane.f32.xlu0 %v505
      %v648 = vpop.xlane.xlu0 %647
      %649 = vadd.xlane.f32.xlu0 %v508
      %v650 = vpop.xlane.xlu0 %649
      %651 = vadd.xlane.f32.xlu0 %v513
      %v652 = vpop.xlane.xlu0 %651
      %653 = vadd.xlane.f32.xlu0 %v516
      %v654 = vpop.xlane.xlu0 %653
      %655 = vadd.xlane.f32.xlu0 %v521
      %v656 = vpop.xlane.xlu0 %655
      %657 = vadd.xlane.f32.xlu0 %v524
      %v658 = vpop.xlane.xlu0 %657
      %659 = vadd.xlane.f32.xlu0 %v529
      %v660 = vpop.xlane.xlu0 %659
      %661 = vadd.xlane.f32.xlu0 %v532
      %v662 = vpop.xlane.xlu0 %661
      %663 = vadd.xlane.f32.xlu0 %v537
      %v664 = vpop.xlane.xlu0 %663
      %665 = vadd.xlane.f32.xlu0 %v540
      %v666 = vpop.xlane.xlu0 %665
      %667 = vadd.xlane.f32.xlu0 %v545
      %v668 = vpop.xlane.xlu0 %667
      %669 = vadd.xlane.f32.xlu0 %v548
      %v670 = vpop.xlane.xlu0 %669
      %671 = vadd.xlane.f32.xlu0 %v553
      %v672 = vpop.xlane.xlu0 %671
      %673 = vadd.xlane.f32.xlu0 %v556
      %v674 = vpop.xlane.xlu0 %673
      %675 = vadd.xlane.f32.xlu0 %v561
      %v676 = vpop.xlane.xlu0 %675
      %677 = vadd.xlane.f32.xlu0 %v564
      %v678 = vpop.xlane.xlu0 %677
      %v679 = vmul.f32 %v505, %v505
      %v680 = vmul.f32 %v508, %v508
      %v681 = vmul.f32 %v513, %v513
      %v682 = vmul.f32 %v516, %v516
      %v683 = vmul.f32 %v521, %v521
      %v684 = vmul.f32 %v524, %v524
      %v685 = vmul.f32 %v529, %v529
      %v686 = vmul.f32 %v532, %v532
      %v687 = vmul.f32 %v537, %v537
      %v688 = vmul.f32 %v540, %v540
      %v689 = vmul.f32 %v545, %v545
      %v690 = vmul.f32 %v548, %v548
      %v691 = vmul.f32 %v553, %v553
      %v692 = vmul.f32 %v556, %v556
      %v693 = vmul.f32 %v561, %v561
      %v694 = vmul.f32 %v564, %v564
      %695 = vadd.xlane.f32.xlu0 %v679
      %v696 = vpop.xlane.xlu0 %695
      %697 = vadd.xlane.f32.xlu0 %v680
      %v698 = vpop.xlane.xlu0 %697
      %699 = vadd.xlane.f32.xlu0 %v681
      %v700 = vpop.xlane.xlu0 %699
      %701 = vadd.xlane.f32.xlu0 %v682
      %v702 = vpop.xlane.xlu0 %701
      %703 = vadd.xlane.f32.xlu0 %v683
      %v704 = vpop.xlane.xlu0 %703
      %705 = vadd.xlane.f32.xlu0 %v684
      %v706 = vpop.xlane.xlu0 %705
      %707 = vadd.xlane.f32.xlu0 %v685
      %v708 = vpop.xlane.xlu0 %707
      %709 = vadd.xlane.f32.xlu0 %v686
      %v710 = vpop.xlane.xlu0 %709
      %711 = vadd.xlane.f32.xlu0 %v687
      %v712 = vpop.xlane.xlu0 %711
      %713 = vadd.xlane.f32.xlu0 %v688
      %v714 = vpop.xlane.xlu0 %713
      %715 = vadd.xlane.f32.xlu0 %v689
      %v716 = vpop.xlane.xlu0 %715
      %717 = vadd.xlane.f32.xlu0 %v690
      %v718 = vpop.xlane.xlu0 %717
      %719 = vadd.xlane.f32.xlu0 %v691
      %v720 = vpop.xlane.xlu0 %719
      %721 = vadd.xlane.f32.xlu0 %v692
      %v722 = vpop.xlane.xlu0 %721
      %723 = vadd.xlane.f32.xlu0 %v693
      %v724 = vpop.xlane.xlu0 %723
      %725 = vadd.xlane.f32.xlu0 %v694
      %v726 = vpop.xlane.xlu0 %725
      %728 = vset.pattern.permute.xlu0 0
      %729 = vperm.xlu0 %728, %v648
      %v730 = vpop.permute.xlu0 %729
      %733 = vset.pattern.permute.xlu0 0
      %734 = vperm.xlu0 %733, %v650
      %v735 = vpop.permute.xlu0 %734
      %738 = vset.pattern.permute.xlu0 0
      %739 = vperm.xlu0 %738, %v652
      %v740 = vpop.permute.xlu0 %739
      %743 = vset.pattern.permute.xlu0 0
      %744 = vperm.xlu0 %743, %v654
      %v745 = vpop.permute.xlu0 %744
      %748 = vset.pattern.permute.xlu0 0
      %749 = vperm.xlu0 %748, %v656
      %v750 = vpop.permute.xlu0 %749
      %753 = vset.pattern.permute.xlu0 0
      %754 = vperm.xlu0 %753, %v658
      %v755 = vpop.permute.xlu0 %754
      %758 = vset.pattern.permute.xlu0 0
      %759 = vperm.xlu0 %758, %v660
      %v760 = vpop.permute.xlu0 %759
      %763 = vset.pattern.permute.xlu0 0
      %764 = vperm.xlu0 %763, %v662
      %v765 = vpop.permute.xlu0 %764
      %768 = vset.pattern.permute.xlu0 0
      %769 = vperm.xlu0 %768, %v664
      %v770 = vpop.permute.xlu0 %769
      %773 = vset.pattern.permute.xlu0 0
      %774 = vperm.xlu0 %773, %v666
      %v775 = vpop.permute.xlu0 %774
      %778 = vset.pattern.permute.xlu0 0
      %779 = vperm.xlu0 %778, %v668
      %v780 = vpop.permute.xlu0 %779
      %783 = vset.pattern.permute.xlu0 0
      %784 = vperm.xlu0 %783, %v670
      %v785 = vpop.permute.xlu0 %784
      %788 = vset.pattern.permute.xlu0 0
      %789 = vperm.xlu0 %788, %v672
      %v790 = vpop.permute.xlu0 %789
      %793 = vset.pattern.permute.xlu0 0
      %794 = vperm.xlu0 %793, %v674
      %v795 = vpop.permute.xlu0 %794
      %798 = vset.pattern.permute.xlu0 0
      %799 = vperm.xlu0 %798, %v676
      %v800 = vpop.permute.xlu0 %799
      %803 = vset.pattern.permute.xlu0 0
      %804 = vperm.xlu0 %803, %v678
      %v805 = vpop.permute.xlu0 %804
      %808 = vset.pattern.permute.xlu0 0
      %809 = vperm.xlu0 %808, %v696
      %v810 = vpop.permute.xlu0 %809
      %813 = vset.pattern.permute.xlu0 0
      %814 = vperm.xlu0 %813, %v698
      %v815 = vpop.permute.xlu0 %814
      %818 = vset.pattern.permute.xlu0 0
      %819 = vperm.xlu0 %818, %v700
      %v820 = vpop.permute.xlu0 %819
      %823 = vset.pattern.permute.xlu0 0
      %824 = vperm.xlu0 %823, %v702
      %v825 = vpop.permute.xlu0 %824
      %828 = vset.pattern.permute.xlu0 0
      %829 = vperm.xlu0 %828, %v704
      %v830 = vpop.permute.xlu0 %829
      %833 = vset.pattern.permute.xlu0 0
      %834 = vperm.xlu0 %833, %v706
      %v835 = vpop.permute.xlu0 %834
      %838 = vset.pattern.permute.xlu0 0
      %839 = vperm.xlu0 %838, %v708
      %v840 = vpop.permute.xlu0 %839
      %843 = vset.pattern.permute.xlu0 0
      %844 = vperm.xlu0 %843, %v710
      %v845 = vpop.permute.xlu0 %844
      %848 = vset.pattern.permute.xlu0 0
      %849 = vperm.xlu0 %848, %v712
      %v850 = vpop.permute.xlu0 %849
      %853 = vset.pattern.permute.xlu0 0
      %854 = vperm.xlu0 %853, %v714
      %v855 = vpop.permute.xlu0 %854
      %858 = vset.pattern.permute.xlu0 0
      %859 = vperm.xlu0 %858, %v716
      %v860 = vpop.permute.xlu0 %859
      %863 = vset.pattern.permute.xlu0 0
      %864 = vperm.xlu0 %863, %v718
      %v865 = vpop.permute.xlu0 %864
      %868 = vset.pattern.permute.xlu0 0
      %869 = vperm.xlu0 %868, %v720
      %v870 = vpop.permute.xlu0 %869
      %873 = vset.pattern.permute.xlu0 0
      %874 = vperm.xlu0 %873, %v722
      %v875 = vpop.permute.xlu0 %874
      %878 = vset.pattern.permute.xlu0 0
      %879 = vperm.xlu0 %878, %v724
      %v880 = vpop.permute.xlu0 %879
      %883 = vset.pattern.permute.xlu0 0
      %884 = vperm.xlu0 %883, %v726
      %v885 = vpop.permute.xlu0 %884
      %887 = vst [vmem:[%s244] sm:$0xff] %v730
      %888 = vst [vmem:[%s244 + $0x8] sm:$0xff] %v735
      %889 = vst [vmem:[%s244 + $0x10] sm:$0xff] %v740
      %890 = vst [vmem:[%s244 + $0x18] sm:$0xff] %v745
      %891 = vst [vmem:[%s244 + $0x20] sm:$0xff] %v750
      %892 = vst [vmem:[%s244 + $0x28] sm:$0xff] %v755
      %893 = vst [vmem:[%s244 + $0x30] sm:$0xff] %v760
      %894 = vst [vmem:[%s244 + $0x38] sm:$0xff] %v765
      %895 = vst [vmem:[%s244 + $0x40] sm:$0xff] %v770
      %896 = vst [vmem:[%s244 + $0x48] sm:$0xff] %v775
      %897 = vst [vmem:[%s244 + $0x50] sm:$0xff] %v780
      %898 = vst [vmem:[%s244 + $0x58] sm:$0xff] %v785
      %899 = vst [vmem:[%s244 + $0x60] sm:$0xff] %v790
      %900 = vst [vmem:[%s244 + $0x68] sm:$0xff] %v795
      %901 = vst [vmem:[%s244 + $0x70] sm:$0xff] %v800
      %902 = vst [vmem:[%s244 + $0x78] sm:$0xff] %v805
      %903 = vst [vmem:[%s244 + $0x80] sm:$0xff] %v810
      %904 = vst [vmem:[%s244 + $0x88] sm:$0xff] %v815
      %905 = vst [vmem:[%s244 + $0x90] sm:$0xff] %v820
      %906 = vst [vmem:[%s244 + $0x98] sm:$0xff] %v825
      %907 = vst [vmem:[%s244 + $0xa0] sm:$0xff] %v830
      %908 = vst [vmem:[%s244 + $0xa8] sm:$0xff] %v835
      %909 = vst [vmem:[%s244 + $0xb0] sm:$0xff] %v840
      %910 = vst [vmem:[%s244 + $0xb8] sm:$0xff] %v845
      %911 = vst [vmem:[%s244 + $0xc0] sm:$0xff] %v850
      %912 = vst [vmem:[%s244 + $0xc8] sm:$0xff] %v855
      %913 = vst [vmem:[%s244 + $0xd0] sm:$0xff] %v860
      %914 = vst [vmem:[%s244 + $0xd8] sm:$0xff] %v865
      %915 = vst [vmem:[%s244 + $0xe0] sm:$0xff] %v870
      %916 = vst [vmem:[%s244 + $0xe8] sm:$0xff] %v875
      %917 = vst [vmem:[%s244 + $0xf0] sm:$0xff] %v880
      %918 = vst [vmem:[%s244 + $0xf8] sm:$0xff] %v885
      %p919 = scmp.lt.s32.totalorder %s19, 3
      %s920 = scalar_select %p919, %s19, 3
      %p921 = scmp.lt.s32.totalorder %s20, 0
      %s922 = scalar_select %p921, %s20, 0
      %s923 = smul.addr %s920, 16
      %s924 = sadd.s32 %s922, %s923
      %s925 = smul.addr %s924, 4
      %s926 = scalar_lea.vmem %s2, %s925
      %p927 = scmp.lt.s32.totalorder %s19, 3
      %s928 = scalar_select %p927, %s19, 3
      %p929 = scmp.lt.s32.totalorder %s20, 0
      %s930 = scalar_select %p929, %s20, 0
      %s931 = smul.addr %s930, 32
      %s932 = smul.addr %s928, 32
      %s933 = sadd.s32 %s931, %s932
      %s934 = smul.addr %s933, 8
      %s935 = scalar_lea.vmem %s3, %s934
      // Predicated region
      $region29: #{generator_forward.8} parent=27 // pred_check
        %p936 = pneg %p101
      $region30: #{generator_forward.8} parent=27 // pred_check_branch
        %938 = sbr.rel (%p936) target = $region32
      $region31: #{generator_forward.8} parent=27 // pred_region
        _
      $region32: #{generator_forward.8} parent=27 // pred_fallthru
        _
      // Predicated region
      $region33: #{generator_forward.8} parent=27 // pred_check
        %p939 = pneg %p129
      $region34: #{generator_forward.8} parent=27 // pred_check_branch
        %941 = sbr.rel (%p939) target = $region36
      $region35: #{generator_forward.8} parent=27 // pred_region
        _
      $region36: #{generator_forward.8} parent=27 // pred_fallthru
        _
    $region28: #{generator_forward.8} parent=5 // pred_fallthru
      _
    %p942 = scmp.le.s32.totalorder 2, %s10
    // Predicated region
    $region37: #{generator_forward.8} parent=5 // pred_check
      %p943 = pneg %p942
    $region38: #{generator_forward.8} parent=5 // pred_check_branch
      %945 = sbr.rel (%p943) target = $region40
    $region39: #{generator_forward.8} parent=5 // pred_region
      %s946 = ssub.s32 %s10, 2
      // Predicated region
      $region41: #{generator_forward.8} parent=39 // pred_check
        %p947 = pneg %p107
      $region42: #{generator_forward.8} parent=39 // pred_check_branch
        %949 = sbr.rel (%p947) target = $region44
      $region43: #{generator_forward.8} parent=39 // pred_region
        %p950 = scmp.lt.s32.totalorder %s21, 3
        %s951 = scalar_select %p950, %s21, 3
        %p952 = scmp.lt.s32.totalorder %s22, 0
        %s953 = scalar_select %p952, %s22, 0
        %s954 = smul.addr %s951, 16
        %s955 = sadd.s32 %s953, %s954
        %s956 = smul.addr %s955, 4
        %s957 = scalar_lea.vmem %s2, %s956
      $region44: #{generator_forward.8} parent=39 // pred_fallthru
        _
      // Predicated region
      $region45: #{generator_forward.8} parent=39 // pred_check
        %p958 = pneg %p135
      $region46: #{generator_forward.8} parent=39 // pred_check_branch
        %960 = sbr.rel (%p958) target = $region48
      $region47: #{generator_forward.8} parent=39 // pred_region
        %p961 = scmp.lt.s32.totalorder %s21, 3
        %s962 = scalar_select %p961, %s21, 3
        %p963 = scmp.lt.s32.totalorder %s22, 0
        %s964 = scalar_select %p963, %s22, 0
        %s965 = smul.addr %s964, 32
        %s966 = smul.addr %s962, 32
        %s967 = sadd.s32 %s965, %s966
        %s968 = smul.addr %s967, 8
        %s969 = scalar_lea.vmem %s3, %s968
      $region48: #{generator_forward.8} parent=39 // pred_fallthru
        _
    $region40: #{generator_forward.8} parent=5 // pred_fallthru
      _
  $region6: #{generator_forward.8} parent=0 // loop_footer
    %s14 = sadd.s32 1, %s10
  $region7: #{generator_forward.8} parent=0 // loop_footer_branch
    %9 = sbr.rel target = $region3
  $region8: #{generator_forward.8} parent=0 // loop_exit
    _

// kernel: generator_forward.9
$region0: #{generator_forward.9}
  #allocation0 [shape = 'u32[]', space=smem, size = 0x4, offset = 0x4, fixed_abs, tag = 'smem constant byte address 0x4 - core index']
  #allocation1 [shape = 'u32[144,128]{1,0:T(1,128)}', space=vmem, size = 0x12000, scoped, tag = 'internal scratch']
  %s0 = inlined_call_operand.vmem [shape: bf16[4,64,256], index: 0, kind: input, shape index: {}]
  %s1 = inlined_call_operand.vmem [shape: bf16[4,256,128], index: 1, kind: input, shape index: {}]
  %s2 = inlined_call_operand.vmem [shape: bf16[4,64,128], index: 2, kind: output, shape index: {0}]
  %s3 = inlined_call_operand.vmem [shape: f32[4,1,128,128], index: 3, kind: output, shape index: {1}]
  %4 = xla_tuple %s2, %s3
  %s5 = sld [smem:[#allocation0]]
  $region49: #{generator_forward.9} parent=0
    _
  %s7 = ssub.s32 1, %s5
  %s8 = scalar_select 0, %s7, %s5
  loop: start=0, step=1, limit=6
  $region2: #{generator_forward.9} parent=0 // loop_pre_header
    _
  $region3: #{generator_forward.9} parent=0 // loop_header
    %s10 = sphi 0, %s14
    %p11 = scmp.ge.s32.totalorder %s10, 6
    %s17 = sphi 0, %s29
    %s18 = sphi 0, %s25
    %s19 = sphi 0, %s17
    %s20 = sphi 0, %s18
    %s21 = sphi 0, %s19
    %s22 = sphi 0, %s20
    %s32 = sphi 0, %s34
    %s35 = sphi 0, %s32
    %s36 = sphi 0, %s35
    %s52 = sphi 0, %s36
    %s60 = sphi 0, %s62
    %s63 = sphi 0, %s60
    %s64 = sphi 0, %s63
    %s80 = sphi 0, %s64
    %s88 = sphi 0, %s90
    %s91 = sphi 0, %s88
    %s92 = sphi 0, %s91
    %s108 = sphi 0, %s92
    %s116 = sphi 0, %s118
    %s119 = sphi 0, %s116
    %s120 = sphi 0, %s119
    %s136 = sphi 0, %s120
  $region4: #{generator_forward.9} parent=0 // loop_header_branch
    %13 = sbr.rel (%p11) target = $region8
  $region5: #{generator_forward.9} parent=0 // loop_body
    %s15 = ssub.s32 %s10, 1
    %s16 = ssub.s32 %s10, 2
    %s23 = sadd.s32 1, %s18
    %p24 = scmp.ge.s32.totalorder %s23, 1
    %s25 = scalar_select %p24, 0, %s23
    %s26 = sadd.s32 1, %s17
    %s27 = scalar_select %p24, %s26, %s17
    %p28 = scmp.ge.s32.totalorder %s27, 4
    %s29 = scalar_select %p28, 0, %s27
    %s30 = ssub.s32 %s17, %s29
    %p31 = scmp.eq.s32.totalorder %s30, 0
    %s33 = sadd.s32 %s32, 1
    %s34 = scalar_select %p31, %s32, %s33
    %p37 = pneg %p31
    %p38 = scmp.eq.s32.totalorder %s10, 3
    %p39 = por %p37, %p38
    %p40 = scmp.ne.s32.totalorder %s32, %s35
    %p41 = scmp.eq.s32.totalorder %s10, 0
    %p42 = por %p40, %p41
    %p43 = scmp.ne.s32.totalorder %s32, %s35
    %p44 = scmp.eq.s32.totalorder %s15, 3
    %p45 = por %p43, %p44
    %p46 = scmp.ne.s32.totalorder %s35, %s36
    %p47 = scmp.eq.s32.totalorder %s15, 0
    %p48 = por %p46, %p47
    %p49 = scmp.ne.s32.totalorder %s35, %s36
    %p50 = scmp.eq.s32.totalorder %s16, 3
    %p51 = por %p49, %p50
    %p53 = scmp.ne.s32.totalorder %s36, %s52
    %p54 = scmp.eq.s32.totalorder %s16, 0
    %p55 = por %p53, %p54
    %s56 = ssub.s32 %s17, %s29
    %s57 = ssub.s32 %s18, %s25
    %s58 = sor.u32 %s56, %s57
    %p59 = scmp.eq.s32.totalorder %s58, 0
    %s61 = sadd.s32 %s60, 1
    %s62 = scalar_select %p59, %s60, %s61
    %p65 = pneg %p59
    %p66 = scmp.eq.s32.totalorder %s10, 3
    %p67 = por %p65, %p66
    %p68 = scmp.ne.s32.totalorder %s60, %s63
    %p69 = scmp.eq.s32.totalorder %s10, 0
    %p70 = por %p68, %p69
    %p71 = scmp.ne.s32.totalorder %s60, %s63
    %p72 = scmp.eq.s32.totalorder %s15, 3
    %p73 = por %p71, %p72
    %p74 = scmp.ne.s32.totalorder %s63, %s64
    %p75 = scmp.eq.s32.totalorder %s15, 0
    %p76 = por %p74, %p75
    %p77 = scmp.ne.s32.totalorder %s63, %s64
    %p78 = scmp.eq.s32.totalorder %s16, 3
    %p79 = por %p77, %p78
    %p81 = scmp.ne.s32.totalorder %s64, %s80
    %p82 = scmp.eq.s32.totalorder %s16, 0
    %p83 = por %p81, %p82
    %s84 = ssub.s32 %s17, %s29
    %s85 = ssub.s32 %s18, %s25
    %s86 = sor.u32 %s84, %s85
    %p87 = scmp.eq.s32.totalorder %s86, 0
    %s89 = sadd.s32 %s88, 1
    %s90 = scalar_select %p87, %s88, %s89
    %p93 = pneg %p87
    %p94 = scmp.eq.s32.totalorder %s10, 3
    %p95 = por %p93, %p94
    %p96 = scmp.ne.s32.totalorder %s88, %s91
    %p97 = scmp.eq.s32.totalorder %s10, 0
    %p98 = por %p96, %p97
    %p99 = scmp.ne.s32.totalorder %s88, %s91
    %p100 = scmp.eq.s32.totalorder %s15, 3
    %p101 = por %p99, %p100
    %p102 = scmp.ne.s32.totalorder %s91, %s92
    %p103 = scmp.eq.s32.totalorder %s15, 0
    %p104 = por %p102, %p103
    %p105 = scmp.ne.s32.totalorder %s91, %s92
    %p106 = scmp.eq.s32.totalorder %s16, 3
    %p107 = por %p105, %p106
    %p109 = scmp.ne.s32.totalorder %s92, %s108
    %p110 = scmp.eq.s32.totalorder %s16, 0
    %p111 = por %p109, %p110
    %s112 = ssub.s32 %s17, %s29
    %s113 = ssub.s32 %s18, %s25
    %s114 = sor.u32 %s112, %s113
    %p115 = scmp.eq.s32.totalorder %s114, 0
    %s117 = sadd.s32 %s116, 1
    %s118 = scalar_select %p115, %s116, %s117
    %p121 = pneg %p115
    %p122 = scmp.eq.s32.totalorder %s10, 3
    %p123 = por %p121, %p122
    %p124 = scmp.ne.s32.totalorder %s116, %s119
    %p125 = scmp.eq.s32.totalorder %s10, 0
    %p126 = por %p124, %p125
    %p127 = scmp.ne.s32.totalorder %s116, %s119
    %p128 = scmp.eq.s32.totalorder %s15, 3
    %p129 = por %p127, %p128
    %p130 = scmp.ne.s32.totalorder %s119, %s120
    %p131 = scmp.eq.s32.totalorder %s15, 0
    %p132 = por %p130, %p131
    %p133 = scmp.ne.s32.totalorder %s119, %s120
    %p134 = scmp.eq.s32.totalorder %s16, 3
    %p135 = por %p133, %p134
    %p137 = scmp.ne.s32.totalorder %s120, %s136
    %p138 = scmp.eq.s32.totalorder %s16, 0
    %p139 = por %p137, %p138
    %p140 = scmp.le.s32.totalorder 1, %s10
    %p141 = scmp.lt.s32.totalorder %s10, 5
    %p142 = pnand %p140, %p141
    %p143 = pneg %p142
    // Predicated region
    $region9: #{generator_forward.9} parent=5 // pred_check
      _
    $region10: #{generator_forward.9} parent=5 // pred_check_branch
      %145 = sbr.rel (%p142) target = $region12
    $region11: #{generator_forward.9} parent=5 // pred_region
      %s146 = ssub.s32 %s10, 1
    $region12: #{generator_forward.9} parent=5 // pred_fallthru
      _
    %p147 = scmp.lt.s32.totalorder %s10, 4
    // Predicated region
    $region13: #{generator_forward.9} parent=5 // pred_check
      %p148 = pneg %p147
    $region14: #{generator_forward.9} parent=5 // pred_check_branch
      %150 = sbr.rel (%p148) target = $region16
    $region15: #{generator_forward.9} parent=5 // pred_region
      // Predicated region
      $region17: #{generator_forward.9} parent=15 // pred_check
        %p151 = pneg %p42
      $region18: #{generator_forward.9} parent=15 // pred_check_branch
        %153 = sbr.rel (%p151) target = $region20
      $region19: #{generator_forward.9} parent=15 // pred_region
        %p154 = scmp.lt.s32.totalorder %s17, 3
        %s155 = scalar_select %p154, %s17, 3
        %s156 = smul.addr %s155, 16
        %s157 = smul.addr %s156, 4
        %s158 = scalar_lea.vmem %s0, %s157
      $region20: #{generator_forward.9} parent=15 // pred_fallthru
        _
      // Predicated region
      $region21: #{generator_forward.9} parent=15 // pred_check
        %p159 = pneg %p70
      $region22: #{generator_forward.9} parent=15 // pred_check_branch
        %161 = sbr.rel (%p159) target = $region24
      $region23: #{generator_forward.9} parent=15 // pred_region
        %p162 = scmp.lt.s32.totalorder %s17, 3
        %s163 = scalar_select %p162, %s17, 3
        %p164 = scmp.lt.s32.totalorder %s18, 0
        %s165 = scalar_select %p164, %s18, 0
        %s166 = smul.addr %s163, 32
        %s167 = sadd.s32 %s165, %s166
        %s168 = smul.addr %s167, 4
        %s169 = scalar_lea.vmem %s1, %s168
      $region24: #{generator_forward.9} parent=15 // pred_fallthru
        _
    $region16: #{generator_forward.9} parent=5 // pred_fallthru
      _
    %p170 = scmp.le.s32.totalorder 1, %s10
    %p171 = scmp.lt.s32.totalorder %s10, 5
    %p172 = pnand %p170, %p171
    %p173 = pneg %p172
    // Predicated region
    $region25: #{generator_forward.9} parent=5 // pred_check
      _
    $region26: #{generator_forward.9} parent=5 // pred_check_branch
      %175 = sbr.rel (%p172) target = $region28
    $region27: #{generator_forward.9} parent=5 // pred_region
      %s176 = ssub.s32 %s10, 1
      %p177 = scmp.lt.s32.totalorder %s19, 3
      %s178 = scalar_select %p177, %s19, 3
      %s179 = smul.addr %s178, 16
      %s180 = smul.addr %s179, 4
      %s181 = scalar_lea.vmem %s0, %s180
      %p182 = pneg %p48
      %p183 = pneg %p45
      %p184 = scmp.lt.s32.totalorder %s19, 3
      %s185 = scalar_select %p184, %s19, 3
      %p186 = scmp.lt.s32.totalorder %s20, 0
      %s187 = scalar_select %p186, %s20, 0
      %s188 = smul.addr %s185, 32
      %s189 = sadd.s32 %s187, %s188
      %s190 = smul.addr %s189, 4
      %s191 = scalar_lea.vmem %s1, %s190
      %p192 = pneg %p76
      %p193 = pneg %p73
      %p194 = pneg %p104
      %p195 = pneg %p101
      %p196 = scmp.lt.s32.totalorder %s19, 3
      %s197 = scalar_select %p196, %s19, 3
      %p198 = scmp.lt.s32.totalorder %s20, 0
      %s199 = scalar_select %p198, %s20, 0
      %s200 = smul.addr %s197, 8
      %s201 = sadd.s32 %s199, %s200
      %s202 = smul.addr %s201, 4
      %s203 = scalar_lea.vmem %s2, %s202
      %p204 = pneg %p132
      %p205 = pneg %p129
      %p206 = scmp.lt.s32.totalorder %s19, 3
      %s207 = scalar_select %p206, %s19, 3
      %p208 = scmp.lt.s32.totalorder %s20, 0
      %s209 = scalar_select %p208, %s20, 0
      %s210 = smul.addr %s209, 16
      %s211 = smul.addr %s207, 16
      %s212 = sadd.s32 %s210, %s211
      %s213 = smul.addr %s212, 8
      %s214 = scalar_lea.vmem %s3, %s213
      %p215 = scmp.lt.s32.totalorder %s19, 3
      %s216 = scalar_select %p215, %s19, 3
      %s217 = smul.addr %s216, 16
      %s218 = smul.addr %s217, 4
      %s219 = scalar_lea.vmem %s0, %s218
      %p220 = scmp.lt.s32.totalorder %s19, 3
      %s221 = scalar_select %p220, %s19, 3
      %p222 = scmp.lt.s32.totalorder %s20, 0
      %s223 = scalar_select %p222, %s20, 0
      %s224 = smul.addr %s221, 32
      %s225 = sadd.s32 %s223, %s224
      %s226 = smul.addr %s225, 4
      %s227 = scalar_lea.vmem %s1, %s226
      %p228 = scmp.lt.s32.totalorder %s19, 3
      %s229 = scalar_select %p228, %s19, 3
      %p230 = scmp.lt.s32.totalorder %s20, 0
      %s231 = scalar_select %p230, %s20, 0
      %s232 = smul.addr %s229, 8
      %s233 = sadd.s32 %s231, %s232
      %s234 = smul.addr %s233, 4
      %s235 = scalar_lea.vmem %s2, %s234
      %p236 = scmp.lt.s32.totalorder %s19, 3
      %s237 = scalar_select %p236, %s19, 3
      %p238 = scmp.lt.s32.totalorder %s20, 0
      %s239 = scalar_select %p238, %s20, 0
      %s240 = smul.addr %s239, 16
      %s241 = smul.addr %s237, 16
      %s242 = sadd.s32 %s240, %s241
      %s243 = smul.addr %s242, 8
      %s244 = scalar_lea.vmem %s3, %s243
      %v246 = vld [vmem:[%s219] sm:$0xff]
      %v247 = vld [vmem:[%s219 + $0x8] sm:$0xff]
      %v248 = vld [vmem:[%s219 + $0x10] sm:$0xff]
      %v249 = vld [vmem:[%s219 + $0x18] sm:$0xff]
      %v250 = vld [vmem:[%s219 + $0x20] sm:$0xff]
      %v251 = vld [vmem:[%s219 + $0x28] sm:$0xff]
      %v252 = vld [vmem:[%s219 + $0x30] sm:$0xff]
      %v253 = vld [vmem:[%s219 + $0x38] sm:$0xff]
      %v254 = vld [vmem:[%s227] sm:$0xf]
      %v255 = vld [vmem:[%s227 + $0x4] sm:$0xf]
      %v256 = vld [vmem:[%s227 + $0x8] sm:$0xf]
      %v257 = vld [vmem:[%s227 + $0xc] sm:$0xf]
      %v258 = vld [vmem:[%s227 + $0x10] sm:$0xf]
      %v259 = vld [vmem:[%s227 + $0x14] sm:$0xf]
      %v260 = vld [vmem:[%s227 + $0x18] sm:$0xf]
      %v261 = vld [vmem:[%s227 + $0x1c] sm:$0xf]
      %v262 = vld [vmem:[%s227 + $0x20] sm:$0xf]
      %v263 = vld [vmem:[%s227 + $0x24] sm:$0xf]
      %v264 = vld [vmem:[%s227 + $0x28] sm:$0xf]
      %v265 = vld [vmem:[%s227 + $0x2c] sm:$0xf]
      %v266 = vld [vmem:[%s227 + $0x30] sm:$0xf]
      %v267 = vld [vmem:[%s227 + $0x34] sm:$0xf]
      %v268 = vld [vmem:[%s227 + $0x38] sm:$0xf]
      %v269 = vld [vmem:[%s227 + $0x3c] sm:$0xf]
      %v270 = vld [vmem:[%s227 + $0x40] sm:$0xf]
      %v271 = vld [vmem:[%s227 + $0x44] sm:$0xf]
      %v272 = vld [vmem:[%s227 + $0x48] sm:$0xf]
      %v273 = vld [vmem:[%s227 + $0x4c] sm:$0xf]
      %v274 = vld [vmem:[%s227 + $0x50] sm:$0xf]
      %v275 = vld [vmem:[%s227 + $0x54] sm:$0xf]
      %v276 = vld [vmem:[%s227 + $0x58] sm:$0xf]
      %v277 = vld [vmem:[%s227 + $0x5c] sm:$0xf]
      %v278 = vld [vmem:[%s227 + $0x60] sm:$0xf]
      %v279 = vld [vmem:[%s227 + $0x64] sm:$0xf]
      %v280 = vld [vmem:[%s227 + $0x68] sm:$0xf]
      %v281 = vld [vmem:[%s227 + $0x6c] sm:$0xf]
      %v282 = vld [vmem:[%s227 + $0x70] sm:$0xf]
      %v283 = vld [vmem:[%s227 + $0x74] sm:$0xf]
      %v284 = vld [vmem:[%s227 + $0x78] sm:$0xf]
      %v285 = vld [vmem:[%s227 + $0x7c] sm:$0xf]
      %v294 = vunpack.c.l.b16 %v246
      %v295 = vunpack.c.h.b16 %v246
      %v296 = vunpack.c.l.b16 %v247
      %v297 = vunpack.c.h.b16 %v247
      %v298 = vunpack.c.l.b16 %v248
      %v299 = vunpack.c.h.b16 %v248
      %v300 = vunpack.c.l.b16 %v249
      %v301 = vunpack.c.h.b16 %v249
      %v302 = vunpack.c.l.b16 %v250
      %v303 = vunpack.c.h.b16 %v250
      %v304 = vunpack.c.l.b16 %v251
      %v305 = vunpack.c.h.b16 %v251
      %v306 = vunpack.c.l.b16 %v252
      %v307 = vunpack.c.h.b16 %v252
      %v308 = vunpack.c.l.b16 %v253
      %v309 = vunpack.c.h.b16 %v253
      %v310 = vpack.c.b16 %v296, %v294
      %v311 = vpack.c.b16 %v297, %v295
      %v312 = vpack.c.b16 %v300, %v298
      %v313 = vpack.c.b16 %v301, %v299
      %v314 = vpack.c.b16 %v304, %v302
      %v315 = vpack.c.b16 %v305, %v303
      %v316 = vpack.c.b16 %v308, %v306
      %v317 = vpack.c.b16 %v309, %v307
      %v358 = vunpack.c.l.b16 %v254
      %v359 = vunpack.c.l.b16 %v255
      %v360 = vunpack.c.l.b16 %v256
      %v361 = vunpack.c.l.b16 %v257
      %v362 = vunpack.c.l.b16 %v258
      %v363 = vunpack.c.l.b16 %v259
      %v364 = vunpack.c.l.b16 %v260
      %v365 = vunpack.c.l.b16 %v261
      %v366 = vunpack.c.l.b16 %v262
      %v367 = vunpack.c.l.b16 %v263
      %v368 = vunpack.c.l.b16 %v264
      %v369 = vunpack.c.l.b16 %v265
      %v370 = vunpack.c.l.b16 %v266
      %v371 = vunpack.c.l.b16 %v267
      %v372 = vunpack.c.l.b16 %v268
      %v373 = vunpack.c.l.b16 %v269
      %v374 = vunpack.c.l.b16 %v270
      %v375 = vunpack.c.l.b16 %v271
      %v376 = vunpack.c.l.b16 %v272
      %v377 = vunpack.c.l.b16 %v273
      %v378 = vunpack.c.l.b16 %v274
      %v379 = vunpack.c.l.b16 %v275
      %v380 = vunpack.c.l.b16 %v276
      %v381 = vunpack.c.l.b16 %v277
      %v382 = vunpack.c.l.b16 %v278
      %v383 = vunpack.c.l.b16 %v279
      %v384 = vunpack.c.l.b16 %v280
      %v385 = vunpack.c.l.b16 %v281
      %v386 = vunpack.c.l.b16 %v282
      %v387 = vunpack.c.l.b16 %v283
      %v388 = vunpack.c.l.b16 %v284
      %v389 = vunpack.c.l.b16 %v285
      %v390 = vpack.c.b16 %v359, %v358
      %v391 = vpack.c.b16 %v361, %v360
      %v392 = vpack.c.b16 %v363, %v362
      %v393 = vpack.c.b16 %v365, %v364
      %v394 = vpack.c.b16 %v367, %v366
      %v395 = vpack.c.b16 %v369, %v368
      %v396 = vpack.c.b16 %v371, %v370
      %v397 = vpack.c.b16 %v373, %v372
      %v398 = vpack.c.b16 %v375, %v374
      %v399 = vpack.c.b16 %v377, %v376
      %v400 = vpack.c.b16 %v379, %v378
      %v401 = vpack.c.b16 %v381, %v380
      %v402 = vpack.c.b16 %v383, %v382
      %v403 = vpack.c.b16 %v385, %v384
      %v404 = vpack.c.b16 %v387, %v386
      %v405 = vpack.c.b16 %v389, %v388
      %422 = vmatprep.subr.bf16.mxu0 0
      %423 = vmatpush1.bf16.msra.mxu0 %v390
      %424 = vmatprep.subr.bf16.mxu0 0
      %425 = vmatpush1.bf16.msra.mxu0 %v391
      %426 = vmatprep.subr.bf16.mxu0 0
      %427 = vmatpush1.bf16.msra.mxu0 %v392
      %428 = vmatprep.subr.bf16.mxu0 0
      %429 = vmatpush1.bf16.msra.mxu0 %v393
      %430 = vmatprep.subr.bf16.mxu0 0
      %431 = vmatpush1.bf16.msra.mxu0 %v394
      %432 = vmatprep.subr.bf16.mxu0 0
      %433 = vmatpush1.bf16.msra.mxu0 %v395
      %434 = vmatprep.subr.bf16.mxu0 0
      %435 = vmatpush1.bf16.msra.mxu0 %v396
      %436 = vmatprep.subr.bf16.mxu0 0
      %437 = vmatpush1.bf16.msra.mxu0 %v397
      %438 = vmatprep.subr.bf16.mxu0 0
      %439 = vmatpush1.bf16.msra.mxu0 %v398
      %440 = vmatprep.subr.bf16.mxu0 0
      %441 = vmatpush1.bf16.msra.mxu0 %v399
      %442 = vmatprep.subr.bf16.mxu0 0
      %443 = vmatpush1.bf16.msra.mxu0 %v400
      %444 = vmatprep.subr.bf16.mxu0 0
      %445 = vmatpush1.bf16.msra.mxu0 %v401
      %446 = vmatprep.subr.bf16.mxu0 0
      %447 = vmatpush1.bf16.msra.mxu0 %v402
      %448 = vmatprep.subr.bf16.mxu0 0
      %449 = vmatpush1.bf16.msra.mxu0 %v403
      %450 = vmatprep.subr.bf16.mxu0 0
      %451 = vmatpush1.bf16.msra.mxu0 %v404
      %452 = vmatprep.subr.bf16.mxu0 0
      %453 = vmatpush1.bf16.msra.mxu0 %v405
      %454 = vmatprep.mubr.bf16.mxu0 %v311
      %455 = vmatmul.mubr.bf16.gmra.mrb[0].mxu0 %v310
      %v456 = vpop.f32.mrb[0].mxu0
      %v457 = vadd.f32 0.0, %v456
      %v458 = vpop.f32.mrb[0].mxu0
      %v459 = vpop.f32.mrb[0].mxu0
      %v460 = vadd.f32 0.0, %v459
      %v461 = vpop.f32.mrb[0].mxu0
      %462 = vmatprep.mubr.bf16.mxu0 %v313
      %463 = vmatmul.mubr.bf16.gmra.mrb[0].mxu0 %v312
      %v464 = vpop.f32.mrb[0].mxu0
      %v465 = vadd.f32 0.0, %v464
      %v466 = vpop.f32.mrb[0].mxu0
      %v467 = vpop.f32.mrb[0].mxu0
      %v468 = vadd.f32 0.0, %v467
      %v469 = vpop.f32.mrb[0].mxu0
      %470 = vmatprep.mubr.bf16.mxu0 %v315
      %471 = vmatmul.mubr.bf16.gmra.mrb[0].mxu0 %v314
      %v472 = vpop.f32.mrb[0].mxu0
      %v473 = vadd.f32 0.0, %v472
      %v474 = vpop.f32.mrb[0].mxu0
      %v475 = vpop.f32.mrb[0].mxu0
      %v476 = vadd.f32 0.0, %v475
      %v477 = vpop.f32.mrb[0].mxu0
      %478 = vmatprep.mubr.bf16.mxu0 %v317
      %479 = vmatmul.mubr.bf16.gmra.mrb[0].mxu0 %v316
      %v480 = vpop.f32.mrb[0].mxu0
      %v481 = vadd.f32 0.0, %v480
      %v482 = vpop.f32.mrb[0].mxu0
      %v483 = vpop.f32.mrb[0].mxu0
      %v484 = vadd.f32 0.0, %v483
      %v485 = vpop.f32.mrb[0].mxu0
      %486 = vdwg.mxu0
      %v487 = vpack.c.bf16 %v460, %v457
      %v488 = vpack.c.bf16 %v468, %v465
      %v489 = vpack.c.bf16 %v476, %v473
      %v490 = vpack.c.bf16 %v484, %v481
      %v495 = vunpack.c.l.b16 %v487
      %v496 = vunpack.c.h.b16 %v487
      %v497 = vunpack.c.l.b16 %v488
      %v498 = vunpack.c.h.b16 %v488
      %v499 = vunpack.c.l.b16 %v489
      %v500 = vunpack.c.h.b16 %v489
      %v501 = vunpack.c.l.b16 %v490
      %v502 = vunpack.c.h.b16 %v490
      %v503 = vpack.c.b16 %v495, %v495
      %v504 = vpack.c.b16 %v496, %v496
      %v505 = vpack.c.b16 %v497, %v497
      %v506 = vpack.c.b16 %v498, %v498
      %v507 = vpack.c.b16 %v499, %v499
      %v508 = vpack.c.b16 %v500, %v500
      %v509 = vpack.c.b16 %v501, %v501
      %v510 = vpack.c.b16 %v502, %v502
      %519 = vst [vmem:[%s235] sm:$0xf] %v503
      %520 = vst [vmem:[%s235 + $0x4] sm:$0xf] %v504
      %521 = vst [vmem:[%s235 + $0x8] sm:$0xf] %v505
      %522 = vst [vmem:[%s235 + $0xc] sm:$0xf] %v506
      %523 = vst [vmem:[%s235 + $0x10] sm:$0xf] %v507
      %524 = vst [vmem:[%s235 + $0x14] sm:$0xf] %v508
      %525 = vst [vmem:[%s235 + $0x18] sm:$0xf] %v509
      %526 = vst [vmem:[%s235 + $0x1c] sm:$0xf] %v510
      %527 = vadd.xlane.f32.xlu0 %v457
      %v528 = vpop.xlane.xlu0 %527
      %529 = vadd.xlane.f32.xlu0 %v460
      %v530 = vpop.xlane.xlu0 %529
      %531 = vadd.xlane.f32.xlu0 %v465
      %v532 = vpop.xlane.xlu0 %531
      %533 = vadd.xlane.f32.xlu0 %v468
      %v534 = vpop.xlane.xlu0 %533
      %535 = vadd.xlane.f32.xlu0 %v473
      %v536 = vpop.xlane.xlu0 %535
      %537 = vadd.xlane.f32.xlu0 %v476
      %v538 = vpop.xlane.xlu0 %537
      %539 = vadd.xlane.f32.xlu0 %v481
      %v540 = vpop.xlane.xlu0 %539
      %541 = vadd.xlane.f32.xlu0 %v484
      %v542 = vpop.xlane.xlu0 %541
      %v543 = vmul.f32 %v457, %v457
      %v544 = vmul.f32 %v460, %v460
      %v545 = vmul.f32 %v465, %v465
      %v546 = vmul.f32 %v468, %v468
      %v547 = vmul.f32 %v473, %v473
      %v548 = vmul.f32 %v476, %v476
      %v549 = vmul.f32 %v481, %v481
      %v550 = vmul.f32 %v484, %v484
      %551 = vadd.xlane.f32.xlu0 %v543
      %v552 = vpop.xlane.xlu0 %551
      %553 = vadd.xlane.f32.xlu0 %v544
      %v554 = vpop.xlane.xlu0 %553
      %555 = vadd.xlane.f32.xlu0 %v545
      %v556 = vpop.xlane.xlu0 %555
      %557 = vadd.xlane.f32.xlu0 %v546
      %v558 = vpop.xlane.xlu0 %557
      %559 = vadd.xlane.f32.xlu0 %v547
      %v560 = vpop.xlane.xlu0 %559
      %561 = vadd.xlane.f32.xlu0 %v548
      %v562 = vpop.xlane.xlu0 %561
      %563 = vadd.xlane.f32.xlu0 %v549
      %v564 = vpop.xlane.xlu0 %563
      %565 = vadd.xlane.f32.xlu0 %v550
      %v566 = vpop.xlane.xlu0 %565
      %568 = vset.pattern.permute.xlu0 0
      %569 = vperm.xlu0 %568, %v528
      %v570 = vpop.permute.xlu0 %569
      %573 = vset.pattern.permute.xlu0 0
      %574 = vperm.xlu0 %573, %v530
      %v575 = vpop.permute.xlu0 %574
      %578 = vset.pattern.permute.xlu0 0
      %579 = vperm.xlu0 %578, %v532
      %v580 = vpop.permute.xlu0 %579
      %583 = vset.pattern.permute.xlu0 0
      %584 = vperm.xlu0 %583, %v534
      %v585 = vpop.permute.xlu0 %584
      %588 = vset.pattern.permute.xlu0 0
      %589 = vperm.xlu0 %588, %v536
      %v590 = vpop.permute.xlu0 %589
      %593 = vset.pattern.permute.xlu0 0
      %594 = vperm.xlu0 %593, %v538
      %v595 = vpop.permute.xlu0 %594
      %598 = vset.pattern.permute.xlu0 0
      %599 = vperm.xlu0 %598, %v540
      %v600 = vpop.permute.xlu0 %599
      %603 = vset.pattern.permute.xlu0 0
      %604 = vperm.xlu0 %603, %v542
      %v605 = vpop.permute.xlu0 %604
      %608 = vset.pattern.permute.xlu0 0
      %609 = vperm.xlu0 %608, %v552
      %v610 = vpop.permute.xlu0 %609
      %613 = vset.pattern.permute.xlu0 0
      %614 = vperm.xlu0 %613, %v554
      %v615 = vpop.permute.xlu0 %614
      %618 = vset.pattern.permute.xlu0 0
      %619 = vperm.xlu0 %618, %v556
      %v620 = vpop.permute.xlu0 %619
      %623 = vset.pattern.permute.xlu0 0
      %624 = vperm.xlu0 %623, %v558
      %v625 = vpop.permute.xlu0 %624
      %628 = vset.pattern.permute.xlu0 0
      %629 = vperm.xlu0 %628, %v560
      %v630 = vpop.permute.xlu0 %629
      %633 = vset.pattern.permute.xlu0 0
      %634 = vperm.xlu0 %633, %v562
      %v635 = vpop.permute.xlu0 %634
      %638 = vset.pattern.permute.xlu0 0
      %639 = vperm.xlu0 %638, %v564
      %v640 = vpop.permute.xlu0 %639
      %643 = vset.pattern.permute.xlu0 0
      %644 = vperm.xlu0 %643, %v566
      %v645 = vpop.permute.xlu0 %644
      %647 = vst [vmem:[%s244] sm:$0xff] %v570
      %648 = vst [vmem:[%s244 + $0x8] sm:$0xff] %v575
      %649 = vst [vmem:[%s244 + $0x10] sm:$0xff] %v580
      %650 = vst [vmem:[%s244 + $0x18] sm:$0xff] %v585
      %651 = vst [vmem:[%s244 + $0x20] sm:$0xff] %v590
      %652 = vst [vmem:[%s244 + $0x28] sm:$0xff] %v595
      %653 = vst [vmem:[%s244 + $0x30] sm:$0xff] %v600
      %654 = vst [vmem:[%s244 + $0x38] sm:$0xff] %v605
      %655 = vst [vmem:[%s244 + $0x40] sm:$0xff] %v610
      %656 = vst [vmem:[%s244 + $0x48] sm:$0xff] %v615
      %657 = vst [vmem:[%s244 + $0x50] sm:$0xff] %v620
      %658 = vst [vmem:[%s244 + $0x58] sm:$0xff] %v625
      %659 = vst [vmem:[%s244 + $0x60] sm:$0xff] %v630
      %660 = vst [vmem:[%s244 + $0x68] sm:$0xff] %v635
      %661 = vst [vmem:[%s244 + $0x70] sm:$0xff] %v640
      %662 = vst [vmem:[%s244 + $0x78] sm:$0xff] %v645
      %p663 = scmp.lt.s32.totalorder %s19, 3
      %s664 = scalar_select %p663, %s19, 3
      %p665 = scmp.lt.s32.totalorder %s20, 0
      %s666 = scalar_select %p665, %s20, 0
      %s667 = smul.addr %s664, 8
      %s668 = sadd.s32 %s666, %s667
      %s669 = smul.addr %s668, 4
      %s670 = scalar_lea.vmem %s2, %s669
      %p671 = scmp.lt.s32.totalorder %s19, 3
      %s672 = scalar_select %p671, %s19, 3
      %p673 = scmp.lt.s32.totalorder %s20, 0
      %s674 = scalar_select %p673, %s20, 0
      %s675 = smul.addr %s674, 16
      %s676 = smul.addr %s672, 16
      %s677 = sadd.s32 %s675, %s676
      %s678 = smul.addr %s677, 8
      %s679 = scalar_lea.vmem %s3, %s678
      // Predicated region
      $region29: #{generator_forward.9} parent=27 // pred_check
        %p680 = pneg %p101
      $region30: #{generator_forward.9} parent=27 // pred_check_branch
        %682 = sbr.rel (%p680) target = $region32
      $region31: #{generator_forward.9} parent=27 // pred_region
        _
      $region32: #{generator_forward.9} parent=27 // pred_fallthru
        _
      // Predicated region
      $region33: #{generator_forward.9} parent=27 // pred_check
        %p683 = pneg %p129
      $region34: #{generator_forward.9} parent=27 // pred_check_branch
        %685 = sbr.rel (%p683) target = $region36
      $region35: #{generator_forward.9} parent=27 // pred_region
        _
      $region36: #{generator_forward.9} parent=27 // pred_fallthru
        _
    $region28: #{generator_forward.9} parent=5 // pred_fallthru
      _
    %p686 = scmp.le.s32.totalorder 2, %s10
    // Predicated region
    $region37: #{generator_forward.9} parent=5 // pred_check
      %p687 = pneg %p686
    $region38: #{generator_forward.9} parent=5 // pred_check_branch
      %689 = sbr.rel (%p687) target = $region40
    $region39: #{generator_forward.9} parent=5 // pred_region
      %s690 = ssub.s32 %s10, 2
      // Predicated region
      $region41: #{generator_forward.9} parent=39 // pred_check
        %p691 = pneg %p107
      $region42: #{generator_forward.9} parent=39 // pred_check_branch
        %693 = sbr.rel (%p691) target = $region44
      $region43: #{generator_forward.9} parent=39 // pred_region
        %p694 = scmp.lt.s32.totalorder %s21, 3
        %s695 = scalar_select %p694, %s21, 3
        %p696 = scmp.lt.s32.totalorder %s22, 0
        %s697 = scalar_select %p696, %s22, 0
        %s698 = smul.addr %s695, 8
        %s699 = sadd.s32 %s697, %s698
        %s700 = smul.addr %s699, 4
        %s701 = scalar_lea.vmem %s2, %s700
      $region44: #{generator_forward.9} parent=39 // pred_fallthru
        _
      // Predicated region
      $region45: #{generator_forward.9} parent=39 // pred_check
        %p702 = pneg %p135
      $region46: #{generator_forward.9} parent=39 // pred_check_branch
        %704 = sbr.rel (%p702) target = $region48
      $region47: #{generator_forward.9} parent=39 // pred_region
        %p705 = scmp.lt.s32.totalorder %s21, 3
        %s706 = scalar_select %p705, %s21, 3
        %p707 = scmp.lt.s32.totalorder %s22, 0
        %s708 = scalar_select %p707, %s22, 0
        %s709 = smul.addr %s708, 16
        %s710 = smul.addr %s706, 16
        %s711 = sadd.s32 %s709, %s710
        %s712 = smul.addr %s711, 8
        %s713 = scalar_lea.vmem %s3, %s712
      $region48: #{generator_forward.9} parent=39 // pred_fallthru
        _
    $region40: #{generator_forward.9} parent=5 // pred_fallthru
      _
  $region6: #{generator_forward.9} parent=0 // loop_footer
    %s14 = sadd.s32 1, %s10
  $region7: #{generator_forward.9} parent=0 // loop_footer_branch
    %9 = sbr.rel target = $region3
  $region8: #{generator_forward.9} parent=0 // loop_exit
    _

// kernel: generator_forward.10
$region0: #{generator_forward.10}
  #allocation0 [shape = 'u32[]', space=smem, size = 0x4, offset = 0x4, fixed_abs, tag = 'smem constant byte address 0x4 - core index']
  #allocation1 [shape = 'u32[144,128]{1,0:T(1,128)}', space=vmem, size = 0x12000, scoped, tag = 'internal scratch']
  %s0 = inlined_call_operand.vmem [shape: bf16[4,32,128], index: 0, kind: input, shape index: {}]
  %s1 = inlined_call_operand.vmem [shape: bf16[4,128,384], index: 1, kind: input, shape index: {}]
  %s2 = inlined_call_operand.vmem [shape: bf16[4,32,384], index: 2, kind: output, shape index: {0}]
  %s3 = inlined_call_operand.vmem [shape: f32[4,1,64,128], index: 3, kind: output, shape index: {1}]
  %4 = xla_tuple %s2, %s3
  %s5 = sld [smem:[#allocation0]]
  $region49: #{generator_forward.10} parent=0
    _
  %s7 = ssub.s32 1, %s5
  %s8 = scalar_select 0, %s7, %s5
  loop: start=0, step=1, limit=6
  $region2: #{generator_forward.10} parent=0 // loop_pre_header
    _
  $region3: #{generator_forward.10} parent=0 // loop_header
    %s10 = sphi 0, %s14
    %p11 = scmp.ge.s32.totalorder %s10, 6
    %s17 = sphi 0, %s29
    %s18 = sphi 0, %s25
    %s19 = sphi 0, %s17
    %s20 = sphi 0, %s18
    %s21 = sphi 0, %s19
    %s22 = sphi 0, %s20
    %s32 = sphi 0, %s34
    %s35 = sphi 0, %s32
    %s36 = sphi 0, %s35
    %s52 = sphi 0, %s36
    %s60 = sphi 0, %s62
    %s63 = sphi 0, %s60
    %s64 = sphi 0, %s63
    %s80 = sphi 0, %s64
    %s88 = sphi 0, %s90
    %s91 = sphi 0, %s88
    %s92 = sphi 0, %s91
    %s108 = sphi 0, %s92
    %s116 = sphi 0, %s118
    %s119 = sphi 0, %s116
    %s120 = sphi 0, %s119
    %s136 = sphi 0, %s120
  $region4: #{generator_forward.10} parent=0 // loop_header_branch
    %13 = sbr.rel (%p11) target = $region8
  $region5: #{generator_forward.10} parent=0 // loop_body
    %s15 = ssub.s32 %s10, 1
    %s16 = ssub.s32 %s10, 2
    %s23 = sadd.s32 1, %s18
    %p24 = scmp.ge.s32.totalorder %s23, 1
    %s25 = scalar_select %p24, 0, %s23
    %s26 = sadd.s32 1, %s17
    %s27 = scalar_select %p24, %s26, %s17
    %p28 = scmp.ge.s32.totalorder %s27, 4
    %s29 = scalar_select %p28, 0, %s27
    %s30 = ssub.s32 %s17, %s29
    %p31 = scmp.eq.s32.totalorder %s30, 0
    %s33 = sadd.s32 %s32, 1
    %s34 = scalar_select %p31, %s32, %s33
    %p37 = pneg %p31
    %p38 = scmp.eq.s32.totalorder %s10, 3
    %p39 = por %p37, %p38
    %p40 = scmp.ne.s32.totalorder %s32, %s35
    %p41 = scmp.eq.s32.totalorder %s10, 0
    %p42 = por %p40, %p41
    %p43 = scmp.ne.s32.totalorder %s32, %s35
    %p44 = scmp.eq.s32.totalorder %s15, 3
    %p45 = por %p43, %p44
    %p46 = scmp.ne.s32.totalorder %s35, %s36
    %p47 = scmp.eq.s32.totalorder %s15, 0
    %p48 = por %p46, %p47
    %p49 = scmp.ne.s32.totalorder %s35, %s36
    %p50 = scmp.eq.s32.totalorder %s16, 3
    %p51 = por %p49, %p50
    %p53 = scmp.ne.s32.totalorder %s36, %s52
    %p54 = scmp.eq.s32.totalorder %s16, 0
    %p55 = por %p53, %p54
    %s56 = ssub.s32 %s17, %s29
    %s57 = ssub.s32 %s18, %s25
    %s58 = sor.u32 %s56, %s57
    %p59 = scmp.eq.s32.totalorder %s58, 0
    %s61 = sadd.s32 %s60, 1
    %s62 = scalar_select %p59, %s60, %s61
    %p65 = pneg %p59
    %p66 = scmp.eq.s32.totalorder %s10, 3
    %p67 = por %p65, %p66
    %p68 = scmp.ne.s32.totalorder %s60, %s63
    %p69 = scmp.eq.s32.totalorder %s10, 0
    %p70 = por %p68, %p69
    %p71 = scmp.ne.s32.totalorder %s60, %s63
    %p72 = scmp.eq.s32.totalorder %s15, 3
    %p73 = por %p71, %p72
    %p74 = scmp.ne.s32.totalorder %s63, %s64
    %p75 = scmp.eq.s32.totalorder %s15, 0
    %p76 = por %p74, %p75
    %p77 = scmp.ne.s32.totalorder %s63, %s64
    %p78 = scmp.eq.s32.totalorder %s16, 3
    %p79 = por %p77, %p78
    %p81 = scmp.ne.s32.totalorder %s64, %s80
    %p82 = scmp.eq.s32.totalorder %s16, 0
    %p83 = por %p81, %p82
    %s84 = ssub.s32 %s17, %s29
    %s85 = ssub.s32 %s18, %s25
    %s86 = sor.u32 %s84, %s85
    %p87 = scmp.eq.s32.totalorder %s86, 0
    %s89 = sadd.s32 %s88, 1
    %s90 = scalar_select %p87, %s88, %s89
    %p93 = pneg %p87
    %p94 = scmp.eq.s32.totalorder %s10, 3
    %p95 = por %p93, %p94
    %p96 = scmp.ne.s32.totalorder %s88, %s91
    %p97 = scmp.eq.s32.totalorder %s10, 0
    %p98 = por %p96, %p97
    %p99 = scmp.ne.s32.totalorder %s88, %s91
    %p100 = scmp.eq.s32.totalorder %s15, 3
    %p101 = por %p99, %p100
    %p102 = scmp.ne.s32.totalorder %s91, %s92
    %p103 = scmp.eq.s32.totalorder %s15, 0
    %p104 = por %p102, %p103
    %p105 = scmp.ne.s32.totalorder %s91, %s92
    %p106 = scmp.eq.s32.totalorder %s16, 3
    %p107 = por %p105, %p106
    %p109 = scmp.ne.s32.totalorder %s92, %s108
    %p110 = scmp.eq.s32.totalorder %s16, 0
    %p111 = por %p109, %p110
    %s112 = ssub.s32 %s17, %s29
    %s113 = ssub.s32 %s18, %s25
    %s114 = sor.u32 %s112, %s113
    %p115 = scmp.eq.s32.totalorder %s114, 0
    %s117 = sadd.s32 %s116, 1
    %s118 = scalar_select %p115, %s116, %s117
    %p121 = pneg %p115
    %p122 = scmp.eq.s32.totalorder %s10, 3
    %p123 = por %p121, %p122
    %p124 = scmp.ne.s32.totalorder %s116, %s119
    %p125 = scmp.eq.s32.totalorder %s10, 0
    %p126 = por %p124, %p125
    %p127 = scmp.ne.s32.totalorder %s116, %s119
    %p128 = scmp.eq.s32.totalorder %s15, 3
    %p129 = por %p127, %p128
    %p130 = scmp.ne.s32.totalorder %s119, %s120
    %p131 = scmp.eq.s32.totalorder %s15, 0
    %p132 = por %p130, %p131
    %p133 = scmp.ne.s32.totalorder %s119, %s120
    %p134 = scmp.eq.s32.totalorder %s16, 3
    %p135 = por %p133, %p134
    %p137 = scmp.ne.s32.totalorder %s120, %s136
    %p138 = scmp.eq.s32.totalorder %s16, 0
    %p139 = por %p137, %p138
    %p140 = scmp.le.s32.totalorder 1, %s10
    %p141 = scmp.lt.s32.totalorder %s10, 5
    %p142 = pnand %p140, %p141
    %p143 = pneg %p142
    // Predicated region
    $region9: #{generator_forward.10} parent=5 // pred_check
      _
    $region10: #{generator_forward.10} parent=5 // pred_check_branch
      %145 = sbr.rel (%p142) target = $region12
    $region11: #{generator_forward.10} parent=5 // pred_region
      %s146 = ssub.s32 %s10, 1
    $region12: #{generator_forward.10} parent=5 // pred_fallthru
      _
    %p147 = scmp.lt.s32.totalorder %s10, 4
    // Predicated region
    $region13: #{generator_forward.10} parent=5 // pred_check
      %p148 = pneg %p147
    $region14: #{generator_forward.10} parent=5 // pred_check_branch
      %150 = sbr.rel (%p148) target = $region16
    $region15: #{generator_forward.10} parent=5 // pred_region
      // Predicated region
      $region17: #{generator_forward.10} parent=15 // pred_check
        %p151 = pneg %p42
      $region18: #{generator_forward.10} parent=15 // pred_check_branch
        %153 = sbr.rel (%p151) target = $region20
      $region19: #{generator_forward.10} parent=15 // pred_region
        %p154 = scmp.lt.s32.totalorder %s17, 3
        %s155 = scalar_select %p154, %s17, 3
        %s156 = smul.addr %s155, 4
        %s157 = smul.addr %s156, 4
        %s158 = scalar_lea.vmem %s0, %s157
      $region20: #{generator_forward.10} parent=15 // pred_fallthru
        _
      // Predicated region
      $region21: #{generator_forward.10} parent=15 // pred_check
        %p159 = pneg %p70
      $region22: #{generator_forward.10} parent=15 // pred_check_branch
        %161 = sbr.rel (%p159) target = $region24
      $region23: #{generator_forward.10} parent=15 // pred_region
        %s162 = smul.u32 3, %s18
        %p163 = scmp.lt.s32.totalorder %s17, 3
        %s164 = scalar_select %p163, %s17, 3
        %p165 = scmp.lt.s32.totalorder %s162, 2
        %s166 = scalar_select %p165, %s162, 2
        %s167 = smul.addr %s164, 48
        %s168 = sadd.s32 %s166, %s167
        %s169 = smul.addr %s168, 4
        %s170 = scalar_lea.vmem %s1, %s169
        %s171 = smul.u32 3, %s18
      $region24: #{generator_forward.10} parent=15 // pred_fallthru
        _
    $region16: #{generator_forward.10} parent=5 // pred_fallthru
      _
    %p172 = scmp.le.s32.totalorder 1, %s10
    %p173 = scmp.lt.s32.totalorder %s10, 5
    %p174 = pnand %p172, %p173
    %p175 = pneg %p174
    // Predicated region
    $region25: #{generator_forward.10} parent=5 // pred_check
      _
    $region26: #{generator_forward.10} parent=5 // pred_check_branch
      %177 = sbr.rel (%p174) target = $region28
    $region27: #{generator_forward.10} parent=5 // pred_region
      %s178 = ssub.s32 %s10, 1
      %p179 = scmp.lt.s32.totalorder %s19, 3
      %s180 = scalar_select %p179, %s19, 3
      %s181 = smul.addr %s180, 4
      %s182 = smul.addr %s181, 4
      %s183 = scalar_lea.vmem %s0, %s182
      %p184 = pneg %p48
      %p185 = pneg %p45
      %s186 = smul.u32 3, %s20
      %p187 = scmp.lt.s32.totalorder %s19, 3
      %s188 = scalar_select %p187, %s19, 3
      %p189 = scmp.lt.s32.totalorder %s186, 2
      %s190 = scalar_select %p189, %s186, 2
      %s191 = smul.addr %s188, 48
      %s192 = sadd.s32 %s190, %s191
      %s193 = smul.addr %s192, 4
      %s194 = scalar_lea.vmem %s1, %s193
      %p195 = pneg %p76
      %p196 = pneg %p73
      %p197 = pneg %p104
      %p198 = pneg %p101
      %s199 = smul.u32 3, %s20
      %p200 = scmp.lt.s32.totalorder %s19, 3
      %s201 = scalar_select %p200, %s19, 3
      %p202 = scmp.lt.s32.totalorder %s199, 2
      %s203 = scalar_select %p202, %s199, 2
      %s204 = smul.addr %s201, 12
      %s205 = sadd.s32 %s203, %s204
      %s206 = smul.addr %s205, 4
      %s207 = scalar_lea.vmem %s2, %s206
      %p208 = pneg %p132
      %p209 = pneg %p129
      %p210 = scmp.lt.s32.totalorder %s19, 3
      %s211 = scalar_select %p210, %s19, 3
      %p212 = scmp.lt.s32.totalorder %s20, 0
      %s213 = scalar_select %p212, %s20, 0
      %s214 = smul.addr %s213, 8
      %s215 = smul.addr %s211, 8
      %s216 = sadd.s32 %s214, %s215
      %s217 = smul.addr %s216, 8
      %s218 = scalar_lea.vmem %s3, %s217
      %p219 = scmp.lt.s32.totalorder %s19, 3
      %s220 = scalar_select %p219, %s19, 3
      %s221 = smul.addr %s220, 4
      %s222 = smul.addr %s221, 4
      %s223 = scalar_lea.vmem %s0, %s222
      %s224 = smul.u32 3, %s20
      %p225 = scmp.lt.s32.totalorder %s19, 3
      %s226 = scalar_select %p225, %s19, 3
      %p227 = scmp.lt.s32.totalorder %s224, 2
      %s228 = scalar_select %p227, %s224, 2
      %s229 = smul.addr %s226, 48
      %s230 = sadd.s32 %s228, %s229
      %s231 = smul.addr %s230, 4
      %s232 = scalar_lea.vmem %s1, %s231
      %s233 = smul.u32 3, %s20
      %s234 = smul.u32 3, %s20
      %p235 = scmp.lt.s32.totalorder %s19, 3
      %s236 = scalar_select %p235, %s19, 3
      %p237 = scmp.lt.s32.totalorder %s234, 2
      %s238 = scalar_select %p237, %s234, 2
      %s239 = smul.addr %s236, 12
      %s240 = sadd.s32 %s238, %s239
      %s241 = smul.addr %s240, 4
      %s242 = scalar_lea.vmem %s2, %s241
      %s243 = smul.u32 3, %s20
      %p244 = scmp.lt.s32.totalorder %s19, 3
      %s245 = scalar_select %p244, %s19, 3
      %p246 = scmp.lt.s32.totalorder %s20, 0
      %s247 = scalar_select %p246, %s20, 0
      %s248 = smul.addr %s247, 8
      %s249 = smul.addr %s245, 8
      %s250 = sadd.s32 %s248, %s249
      %s251 = smul.addr %s250, 8
      %s252 = scalar_lea.vmem %s3, %s251
      %v254 = vld [vmem:[%s223] sm:$0xf]
      %v255 = vld [vmem:[%s223 + $0x4] sm:$0xf]
      %v256 = vld [vmem:[%s223 + $0x8] sm:$0xf]
      %v257 = vld [vmem:[%s223 + $0xc] sm:$0xf]
      %v258 = vld [vmem:[%s232] sm:$0xff]
      %v259 = vld [vmem:[%s232 + $0x8] sm:$0xf]
      %v260 = vld [vmem:[%s232 + $0xc] sm:$0xff]
      %v261 = vld [vmem:[%s232 + $0x14] sm:$0xf]
      %v262 = vld [vmem:[%s232 + $0x18] sm:$0xff]
      %v263 = vld [vmem:[%s232 + $0x20] sm:$0xf]
      %v264 = vld [vmem:[%s232 + $0x24] sm:$0xff]
      %v265 = vld [vmem:[%s232 + $0x2c] sm:$0xf]
      %v266 = vld [vmem:[%s232 + $0x30] sm:$0xff]
      %v267 = vld [vmem:[%s232 + $0x38] sm:$0xf]
      %v268 = vld [vmem:[%s232 + $0x3c] sm:$0xff]
      %v269 = vld [vmem:[%s232 + $0x44] sm:$0xf]
      %v270 = vld [vmem:[%s232 + $0x48] sm:$0xff]
      %v271 = vld [vmem:[%s232 + $0x50] sm:$0xf]
      %v272 = vld [vmem:[%s232 + $0x54] sm:$0xff]
      %v273 = vld [vmem:[%s232 + $0x5c] sm:$0xf]
      %v274 = vld [vmem:[%s232 + $0x60] sm:$0xff]
      %v275 = vld [vmem:[%s232 + $0x68] sm:$0xf]
      %v276 = vld [vmem:[%s232 + $0x6c] sm:$0xff]
      %v277 = vld [vmem:[%s232 + $0x74] sm:$0xf]
      %v278 = vld [vmem:[%s232 + $0x78] sm:$0xff]
      %v279 = vld [vmem:[%s232 + $0x80] sm:$0xf]
      %v280 = vld [vmem:[%s232 + $0x84] sm:$0xff]
      %v281 = vld [vmem:[%s232 + $0x8c] sm:$0xf]
      %v282 = vld [vmem:[%s232 + $0x90] sm:$0xff]
      %v283 = vld [vmem:[%s232 + $0x98] sm:$0xf]
      %v284 = vld [vmem:[%s232 + $0x9c] sm:$0xff]
      %v285 = vld [vmem:[%s232 + $0xa4] sm:$0xf]
      %v286 = vld [vmem:[%s232 + $0xa8] sm:$0xff]
      %v287 = vld [vmem:[%s232 + $0xb0] sm:$0xf]
      %v288 = vld [vmem:[%s232 + $0xb4] sm:$0xff]
      %v289 = vld [vmem:[%s232 + $0xbc] sm:$0xf]
      %v294 = vunpack.c.l.b16 %v254
      %v295 = vunpack.c.l.b16 %v255
      %v296 = vunpack.c.l.b16 %v256
      %v297 = vunpack.c.l.b16 %v257
      %v298 = vpack.c.b16 %v295, %v294
      %v299 = vpack.c.b16 %v297, %v296
      %v334 = vunpack.c.l.b16 %v258
      %v335 = vunpack.c.h.b16 %v258
      %v336 = vunpack.c.l.b16 %v259
      %v337 = vunpack.c.l.b16 %v260
      %v338 = vunpack.c.h.b16 %v260
      %v339 = vunpack.c.l.b16 %v261
      %v340 = vunpack.c.l.b16 %v262
      %v341 = vunpack.c.h.b16 %v262
      %v342 = vunpack.c.l.b16 %v263
      %v343 = vunpack.c.l.b16 %v264
      %v344 = vunpack.c.h.b16 %v264
      %v345 = vunpack.c.l.b16 %v265
      %v346 = vunpack.c.l.b16 %v266
      %v347 = vunpack.c.h.b16 %v266
      %v348 = vunpack.c.l.b16 %v267
      %v349 = vunpack.c.l.b16 %v268
      %v350 = vunpack.c.h.b16 %v268
      %v351 = vunpack.c.l.b16 %v269
      %v352 = vunpack.c.l.b16 %v270
      %v353 = vunpack.c.h.b16 %v270
      %v354 = vunpack.c.l.b16 %v271
      %v355 = vunpack.c.l.b16 %v272
      %v356 = vunpack.c.h.b16 %v272
      %v357 = vunpack.c.l.b16 %v273
      %v358 = vunpack.c.l.b16 %v274
      %v359 = vunpack.c.h.b16 %v274
      %v360 = vunpack.c.l.b16 %v275
      %v361 = vunpack.c.l.b16 %v276
      %v362 = vunpack.c.h.b16 %v276
      %v363 = vunpack.c.l.b16 %v277
      %v364 = vunpack.c.l.b16 %v278
      %v365 = vunpack.c.h.b16 %v278
      %v366 = vunpack.c.l.b16 %v279
      %v367 = vunpack.c.l.b16 %v280
      %v368 = vunpack.c.h.b16 %v280
      %v369 = vunpack.c.l.b16 %v281
      %v370 = vunpack.c.l.b16 %v282
      %v371 = vunpack.c.h.b16 %v282
      %v372 = vunpack.c.l.b16 %v283
      %v373 = vunpack.c.l.b16 %v284
      %v374 = vunpack.c.h.b16 %v284
      %v375 = vunpack.c.l.b16 %v285
      %v376 = vunpack.c.l.b16 %v286
      %v377 = vunpack.c.h.b16 %v286
      %v378 = vunpack.c.l.b16 %v287
      %v379 = vunpack.c.l.b16 %v288
      %v380 = vunpack.c.h.b16 %v288
      %v381 = vunpack.c.l.b16 %v289
      %v382 = vpack.c.b16 %v337, %v334
      %v383 = vpack.c.b16 %v338, %v335
      %v384 = vpack.c.b16 %v339, %v336
      %v385 = vpack.c.b16 %v343, %v340
      %v386 = vpack.c.b16 %v344, %v341
      %v387 = vpack.c.b16 %v345, %v342
      %v388 = vpack.c.b16 %v349, %v346
      %v389 = vpack.c.b16 %v350, %v347
      %v390 = vpack.c.b16 %v351, %v348
      %v391 = vpack.c.b16 %v355, %v352
      %v392 = vpack.c.b16 %v356, %v353
      %v393 = vpack.c.b16 %v357, %v354
      %v394 = vpack.c.b16 %v361, %v358
      %v395 = vpack.c.b16 %v362, %v359
      %v396 = vpack.c.b16 %v363, %v360
      %v397 = vpack.c.b16 %v367, %v364
      %v398 = vpack.c.b16 %v368, %v365
      %v399 = vpack.c.b16 %v369, %v366
      %v400 = vpack.c.b16 %v373, %v370
      %v401 = vpack.c.b16 %v374, %v371
      %v402 = vpack.c.b16 %v375, %v372
      %v403 = vpack.c.b16 %v379, %v376
      %v404 = vpack.c.b16 %v380, %v377
      %v405 = vpack.c.b16 %v381, %v378
      %430 = vmatprep.subr.bf16.mxu0 %v383
      %431 = vmatpush1.bf16.msra.mxu0 %v382
      %432 = vmatprep.subr.bf16.mxu0 %v386
      %433 = vmatpush1.bf16.msra.mxu0 %v385
      %434 = vmatprep.subr.bf16.mxu0 %v389
      %435 = vmatpush1.bf16.msra.mxu0 %v388
      %436 = vmatprep.subr.bf16.mxu0 %v392
      %437 = vmatpush1.bf16.msra.mxu0 %v391
      %438 = vmatprep.subr.bf16.mxu0 %v395
      %439 = vmatpush1.bf16.msra.mxu0 %v394
      %440 = vmatprep.subr.bf16.mxu0 %v398
      %441 = vmatpush1.bf16.msra.mxu0 %v397
      %442 = vmatprep.subr.bf16.mxu0 %v401
      %443 = vmatpush1.bf16.msra.mxu0 %v400
      %444 = vmatprep.subr.bf16.mxu0 %v404
      %445 = vmatpush1.bf16.msra.mxu0 %v403
      %446 = vmatprep.subr.bf16.mxu0 0
      %447 = vmatpush1.bf16.msra.mxu0 0
      %448 = vmatprep.subr.bf16.mxu0 0
      %449 = vmatpush1.bf16.msra.mxu0 0
      %450 = vmatprep.subr.bf16.mxu0 0
      %451 = vmatpush1.bf16.msra.mxu0 0
      %452 = vmatprep.subr.bf16.mxu0 0
      %453 = vmatpush1.bf16.msra.mxu0 0
      %454 = vmatprep.subr.bf16.mxu0 0
      %455 = vmatpush1.bf16.msra.mxu0 0
      %456 = vmatprep.subr.bf16.mxu0 0
      %457 = vmatpush1.bf16.msra.mxu0 0
      %458 = vmatprep.subr.bf16.mxu0 0
      %459 = vmatpush1.bf16.msra.mxu0 0
      %460 = vmatprep.subr.bf16.mxu0 0
      %461 = vmatpush1.bf16.msra.mxu0 0
      %462 = vmatprep.mubr.bf16.mxu0 0
      %463 = vmatmul.mubr.bf16.gmra.mrb[0].mxu0 %v298
      %v464 = vpop.f32.mrb[0].mxu0
      %v465 = vadd.f32 0.0, %v464
      %v466 = vpop.f32.mrb[0].mxu0
      %v467 = vadd.f32 0.0, %v466
      %v468 = vpop.f32.mrb[0].mxu0
      %v469 = vadd.f32 0.0, %v468
      %v470 = vpop.f32.mrb[0].mxu0
      %v471 = vadd.f32 0.0, %v470
      %472 = vmatprep.mubr.bf16.mxu0 0
      %473 = vmatmul.mubr.bf16.gmra.mrb[0].mxu0 %v299
      %v474 = vpop.f32.mrb[0].mxu0
      %v475 = vadd.f32 0.0, %v474
      %v476 = vpop.f32.mrb[0].mxu0
      %v477 = vadd.f32 0.0, %v476
      %v478 = vpop.f32.mrb[0].mxu0
      %v479 = vadd.f32 0.0, %v478
      %v480 = vpop.f32.mrb[0].mxu0
      %v481 = vadd.f32 0.0, %v480
      %482 = vdwg.mxu0
      %483 = vmatprep.subr.bf16.mxu0 0
      %484 = vmatpush1.bf16.msra.mxu0 %v384
      %485 = vmatprep.subr.bf16.mxu0 0
      %486 = vmatpush1.bf16.msra.mxu0 %v387
      %487 = vmatprep.subr.bf16.mxu0 0
      %488 = vmatpush1.bf16.msra.mxu0 %v390
      %489 = vmatprep.subr.bf16.mxu0 0
      %490 = vmatpush1.bf16.msra.mxu0 %v393
      %491 = vmatprep.subr.bf16.mxu0 0
      %492 = vmatpush1.bf16.msra.mxu0 %v396
      %493 = vmatprep.subr.bf16.mxu0 0
      %494 = vmatpush1.bf16.msra.mxu0 %v399
      %495 = vmatprep.subr.bf16.mxu0 0
      %496 = vmatpush1.bf16.msra.mxu0 %v402
      %497 = vmatprep.subr.bf16.mxu0 0
      %498 = vmatpush1.bf16.msra.mxu0 %v405
      %499 = vmatprep.subr.bf16.mxu0 0
      %500 = vmatpush1.bf16.msra.mxu0 0
      %501 = vmatprep.subr.bf16.mxu0 0
      %502 = vmatpush1.bf16.msra.mxu0 0
      %503 = vmatprep.subr.bf16.mxu0 0
      %504 = vmatpush1.bf16.msra.mxu0 0
      %505 = vmatprep.subr.bf16.mxu0 0
      %506 = vmatpush1.bf16.msra.mxu0 0
      %507 = vmatprep.subr.bf16.mxu0 0
      %508 = vmatpush1.bf16.msra.mxu0 0
      %509 = vmatprep.subr.bf16.mxu0 0
      %510 = vmatpush1.bf16.msra.mxu0 0
      %511 = vmatprep.subr.bf16.mxu0 0
      %512 = vmatpush1.bf16.msra.mxu0 0
      %513 = vmatprep.subr.bf16.mxu0 0
      %514 = vmatpush1.bf16.msra.mxu0 0
      %515 = vmatprep.mubr.bf16.mxu0 0
      %516 = vmatmul.mubr.bf16.gmra.mrb[0].mxu0 %v298
      %v517 = vpop.f32.mrb[0].mxu0
      %v518 = vadd.f32 0.0, %v517
      %v519 = vpop.f32.mrb[0].mxu0
      %v520 = vpop.f32.mrb[0].mxu0
      %v521 = vadd.f32 0.0, %v520
      %v522 = vpop.f32.mrb[0].mxu0
      %523 = vmatprep.mubr.bf16.mxu0 0
      %524 = vmatmul.mubr.bf16.gmra.mrb[0].mxu0 %v299
      %v525 = vpop.f32.mrb[0].mxu0
      %v526 = vadd.f32 0.0, %v525
      %v527 = vpop.f32.mrb[0].mxu0
      %v528 = vpop.f32.mrb[0].mxu0
      %v529 = vadd.f32 0.0, %v528
      %v530 = vpop.f32.mrb[0].mxu0
      %531 = vdwg.mxu0
      %v532 = vpack.c.bf16 %v469, %v465
      %v533 = vpack.c.bf16 %v471, %v467
      %v534 = vpack.c.bf16 %v521, %v518
      %v535 = vpack.c.bf16 %v479, %v475
      %v536 = vpack.c.bf16 %v481, %v477
      %v537 = vpack.c.bf16 %v529, %v526
      %v544 = vunpack.c.l.b16 %v532
      %v545 = vunpack.c.l.b16 %v533
      %v546 = vunpack.c.l.b16 %v534
      %v547 = vunpack.c.h.b16 %v532
      %v548 = vunpack.c.h.b16 %v533
      %v549 = vunpack.c.h.b16 %v534
      %v550 = vunpack.c.l.b16 %v535
      %v551 = vunpack.c.l.b16 %v536
      %v552 = vunpack.c.l.b16 %v537
      %v553 = vunpack.c.h.b16 %v535
      %v554 = vunpack.c.h.b16 %v536
      %v555 = vunpack.c.h.b16 %v537
      %v556 = vpack.c.b16 %v545, %v544
      %v557 = vpack.c.b16 %v546, %v546
      %v558 = vpack.c.b16 %v548, %v547
      %v559 = vpack.c.b16 %v549, %v549
      %v560 = vpack.c.b16 %v551, %v550
      %v561 = vpack.c.b16 %v552, %v552
      %v562 = vpack.c.b16 %v554, %v553
      %v563 = vpack.c.b16 %v555, %v555
      %572 = vst [vmem:[%s242] sm:$0xff] %v556
      %573 = vst [vmem:[%s242 + $0x8] sm:$0xf] %v557
      %574 = vst [vmem:[%s242 + $0xc] sm:$0xff] %v558
      %575 = vst [vmem:[%s242 + $0x14] sm:$0xf] %v559
      %576 = vst [vmem:[%s242 + $0x18] sm:$0xff] %v560
      %577 = vst [vmem:[%s242 + $0x20] sm:$0xf] %v561
      %578 = vst [vmem:[%s242 + $0x24] sm:$0xff] %v562
      %579 = vst [vmem:[%s242 + $0x2c] sm:$0xf] %v563
      %v580 = vadd.f32 %v465, %v467
      %v581 = vadd.f32 %v580, %v518
      %582 = vadd.xlane.f32.xlu0 %v581
      %v583 = vpop.xlane.xlu0 %582
      %v584 = vadd.f32 %v469, %v471
      %v585 = vadd.f32 %v584, %v521
      %586 = vadd.xlane.f32.xlu0 %v585
      %v587 = vpop.xlane.xlu0 %586
      %v588 = vadd.f32 %v475, %v477
      %v589 = vadd.f32 %v588, %v526
      %590 = vadd.xlane.f32.xlu0 %v589
      %v591 = vpop.xlane.xlu0 %590
      %v592 = vadd.f32 %v479, %v481
      %v593 = vadd.f32 %v592, %v529
      %594 = vadd.xlane.f32.xlu0 %v593
      %v595 = vpop.xlane.xlu0 %594
      %v596 = vmul.f32 %v465, %v465
      %v597 = vmul.f32 %v467, %v467
      %v598 = vmul.f32 %v518, %v518
      %v599 = vmul.f32 %v469, %v469
      %v600 = vmul.f32 %v471, %v471
      %v601 = vmul.f32 %v521, %v521
      %v602 = vmul.f32 %v475, %v475
      %v603 = vmul.f32 %v477, %v477
      %v604 = vmul.f32 %v526, %v526
      %v605 = vmul.f32 %v479, %v479
      %v606 = vmul.f32 %v481, %v481
      %v607 = vmul.f32 %v529, %v529
      %v608 = vadd.f32 %v596, %v597
      %v609 = vadd.f32 %v608, %v598
      %610 = vadd.xlane.f32.xlu0 %v609
      %v611 = vpop.xlane.xlu0 %610
      %v612 = vadd.f32 %v599, %v600
      %v613 = vadd.f32 %v612, %v601
      %614 = vadd.xlane.f32.xlu0 %v613
      %v615 = vpop.xlane.xlu0 %614
      %v616 = vadd.f32 %v602, %v603
      %v617 = vadd.f32 %v616, %v604
      %618 = vadd.xlane.f32.xlu0 %v617
      %v619 = vpop.xlane.xlu0 %618
      %v620 = vadd.f32 %v605, %v606
      %v621 = vadd.f32 %v620, %v607
      %622 = vadd.xlane.f32.xlu0 %v621
      %v623 = vpop.xlane.xlu0 %622
      %625 = vset.pattern.permute.xlu0 0
      %626 = vperm.xlu0 %625, %v583
      %v627 = vpop.permute.xlu0 %626
      %630 = vset.pattern.permute.xlu0 0
      %631 = vperm.xlu0 %630, %v587
      %v632 = vpop.permute.xlu0 %631
      %635 = vset.pattern.permute.xlu0 0
      %636 = vperm.xlu0 %635, %v591
      %v637 = vpop.permute.xlu0 %636
      %640 = vset.pattern.permute.xlu0 0
      %641 = vperm.xlu0 %640, %v595
      %v642 = vpop.permute.xlu0 %641
      %645 = vset.pattern.permute.xlu0 0
      %646 = vperm.xlu0 %645, %v611
      %v647 = vpop.permute.xlu0 %646
      %650 = vset.pattern.permute.xlu0 0
      %651 = vperm.xlu0 %650, %v615
      %v652 = vpop.permute.xlu0 %651
      %655 = vset.pattern.permute.xlu0 0
      %656 = vperm.xlu0 %655, %v619
      %v657 = vpop.permute.xlu0 %656
      %660 = vset.pattern.permute.xlu0 0
      %661 = vperm.xlu0 %660, %v623
      %v662 = vpop.permute.xlu0 %661
      %664 = vst [vmem:[%s252] sm:$0xff] %v627
      %665 = vst [vmem:[%s252 + $0x8] sm:$0xff] %v632
      %666 = vst [vmem:[%s252 + $0x10] sm:$0xff] %v637
      %667 = vst [vmem:[%s252 + $0x18] sm:$0xff] %v642
      %668 = vst [vmem:[%s252 + $0x20] sm:$0xff] %v647
      %669 = vst [vmem:[%s252 + $0x28] sm:$0xff] %v652
      %670 = vst [vmem:[%s252 + $0x30] sm:$0xff] %v657
      %671 = vst [vmem:[%s252 + $0x38] sm:$0xff] %v662
      %s672 = smul.u32 3, %s20
      %p673 = scmp.lt.s32.totalorder %s19, 3
      %s674 = scalar_select %p673, %s19, 3
      %p675 = scmp.lt.s32.totalorder %s672, 2
      %s676 = scalar_select %p675, %s672, 2
      %s677 = smul.addr %s674, 12
      %s678 = sadd.s32 %s676, %s677
      %s679 = smul.addr %s678, 4
      %s680 = scalar_lea.vmem %s2, %s679
      %p681 = scmp.lt.s32.totalorder %s19, 3
      %s682 = scalar_select %p681, %s19, 3
      %p683 = scmp.lt.s32.totalorder %s20, 0
      %s684 = scalar_select %p683, %s20, 0
      %s685 = smul.addr %s684, 8
      %s686 = smul.addr %s682, 8
      %s687 = sadd.s32 %s685, %s686
      %s688 = smul.addr %s687, 8
      %s689 = scalar_lea.vmem %s3, %s688
      // Predicated region
      $region29: #{generator_forward.10} parent=27 // pred_check
        %p690 = pneg %p101
      $region30: #{generator_forward.10} parent=27 // pred_check_branch
        %692 = sbr.rel (%p690) target = $region32
      $region31: #{generator_forward.10} parent=27 // pred_region
        %s693 = smul.u32 3, %s20
      $region32: #{generator_forward.10} parent=27 // pred_fallthru
        _
      // Predicated region
      $region33: #{generator_forward.10} parent=27 // pred_check
        %p694 = pneg %p129
      $region34: #{generator_forward.10} parent=27 // pred_check_branch
        %696 = sbr.rel (%p694) target = $region36
      $region35: #{generator_forward.10} parent=27 // pred_region
        _
      $region36: #{generator_forward.10} parent=27 // pred_fallthru
        _
    $region28: #{generator_forward.10} parent=5 // pred_fallthru
      _
    %p697 = scmp.le.s32.totalorder 2, %s10
    // Predicated region
    $region37: #{generator_forward.10} parent=5 // pred_check
      %p698 = pneg %p697
    $region38: #{generator_forward.10} parent=5 // pred_check_branch
      %700 = sbr.rel (%p698) target = $region40
    $region39: #{generator_forward.10} parent=5 // pred_region
      %s701 = ssub.s32 %s10, 2
      // Predicated region
      $region41: #{generator_forward.10} parent=39 // pred_check
        %p702 = pneg %p107
      $region42: #{generator_forward.10} parent=39 // pred_check_branch
        %704 = sbr.rel (%p702) target = $region44
      $region43: #{generator_forward.10} parent=39 // pred_region
        %s705 = smul.u32 3, %s22
        %p706 = scmp.lt.s32.totalorder %s21, 3
        %s707 = scalar_select %p706, %s21, 3
        %p708 = scmp.lt.s32.totalorder %s705, 2
        %s709 = scalar_select %p708, %s705, 2
        %s710 = smul.addr %s707, 12
        %s711 = sadd.s32 %s709, %s710
        %s712 = smul.addr %s711, 4
        %s713 = scalar_lea.vmem %s2, %s712
      $region44: #{generator_forward.10} parent=39 // pred_fallthru
        _
      // Predicated region
      $region45: #{generator_forward.10} parent=39 // pred_check
        %p714 = pneg %p135
      $region46: #{generator_forward.10} parent=39 // pred_check_branch
        %716 = sbr.rel (%p714) target = $region48
      $region47: #{generator_forward.10} parent=39 // pred_region
        %p717 = scmp.lt.s32.totalorder %s21, 3
        %s718 = scalar_select %p717, %s21, 3
        %p719 = scmp.lt.s32.totalorder %s22, 0
        %s720 = scalar_select %p719, %s22, 0
        %s721 = smul.addr %s720, 8
        %s722 = smul.addr %s718, 8
        %s723 = sadd.s32 %s721, %s722
        %s724 = smul.addr %s723, 8
        %s725 = scalar_lea.vmem %s3, %s724
      $region48: #{generator_forward.10} parent=39 // pred_fallthru
        _
    $region40: #{generator_forward.10} parent=5 // pred_fallthru
      _
  $region6: #{generator_forward.10} parent=0 // loop_footer
    %s14 = sadd.s32 1, %s10
  $region7: #{generator_forward.10} parent=0 // loop_footer_branch
    %9 = sbr.rel target = $region3
  $region8: #{generator_forward.10} parent=0 // loop_exit
    _

// kernel: generator_forward.11
$region0: #{generator_forward.11}
  #allocation0 [shape = 'u32[]', space=smem, size = 0x4, offset = 0x4, fixed_abs, tag = 'smem constant byte address 0x4 - core index']
  #allocation1 [shape = 'u32[144,128]{1,0:T(1,128)}', space=vmem, size = 0x12000, scoped, tag = 'internal scratch']
  %s0 = inlined_call_operand.vmem [shape: bf16[4,16,128], index: 0, kind: input, shape index: {}]
  %s1 = inlined_call_operand.vmem [shape: bf16[4,128,1152], index: 1, kind: input, shape index: {}]
  %s2 = inlined_call_operand.vmem [shape: bf16[4,16,1152], index: 2, kind: output, shape index: {0}]
  %s3 = inlined_call_operand.vmem [shape: f32[4,1,32,128], index: 3, kind: output, shape index: {1}]
  %4 = xla_tuple %s2, %s3
  %s5 = sld [smem:[#allocation0]]
  $region49: #{generator_forward.11} parent=0
    _
  %s7 = ssub.s32 1, %s5
  %s8 = scalar_select 0, %s7, %s5
  loop: start=0, step=1, limit=6
  $region2: #{generator_forward.11} parent=0 // loop_pre_header
    _
  $region3: #{generator_forward.11} parent=0 // loop_header
    %s10 = sphi 0, %s14
    %p11 = scmp.ge.s32.totalorder %s10, 6
    %s17 = sphi 0, %s29
    %s18 = sphi 0, %s25
    %s19 = sphi 0, %s17
    %s20 = sphi 0, %s18
    %s21 = sphi 0, %s19
    %s22 = sphi 0, %s20
    %s32 = sphi 0, %s34
    %s35 = sphi 0, %s32
    %s36 = sphi 0, %s35
    %s52 = sphi 0, %s36
    %s60 = sphi 0, %s62
    %s63 = sphi 0, %s60
    %s64 = sphi 0, %s63
    %s80 = sphi 0, %s64
    %s88 = sphi 0, %s90
    %s91 = sphi 0, %s88
    %s92 = sphi 0, %s91
    %s108 = sphi 0, %s92
    %s116 = sphi 0, %s118
    %s119 = sphi 0, %s116
    %s120 = sphi 0, %s119
    %s136 = sphi 0, %s120
  $region4: #{generator_forward.11} parent=0 // loop_header_branch
    %13 = sbr.rel (%p11) target = $region8
  $region5: #{generator_forward.11} parent=0 // loop_body
    %s15 = ssub.s32 %s10, 1
    %s16 = ssub.s32 %s10, 2
    %s23 = sadd.s32 1, %s18
    %p24 = scmp.ge.s32.totalorder %s23, 1
    %s25 = scalar_select %p24, 0, %s23
    %s26 = sadd.s32 1, %s17
    %s27 = scalar_select %p24, %s26, %s17
    %p28 = scmp.ge.s32.totalorder %s27, 4
    %s29 = scalar_select %p28, 0, %s27
    %s30 = ssub.s32 %s17, %s29
    %p31 = scmp.eq.s32.totalorder %s30, 0
    %s33 = sadd.s32 %s32, 1
    %s34 = scalar_select %p31, %s32, %s33
    %p37 = pneg %p31
    %p38 = scmp.eq.s32.totalorder %s10, 3
    %p39 = por %p37, %p38
    %p40 = scmp.ne.s32.totalorder %s32, %s35
    %p41 = scmp.eq.s32.totalorder %s10, 0
    %p42 = por %p40, %p41
    %p43 = scmp.ne.s32.totalorder %s32, %s35
    %p44 = scmp.eq.s32.totalorder %s15, 3
    %p45 = por %p43, %p44
    %p46 = scmp.ne.s32.totalorder %s35, %s36
    %p47 = scmp.eq.s32.totalorder %s15, 0
    %p48 = por %p46, %p47
    %p49 = scmp.ne.s32.totalorder %s35, %s36
    %p50 = scmp.eq.s32.totalorder %s16, 3
    %p51 = por %p49, %p50
    %p53 = scmp.ne.s32.totalorder %s36, %s52
    %p54 = scmp.eq.s32.totalorder %s16, 0
    %p55 = por %p53, %p54
    %s56 = ssub.s32 %s17, %s29
    %s57 = ssub.s32 %s18, %s25
    %s58 = sor.u32 %s56, %s57
    %p59 = scmp.eq.s32.totalorder %s58, 0
    %s61 = sadd.s32 %s60, 1
    %s62 = scalar_select %p59, %s60, %s61
    %p65 = pneg %p59
    %p66 = scmp.eq.s32.totalorder %s10, 3
    %p67 = por %p65, %p66
    %p68 = scmp.ne.s32.totalorder %s60, %s63
    %p69 = scmp.eq.s32.totalorder %s10, 0
    %p70 = por %p68, %p69
    %p71 = scmp.ne.s32.totalorder %s60, %s63
    %p72 = scmp.eq.s32.totalorder %s15, 3
    %p73 = por %p71, %p72
    %p74 = scmp.ne.s32.totalorder %s63, %s64
    %p75 = scmp.eq.s32.totalorder %s15, 0
    %p76 = por %p74, %p75
    %p77 = scmp.ne.s32.totalorder %s63, %s64
    %p78 = scmp.eq.s32.totalorder %s16, 3
    %p79 = por %p77, %p78
    %p81 = scmp.ne.s32.totalorder %s64, %s80
    %p82 = scmp.eq.s32.totalorder %s16, 0
    %p83 = por %p81, %p82
    %s84 = ssub.s32 %s17, %s29
    %s85 = ssub.s32 %s18, %s25
    %s86 = sor.u32 %s84, %s85
    %p87 = scmp.eq.s32.totalorder %s86, 0
    %s89 = sadd.s32 %s88, 1
    %s90 = scalar_select %p87, %s88, %s89
    %p93 = pneg %p87
    %p94 = scmp.eq.s32.totalorder %s10, 3
    %p95 = por %p93, %p94
    %p96 = scmp.ne.s32.totalorder %s88, %s91
    %p97 = scmp.eq.s32.totalorder %s10, 0
    %p98 = por %p96, %p97
    %p99 = scmp.ne.s32.totalorder %s88, %s91
    %p100 = scmp.eq.s32.totalorder %s15, 3
    %p101 = por %p99, %p100
    %p102 = scmp.ne.s32.totalorder %s91, %s92
    %p103 = scmp.eq.s32.totalorder %s15, 0
    %p104 = por %p102, %p103
    %p105 = scmp.ne.s32.totalorder %s91, %s92
    %p106 = scmp.eq.s32.totalorder %s16, 3
    %p107 = por %p105, %p106
    %p109 = scmp.ne.s32.totalorder %s92, %s108
    %p110 = scmp.eq.s32.totalorder %s16, 0
    %p111 = por %p109, %p110
    %s112 = ssub.s32 %s17, %s29
    %s113 = ssub.s32 %s18, %s25
    %s114 = sor.u32 %s112, %s113
    %p115 = scmp.eq.s32.totalorder %s114, 0
    %s117 = sadd.s32 %s116, 1
    %s118 = scalar_select %p115, %s116, %s117
    %p121 = pneg %p115
    %p122 = scmp.eq.s32.totalorder %s10, 3
    %p123 = por %p121, %p122
    %p124 = scmp.ne.s32.totalorder %s116, %s119
    %p125 = scmp.eq.s32.totalorder %s10, 0
    %p126 = por %p124, %p125
    %p127 = scmp.ne.s32.totalorder %s116, %s119
    %p128 = scmp.eq.s32.totalorder %s15, 3
    %p129 = por %p127, %p128
    %p130 = scmp.ne.s32.totalorder %s119, %s120
    %p131 = scmp.eq.s32.totalorder %s15, 0
    %p132 = por %p130, %p131
    %p133 = scmp.ne.s32.totalorder %s119, %s120
    %p134 = scmp.eq.s32.totalorder %s16, 3
    %p135 = por %p133, %p134
    %p137 = scmp.ne.s32.totalorder %s120, %s136
    %p138 = scmp.eq.s32.totalorder %s16, 0
    %p139 = por %p137, %p138
    %p140 = scmp.le.s32.totalorder 1, %s10
    %p141 = scmp.lt.s32.totalorder %s10, 5
    %p142 = pnand %p140, %p141
    %p143 = pneg %p142
    // Predicated region
    $region9: #{generator_forward.11} parent=5 // pred_check
      _
    $region10: #{generator_forward.11} parent=5 // pred_check_branch
      %145 = sbr.rel (%p142) target = $region12
    $region11: #{generator_forward.11} parent=5 // pred_region
      %s146 = ssub.s32 %s10, 1
    $region12: #{generator_forward.11} parent=5 // pred_fallthru
      _
    %p147 = scmp.lt.s32.totalorder %s10, 4
    // Predicated region
    $region13: #{generator_forward.11} parent=5 // pred_check
      %p148 = pneg %p147
    $region14: #{generator_forward.11} parent=5 // pred_check_branch
      %150 = sbr.rel (%p148) target = $region16
    $region15: #{generator_forward.11} parent=5 // pred_region
      // Predicated region
      $region17: #{generator_forward.11} parent=15 // pred_check
        %p151 = pneg %p42
      $region18: #{generator_forward.11} parent=15 // pred_check_branch
        %153 = sbr.rel (%p151) target = $region20
      $region19: #{generator_forward.11} parent=15 // pred_region
        %p154 = scmp.lt.s32.totalorder %s17, 3
        %s155 = scalar_select %p154, %s17, 3
        %s156 = smul.addr %s155, 2
        %s157 = smul.addr %s156, 4
        %s158 = scalar_lea.vmem %s0, %s157
      $region20: #{generator_forward.11} parent=15 // pred_fallthru
        _
      // Predicated region
      $region21: #{generator_forward.11} parent=15 // pred_check
        %p159 = pneg %p70
      $region22: #{generator_forward.11} parent=15 // pred_check_branch
        %161 = sbr.rel (%p159) target = $region24
      $region23: #{generator_forward.11} parent=15 // pred_region
        %s162 = smul.u32 9, %s18
        %p163 = scmp.lt.s32.totalorder %s17, 3
        %s164 = scalar_select %p163, %s17, 3
        %p165 = scmp.lt.s32.totalorder %s162, 8
        %s166 = scalar_select %p165, %s162, 8
        %s167 = smul.addr %s164, 144
        %s168 = sadd.s32 %s166, %s167
        %s169 = smul.addr %s168, 4
        %s170 = scalar_lea.vmem %s1, %s169
        %s171 = smul.u32 9, %s18
      $region24: #{generator_forward.11} parent=15 // pred_fallthru
        _
    $region16: #{generator_forward.11} parent=5 // pred_fallthru
      _
    %p172 = scmp.le.s32.totalorder 1, %s10
    %p173 = scmp.lt.s32.totalorder %s10, 5
    %p174 = pnand %p172, %p173
    %p175 = pneg %p174
    // Predicated region
    $region25: #{generator_forward.11} parent=5 // pred_check
      _
    $region26: #{generator_forward.11} parent=5 // pred_check_branch
      %177 = sbr.rel (%p174) target = $region28
    $region27: #{generator_forward.11} parent=5 // pred_region
      %s178 = ssub.s32 %s10, 1
      %p179 = scmp.lt.s32.totalorder %s19, 3
      %s180 = scalar_select %p179, %s19, 3
      %s181 = smul.addr %s180, 2
      %s182 = smul.addr %s181, 4
      %s183 = scalar_lea.vmem %s0, %s182
      %p184 = pneg %p48
      %p185 = pneg %p45
      %s186 = smul.u32 9, %s20
      %p187 = scmp.lt.s32.totalorder %s19, 3
      %s188 = scalar_select %p187, %s19, 3
      %p189 = scmp.lt.s32.totalorder %s186, 8
      %s190 = scalar_select %p189, %s186, 8
      %s191 = smul.addr %s188, 144
      %s192 = sadd.s32 %s190, %s191
      %s193 = smul.addr %s192, 4
      %s194 = scalar_lea.vmem %s1, %s193
      %p195 = pneg %p76
      %p196 = pneg %p73
      %p197 = pneg %p104
      %p198 = pneg %p101
      %s199 = smul.u32 9, %s20
      %p200 = scmp.lt.s32.totalorder %s19, 3
      %s201 = scalar_select %p200, %s19, 3
      %p202 = scmp.lt.s32.totalorder %s199, 8
      %s203 = scalar_select %p202, %s199, 8
      %s204 = smul.addr %s201, 18
      %s205 = sadd.s32 %s203, %s204
      %s206 = smul.addr %s205, 4
      %s207 = scalar_lea.vmem %s2, %s206
      %p208 = pneg %p132
      %p209 = pneg %p129
      %p210 = scmp.lt.s32.totalorder %s19, 3
      %s211 = scalar_select %p210, %s19, 3
      %p212 = scmp.lt.s32.totalorder %s20, 0
      %s213 = scalar_select %p212, %s20, 0
      %s214 = smul.addr %s213, 4
      %s215 = smul.addr %s211, 4
      %s216 = sadd.s32 %s214, %s215
      %s217 = smul.addr %s216, 8
      %s218 = scalar_lea.vmem %s3, %s217
      %p219 = scmp.lt.s32.totalorder %s19, 3
      %s220 = scalar_select %p219, %s19, 3
      %s221 = smul.addr %s220, 2
      %s222 = smul.addr %s221, 4
      %s223 = scalar_lea.vmem %s0, %s222
      %s224 = smul.u32 9, %s20
      %p225 = scmp.lt.s32.totalorder %s19, 3
      %s226 = scalar_select %p225, %s19, 3
      %p227 = scmp.lt.s32.totalorder %s224, 8
      %s228 = scalar_select %p227, %s224, 8
      %s229 = smul.addr %s226, 144
      %s230 = sadd.s32 %s228, %s229
      %s231 = smul.addr %s230, 4
      %s232 = scalar_lea.vmem %s1, %s231
      %s233 = smul.u32 9, %s20
      %s234 = smul.u32 9, %s20
      %p235 = scmp.lt.s32.totalorder %s19, 3
      %s236 = scalar_select %p235, %s19, 3
      %p237 = scmp.lt.s32.totalorder %s234, 8
      %s238 = scalar_select %p237, %s234, 8
      %s239 = smul.addr %s236, 18
      %s240 = sadd.s32 %s238, %s239
      %s241 = smul.addr %s240, 4
      %s242 = scalar_lea.vmem %s2, %s241
      %s243 = smul.u32 9, %s20
      %p244 = scmp.lt.s32.totalorder %s19, 3
      %s245 = scalar_select %p244, %s19, 3
      %p246 = scmp.lt.s32.totalorder %s20, 0
      %s247 = scalar_select %p246, %s20, 0
      %s248 = smul.addr %s247, 4
      %s249 = smul.addr %s245, 4
      %s250 = sadd.s32 %s248, %s249
      %s251 = smul.addr %s250, 8
      %s252 = scalar_lea.vmem %s3, %s251
      %v254 = vld [vmem:[%s223] sm:$0xf]
      %v255 = vld [vmem:[%s223 + $0x4] sm:$0xf]
      %v256 = vld [vmem:[%s232] sm:$0xff]
      %v257 = vld [vmem:[%s232 + $0x8] sm:$0xff]
      %v258 = vld [vmem:[%s232 + $0x10] sm:$0xff]
      %v259 = vld [vmem:[%s232 + $0x18] sm:$0xff]
      %v260 = vld [vmem:[%s232 + $0x20] sm:$0xf]
      %v261 = vld [vmem:[%s232 + $0x24] sm:$0xff]
      %v262 = vld [vmem:[%s232 + $0x2c] sm:$0xff]
      %v263 = vld [vmem:[%s232 + $0x34] sm:$0xff]
      %v264 = vld [vmem:[%s232 + $0x3c] sm:$0xff]
      %v265 = vld [vmem:[%s232 + $0x44] sm:$0xf]
      %v266 = vld [vmem:[%s232 + $0x48] sm:$0xff]
      %v267 = vld [vmem:[%s232 + $0x50] sm:$0xff]
      %v268 = vld [vmem:[%s232 + $0x58] sm:$0xff]
      %v269 = vld [vmem:[%s232 + $0x60] sm:$0xff]
      %v270 = vld [vmem:[%s232 + $0x68] sm:$0xf]
      %v271 = vld [vmem:[%s232 + $0x6c] sm:$0xff]
      %v272 = vld [vmem:[%s232 + $0x74] sm:$0xff]
      %v273 = vld [vmem:[%s232 + $0x7c] sm:$0xff]
      %v274 = vld [vmem:[%s232 + $0x84] sm:$0xff]
      %v275 = vld [vmem:[%s232 + $0x8c] sm:$0xf]
      %v276 = vld [vmem:[%s232 + $0x90] sm:$0xff]
      %v277 = vld [vmem:[%s232 + $0x98] sm:$0xff]
      %v278 = vld [vmem:[%s232 + $0xa0] sm:$0xff]
      %v279 = vld [vmem:[%s232 + $0xa8] sm:$0xff]
      %v280 = vld [vmem:[%s232 + $0xb0] sm:$0xf]
      %v281 = vld [vmem:[%s232 + $0xb4] sm:$0xff]
      %v282 = vld [vmem:[%s232 + $0xbc] sm:$0xff]
      %v283 = vld [vmem:[%s232 + $0xc4] sm:$0xff]
      %v284 = vld [vmem:[%s232 + $0xcc] sm:$0xff]
      %v285 = vld [vmem:[%s232 + $0xd4] sm:$0xf]
      %v286 = vld [vmem:[%s232 + $0xd8] sm:$0xff]
      %v287 = vld [vmem:[%s232 + $0xe0] sm:$0xff]
      %v288 = vld [vmem:[%s232 + $0xe8] sm:$0xff]
      %v289 = vld [vmem:[%s232 + $0xf0] sm:$0xff]
      %v290 = vld [vmem:[%s232 + $0xf8] sm:$0xf]
      %v291 = vld [vmem:[%s232 + $0xfc] sm:$0xff]
      %v292 = vld [vmem:[%s232 + $0x104] sm:$0xff]
      %v293 = vld [vmem:[%s232 + $0x10c] sm:$0xff]
      %v294 = vld [vmem:[%s232 + $0x114] sm:$0xff]
      %v295 = vld [vmem:[%s232 + $0x11c] sm:$0xf]
      %v296 = vld [vmem:[%s232 + $0x120] sm:$0xff]
      %v297 = vld [vmem:[%s232 + $0x128] sm:$0xff]
      %v298 = vld [vmem:[%s232 + $0x130] sm:$0xff]
      %v299 = vld [vmem:[%s232 + $0x138] sm:$0xff]
      %v300 = vld [vmem:[%s232 + $0x140] sm:$0xf]
      %v301 = vld [vmem:[%s232 + $0x144] sm:$0xff]
      %v302 = vld [vmem:[%s232 + $0x14c] sm:$0xff]
      %v303 = vld [vmem:[%s232 + $0x154] sm:$0xff]
      %v304 = vld [vmem:[%s232 + $0x15c] sm:$0xff]
      %v305 = vld [vmem:[%s232 + $0x164] sm:$0xf]
      %v306 = vld [vmem:[%s232 + $0x168] sm:$0xff]
      %v307 = vld [vmem:[%s232 + $0x170] sm:$0xff]
      %v308 = vld [vmem:[%s232 + $0x178] sm:$0xff]
      %v309 = vld [vmem:[%s232 + $0x180] sm:$0xff]
      %v310 = vld [vmem:[%s232 + $0x188] sm:$0xf]
      %v311 = vld [vmem:[%s232 + $0x18c] sm:$0xff]
      %v312 = vld [vmem:[%s232 + $0x194] sm:$0xff]
      %v313 = vld [vmem:[%s232 + $0x19c] sm:$0xff]
      %v314 = vld [vmem:[%s232 + $0x1a4] sm:$0xff]
      %v315 = vld [vmem:[%s232 + $0x1ac] sm:$0xf]
      %v316 = vld [vmem:[%s232 + $0x1b0] sm:$0xff]
      %v317 = vld [vmem:[%s232 + $0x1b8] sm:$0xff]
      %v318 = vld [vmem:[%s232 + $0x1c0] sm:$0xff]
      %v319 = vld [vmem:[%s232 + $0x1c8] sm:$0xff]
      %v320 = vld [vmem:[%s232 + $0x1d0] sm:$0xf]
      %v321 = vld [vmem:[%s232 + $0x1d4] sm:$0xff]
      %v322 = vld [vmem:[%s232 + $0x1dc] sm:$0xff]
      %v323 = vld [vmem:[%s232 + $0x1e4] sm:$0xff]
      %v324 = vld [vmem:[%s232 + $0x1ec] sm:$0xff]
      %v325 = vld [vmem:[%s232 + $0x1f4] sm:$0xf]
      %v326 = vld [vmem:[%s232 + $0x1f8] sm:$0xff]
      %v327 = vld [vmem:[%s232 + $0x200] sm:$0xff]
      %v328 = vld [vmem:[%s232 + $0x208] sm:$0xff]
      %v329 = vld [vmem:[%s232 + $0x210] sm:$0xff]
      %v330 = vld [vmem:[%s232 + $0x218] sm:$0xf]
      %v331 = vld [vmem:[%s232 + $0x21c] sm:$0xff]
      %v332 = vld [vmem:[%s232 + $0x224] sm:$0xff]
      %v333 = vld [vmem:[%s232 + $0x22c] sm:$0xff]
      %v334 = vld [vmem:[%s232 + $0x234] sm:$0xff]
      %v335 = vld [vmem:[%s232 + $0x23c] sm:$0xf]
      %v338 = vunpack.c.l.b16 %v254
      %v339 = vunpack.c.l.b16 %v255
      %v340 = vpack.c.b16 %v339, %v338
      %v422 = vunpack.c.l.b16 %v256
      %v423 = vunpack.c.h.b16 %v256
      %v424 = vunpack.c.l.b16 %v257
      %v425 = vunpack.c.h.b16 %v257
      %v426 = vunpack.c.l.b16 %v258
      %v427 = vunpack.c.h.b16 %v258
      %v428 = vunpack.c.l.b16 %v259
      %v429 = vunpack.c.h.b16 %v259
      %v430 = vunpack.c.l.b16 %v260
      %v431 = vunpack.c.l.b16 %v261
      %v432 = vunpack.c.h.b16 %v261
      %v433 = vunpack.c.l.b16 %v262
      %v434 = vunpack.c.h.b16 %v262
      %v435 = vunpack.c.l.b16 %v263
      %v436 = vunpack.c.h.b16 %v263
      %v437 = vunpack.c.l.b16 %v264
      %v438 = vunpack.c.h.b16 %v264
      %v439 = vunpack.c.l.b16 %v265
      %v440 = vunpack.c.l.b16 %v266
      %v441 = vunpack.c.h.b16 %v266
      %v442 = vunpack.c.l.b16 %v267
      %v443 = vunpack.c.h.b16 %v267
      %v444 = vunpack.c.l.b16 %v268
      %v445 = vunpack.c.h.b16 %v268
      %v446 = vunpack.c.l.b16 %v269
      %v447 = vunpack.c.h.b16 %v269
      %v448 = vunpack.c.l.b16 %v270
      %v449 = vunpack.c.l.b16 %v271
      %v450 = vunpack.c.h.b16 %v271
      %v451 = vunpack.c.l.b16 %v272
      %v452 = vunpack.c.h.b16 %v272
      %v453 = vunpack.c.l.b16 %v273
      %v454 = vunpack.c.h.b16 %v273
      %v455 = vunpack.c.l.b16 %v274
      %v456 = vunpack.c.h.b16 %v274
      %v457 = vunpack.c.l.b16 %v275
      %v458 = vunpack.c.l.b16 %v276
      %v459 = vunpack.c.h.b16 %v276
      %v460 = vunpack.c.l.b16 %v277
      %v461 = vunpack.c.h.b16 %v277
      %v462 = vunpack.c.l.b16 %v278
      %v463 = vunpack.c.h.b16 %v278
      %v464 = vunpack.c.l.b16 %v279
      %v465 = vunpack.c.h.b16 %v279
      %v466 = vunpack.c.l.b16 %v280
      %v467 = vunpack.c.l.b16 %v281
      %v468 = vunpack.c.h.b16 %v281
      %v469 = vunpack.c.l.b16 %v282
      %v470 = vunpack.c.h.b16 %v282
      %v471 = vunpack.c.l.b16 %v283
      %v472 = vunpack.c.h.b16 %v283
      %v473 = vunpack.c.l.b16 %v284
      %v474 = vunpack.c.h.b16 %v284
      %v475 = vunpack.c.l.b16 %v285
      %v476 = vunpack.c.l.b16 %v286
      %v477 = vunpack.c.h.b16 %v286
      %v478 = vunpack.c.l.b16 %v287
      %v479 = vunpack.c.h.b16 %v287
      %v480 = vunpack.c.l.b16 %v288
      %v481 = vunpack.c.h.b16 %v288
      %v482 = vunpack.c.l.b16 %v289
      %v483 = vunpack.c.h.b16 %v289
      %v484 = vunpack.c.l.b16 %v290
      %v485 = vunpack.c.l.b16 %v291
      %v486 = vunpack.c.h.b16 %v291
      %v487 = vunpack.c.l.b16 %v292
      %v488 = vunpack.c.h.b16 %v292
      %v489 = vunpack.c.l.b16 %v293
      %v490 = vunpack.c.h.b16 %v293
      %v491 = vunpack.c.l.b16 %v294
      %v492 = vunpack.c.h.b16 %v294
      %v493 = vunpack.c.l.b16 %v295
      %v494 = vunpack.c.l.b16 %v296
      %v495 = vunpack.c.h.b16 %v296
      %v496 = vunpack.c.l.b16 %v297
      %v497 = vunpack.c.h.b16 %v297
      %v498 = vunpack.c.l.b16 %v298
      %v499 = vunpack.c.h.b16 %v298
      %v500 = vunpack.c.l.b16 %v299
      %v501 = vunpack.c.h.b16 %v299
      %v502 = vunpack.c.l.b16 %v300
      %v503 = vunpack.c.l.b16 %v301
      %v504 = vunpack.c.h.b16 %v301
      %v505 = vunpack.c.l.b16 %v302
      %v506 = vunpack.c.h.b16 %v302
      %v507 = vunpack.c.l.b16 %v303
      %v508 = vunpack.c.h.b16 %v303
      %v509 = vunpack.c.l.b16 %v304
      %v510 = vunpack.c.h.b16 %v304
      %v511 = vunpack.c.l.b16 %v305
      %v512 = vunpack.c.l.b16 %v306
      %v513 = vunpack.c.h.b16 %v306
      %v514 = vunpack.c.l.b16 %v307
      %v515 = vunpack.c.h.b16 %v307
      %v516 = vunpack.c.l.b16 %v308
      %v517 = vunpack.c.h.b16 %v308
      %v518 = vunpack.c.l.b16 %v309
      %v519 = vunpack.c.h.b16 %v309
      %v520 = vunpack.c.l.b16 %v310
      %v521 = vunpack.c.l.b16 %v311
      %v522 = vunpack.c.h.b16 %v311
      %v523 = vunpack.c.l.b16 %v312
      %v524 = vunpack.c.h.b16 %v312
      %v525 = vunpack.c.l.b16 %v313
      %v526 = vunpack.c.h.b16 %v313
      %v527 = vunpack.c.l.b16 %v314
      %v528 = vunpack.c.h.b16 %v314
      %v529 = vunpack.c.l.b16 %v315
      %v530 = vunpack.c.l.b16 %v316
      %v531 = vunpack.c.h.b16 %v316
      %v532 = vunpack.c.l.b16 %v317
      %v533 = vunpack.c.h.b16 %v317
      %v534 = vunpack.c.l.b16 %v318
      %v535 = vunpack.c.h.b16 %v318
      %v536 = vunpack.c.l.b16 %v319
      %v537 = vunpack.c.h.b16 %v319
      %v538 = vunpack.c.l.b16 %v320
      %v539 = vunpack.c.l.b16 %v321
      %v540 = vunpack.c.h.b16 %v321
      %v541 = vunpack.c.l.b16 %v322
      %v542 = vunpack.c.h.b16 %v322
      %v543 = vunpack.c.l.b16 %v323
      %v544 = vunpack.c.h.b16 %v323
      %v545 = vunpack.c.l.b16 %v324
      %v546 = vunpack.c.h.b16 %v324
      %v547 = vunpack.c.l.b16 %v325
      %v548 = vunpack.c.l.b16 %v326
      %v549 = vunpack.c.h.b16 %v326
      %v550 = vunpack.c.l.b16 %v327
      %v551 = vunpack.c.h.b16 %v327
      %v552 = vunpack.c.l.b16 %v328
      %v553 = vunpack.c.h.b16 %v328
      %v554 = vunpack.c.l.b16 %v329
      %v555 = vunpack.c.h.b16 %v329
      %v556 = vunpack.c.l.b16 %v330
      %v557 = vunpack.c.l.b16 %v331
      %v558 = vunpack.c.h.b16 %v331
      %v559 = vunpack.c.l.b16 %v332
      %v560 = vunpack.c.h.b16 %v332
      %v561 = vunpack.c.l.b16 %v333
      %v562 = vunpack.c.h.b16 %v333
      %v563 = vunpack.c.l.b16 %v334
      %v564 = vunpack.c.h.b16 %v334
      %v565 = vunpack.c.l.b16 %v335
      %v566 = vpack.c.b16 %v431, %v422
      %v567 = vpack.c.b16 %v432, %v423
      %v568 = vpack.c.b16 %v433, %v424
      %v569 = vpack.c.b16 %v434, %v425
      %v570 = vpack.c.b16 %v435, %v426
      %v571 = vpack.c.b16 %v436, %v427
      %v572 = vpack.c.b16 %v437, %v428
      %v573 = vpack.c.b16 %v438, %v429
      %v574 = vpack.c.b16 %v439, %v430
      %v575 = vpack.c.b16 %v449, %v440
      %v576 = vpack.c.b16 %v450, %v441
      %v577 = vpack.c.b16 %v451, %v442
      %v578 = vpack.c.b16 %v452, %v443
      %v579 = vpack.c.b16 %v453, %v444
      %v580 = vpack.c.b16 %v454, %v445
      %v581 = vpack.c.b16 %v455, %v446
      %v582 = vpack.c.b16 %v456, %v447
      %v583 = vpack.c.b16 %v457, %v448
      %v584 = vpack.c.b16 %v467, %v458
      %v585 = vpack.c.b16 %v468, %v459
      %v586 = vpack.c.b16 %v469, %v460
      %v587 = vpack.c.b16 %v470, %v461
      %v588 = vpack.c.b16 %v471, %v462
      %v589 = vpack.c.b16 %v472, %v463
      %v590 = vpack.c.b16 %v473, %v464
      %v591 = vpack.c.b16 %v474, %v465
      %v592 = vpack.c.b16 %v475, %v466
      %v593 = vpack.c.b16 %v485, %v476
      %v594 = vpack.c.b16 %v486, %v477
      %v595 = vpack.c.b16 %v487, %v478
      %v596 = vpack.c.b16 %v488, %v479
      %v597 = vpack.c.b16 %v489, %v480
      %v598 = vpack.c.b16 %v490, %v481
      %v599 = vpack.c.b16 %v491, %v482
      %v600 = vpack.c.b16 %v492, %v483
      %v601 = vpack.c.b16 %v493, %v484
      %v602 = vpack.c.b16 %v503, %v494
      %v603 = vpack.c.b16 %v504, %v495
      %v604 = vpack.c.b16 %v505, %v496
      %v605 = vpack.c.b16 %v506, %v497
      %v606 = vpack.c.b16 %v507, %v498
      %v607 = vpack.c.b16 %v508, %v499
      %v608 = vpack.c.b16 %v509, %v500
      %v609 = vpack.c.b16 %v510, %v501
      %v610 = vpack.c.b16 %v511, %v502
      %v611 = vpack.c.b16 %v521, %v512
      %v612 = vpack.c.b16 %v522, %v513
      %v613 = vpack.c.b16 %v523, %v514
      %v614 = vpack.c.b16 %v524, %v515
      %v615 = vpack.c.b16 %v525, %v516
      %v616 = vpack.c.b16 %v526, %v517
      %v617 = vpack.c.b16 %v527, %v518
      %v618 = vpack.c.b16 %v528, %v519
      %v619 = vpack.c.b16 %v529, %v520
      %v620 = vpack.c.b16 %v539, %v530
      %v621 = vpack.c.b16 %v540, %v531
      %v622 = vpack.c.b16 %v541, %v532
      %v623 = vpack.c.b16 %v542, %v533
      %v624 = vpack.c.b16 %v543, %v534
      %v625 = vpack.c.b16 %v544, %v535
      %v626 = vpack.c.b16 %v545, %v536
      %v627 = vpack.c.b16 %v546, %v537
      %v628 = vpack.c.b16 %v547, %v538
      %v629 = vpack.c.b16 %v557, %v548
      %v630 = vpack.c.b16 %v558, %v549
      %v631 = vpack.c.b16 %v559, %v550
      %v632 = vpack.c.b16 %v560, %v551
      %v633 = vpack.c.b16 %v561, %v552
      %v634 = vpack.c.b16 %v562, %v553
      %v635 = vpack.c.b16 %v563, %v554
      %v636 = vpack.c.b16 %v564, %v555
      %v637 = vpack.c.b16 %v565, %v556
      %710 = vmatprep.subr.bf16.mxu0 %v567
      %711 = vmatpush1.bf16.msra.mxu0 %v566
      %712 = vmatprep.subr.bf16.mxu0 %v576
      %713 = vmatpush1.bf16.msra.mxu0 %v575
      %714 = vmatprep.subr.bf16.mxu0 %v585
      %715 = vmatpush1.bf16.msra.mxu0 %v584
      %716 = vmatprep.subr.bf16.mxu0 %v594
      %717 = vmatpush1.bf16.msra.mxu0 %v593
      %718 = vmatprep.subr.bf16.mxu0 %v603
      %719 = vmatpush1.bf16.msra.mxu0 %v602
      %720 = vmatprep.subr.bf16.mxu0 %v612
      %721 = vmatpush1.bf16.msra.mxu0 %v611
      %722 = vmatprep.subr.bf16.mxu0 %v621
      %723 = vmatpush1.bf16.msra.mxu0 %v620
      %724 = vmatprep.subr.bf16.mxu0 %v630
      %725 = vmatpush1.bf16.msra.mxu0 %v629
      %726 = vmatprep.subr.bf16.mxu0 0
      %727 = vmatpush1.bf16.msra.mxu0 0
      %728 = vmatprep.subr.bf16.mxu0 0
      %729 = vmatpush1.bf16.msra.mxu0 0
      %730 = vmatprep.subr.bf16.mxu0 0
      %731 = vmatpush1.bf16.msra.mxu0 0
      %732 = vmatprep.subr.bf16.mxu0 0
      %733 = vmatpush1.bf16.msra.mxu0 0
      %734 = vmatprep.subr.bf16.mxu0 0
      %735 = vmatpush1.bf16.msra.mxu0 0
      %736 = vmatprep.subr.bf16.mxu0 0
      %737 = vmatpush1.bf16.msra.mxu0 0
      %738 = vmatprep.subr.bf16.mxu0 0
      %739 = vmatpush1.bf16.msra.mxu0 0
      %740 = vmatprep.subr.bf16.mxu0 0
      %741 = vmatpush1.bf16.msra.mxu0 0
      %742 = vmatprep.mubr.bf16.mxu0 0
      %743 = vmatmul.mubr.bf16.gmra.mrb[0].mxu0 %v340
      %v744 = vpop.f32.mrb[0].mxu0
      %v745 = vadd.f32 0.0, %v744
      %v746 = vpop.f32.mrb[0].mxu0
      %v747 = vadd.f32 0.0, %v746
      %v748 = vpop.f32.mrb[0].mxu0
      %v749 = vadd.f32 0.0, %v748
      %v750 = vpop.f32.mrb[0].mxu0
      %v751 = vadd.f32 0.0, %v750
      %752 = vdwg.mxu0
      %753 = vmatprep.subr.bf16.mxu0 %v569
      %754 = vmatpush1.bf16.msra.mxu0 %v568
      %755 = vmatprep.subr.bf16.mxu0 %v578
      %756 = vmatpush1.bf16.msra.mxu0 %v577
      %757 = vmatprep.subr.bf16.mxu0 %v587
      %758 = vmatpush1.bf16.msra.mxu0 %v586
      %759 = vmatprep.subr.bf16.mxu0 %v596
      %760 = vmatpush1.bf16.msra.mxu0 %v595
      %761 = vmatprep.subr.bf16.mxu0 %v605
      %762 = vmatpush1.bf16.msra.mxu0 %v604
      %763 = vmatprep.subr.bf16.mxu0 %v614
      %764 = vmatpush1.bf16.msra.mxu0 %v613
      %765 = vmatprep.subr.bf16.mxu0 %v623
      %766 = vmatpush1.bf16.msra.mxu0 %v622
      %767 = vmatprep.subr.bf16.mxu0 %v632
      %768 = vmatpush1.bf16.msra.mxu0 %v631
      %769 = vmatprep.subr.bf16.mxu0 0
      %770 = vmatpush1.bf16.msra.mxu0 0
      %771 = vmatprep.subr.bf16.mxu0 0
      %772 = vmatpush1.bf16.msra.mxu0 0
      %773 = vmatprep.subr.bf16.mxu0 0
      %774 = vmatpush1.bf16.msra.mxu0 0
      %775 = vmatprep.subr.bf16.mxu0 0
      %776 = vmatpush1.bf16.msra.mxu0 0
      %777 = vmatprep.subr.bf16.mxu0 0
      %778 = vmatpush1.bf16.msra.mxu0 0
      %779 = vmatprep.subr.bf16.mxu0 0
      %780 = vmatpush1.bf16.msra.mxu0 0
      %781 = vmatprep.subr.bf16.mxu0 0
      %782 = vmatpush1.bf16.msra.mxu0 0
      %783 = vmatprep.subr.bf16.mxu0 0
      %784 = vmatpush1.bf16.msra.mxu0 0
      %785 = vmatprep.mubr.bf16.mxu0 0
      %786 = vmatmul.mubr.bf16.gmra.mrb[0].mxu0 %v340
      %v787 = vpop.f32.mrb[0].mxu0
      %v788 = vadd.f32 0.0, %v787
      %v789 = vpop.f32.mrb[0].mxu0
      %v790 = vadd.f32 0.0, %v789
      %v791 = vpop.f32.mrb[0].mxu0
      %v792 = vadd.f32 0.0, %v791
      %v793 = vpop.f32.mrb[0].mxu0
      %v794 = vadd.f32 0.0, %v793
      %795 = vdwg.mxu0
      %796 = vmatprep.subr.bf16.mxu0 %v571
      %797 = vmatpush1.bf16.msra.mxu0 %v570
      %798 = vmatprep.subr.bf16.mxu0 %v580
      %799 = vmatpush1.bf16.msra.mxu0 %v579
      %800 = vmatprep.subr.bf16.mxu0 %v589
      %801 = vmatpush1.bf16.msra.mxu0 %v588
      %802 = vmatprep.subr.bf16.mxu0 %v598
      %803 = vmatpush1.bf16.msra.mxu0 %v597
      %804 = vmatprep.subr.bf16.mxu0 %v607
      %805 = vmatpush1.bf16.msra.mxu0 %v606
      %806 = vmatprep.subr.bf16.mxu0 %v616
      %807 = vmatpush1.bf16.msra.mxu0 %v615
      %808 = vmatprep.subr.bf16.mxu0 %v625
      %809 = vmatpush1.bf16.msra.mxu0 %v624
      %810 = vmatprep.subr.bf16.mxu0 %v634
      %811 = vmatpush1.bf16.msra.mxu0 %v633
      %812 = vmatprep.subr.bf16.mxu0 0
      %813 = vmatpush1.bf16.msra.mxu0 0
      %814 = vmatprep.subr.bf16.mxu0 0
      %815 = vmatpush1.bf16.msra.mxu0 0
      %816 = vmatprep.subr.bf16.mxu0 0
      %817 = vmatpush1.bf16.msra.mxu0 0
      %818 = vmatprep.subr.bf16.mxu0 0
      %819 = vmatpush1.bf16.msra.mxu0 0
      %820 = vmatprep.subr.bf16.mxu0 0
      %821 = vmatpush1.bf16.msra.mxu0 0
      %822 = vmatprep.subr.bf16.mxu0 0
      %823 = vmatpush1.bf16.msra.mxu0 0
      %824 = vmatprep.subr.bf16.mxu0 0
      %825 = vmatpush1.bf16.msra.mxu0 0
      %826 = vmatprep.subr.bf16.mxu0 0
      %827 = vmatpush1.bf16.msra.mxu0 0
      %828 = vmatprep.mubr.bf16.mxu0 0
      %829 = vmatmul.mubr.bf16.gmra.mrb[0].mxu0 %v340
      %v830 = vpop.f32.mrb[0].mxu0
      %v831 = vadd.f32 0.0, %v830
      %v832 = vpop.f32.mrb[0].mxu0
      %v833 = vadd.f32 0.0, %v832
      %v834 = vpop.f32.mrb[0].mxu0
      %v835 = vadd.f32 0.0, %v834
      %v836 = vpop.f32.mrb[0].mxu0
      %v837 = vadd.f32 0.0, %v836
      %838 = vdwg.mxu0
      %839 = vmatprep.subr.bf16.mxu0 %v573
      %840 = vmatpush1.bf16.msra.mxu0 %v572
      %841 = vmatprep.subr.bf16.mxu0 %v582
      %842 = vmatpush1.bf16.msra.mxu0 %v581
      %843 = vmatprep.subr.bf16.mxu0 %v591
      %844 = vmatpush1.bf16.msra.mxu0 %v590
      %845 = vmatprep.subr.bf16.mxu0 %v600
      %846 = vmatpush1.bf16.msra.mxu0 %v599
      %847 = vmatprep.subr.bf16.mxu0 %v609
      %848 = vmatpush1.bf16.msra.mxu0 %v608
      %849 = vmatprep.subr.bf16.mxu0 %v618
      %850 = vmatpush1.bf16.msra.mxu0 %v617
      %851 = vmatprep.subr.bf16.mxu0 %v627
      %852 = vmatpush1.bf16.msra.mxu0 %v626
      %853 = vmatprep.subr.bf16.mxu0 %v636
      %854 = vmatpush1.bf16.msra.mxu0 %v635
      %855 = vmatprep.subr.bf16.mxu0 0
      %856 = vmatpush1.bf16.msra.mxu0 0
      %857 = vmatprep.subr.bf16.mxu0 0
      %858 = vmatpush1.bf16.msra.mxu0 0
      %859 = vmatprep.subr.bf16.mxu0 0
      %860 = vmatpush1.bf16.msra.mxu0 0
      %861 = vmatprep.subr.bf16.mxu0 0
      %862 = vmatpush1.bf16.msra.mxu0 0
      %863 = vmatprep.subr.bf16.mxu0 0
      %864 = vmatpush1.bf16.msra.mxu0 0
      %865 = vmatprep.subr.bf16.mxu0 0
      %866 = vmatpush1.bf16.msra.mxu0 0
      %867 = vmatprep.subr.bf16.mxu0 0
      %868 = vmatpush1.bf16.msra.mxu0 0
      %869 = vmatprep.subr.bf16.mxu0 0
      %870 = vmatpush1.bf16.msra.mxu0 0
      %871 = vmatprep.mubr.bf16.mxu0 0
      %872 = vmatmul.mubr.bf16.gmra.mrb[0].mxu0 %v340
      %v873 = vpop.f32.mrb[0].mxu0
      %v874 = vadd.f32 0.0, %v873
      %v875 = vpop.f32.mrb[0].mxu0
      %v876 = vadd.f32 0.0, %v875
      %v877 = vpop.f32.mrb[0].mxu0
      %v878 = vadd.f32 0.0, %v877
      %v879 = vpop.f32.mrb[0].mxu0
      %v880 = vadd.f32 0.0, %v879
      %881 = vdwg.mxu0
      %882 = vmatprep.subr.bf16.mxu0 0
      %883 = vmatpush1.bf16.msra.mxu0 %v574
      %884 = vmatprep.subr.bf16.mxu0 0
      %885 = vmatpush1.bf16.msra.mxu0 %v583
      %886 = vmatprep.subr.bf16.mxu0 0
      %887 = vmatpush1.bf16.msra.mxu0 %v592
      %888 = vmatprep.subr.bf16.mxu0 0
      %889 = vmatpush1.bf16.msra.mxu0 %v601
      %890 = vmatprep.subr.bf16.mxu0 0
      %891 = vmatpush1.bf16.msra.mxu0 %v610
      %892 = vmatprep.subr.bf16.mxu0 0
      %893 = vmatpush1.bf16.msra.mxu0 %v619
      %894 = vmatprep.subr.bf16.mxu0 0
      %895 = vmatpush1.bf16.msra.mxu0 %v628
      %896 = vmatprep.subr.bf16.mxu0 0
      %897 = vmatpush1.bf16.msra.mxu0 %v637
      %898 = vmatprep.subr.bf16.mxu0 0
      %899 = vmatpush1.bf16.msra.mxu0 0
      %900 = vmatprep.subr.bf16.mxu0 0
      %901 = vmatpush1.bf16.msra.mxu0 0
      %902 = vmatprep.subr.bf16.mxu0 0
      %903 = vmatpush1.bf16.msra.mxu0 0
      %904 = vmatprep.subr.bf16.mxu0 0
      %905 = vmatpush1.bf16.msra.mxu0 0
      %906 = vmatprep.subr.bf16.mxu0 0
      %907 = vmatpush1.bf16.msra.mxu0 0
      %908 = vmatprep.subr.bf16.mxu0 0
      %909 = vmatpush1.bf16.msra.mxu0 0
      %910 = vmatprep.subr.bf16.mxu0 0
      %911 = vmatpush1.bf16.msra.mxu0 0
      %912 = vmatprep.subr.bf16.mxu0 0
      %913 = vmatpush1.bf16.msra.mxu0 0
      %914 = vmatprep.mubr.bf16.mxu0 0
      %915 = vmatmul.mubr.bf16.gmra.mrb[0].mxu0 %v340
      %v916 = vpop.f32.mrb[0].mxu0
      %v917 = vadd.f32 0.0, %v916
      %v918 = vpop.f32.mrb[0].mxu0
      %v919 = vpop.f32.mrb[0].mxu0
      %v920 = vadd.f32 0.0, %v919
      %v921 = vpop.f32.mrb[0].mxu0
      %922 = vdwg.mxu0
      %v923 = vpack.c.bf16 %v749, %v745
      %v924 = vpack.c.bf16 %v751, %v747
      %v925 = vpack.c.bf16 %v792, %v788
      %v926 = vpack.c.bf16 %v794, %v790
      %v927 = vpack.c.bf16 %v835, %v831
      %v928 = vpack.c.bf16 %v837, %v833
      %v929 = vpack.c.bf16 %v878, %v874
      %v930 = vpack.c.bf16 %v880, %v876
      %v931 = vpack.c.bf16 %v920, %v917
      %v941 = vunpack.c.l.b16 %v923
      %v942 = vunpack.c.l.b16 %v924
      %v943 = vunpack.c.l.b16 %v925
      %v944 = vunpack.c.l.b16 %v926
      %v945 = vunpack.c.l.b16 %v927
      %v946 = vunpack.c.l.b16 %v928
      %v947 = vunpack.c.l.b16 %v929
      %v948 = vunpack.c.l.b16 %v930
      %v949 = vunpack.c.l.b16 %v931
      %v950 = vunpack.c.h.b16 %v923
      %v951 = vunpack.c.h.b16 %v924
      %v952 = vunpack.c.h.b16 %v925
      %v953 = vunpack.c.h.b16 %v926
      %v954 = vunpack.c.h.b16 %v927
      %v955 = vunpack.c.h.b16 %v928
      %v956 = vunpack.c.h.b16 %v929
      %v957 = vunpack.c.h.b16 %v930
      %v958 = vunpack.c.h.b16 %v931
      %v959 = vpack.c.b16 %v942, %v941
      %v960 = vpack.c.b16 %v944, %v943
      %v961 = vpack.c.b16 %v946, %v945
      %v962 = vpack.c.b16 %v948, %v947
      %v963 = vpack.c.b16 %v949, %v949
      %v964 = vpack.c.b16 %v951, %v950
      %v965 = vpack.c.b16 %v953, %v952
      %v966 = vpack.c.b16 %v955, %v954
      %v967 = vpack.c.b16 %v957, %v956
      %v968 = vpack.c.b16 %v958, %v958
      %979 = vst [vmem:[%s242] sm:$0xff] %v959
      %980 = vst [vmem:[%s242 + $0x8] sm:$0xff] %v960
      %981 = vst [vmem:[%s242 + $0x10] sm:$0xff] %v961
      %982 = vst [vmem:[%s242 + $0x18] sm:$0xff] %v962
      %983 = vst [vmem:[%s242 + $0x20] sm:$0xf] %v963
      %984 = vst [vmem:[%s242 + $0x24] sm:$0xff] %v964
      %985 = vst [vmem:[%s242 + $0x2c] sm:$0xff] %v965
      %986 = vst [vmem:[%s242 + $0x34] sm:$0xff] %v966
      %987 = vst [vmem:[%s242 + $0x3c] sm:$0xff] %v967
      %988 = vst [vmem:[%s242 + $0x44] sm:$0xf] %v968
      %v989 = vadd.f32 %v745, %v747
      %v990 = vadd.f32 %v989, %v788
      %v991 = vadd.f32 %v990, %v790
      %v992 = vadd.f32 %v991, %v831
      %v993 = vadd.f32 %v992, %v833
      %v994 = vadd.f32 %v993, %v874
      %v995 = vadd.f32 %v994, %v876
      %v996 = vadd.f32 %v995, %v917
      %997 = vadd.xlane.f32.xlu0 %v996
      %v998 = vpop.xlane.xlu0 %997
      %v999 = vadd.f32 %v749, %v751
      %v1000 = vadd.f32 %v999, %v792
      %v1001 = vadd.f32 %v1000, %v794
      %v1002 = vadd.f32 %v1001, %v835
      %v1003 = vadd.f32 %v1002, %v837
      %v1004 = vadd.f32 %v1003, %v878
      %v1005 = vadd.f32 %v1004, %v880
      %v1006 = vadd.f32 %v1005, %v920
      %1007 = vadd.xlane.f32.xlu0 %v1006
      %v1008 = vpop.xlane.xlu0 %1007
      %v1009 = vmul.f32 %v745, %v745
      %v1010 = vmul.f32 %v747, %v747
      %v1011 = vmul.f32 %v788, %v788
      %v1012 = vmul.f32 %v790, %v790
      %v1013 = vmul.f32 %v831, %v831
      %v1014 = vmul.f32 %v833, %v833
      %v1015 = vmul.f32 %v874, %v874
      %v1016 = vmul.f32 %v876, %v876
      %v1017 = vmul.f32 %v917, %v917
      %v1018 = vmul.f32 %v749, %v749
      %v1019 = vmul.f32 %v751, %v751
      %v1020 = vmul.f32 %v792, %v792
      %v1021 = vmul.f32 %v794, %v794
      %v1022 = vmul.f32 %v835, %v835
      %v1023 = vmul.f32 %v837, %v837
      %v1024 = vmul.f32 %v878, %v878
      %v1025 = vmul.f32 %v880, %v880
      %v1026 = vmul.f32 %v920, %v920
      %v1027 = vadd.f32 %v1009, %v1010
      %v1028 = vadd.f32 %v1027, %v1011
      %v1029 = vadd.f32 %v1028, %v1012
      %v1030 = vadd.f32 %v1029, %v1013
      %v1031 = vadd.f32 %v1030, %v1014
      %v1032 = vadd.f32 %v1031, %v1015
      %v1033 = vadd.f32 %v1032, %v1016
      %v1034 = vadd.f32 %v1033, %v1017
      %1035 = vadd.xlane.f32.xlu0 %v1034
      %v1036 = vpop.xlane.xlu0 %1035
      %v1037 = vadd.f32 %v1018, %v1019
      %v1038 = vadd.f32 %v1037, %v1020
      %v1039 = vadd.f32 %v1038, %v1021
      %v1040 = vadd.f32 %v1039, %v1022
      %v1041 = vadd.f32 %v1040, %v1023
      %v1042 = vadd.f32 %v1041, %v1024
      %v1043 = vadd.f32 %v1042, %v1025
      %v1044 = vadd.f32 %v1043, %v1026
      %1045 = vadd.xlane.f32.xlu0 %v1044
      %v1046 = vpop.xlane.xlu0 %1045
      %1048 = vset.pattern.permute.xlu0 0
      %1049 = vperm.xlu0 %1048, %v998
      %v1050 = vpop.permute.xlu0 %1049
      %1053 = vset.pattern.permute.xlu0 0
      %1054 = vperm.xlu0 %1053, %v1008
      %v1055 = vpop.permute.xlu0 %1054
      %1058 = vset.pattern.permute.xlu0 0
      %1059 = vperm.xlu0 %1058, %v1036
      %v1060 = vpop.permute.xlu0 %1059
      %1063 = vset.pattern.permute.xlu0 0
      %1064 = vperm.xlu0 %1063, %v1046
      %v1065 = vpop.permute.xlu0 %1064
      %1067 = vst [vmem:[%s252] sm:$0xff] %v1050
      %1068 = vst [vmem:[%s252 + $0x8] sm:$0xff] %v1055
      %1069 = vst [vmem:[%s252 + $0x10] sm:$0xff] %v1060
      %1070 = vst [vmem:[%s252 + $0x18] sm:$0xff] %v1065
      %s1071 = smul.u32 9, %s20
      %p1072 = scmp.lt.s32.totalorder %s19, 3
      %s1073 = scalar_select %p1072, %s19, 3
      %p1074 = scmp.lt.s32.totalorder %s1071, 8
      %s1075 = scalar_select %p1074, %s1071, 8
      %s1076 = smul.addr %s1073, 18
      %s1077 = sadd.s32 %s1075, %s1076
      %s1078 = smul.addr %s1077, 4
      %s1079 = scalar_lea.vmem %s2, %s1078
      %p1080 = scmp.lt.s32.totalorder %s19, 3
      %s1081 = scalar_select %p1080, %s19, 3
      %p1082 = scmp.lt.s32.totalorder %s20, 0
      %s1083 = scalar_select %p1082, %s20, 0
      %s1084 = smul.addr %s1083, 4
      %s1085 = smul.addr %s1081, 4
      %s1086 = sadd.s32 %s1084, %s1085
      %s1087 = smul.addr %s1086, 8
      %s1088 = scalar_lea.vmem %s3, %s1087
      // Predicated region
      $region29: #{generator_forward.11} parent=27 // pred_check
        %p1089 = pneg %p101
      $region30: #{generator_forward.11} parent=27 // pred_check_branch
        %1091 = sbr.rel (%p1089) target = $region32
      $region31: #{generator_forward.11} parent=27 // pred_region
        %s1092 = smul.u32 9, %s20
      $region32: #{generator_forward.11} parent=27 // pred_fallthru
        _
      // Predicated region
      $region33: #{generator_forward.11} parent=27 // pred_check
        %p1093 = pneg %p129
      $region34: #{generator_forward.11} parent=27 // pred_check_branch
        %1095 = sbr.rel (%p1093) target = $region36
      $region35: #{generator_forward.11} parent=27 // pred_region
        _
      $region36: #{generator_forward.11} parent=27 // pred_fallthru
        _
    $region28: #{generator_forward.11} parent=5 // pred_fallthru
      _
    %p1096 = scmp.le.s32.totalorder 2, %s10
    // Predicated region
    $region37: #{generator_forward.11} parent=5 // pred_check
      %p1097 = pneg %p1096
    $region38: #{generator_forward.11} parent=5 // pred_check_branch
      %1099 = sbr.rel (%p1097) target = $region40
    $region39: #{generator_forward.11} parent=5 // pred_region
      %s1100 = ssub.s32 %s10, 2
      // Predicated region
      $region41: #{generator_forward.11} parent=39 // pred_check
        %p1101 = pneg %p107
      $region42: #{generator_forward.11} parent=39 // pred_check_branch
        %1103 = sbr.rel (%p1101) target = $region44
      $region43: #{generator_forward.11} parent=39 // pred_region
        %s1104 = smul.u32 9, %s22
        %p1105 = scmp.lt.s32.totalorder %s21, 3
        %s1106 = scalar_select %p1105, %s21, 3
        %p1107 = scmp.lt.s32.totalorder %s1104, 8
        %s1108 = scalar_select %p1107, %s1104, 8
        %s1109 = smul.addr %s1106, 18
        %s1110 = sadd.s32 %s1108, %s1109
        %s1111 = smul.addr %s1110, 4
        %s1112 = scalar_lea.vmem %s2, %s1111
      $region44: #{generator_forward.11} parent=39 // pred_fallthru
        _
      // Predicated region
      $region45: #{generator_forward.11} parent=39 // pred_check
        %p1113 = pneg %p135
      $region46: #{generator_forward.11} parent=39 // pred_check_branch
        %1115 = sbr.rel (%p1113) target = $region48
      $region47: #{generator_forward.11} parent=39 // pred_region
        %p1116 = scmp.lt.s32.totalorder %s21, 3
        %s1117 = scalar_select %p1116, %s21, 3
        %p1118 = scmp.lt.s32.totalorder %s22, 0
        %s1119 = scalar_select %p1118, %s22, 0
        %s1120 = smul.addr %s1119, 4
        %s1121 = smul.addr %s1117, 4
        %s1122 = sadd.s32 %s1120, %s1121
        %s1123 = smul.addr %s1122, 8
        %s1124 = scalar_lea.vmem %s3, %s1123
      $region48: #{generator_forward.11} parent=39 // pred_fallthru
        _
    $region40: #{generator_forward.11} parent=5 // pred_fallthru
      _
  $region6: #{generator_forward.11} parent=0 // loop_footer
    %s14 = sadd.s32 1, %s10
  $region7: #{generator_forward.11} parent=0 // loop_footer_branch
    %9 = sbr.rel target = $region3
  $region8: #{generator_forward.11} parent=0 // loop_exit
    _

// kernel: generator_forward.12
$region0: #{generator_forward.12}
  #allocation0 [shape = 'u32[]', space=smem, size = 0x4, offset = 0x4, fixed_abs, tag = 'smem constant byte address 0x4 - core index']
  #allocation1 [shape = 'u32[144,128]{1,0:T(1,128)}', space=vmem, size = 0x12000, scoped, tag = 'internal scratch']
  %s0 = inlined_call_operand.vmem [shape: bf16[4,8,64], index: 0, kind: input, shape index: {}]
  %s1 = inlined_call_operand.vmem [shape: bf16[4,64,4608], index: 1, kind: input, shape index: {}]
  %s2 = inlined_call_operand.vmem [shape: bf16[4,8,4608], index: 2, kind: output, shape index: {0}]
  %s3 = inlined_call_operand.vmem [shape: f32[4,1,16,128], index: 3, kind: output, shape index: {1}]
  %4 = xla_tuple %s2, %s3
  %s5 = sld [smem:[#allocation0]]
  $region49: #{generator_forward.12} parent=0
    _
  %s7 = ssub.s32 1, %s5
  %s8 = scalar_select 0, %s7, %s5
  loop: start=0, step=1, limit=6
  $region2: #{generator_forward.12} parent=0 // loop_pre_header
    _
  $region3: #{generator_forward.12} parent=0 // loop_header
    %s10 = sphi 0, %s14
    %p11 = scmp.ge.s32.totalorder %s10, 6
    %s17 = sphi 0, %s29
    %s18 = sphi 0, %s25
    %s19 = sphi 0, %s17
    %s20 = sphi 0, %s18
    %s21 = sphi 0, %s19
    %s22 = sphi 0, %s20
    %s32 = sphi 0, %s34
    %s35 = sphi 0, %s32
    %s36 = sphi 0, %s35
    %s52 = sphi 0, %s36
    %s60 = sphi 0, %s62
    %s63 = sphi 0, %s60
    %s64 = sphi 0, %s63
    %s80 = sphi 0, %s64
    %s88 = sphi 0, %s90
    %s91 = sphi 0, %s88
    %s92 = sphi 0, %s91
    %s108 = sphi 0, %s92
    %s116 = sphi 0, %s118
    %s119 = sphi 0, %s116
    %s120 = sphi 0, %s119
    %s136 = sphi 0, %s120
  $region4: #{generator_forward.12} parent=0 // loop_header_branch
    %13 = sbr.rel (%p11) target = $region8
  $region5: #{generator_forward.12} parent=0 // loop_body
    %s15 = ssub.s32 %s10, 1
    %s16 = ssub.s32 %s10, 2
    %s23 = sadd.s32 1, %s18
    %p24 = scmp.ge.s32.totalorder %s23, 1
    %s25 = scalar_select %p24, 0, %s23
    %s26 = sadd.s32 1, %s17
    %s27 = scalar_select %p24, %s26, %s17
    %p28 = scmp.ge.s32.totalorder %s27, 4
    %s29 = scalar_select %p28, 0, %s27
    %s30 = ssub.s32 %s17, %s29
    %p31 = scmp.eq.s32.totalorder %s30, 0
    %s33 = sadd.s32 %s32, 1
    %s34 = scalar_select %p31, %s32, %s33
    %p37 = pneg %p31
    %p38 = scmp.eq.s32.totalorder %s10, 3
    %p39 = por %p37, %p38
    %p40 = scmp.ne.s32.totalorder %s32, %s35
    %p41 = scmp.eq.s32.totalorder %s10, 0
    %p42 = por %p40, %p41
    %p43 = scmp.ne.s32.totalorder %s32, %s35
    %p44 = scmp.eq.s32.totalorder %s15, 3
    %p45 = por %p43, %p44
    %p46 = scmp.ne.s32.totalorder %s35, %s36
    %p47 = scmp.eq.s32.totalorder %s15, 0
    %p48 = por %p46, %p47
    %p49 = scmp.ne.s32.totalorder %s35, %s36
    %p50 = scmp.eq.s32.totalorder %s16, 3
    %p51 = por %p49, %p50
    %p53 = scmp.ne.s32.totalorder %s36, %s52
    %p54 = scmp.eq.s32.totalorder %s16, 0
    %p55 = por %p53, %p54
    %s56 = ssub.s32 %s17, %s29
    %s57 = ssub.s32 %s18, %s25
    %s58 = sor.u32 %s56, %s57
    %p59 = scmp.eq.s32.totalorder %s58, 0
    %s61 = sadd.s32 %s60, 1
    %s62 = scalar_select %p59, %s60, %s61
    %p65 = pneg %p59
    %p66 = scmp.eq.s32.totalorder %s10, 3
    %p67 = por %p65, %p66
    %p68 = scmp.ne.s32.totalorder %s60, %s63
    %p69 = scmp.eq.s32.totalorder %s10, 0
    %p70 = por %p68, %p69
    %p71 = scmp.ne.s32.totalorder %s60, %s63
    %p72 = scmp.eq.s32.totalorder %s15, 3
    %p73 = por %p71, %p72
    %p74 = scmp.ne.s32.totalorder %s63, %s64
    %p75 = scmp.eq.s32.totalorder %s15, 0
    %p76 = por %p74, %p75
    %p77 = scmp.ne.s32.totalorder %s63, %s64
    %p78 = scmp.eq.s32.totalorder %s16, 3
    %p79 = por %p77, %p78
    %p81 = scmp.ne.s32.totalorder %s64, %s80
    %p82 = scmp.eq.s32.totalorder %s16, 0
    %p83 = por %p81, %p82
    %s84 = ssub.s32 %s17, %s29
    %s85 = ssub.s32 %s18, %s25
    %s86 = sor.u32 %s84, %s85
    %p87 = scmp.eq.s32.totalorder %s86, 0
    %s89 = sadd.s32 %s88, 1
    %s90 = scalar_select %p87, %s88, %s89
    %p93 = pneg %p87
    %p94 = scmp.eq.s32.totalorder %s10, 3
    %p95 = por %p93, %p94
    %p96 = scmp.ne.s32.totalorder %s88, %s91
    %p97 = scmp.eq.s32.totalorder %s10, 0
    %p98 = por %p96, %p97
    %p99 = scmp.ne.s32.totalorder %s88, %s91
    %p100 = scmp.eq.s32.totalorder %s15, 3
    %p101 = por %p99, %p100
    %p102 = scmp.ne.s32.totalorder %s91, %s92
    %p103 = scmp.eq.s32.totalorder %s15, 0
    %p104 = por %p102, %p103
    %p105 = scmp.ne.s32.totalorder %s91, %s92
    %p106 = scmp.eq.s32.totalorder %s16, 3
    %p107 = por %p105, %p106
    %p109 = scmp.ne.s32.totalorder %s92, %s108
    %p110 = scmp.eq.s32.totalorder %s16, 0
    %p111 = por %p109, %p110
    %s112 = ssub.s32 %s17, %s29
    %s113 = ssub.s32 %s18, %s25
    %s114 = sor.u32 %s112, %s113
    %p115 = scmp.eq.s32.totalorder %s114, 0
    %s117 = sadd.s32 %s116, 1
    %s118 = scalar_select %p115, %s116, %s117
    %p121 = pneg %p115
    %p122 = scmp.eq.s32.totalorder %s10, 3
    %p123 = por %p121, %p122
    %p124 = scmp.ne.s32.totalorder %s116, %s119
    %p125 = scmp.eq.s32.totalorder %s10, 0
    %p126 = por %p124, %p125
    %p127 = scmp.ne.s32.totalorder %s116, %s119
    %p128 = scmp.eq.s32.totalorder %s15, 3
    %p129 = por %p127, %p128
    %p130 = scmp.ne.s32.totalorder %s119, %s120
    %p131 = scmp.eq.s32.totalorder %s15, 0
    %p132 = por %p130, %p131
    %p133 = scmp.ne.s32.totalorder %s119, %s120
    %p134 = scmp.eq.s32.totalorder %s16, 3
    %p135 = por %p133, %p134
    %p137 = scmp.ne.s32.totalorder %s120, %s136
    %p138 = scmp.eq.s32.totalorder %s16, 0
    %p139 = por %p137, %p138
    %p140 = scmp.le.s32.totalorder 1, %s10
    %p141 = scmp.lt.s32.totalorder %s10, 5
    %p142 = pnand %p140, %p141
    %p143 = pneg %p142
    // Predicated region
    $region9: #{generator_forward.12} parent=5 // pred_check
      _
    $region10: #{generator_forward.12} parent=5 // pred_check_branch
      %145 = sbr.rel (%p142) target = $region12
    $region11: #{generator_forward.12} parent=5 // pred_region
      %s146 = ssub.s32 %s10, 1
    $region12: #{generator_forward.12} parent=5 // pred_fallthru
      _
    %p147 = scmp.lt.s32.totalorder %s10, 4
    // Predicated region
    $region13: #{generator_forward.12} parent=5 // pred_check
      %p148 = pneg %p147
    $region14: #{generator_forward.12} parent=5 // pred_check_branch
      %150 = sbr.rel (%p148) target = $region16
    $region15: #{generator_forward.12} parent=5 // pred_region
      // Predicated region
      $region17: #{generator_forward.12} parent=15 // pred_check
        %p151 = pneg %p42
      $region18: #{generator_forward.12} parent=15 // pred_check_branch
        %153 = sbr.rel (%p151) target = $region20
      $region19: #{generator_forward.12} parent=15 // pred_region
        %p154 = scmp.lt.s32.totalorder %s17, 3
        %s155 = scalar_select %p154, %s17, 3
        %s156 = smul.addr %s155, 4
        %s157 = scalar_lea.vmem %s0, %s156
      $region20: #{generator_forward.12} parent=15 // pred_fallthru
        _
      // Predicated region
      $region21: #{generator_forward.12} parent=15 // pred_check
        %p158 = pneg %p70
      $region22: #{generator_forward.12} parent=15 // pred_check_branch
        %160 = sbr.rel (%p158) target = $region24
      $region23: #{generator_forward.12} parent=15 // pred_region
        %s161 = smul.u32 36, %s18
        %p162 = scmp.lt.s32.totalorder %s17, 3
        %s163 = scalar_select %p162, %s17, 3
        %p164 = scmp.lt.s32.totalorder %s161, 35
        %s165 = scalar_select %p164, %s161, 35
        %s166 = smul.addr %s163, 288
        %s167 = sadd.s32 %s165, %s166
        %s168 = smul.addr %s167, 4
        %s169 = scalar_lea.vmem %s1, %s168
        %s170 = smul.u32 36, %s18
      $region24: #{generator_forward.12} parent=15 // pred_fallthru
        _
    $region16: #{generator_forward.12} parent=5 // pred_fallthru
      _
    %p171 = scmp.le.s32.totalorder 1, %s10
    %p172 = scmp.lt.s32.totalorder %s10, 5
    %p173 = pnand %p171, %p172
    %p174 = pneg %p173
    // Predicated region
    $region25: #{generator_forward.12} parent=5 // pred_check
      _
    $region26: #{generator_forward.12} parent=5 // pred_check_branch
      %176 = sbr.rel (%p173) target = $region28
    $region27: #{generator_forward.12} parent=5 // pred_region
      %s177 = ssub.s32 %s10, 1
      %p178 = scmp.lt.s32.totalorder %s19, 3
      %s179 = scalar_select %p178, %s19, 3
      %s180 = smul.addr %s179, 4
      %s181 = scalar_lea.vmem %s0, %s180
      %p182 = pneg %p48
      %p183 = pneg %p45
      %s184 = smul.u32 36, %s20
      %p185 = scmp.lt.s32.totalorder %s19, 3
      %s186 = scalar_select %p185, %s19, 3
      %p187 = scmp.lt.s32.totalorder %s184, 35
      %s188 = scalar_select %p187, %s184, 35
      %s189 = smul.addr %s186, 288
      %s190 = sadd.s32 %s188, %s189
      %s191 = smul.addr %s190, 4
      %s192 = scalar_lea.vmem %s1, %s191
      %p193 = pneg %p76
      %p194 = pneg %p73
      %p195 = pneg %p104
      %p196 = pneg %p101
      %s197 = smul.u32 36, %s20
      %p198 = scmp.lt.s32.totalorder %s19, 3
      %s199 = scalar_select %p198, %s19, 3
      %p200 = scmp.lt.s32.totalorder %s197, 35
      %s201 = scalar_select %p200, %s197, 35
      %s202 = smul.addr %s199, 36
      %s203 = sadd.s32 %s201, %s202
      %s204 = smul.addr %s203, 4
      %s205 = scalar_lea.vmem %s2, %s204
      %p206 = pneg %p132
      %p207 = pneg %p129
      %p208 = scmp.lt.s32.totalorder %s19, 3
      %s209 = scalar_select %p208, %s19, 3
      %p210 = scmp.lt.s32.totalorder %s20, 0
      %s211 = scalar_select %p210, %s20, 0
      %s212 = smul.addr %s211, 2
      %s213 = smul.addr %s209, 2
      %s214 = sadd.s32 %s212, %s213
      %s215 = smul.addr %s214, 8
      %s216 = scalar_lea.vmem %s3, %s215
      %p217 = scmp.lt.s32.totalorder %s19, 3
      %s218 = scalar_select %p217, %s19, 3
      %s219 = smul.addr %s218, 4
      %s220 = scalar_lea.vmem %s0, %s219
      %s221 = smul.u32 36, %s20
      %p222 = scmp.lt.s32.totalorder %s19, 3
      %s223 = scalar_select %p222, %s19, 3
      %p224 = scmp.lt.s32.totalorder %s221, 35
      %s225 = scalar_select %p224, %s221, 35
      %s226 = smul.addr %s223, 288
      %s227 = sadd.s32 %s225, %s226
      %s228 = smul.addr %s227, 4
      %s229 = scalar_lea.vmem %s1, %s228
      %s230 = smul.u32 36, %s20
      %s231 = smul.u32 36, %s20
      %p232 = scmp.lt.s32.totalorder %s19, 3
      %s233 = scalar_select %p232, %s19, 3
      %p234 = scmp.lt.s32.totalorder %s231, 35
      %s235 = scalar_select %p234, %s231, 35
      %s236 = smul.addr %s233, 36
      %s237 = sadd.s32 %s235, %s236
      %s238 = smul.addr %s237, 4
      %s239 = scalar_lea.vmem %s2, %s238
      %s240 = smul.u32 36, %s20
      %p241 = scmp.lt.s32.totalorder %s19, 3
      %s242 = scalar_select %p241, %s19, 3
      %p243 = scmp.lt.s32.totalorder %s20, 0
      %s244 = scalar_select %p243, %s20, 0
      %s245 = smul.addr %s244, 2
      %s246 = smul.addr %s242, 2
      %s247 = sadd.s32 %s245, %s246
      %s248 = smul.addr %s247, 8
      %s249 = scalar_lea.vmem %s3, %s248
      %v251 = vld [vmem:[%s220] sm:$0xf]
      %v252 = vld [vmem:[%s229] sm:$0xff]
      %v253 = vld [vmem:[%s229 + $0x8] sm:$0xff]
      %v254 = vld [vmem:[%s229 + $0x10] sm:$0xff]
      %v255 = vld [vmem:[%s229 + $0x18] sm:$0xff]
      %v256 = vld [vmem:[%s229 + $0x20] sm:$0xff]
      %v257 = vld [vmem:[%s229 + $0x28] sm:$0xff]
      %v258 = vld [vmem:[%s229 + $0x30] sm:$0xff]
      %v259 = vld [vmem:[%s229 + $0x38] sm:$0xff]
      %v260 = vld [vmem:[%s229 + $0x40] sm:$0xff]
      %v261 = vld [vmem:[%s229 + $0x48] sm:$0xff]
      %v262 = vld [vmem:[%s229 + $0x50] sm:$0xff]
      %v263 = vld [vmem:[%s229 + $0x58] sm:$0xff]
      %v264 = vld [vmem:[%s229 + $0x60] sm:$0xff]
      %v265 = vld [vmem:[%s229 + $0x68] sm:$0xff]
      %v266 = vld [vmem:[%s229 + $0x70] sm:$0xff]
      %v267 = vld [vmem:[%s229 + $0x78] sm:$0xff]
      %v268 = vld [vmem:[%s229 + $0x80] sm:$0xff]
      %v269 = vld [vmem:[%s229 + $0x88] sm:$0xff]
      %v270 = vld [vmem:[%s229 + $0x90] sm:$0xff]
      %v271 = vld [vmem:[%s229 + $0x98] sm:$0xff]
      %v272 = vld [vmem:[%s229 + $0xa0] sm:$0xff]
      %v273 = vld [vmem:[%s229 + $0xa8] sm:$0xff]
      %v274 = vld [vmem:[%s229 + $0xb0] sm:$0xff]
      %v275 = vld [vmem:[%s229 + $0xb8] sm:$0xff]
      %v276 = vld [vmem:[%s229 + $0xc0] sm:$0xff]
      %v277 = vld [vmem:[%s229 + $0xc8] sm:$0xff]
      %v278 = vld [vmem:[%s229 + $0xd0] sm:$0xff]
      %v279 = vld [vmem:[%s229 + $0xd8] sm:$0xff]
      %v280 = vld [vmem:[%s229 + $0xe0] sm:$0xff]
      %v281 = vld [vmem:[%s229 + $0xe8] sm:$0xff]
      %v282 = vld [vmem:[%s229 + $0xf0] sm:$0xff]
      %v283 = vld [vmem:[%s229 + $0xf8] sm:$0xff]
      %v284 = vld [vmem:[%s229 + $0x100] sm:$0xff]
      %v285 = vld [vmem:[%s229 + $0x108] sm:$0xff]
      %v286 = vld [vmem:[%s229 + $0x110] sm:$0xff]
      %v287 = vld [vmem:[%s229 + $0x118] sm:$0xff]
      %v288 = vld [vmem:[%s229 + $0x120] sm:$0xff]
      %v289 = vld [vmem:[%s229 + $0x128] sm:$0xff]
      %v290 = vld [vmem:[%s229 + $0x130] sm:$0xff]
      %v291 = vld [vmem:[%s229 + $0x138] sm:$0xff]
      %v292 = vld [vmem:[%s229 + $0x140] sm:$0xff]
      %v293 = vld [vmem:[%s229 + $0x148] sm:$0xff]
      %v294 = vld [vmem:[%s229 + $0x150] sm:$0xff]
      %v295 = vld [vmem:[%s229 + $0x158] sm:$0xff]
      %v296 = vld [vmem:[%s229 + $0x160] sm:$0xff]
      %v297 = vld [vmem:[%s229 + $0x168] sm:$0xff]
      %v298 = vld [vmem:[%s229 + $0x170] sm:$0xff]
      %v299 = vld [vmem:[%s229 + $0x178] sm:$0xff]
      %v300 = vld [vmem:[%s229 + $0x180] sm:$0xff]
      %v301 = vld [vmem:[%s229 + $0x188] sm:$0xff]
      %v302 = vld [vmem:[%s229 + $0x190] sm:$0xff]
      %v303 = vld [vmem:[%s229 + $0x198] sm:$0xff]
      %v304 = vld [vmem:[%s229 + $0x1a0] sm:$0xff]
      %v305 = vld [vmem:[%s229 + $0x1a8] sm:$0xff]
      %v306 = vld [vmem:[%s229 + $0x1b0] sm:$0xff]
      %v307 = vld [vmem:[%s229 + $0x1b8] sm:$0xff]
      %v308 = vld [vmem:[%s229 + $0x1c0] sm:$0xff]
      %v309 = vld [vmem:[%s229 + $0x1c8] sm:$0xff]
      %v310 = vld [vmem:[%s229 + $0x1d0] sm:$0xff]
      %v311 = vld [vmem:[%s229 + $0x1d8] sm:$0xff]
      %v312 = vld [vmem:[%s229 + $0x1e0] sm:$0xff]
      %v313 = vld [vmem:[%s229 + $0x1e8] sm:$0xff]
      %v314 = vld [vmem:[%s229 + $0x1f0] sm:$0xff]
      %v315 = vld [vmem:[%s229 + $0x1f8] sm:$0xff]
      %v316 = vld [vmem:[%s229 + $0x200] sm:$0xff]
      %v317 = vld [vmem:[%s229 + $0x208] sm:$0xff]
      %v318 = vld [vmem:[%s229 + $0x210] sm:$0xff]
      %v319 = vld [vmem:[%s229 + $0x218] sm:$0xff]
      %v320 = vld [vmem:[%s229 + $0x220] sm:$0xff]
      %v321 = vld [vmem:[%s229 + $0x228] sm:$0xff]
      %v322 = vld [vmem:[%s229 + $0x230] sm:$0xff]
      %v323 = vld [vmem:[%s229 + $0x238] sm:$0xff]
      %v324 = vld [vmem:[%s229 + $0x240] sm:$0xff]
      %v325 = vld [vmem:[%s229 + $0x248] sm:$0xff]
      %v326 = vld [vmem:[%s229 + $0x250] sm:$0xff]
      %v327 = vld [vmem:[%s229 + $0x258] sm:$0xff]
      %v328 = vld [vmem:[%s229 + $0x260] sm:$0xff]
      %v329 = vld [vmem:[%s229 + $0x268] sm:$0xff]
      %v330 = vld [vmem:[%s229 + $0x270] sm:$0xff]
      %v331 = vld [vmem:[%s229 + $0x278] sm:$0xff]
      %v332 = vld [vmem:[%s229 + $0x280] sm:$0xff]
      %v333 = vld [vmem:[%s229 + $0x288] sm:$0xff]
      %v334 = vld [vmem:[%s229 + $0x290] sm:$0xff]
      %v335 = vld [vmem:[%s229 + $0x298] sm:$0xff]
      %v336 = vld [vmem:[%s229 + $0x2a0] sm:$0xff]
      %v337 = vld [vmem:[%s229 + $0x2a8] sm:$0xff]
      %v338 = vld [vmem:[%s229 + $0x2b0] sm:$0xff]
      %v339 = vld [vmem:[%s229 + $0x2b8] sm:$0xff]
      %v340 = vld [vmem:[%s229 + $0x2c0] sm:$0xff]
      %v341 = vld [vmem:[%s229 + $0x2c8] sm:$0xff]
      %v342 = vld [vmem:[%s229 + $0x2d0] sm:$0xff]
      %v343 = vld [vmem:[%s229 + $0x2d8] sm:$0xff]
      %v344 = vld [vmem:[%s229 + $0x2e0] sm:$0xff]
      %v345 = vld [vmem:[%s229 + $0x2e8] sm:$0xff]
      %v346 = vld [vmem:[%s229 + $0x2f0] sm:$0xff]
      %v347 = vld [vmem:[%s229 + $0x2f8] sm:$0xff]
      %v348 = vld [vmem:[%s229 + $0x300] sm:$0xff]
      %v349 = vld [vmem:[%s229 + $0x308] sm:$0xff]
      %v350 = vld [vmem:[%s229 + $0x310] sm:$0xff]
      %v351 = vld [vmem:[%s229 + $0x318] sm:$0xff]
      %v352 = vld [vmem:[%s229 + $0x320] sm:$0xff]
      %v353 = vld [vmem:[%s229 + $0x328] sm:$0xff]
      %v354 = vld [vmem:[%s229 + $0x330] sm:$0xff]
      %v355 = vld [vmem:[%s229 + $0x338] sm:$0xff]
      %v356 = vld [vmem:[%s229 + $0x340] sm:$0xff]
      %v357 = vld [vmem:[%s229 + $0x348] sm:$0xff]
      %v358 = vld [vmem:[%s229 + $0x350] sm:$0xff]
      %v359 = vld [vmem:[%s229 + $0x358] sm:$0xff]
      %v360 = vld [vmem:[%s229 + $0x360] sm:$0xff]
      %v361 = vld [vmem:[%s229 + $0x368] sm:$0xff]
      %v362 = vld [vmem:[%s229 + $0x370] sm:$0xff]
      %v363 = vld [vmem:[%s229 + $0x378] sm:$0xff]
      %v364 = vld [vmem:[%s229 + $0x380] sm:$0xff]
      %v365 = vld [vmem:[%s229 + $0x388] sm:$0xff]
      %v366 = vld [vmem:[%s229 + $0x390] sm:$0xff]
      %v367 = vld [vmem:[%s229 + $0x398] sm:$0xff]
      %v368 = vld [vmem:[%s229 + $0x3a0] sm:$0xff]
      %v369 = vld [vmem:[%s229 + $0x3a8] sm:$0xff]
      %v370 = vld [vmem:[%s229 + $0x3b0] sm:$0xff]
      %v371 = vld [vmem:[%s229 + $0x3b8] sm:$0xff]
      %v372 = vld [vmem:[%s229 + $0x3c0] sm:$0xff]
      %v373 = vld [vmem:[%s229 + $0x3c8] sm:$0xff]
      %v374 = vld [vmem:[%s229 + $0x3d0] sm:$0xff]
      %v375 = vld [vmem:[%s229 + $0x3d8] sm:$0xff]
      %v376 = vld [vmem:[%s229 + $0x3e0] sm:$0xff]
      %v377 = vld [vmem:[%s229 + $0x3e8] sm:$0xff]
      %v378 = vld [vmem:[%s229 + $0x3f0] sm:$0xff]
      %v379 = vld [vmem:[%s229 + $0x3f8] sm:$0xff]
      %v380 = vld [vmem:[%s229 + $0x400] sm:$0xff]
      %v381 = vld [vmem:[%s229 + $0x408] sm:$0xff]
      %v382 = vld [vmem:[%s229 + $0x410] sm:$0xff]
      %v383 = vld [vmem:[%s229 + $0x418] sm:$0xff]
      %v384 = vld [vmem:[%s229 + $0x420] sm:$0xff]
      %v385 = vld [vmem:[%s229 + $0x428] sm:$0xff]
      %v386 = vld [vmem:[%s229 + $0x430] sm:$0xff]
      %v387 = vld [vmem:[%s229 + $0x438] sm:$0xff]
      %v388 = vld [vmem:[%s229 + $0x440] sm:$0xff]
      %v389 = vld [vmem:[%s229 + $0x448] sm:$0xff]
      %v390 = vld [vmem:[%s229 + $0x450] sm:$0xff]
      %v391 = vld [vmem:[%s229 + $0x458] sm:$0xff]
      %v392 = vld [vmem:[%s229 + $0x460] sm:$0xff]
      %v393 = vld [vmem:[%s229 + $0x468] sm:$0xff]
      %v394 = vld [vmem:[%s229 + $0x470] sm:$0xff]
      %v395 = vld [vmem:[%s229 + $0x478] sm:$0xff]
      %v540 = vunpack.c.l.b16 %v252
      %v541 = vunpack.c.h.b16 %v252
      %v542 = vunpack.c.l.b16 %v253
      %v543 = vunpack.c.h.b16 %v253
      %v544 = vunpack.c.l.b16 %v254
      %v545 = vunpack.c.h.b16 %v254
      %v546 = vunpack.c.l.b16 %v255
      %v547 = vunpack.c.h.b16 %v255
      %v548 = vunpack.c.l.b16 %v256
      %v549 = vunpack.c.h.b16 %v256
      %v550 = vunpack.c.l.b16 %v257
      %v551 = vunpack.c.h.b16 %v257
      %v552 = vunpack.c.l.b16 %v258
      %v553 = vunpack.c.h.b16 %v258
      %v554 = vunpack.c.l.b16 %v259
      %v555 = vunpack.c.h.b16 %v259
      %v556 = vunpack.c.l.b16 %v260
      %v557 = vunpack.c.h.b16 %v260
      %v558 = vunpack.c.l.b16 %v261
      %v559 = vunpack.c.h.b16 %v261
      %v560 = vunpack.c.l.b16 %v262
      %v561 = vunpack.c.h.b16 %v262
      %v562 = vunpack.c.l.b16 %v263
      %v563 = vunpack.c.h.b16 %v263
      %v564 = vunpack.c.l.b16 %v264
      %v565 = vunpack.c.h.b16 %v264
      %v566 = vunpack.c.l.b16 %v265
      %v567 = vunpack.c.h.b16 %v265
      %v568 = vunpack.c.l.b16 %v266
      %v569 = vunpack.c.h.b16 %v266
      %v570 = vunpack.c.l.b16 %v267
      %v571 = vunpack.c.h.b16 %v267
      %v572 = vunpack.c.l.b16 %v268
      %v573 = vunpack.c.h.b16 %v268
      %v574 = vunpack.c.l.b16 %v269
      %v575 = vunpack.c.h.b16 %v269
      %v576 = vunpack.c.l.b16 %v270
      %v577 = vunpack.c.h.b16 %v270
      %v578 = vunpack.c.l.b16 %v271
      %v579 = vunpack.c.h.b16 %v271
      %v580 = vunpack.c.l.b16 %v272
      %v581 = vunpack.c.h.b16 %v272
      %v582 = vunpack.c.l.b16 %v273
      %v583 = vunpack.c.h.b16 %v273
      %v584 = vunpack.c.l.b16 %v274
      %v585 = vunpack.c.h.b16 %v274
      %v586 = vunpack.c.l.b16 %v275
      %v587 = vunpack.c.h.b16 %v275
      %v588 = vunpack.c.l.b16 %v276
      %v589 = vunpack.c.h.b16 %v276
      %v590 = vunpack.c.l.b16 %v277
      %v591 = vunpack.c.h.b16 %v277
      %v592 = vunpack.c.l.b16 %v278
      %v593 = vunpack.c.h.b16 %v278
      %v594 = vunpack.c.l.b16 %v279
      %v595 = vunpack.c.h.b16 %v279
      %v596 = vunpack.c.l.b16 %v280
      %v597 = vunpack.c.h.b16 %v280
      %v598 = vunpack.c.l.b16 %v281
      %v599 = vunpack.c.h.b16 %v281
      %v600 = vunpack.c.l.b16 %v282
      %v601 = vunpack.c.h.b16 %v282
      %v602 = vunpack.c.l.b16 %v283
      %v603 = vunpack.c.h.b16 %v283
      %v604 = vunpack.c.l.b16 %v284
      %v605 = vunpack.c.h.b16 %v284
      %v606 = vunpack.c.l.b16 %v285
      %v607 = vunpack.c.h.b16 %v285
      %v608 = vunpack.c.l.b16 %v286
      %v609 = vunpack.c.h.b16 %v286
      %v610 = vunpack.c.l.b16 %v287
      %v611 = vunpack.c.h.b16 %v287
      %v612 = vunpack.c.l.b16 %v288
      %v613 = vunpack.c.h.b16 %v288
      %v614 = vunpack.c.l.b16 %v289
      %v615 = vunpack.c.h.b16 %v289
      %v616 = vunpack.c.l.b16 %v290
      %v617 = vunpack.c.h.b16 %v290
      %v618 = vunpack.c.l.b16 %v291
      %v619 = vunpack.c.h.b16 %v291
      %v620 = vunpack.c.l.b16 %v292
      %v621 = vunpack.c.h.b16 %v292
      %v622 = vunpack.c.l.b16 %v293
      %v623 = vunpack.c.h.b16 %v293
      %v624 = vunpack.c.l.b16 %v294
      %v625 = vunpack.c.h.b16 %v294
      %v626 = vunpack.c.l.b16 %v295
      %v627 = vunpack.c.h.b16 %v295
      %v628 = vunpack.c.l.b16 %v296
      %v629 = vunpack.c.h.b16 %v296
      %v630 = vunpack.c.l.b16 %v297
      %v631 = vunpack.c.h.b16 %v297
      %v632 = vunpack.c.l.b16 %v298
      %v633 = vunpack.c.h.b16 %v298
      %v634 = vunpack.c.l.b16 %v299
      %v635 = vunpack.c.h.b16 %v299
      %v636 = vunpack.c.l.b16 %v300
      %v637 = vunpack.c.h.b16 %v300
      %v638 = vunpack.c.l.b16 %v301
      %v639 = vunpack.c.h.b16 %v301
      %v640 = vunpack.c.l.b16 %v302
      %v641 = vunpack.c.h.b16 %v302
      %v642 = vunpack.c.l.b16 %v303
      %v643 = vunpack.c.h.b16 %v303
      %v644 = vunpack.c.l.b16 %v304
      %v645 = vunpack.c.h.b16 %v304
      %v646 = vunpack.c.l.b16 %v305
      %v647 = vunpack.c.h.b16 %v305
      %v648 = vunpack.c.l.b16 %v306
      %v649 = vunpack.c.h.b16 %v306
      %v650 = vunpack.c.l.b16 %v307
      %v651 = vunpack.c.h.b16 %v307
      %v652 = vunpack.c.l.b16 %v308
      %v653 = vunpack.c.h.b16 %v308
      %v654 = vunpack.c.l.b16 %v309
      %v655 = vunpack.c.h.b16 %v309
      %v656 = vunpack.c.l.b16 %v310
      %v657 = vunpack.c.h.b16 %v310
      %v658 = vunpack.c.l.b16 %v311
      %v659 = vunpack.c.h.b16 %v311
      %v660 = vunpack.c.l.b16 %v312
      %v661 = vunpack.c.h.b16 %v312
      %v662 = vunpack.c.l.b16 %v313
      %v663 = vunpack.c.h.b16 %v313
      %v664 = vunpack.c.l.b16 %v314
      %v665 = vunpack.c.h.b16 %v314
      %v666 = vunpack.c.l.b16 %v315
      %v667 = vunpack.c.h.b16 %v315
      %v668 = vunpack.c.l.b16 %v316
      %v669 = vunpack.c.h.b16 %v316
      %v670 = vunpack.c.l.b16 %v317
      %v671 = vunpack.c.h.b16 %v317
      %v672 = vunpack.c.l.b16 %v318
      %v673 = vunpack.c.h.b16 %v318
      %v674 = vunpack.c.l.b16 %v319
      %v675 = vunpack.c.h.b16 %v319
      %v676 = vunpack.c.l.b16 %v320
      %v677 = vunpack.c.h.b16 %v320
      %v678 = vunpack.c.l.b16 %v321
      %v679 = vunpack.c.h.b16 %v321
      %v680 = vunpack.c.l.b16 %v322
      %v681 = vunpack.c.h.b16 %v322
      %v682 = vunpack.c.l.b16 %v323
      %v683 = vunpack.c.h.b16 %v323
      %v684 = vunpack.c.l.b16 %v324
      %v685 = vunpack.c.h.b16 %v324
      %v686 = vunpack.c.l.b16 %v325
      %v687 = vunpack.c.h.b16 %v325
      %v688 = vunpack.c.l.b16 %v326
      %v689 = vunpack.c.h.b16 %v326
      %v690 = vunpack.c.l.b16 %v327
      %v691 = vunpack.c.h.b16 %v327
      %v692 = vunpack.c.l.b16 %v328
      %v693 = vunpack.c.h.b16 %v328
      %v694 = vunpack.c.l.b16 %v329
      %v695 = vunpack.c.h.b16 %v329
      %v696 = vunpack.c.l.b16 %v330
      %v697 = vunpack.c.h.b16 %v330
      %v698 = vunpack.c.l.b16 %v331
      %v699 = vunpack.c.h.b16 %v331
      %v700 = vunpack.c.l.b16 %v332
      %v701 = vunpack.c.h.b16 %v332
      %v702 = vunpack.c.l.b16 %v333
      %v703 = vunpack.c.h.b16 %v333
      %v704 = vunpack.c.l.b16 %v334
      %v705 = vunpack.c.h.b16 %v334
      %v706 = vunpack.c.l.b16 %v335
      %v707 = vunpack.c.h.b16 %v335
      %v708 = vunpack.c.l.b16 %v336
      %v709 = vunpack.c.h.b16 %v336
      %v710 = vunpack.c.l.b16 %v337
      %v711 = vunpack.c.h.b16 %v337
      %v712 = vunpack.c.l.b16 %v338
      %v713 = vunpack.c.h.b16 %v338
      %v714 = vunpack.c.l.b16 %v339
      %v715 = vunpack.c.h.b16 %v339
      %v716 = vunpack.c.l.b16 %v340
      %v717 = vunpack.c.h.b16 %v340
      %v718 = vunpack.c.l.b16 %v341
      %v719 = vunpack.c.h.b16 %v341
      %v720 = vunpack.c.l.b16 %v342
      %v721 = vunpack.c.h.b16 %v342
      %v722 = vunpack.c.l.b16 %v343
      %v723 = vunpack.c.h.b16 %v343
      %v724 = vunpack.c.l.b16 %v344
      %v725 = vunpack.c.h.b16 %v344
      %v726 = vunpack.c.l.b16 %v345
      %v727 = vunpack.c.h.b16 %v345
      %v728 = vunpack.c.l.b16 %v346
      %v729 = vunpack.c.h.b16 %v346
      %v730 = vunpack.c.l.b16 %v347
      %v731 = vunpack.c.h.b16 %v347
      %v732 = vunpack.c.l.b16 %v348
      %v733 = vunpack.c.h.b16 %v348
      %v734 = vunpack.c.l.b16 %v349
      %v735 = vunpack.c.h.b16 %v349
      %v736 = vunpack.c.l.b16 %v350
      %v737 = vunpack.c.h.b16 %v350
      %v738 = vunpack.c.l.b16 %v351
      %v739 = vunpack.c.h.b16 %v351
      %v740 = vunpack.c.l.b16 %v352
      %v741 = vunpack.c.h.b16 %v352
      %v742 = vunpack.c.l.b16 %v353
      %v743 = vunpack.c.h.b16 %v353
      %v744 = vunpack.c.l.b16 %v354
      %v745 = vunpack.c.h.b16 %v354
      %v746 = vunpack.c.l.b16 %v355
      %v747 = vunpack.c.h.b16 %v355
      %v748 = vunpack.c.l.b16 %v356
      %v749 = vunpack.c.h.b16 %v356
      %v750 = vunpack.c.l.b16 %v357
      %v751 = vunpack.c.h.b16 %v357
      %v752 = vunpack.c.l.b16 %v358
      %v753 = vunpack.c.h.b16 %v358
      %v754 = vunpack.c.l.b16 %v359
      %v755 = vunpack.c.h.b16 %v359
      %v756 = vunpack.c.l.b16 %v360
      %v757 = vunpack.c.h.b16 %v360
      %v758 = vunpack.c.l.b16 %v361
      %v759 = vunpack.c.h.b16 %v361
      %v760 = vunpack.c.l.b16 %v362
      %v761 = vunpack.c.h.b16 %v362
      %v762 = vunpack.c.l.b16 %v363
      %v763 = vunpack.c.h.b16 %v363
      %v764 = vunpack.c.l.b16 %v364
      %v765 = vunpack.c.h.b16 %v364
      %v766 = vunpack.c.l.b16 %v365
      %v767 = vunpack.c.h.b16 %v365
      %v768 = vunpack.c.l.b16 %v366
      %v769 = vunpack.c.h.b16 %v366
      %v770 = vunpack.c.l.b16 %v367
      %v771 = vunpack.c.h.b16 %v367
      %v772 = vunpack.c.l.b16 %v368
      %v773 = vunpack.c.h.b16 %v368
      %v774 = vunpack.c.l.b16 %v369
      %v775 = vunpack.c.h.b16 %v369
      %v776 = vunpack.c.l.b16 %v370
      %v777 = vunpack.c.h.b16 %v370
      %v778 = vunpack.c.l.b16 %v371
      %v779 = vunpack.c.h.b16 %v371
      %v780 = vunpack.c.l.b16 %v372
      %v781 = vunpack.c.h.b16 %v372
      %v782 = vunpack.c.l.b16 %v373
      %v783 = vunpack.c.h.b16 %v373
      %v784 = vunpack.c.l.b16 %v374
      %v785 = vunpack.c.h.b16 %v374
      %v786 = vunpack.c.l.b16 %v375
      %v787 = vunpack.c.h.b16 %v375
      %v788 = vunpack.c.l.b16 %v376
      %v789 = vunpack.c.h.b16 %v376
      %v790 = vunpack.c.l.b16 %v377
      %v791 = vunpack.c.h.b16 %v377
      %v792 = vunpack.c.l.b16 %v378
      %v793 = vunpack.c.h.b16 %v378
      %v794 = vunpack.c.l.b16 %v379
      %v795 = vunpack.c.h.b16 %v379
      %v796 = vunpack.c.l.b16 %v380
      %v797 = vunpack.c.h.b16 %v380
      %v798 = vunpack.c.l.b16 %v381
      %v799 = vunpack.c.h.b16 %v381
      %v800 = vunpack.c.l.b16 %v382
      %v801 = vunpack.c.h.b16 %v382
      %v802 = vunpack.c.l.b16 %v383
      %v803 = vunpack.c.h.b16 %v383
      %v804 = vunpack.c.l.b16 %v384
      %v805 = vunpack.c.h.b16 %v384
      %v806 = vunpack.c.l.b16 %v385
      %v807 = vunpack.c.h.b16 %v385
      %v808 = vunpack.c.l.b16 %v386
      %v809 = vunpack.c.h.b16 %v386
      %v810 = vunpack.c.l.b16 %v387
      %v811 = vunpack.c.h.b16 %v387
      %v812 = vunpack.c.l.b16 %v388
      %v813 = vunpack.c.h.b16 %v388
      %v814 = vunpack.c.l.b16 %v389
      %v815 = vunpack.c.h.b16 %v389
      %v816 = vunpack.c.l.b16 %v390
      %v817 = vunpack.c.h.b16 %v390
      %v818 = vunpack.c.l.b16 %v391
      %v819 = vunpack.c.h.b16 %v391
      %v820 = vunpack.c.l.b16 %v392
      %v821 = vunpack.c.h.b16 %v392
      %v822 = vunpack.c.l.b16 %v393
      %v823 = vunpack.c.h.b16 %v393
      %v824 = vunpack.c.l.b16 %v394
      %v825 = vunpack.c.h.b16 %v394
      %v826 = vunpack.c.l.b16 %v395
      %v827 = vunpack.c.h.b16 %v395
      %v828 = vpack.c.b16 %v576, %v540
      %v829 = vpack.c.b16 %v577, %v541
      %v830 = vpack.c.b16 %v578, %v542
      %v831 = vpack.c.b16 %v579, %v543
      %v832 = vpack.c.b16 %v580, %v544
      %v833 = vpack.c.b16 %v581, %v545
      %v834 = vpack.c.b16 %v582, %v546
      %v835 = vpack.c.b16 %v583, %v547
      %v836 = vpack.c.b16 %v584, %v548
      %v837 = vpack.c.b16 %v585, %v549
      %v838 = vpack.c.b16 %v586, %v550
      %v839 = vpack.c.b16 %v587, %v551
      %v840 = vpack.c.b16 %v588, %v552
      %v841 = vpack.c.b16 %v589, %v553
      %v842 = vpack.c.b16 %v590, %v554
      %v843 = vpack.c.b16 %v591, %v555
      %v844 = vpack.c.b16 %v592, %v556
      %v845 = vpack.c.b16 %v593, %v557
      %v846 = vpack.c.b16 %v594, %v558
      %v847 = vpack.c.b16 %v595, %v559
      %v848 = vpack.c.b16 %v596, %v560
      %v849 = vpack.c.b16 %v597, %v561
      %v850 = vpack.c.b16 %v598, %v562
      %v851 = vpack.c.b16 %v599, %v563
      %v852 = vpack.c.b16 %v600, %v564
      %v853 = vpack.c.b16 %v601, %v565
      %v854 = vpack.c.b16 %v602, %v566
      %v855 = vpack.c.b16 %v603, %v567
      %v856 = vpack.c.b16 %v604, %v568
      %v857 = vpack.c.b16 %v605, %v569
      %v858 = vpack.c.b16 %v606, %v570
      %v859 = vpack.c.b16 %v607, %v571
      %v860 = vpack.c.b16 %v608, %v572
      %v861 = vpack.c.b16 %v609, %v573
      %v862 = vpack.c.b16 %v610, %v574
      %v863 = vpack.c.b16 %v611, %v575
      %v864 = vpack.c.b16 %v648, %v612
      %v865 = vpack.c.b16 %v649, %v613
      %v866 = vpack.c.b16 %v650, %v614
      %v867 = vpack.c.b16 %v651, %v615
      %v868 = vpack.c.b16 %v652, %v616
      %v869 = vpack.c.b16 %v653, %v617
      %v870 = vpack.c.b16 %v654, %v618
      %v871 = vpack.c.b16 %v655, %v619
      %v872 = vpack.c.b16 %v656, %v620
      %v873 = vpack.c.b16 %v657, %v621
      %v874 = vpack.c.b16 %v658, %v622
      %v875 = vpack.c.b16 %v659, %v623
      %v876 = vpack.c.b16 %v660, %v624
      %v877 = vpack.c.b16 %v661, %v625
      %v878 = vpack.c.b16 %v662, %v626
      %v879 = vpack.c.b16 %v663, %v627
      %v880 = vpack.c.b16 %v664, %v628
      %v881 = vpack.c.b16 %v665, %v629
      %v882 = vpack.c.b16 %v666, %v630
      %v883 = vpack.c.b16 %v667, %v631
      %v884 = vpack.c.b16 %v668, %v632
      %v885 = vpack.c.b16 %v669, %v633
      %v886 = vpack.c.b16 %v670, %v634
      %v887 = vpack.c.b16 %v671, %v635
      %v888 = vpack.c.b16 %v672, %v636
      %v889 = vpack.c.b16 %v673, %v637
      %v890 = vpack.c.b16 %v674, %v638
      %v891 = vpack.c.b16 %v675, %v639
      %v892 = vpack.c.b16 %v676, %v640
      %v893 = vpack.c.b16 %v677, %v641
      %v894 = vpack.c.b16 %v678, %v642
      %v895 = vpack.c.b16 %v679, %v643
      %v896 = vpack.c.b16 %v680, %v644
      %v897 = vpack.c.b16 %v681, %v645
      %v898 = vpack.c.b16 %v682, %v646
      %v899 = vpack.c.b16 %v683, %v647
      %v900 = vpack.c.b16 %v720, %v684
      %v901 = vpack.c.b16 %v721, %v685
      %v902 = vpack.c.b16 %v722, %v686
      %v903 = vpack.c.b16 %v723, %v687
      %v904 = vpack.c.b16 %v724, %v688
      %v905 = vpack.c.b16 %v725, %v689
      %v906 = vpack.c.b16 %v726, %v690
      %v907 = vpack.c.b16 %v727, %v691
      %v908 = vpack.c.b16 %v728, %v692
      %v909 = vpack.c.b16 %v729, %v693
      %v910 = vpack.c.b16 %v730, %v694
      %v911 = vpack.c.b16 %v731, %v695
      %v912 = vpack.c.b16 %v732, %v696
      %v913 = vpack.c.b16 %v733, %v697
      %v914 = vpack.c.b16 %v734, %v698
      %v915 = vpack.c.b16 %v735, %v699
      %v916 = vpack.c.b16 %v736, %v700
      %v917 = vpack.c.b16 %v737, %v701
      %v918 = vpack.c.b16 %v738, %v702
      %v919 = vpack.c.b16 %v739, %v703
      %v920 = vpack.c.b16 %v740, %v704
      %v921 = vpack.c.b16 %v741, %v705
      %v922 = vpack.c.b16 %v742, %v706
      %v923 = vpack.c.b16 %v743, %v707
      %v924 = vpack.c.b16 %v744, %v708
      %v925 = vpack.c.b16 %v745, %v709
      %v926 = vpack.c.b16 %v746, %v710
      %v927 = vpack.c.b16 %v747, %v711
      %v928 = vpack.c.b16 %v748, %v712
      %v929 = vpack.c.b16 %v749, %v713
      %v930 = vpack.c.b16 %v750, %v714
      %v931 = vpack.c.b16 %v751, %v715
      %v932 = vpack.c.b16 %v752, %v716
      %v933 = vpack.c.b16 %v753, %v717
      %v934 = vpack.c.b16 %v754, %v718
      %v935 = vpack.c.b16 %v755, %v719
      %v936 = vpack.c.b16 %v792, %v756
      %v937 = vpack.c.b16 %v793, %v757
      %v938 = vpack.c.b16 %v794, %v758
      %v939 = vpack.c.b16 %v795, %v759
      %v940 = vpack.c.b16 %v796, %v760
      %v941 = vpack.c.b16 %v797, %v761
      %v942 = vpack.c.b16 %v798, %v762
      %v943 = vpack.c.b16 %v799, %v763
      %v944 = vpack.c.b16 %v800, %v764
      %v945 = vpack.c.b16 %v801, %v765
      %v946 = vpack.c.b16 %v802, %v766
      %v947 = vpack.c.b16 %v803, %v767
      %v948 = vpack.c.b16 %v804, %v768
      %v949 = vpack.c.b16 %v805, %v769
      %v950 = vpack.c.b16 %v806, %v770
      %v951 = vpack.c.b16 %v807, %v771
      %v952 = vpack.c.b16 %v808, %v772
      %v953 = vpack.c.b16 %v809, %v773
      %v954 = vpack.c.b16 %v810, %v774
      %v955 = vpack.c.b16 %v811, %v775
      %v956 = vpack.c.b16 %v812, %v776
      %v957 = vpack.c.b16 %v813, %v777
      %v958 = vpack.c.b16 %v814, %v778
      %v959 = vpack.c.b16 %v815, %v779
      %v960 = vpack.c.b16 %v816, %v780
      %v961 = vpack.c.b16 %v817, %v781
      %v962 = vpack.c.b16 %v818, %v782
      %v963 = vpack.c.b16 %v819, %v783
      %v964 = vpack.c.b16 %v820, %v784
      %v965 = vpack.c.b16 %v821, %v785
      %v966 = vpack.c.b16 %v822, %v786
      %v967 = vpack.c.b16 %v823, %v787
      %v968 = vpack.c.b16 %v824, %v788
      %v969 = vpack.c.b16 %v825, %v789
      %v970 = vpack.c.b16 %v826, %v790
      %v971 = vpack.c.b16 %v827, %v791
      %vm1116 = vcmask 523264
      %v1118 = vsel %vm1116, %v251, 0
      %1120 = vmatprep.subr.bf16.mxu0 %v829
      %1121 = vmatpush1.bf16.msra.mxu0 %v828
      %1122 = vmatprep.subr.bf16.mxu0 %v865
      %1123 = vmatpush1.bf16.msra.mxu0 %v864
      %1124 = vmatprep.subr.bf16.mxu0 %v901
      %1125 = vmatpush1.bf16.msra.mxu0 %v900
      %1126 = vmatprep.subr.bf16.mxu0 %v937
      %1127 = vmatpush1.bf16.msra.mxu0 %v936
      %1128 = vmatprep.subr.bf16.mxu0 0
      %1129 = vmatpush1.bf16.msra.mxu0 0
      %1130 = vmatprep.subr.bf16.mxu0 0
      %1131 = vmatpush1.bf16.msra.mxu0 0
      %1132 = vmatprep.subr.bf16.mxu0 0
      %1133 = vmatpush1.bf16.msra.mxu0 0
      %1134 = vmatprep.subr.bf16.mxu0 0
      %1135 = vmatpush1.bf16.msra.mxu0 0
      %1136 = vmatprep.subr.bf16.mxu0 0
      %1137 = vmatpush1.bf16.msra.mxu0 0
      %1138 = vmatprep.subr.bf16.mxu0 0
      %1139 = vmatpush1.bf16.msra.mxu0 0
      %1140 = vmatprep.subr.bf16.mxu0 0
      %1141 = vmatpush1.bf16.msra.mxu0 0
      %1142 = vmatprep.subr.bf16.mxu0 0
      %1143 = vmatpush1.bf16.msra.mxu0 0
      %1144 = vmatprep.subr.bf16.mxu0 0
      %1145 = vmatpush1.bf16.msra.mxu0 0
      %1146 = vmatprep.subr.bf16.mxu0 0
      %1147 = vmatpush1.bf16.msra.mxu0 0
      %1148 = vmatprep.subr.bf16.mxu0 0
      %1149 = vmatpush1.bf16.msra.mxu0 0
      %1150 = vmatprep.subr.bf16.mxu0 0
      %1151 = vmatpush1.bf16.msra.mxu0 0
      %1152 = vmatprep.mubr.bf16.mxu0 0
      %1153 = vmatmul.mubr.bf16.gmra.mrb[0].mxu0 %v1118
      %v1154 = vpop.f32.mrb[0].mxu0
      %v1155 = vadd.f32 0.0, %v1154
      %v1156 = vpop.f32.mrb[0].mxu0
      %v1157 = vadd.f32 0.0, %v1156
      %v1158 = vpop.f32.mrb[0].mxu0
      %v1159 = vpop.f32.mrb[0].mxu0
      %1160 = vdwg.mxu0
      %1161 = vmatprep.subr.bf16.mxu0 %v831
      %1162 = vmatpush1.bf16.msra.mxu0 %v830
      %1163 = vmatprep.subr.bf16.mxu0 %v867
      %1164 = vmatpush1.bf16.msra.mxu0 %v866
      %1165 = vmatprep.subr.bf16.mxu0 %v903
      %1166 = vmatpush1.bf16.msra.mxu0 %v902
      %1167 = vmatprep.subr.bf16.mxu0 %v939
      %1168 = vmatpush1.bf16.msra.mxu0 %v938
      %1169 = vmatprep.subr.bf16.mxu0 0
      %1170 = vmatpush1.bf16.msra.mxu0 0
      %1171 = vmatprep.subr.bf16.mxu0 0
      %1172 = vmatpush1.bf16.msra.mxu0 0
      %1173 = vmatprep.subr.bf16.mxu0 0
      %1174 = vmatpush1.bf16.msra.mxu0 0
      %1175 = vmatprep.subr.bf16.mxu0 0
      %1176 = vmatpush1.bf16.msra.mxu0 0
      %1177 = vmatprep.subr.bf16.mxu0 0
      %1178 = vmatpush1.bf16.msra.mxu0 0
      %1179 = vmatprep.subr.bf16.mxu0 0
      %1180 = vmatpush1.bf16.msra.mxu0 0
      %1181 = vmatprep.subr.bf16.mxu0 0
      %1182 = vmatpush1.bf16.msra.mxu0 0
      %1183 = vmatprep.subr.bf16.mxu0 0
      %1184 = vmatpush1.bf16.msra.mxu0 0
      %1185 = vmatprep.subr.bf16.mxu0 0
      %1186 = vmatpush1.bf16.msra.mxu0 0
      %1187 = vmatprep.subr.bf16.mxu0 0
      %1188 = vmatpush1.bf16.msra.mxu0 0
      %1189 = vmatprep.subr.bf16.mxu0 0
      %1190 = vmatpush1.bf16.msra.mxu0 0
      %1191 = vmatprep.subr.bf16.mxu0 0
      %1192 = vmatpush1.bf16.msra.mxu0 0
      %1193 = vmatprep.mubr.bf16.mxu0 0
      %1194 = vmatmul.mubr.bf16.gmra.mrb[0].mxu0 %v1118
      %v1195 = vpop.f32.mrb[0].mxu0
      %v1196 = vadd.f32 0.0, %v1195
      %v1197 = vpop.f32.mrb[0].mxu0
      %v1198 = vadd.f32 0.0, %v1197
      %v1199 = vpop.f32.mrb[0].mxu0
      %v1200 = vpop.f32.mrb[0].mxu0
      %1201 = vdwg.mxu0
      %1202 = vmatprep.subr.bf16.mxu0 %v833
      %1203 = vmatpush1.bf16.msra.mxu0 %v832
      %1204 = vmatprep.subr.bf16.mxu0 %v869
      %1205 = vmatpush1.bf16.msra.mxu0 %v868
      %1206 = vmatprep.subr.bf16.mxu0 %v905
      %1207 = vmatpush1.bf16.msra.mxu0 %v904
      %1208 = vmatprep.subr.bf16.mxu0 %v941
      %1209 = vmatpush1.bf16.msra.mxu0 %v940
      %1210 = vmatprep.subr.bf16.mxu0 0
      %1211 = vmatpush1.bf16.msra.mxu0 0
      %1212 = vmatprep.subr.bf16.mxu0 0
      %1213 = vmatpush1.bf16.msra.mxu0 0
      %1214 = vmatprep.subr.bf16.mxu0 0
      %1215 = vmatpush1.bf16.msra.mxu0 0
      %1216 = vmatprep.subr.bf16.mxu0 0
      %1217 = vmatpush1.bf16.msra.mxu0 0
      %1218 = vmatprep.subr.bf16.mxu0 0
      %1219 = vmatpush1.bf16.msra.mxu0 0
      %1220 = vmatprep.subr.bf16.mxu0 0
      %1221 = vmatpush1.bf16.msra.mxu0 0
      %1222 = vmatprep.subr.bf16.mxu0 0
      %1223 = vmatpush1.bf16.msra.mxu0 0
      %1224 = vmatprep.subr.bf16.mxu0 0
      %1225 = vmatpush1.bf16.msra.mxu0 0
      %1226 = vmatprep.subr.bf16.mxu0 0
      %1227 = vmatpush1.bf16.msra.mxu0 0
      %1228 = vmatprep.subr.bf16.mxu0 0
      %1229 = vmatpush1.bf16.msra.mxu0 0
      %1230 = vmatprep.subr.bf16.mxu0 0
      %1231 = vmatpush1.bf16.msra.mxu0 0
      %1232 = vmatprep.subr.bf16.mxu0 0
      %1233 = vmatpush1.bf16.msra.mxu0 0
      %1234 = vmatprep.mubr.bf16.mxu0 0
      %1235 = vmatmul.mubr.bf16.gmra.mrb[0].mxu0 %v1118
      %v1236 = vpop.f32.mrb[0].mxu0
      %v1237 = vadd.f32 0.0, %v1236
      %v1238 = vpop.f32.mrb[0].mxu0
      %v1239 = vadd.f32 0.0, %v1238
      %v1240 = vpop.f32.mrb[0].mxu0
      %v1241 = vpop.f32.mrb[0].mxu0
      %1242 = vdwg.mxu0
      %1243 = vmatprep.subr.bf16.mxu0 %v835
      %1244 = vmatpush1.bf16.msra.mxu0 %v834
      %1245 = vmatprep.subr.bf16.mxu0 %v871
      %1246 = vmatpush1.bf16.msra.mxu0 %v870
      %1247 = vmatprep.subr.bf16.mxu0 %v907
      %1248 = vmatpush1.bf16.msra.mxu0 %v906
      %1249 = vmatprep.subr.bf16.mxu0 %v943
      %1250 = vmatpush1.bf16.msra.mxu0 %v942
      %1251 = vmatprep.subr.bf16.mxu0 0
      %1252 = vmatpush1.bf16.msra.mxu0 0
      %1253 = vmatprep.subr.bf16.mxu0 0
      %1254 = vmatpush1.bf16.msra.mxu0 0
      %1255 = vmatprep.subr.bf16.mxu0 0
      %1256 = vmatpush1.bf16.msra.mxu0 0
      %1257 = vmatprep.subr.bf16.mxu0 0
      %1258 = vmatpush1.bf16.msra.mxu0 0
      %1259 = vmatprep.subr.bf16.mxu0 0
      %1260 = vmatpush1.bf16.msra.mxu0 0
      %1261 = vmatprep.subr.bf16.mxu0 0
      %1262 = vmatpush1.bf16.msra.mxu0 0
      %1263 = vmatprep.subr.bf16.mxu0 0
      %1264 = vmatpush1.bf16.msra.mxu0 0
      %1265 = vmatprep.subr.bf16.mxu0 0
      %1266 = vmatpush1.bf16.msra.mxu0 0
      %1267 = vmatprep.subr.bf16.mxu0 0
      %1268 = vmatpush1.bf16.msra.mxu0 0
      %1269 = vmatprep.subr.bf16.mxu0 0
      %1270 = vmatpush1.bf16.msra.mxu0 0
      %1271 = vmatprep.subr.bf16.mxu0 0
      %1272 = vmatpush1.bf16.msra.mxu0 0
      %1273 = vmatprep.subr.bf16.mxu0 0
      %1274 = vmatpush1.bf16.msra.mxu0 0
      %1275 = vmatprep.mubr.bf16.mxu0 0
      %1276 = vmatmul.mubr.bf16.gmra.mrb[0].mxu0 %v1118
      %v1277 = vpop.f32.mrb[0].mxu0
      %v1278 = vadd.f32 0.0, %v1277
      %v1279 = vpop.f32.mrb[0].mxu0
      %v1280 = vadd.f32 0.0, %v1279
      %v1281 = vpop.f32.mrb[0].mxu0
      %v1282 = vpop.f32.mrb[0].mxu0
      %1283 = vdwg.mxu0
      %1284 = vmatprep.subr.bf16.mxu0 %v837
      %1285 = vmatpush1.bf16.msra.mxu0 %v836
      %1286 = vmatprep.subr.bf16.mxu0 %v873
      %1287 = vmatpush1.bf16.msra.mxu0 %v872
      %1288 = vmatprep.subr.bf16.mxu0 %v909
      %1289 = vmatpush1.bf16.msra.mxu0 %v908
      %1290 = vmatprep.subr.bf16.mxu0 %v945
      %1291 = vmatpush1.bf16.msra.mxu0 %v944
      %1292 = vmatprep.subr.bf16.mxu0 0
      %1293 = vmatpush1.bf16.msra.mxu0 0
      %1294 = vmatprep.subr.bf16.mxu0 0
      %1295 = vmatpush1.bf16.msra.mxu0 0
      %1296 = vmatprep.subr.bf16.mxu0 0
      %1297 = vmatpush1.bf16.msra.mxu0 0
      %1298 = vmatprep.subr.bf16.mxu0 0
      %1299 = vmatpush1.bf16.msra.mxu0 0
      %1300 = vmatprep.subr.bf16.mxu0 0
      %1301 = vmatpush1.bf16.msra.mxu0 0
      %1302 = vmatprep.subr.bf16.mxu0 0
      %1303 = vmatpush1.bf16.msra.mxu0 0
      %1304 = vmatprep.subr.bf16.mxu0 0
      %1305 = vmatpush1.bf16.msra.mxu0 0
      %1306 = vmatprep.subr.bf16.mxu0 0
      %1307 = vmatpush1.bf16.msra.mxu0 0
      %1308 = vmatprep.subr.bf16.mxu0 0
      %1309 = vmatpush1.bf16.msra.mxu0 0
      %1310 = vmatprep.subr.bf16.mxu0 0
      %1311 = vmatpush1.bf16.msra.mxu0 0
      %1312 = vmatprep.subr.bf16.mxu0 0
      %1313 = vmatpush1.bf16.msra.mxu0 0
      %1314 = vmatprep.subr.bf16.mxu0 0
      %1315 = vmatpush1.bf16.msra.mxu0 0
      %1316 = vmatprep.mubr.bf16.mxu0 0
      %1317 = vmatmul.mubr.bf16.gmra.mrb[0].mxu0 %v1118
      %v1318 = vpop.f32.mrb[0].mxu0
      %v1319 = vadd.f32 0.0, %v1318
      %v1320 = vpop.f32.mrb[0].mxu0
      %v1321 = vadd.f32 0.0, %v1320
      %v1322 = vpop.f32.mrb[0].mxu0
      %v1323 = vpop.f32.mrb[0].mxu0
      %1324 = vdwg.mxu0
      %1325 = vmatprep.subr.bf16.mxu0 %v839
      %1326 = vmatpush1.bf16.msra.mxu0 %v838
      %1327 = vmatprep.subr.bf16.mxu0 %v875
      %1328 = vmatpush1.bf16.msra.mxu0 %v874
      %1329 = vmatprep.subr.bf16.mxu0 %v911
      %1330 = vmatpush1.bf16.msra.mxu0 %v910
      %1331 = vmatprep.subr.bf16.mxu0 %v947
      %1332 = vmatpush1.bf16.msra.mxu0 %v946
      %1333 = vmatprep.subr.bf16.mxu0 0
      %1334 = vmatpush1.bf16.msra.mxu0 0
      %1335 = vmatprep.subr.bf16.mxu0 0
      %1336 = vmatpush1.bf16.msra.mxu0 0
      %1337 = vmatprep.subr.bf16.mxu0 0
      %1338 = vmatpush1.bf16.msra.mxu0 0
      %1339 = vmatprep.subr.bf16.mxu0 0
      %1340 = vmatpush1.bf16.msra.mxu0 0
      %1341 = vmatprep.subr.bf16.mxu0 0
      %1342 = vmatpush1.bf16.msra.mxu0 0
      %1343 = vmatprep.subr.bf16.mxu0 0
      %1344 = vmatpush1.bf16.msra.mxu0 0
      %1345 = vmatprep.subr.bf16.mxu0 0
      %1346 = vmatpush1.bf16.msra.mxu0 0
      %1347 = vmatprep.subr.bf16.mxu0 0
      %1348 = vmatpush1.bf16.msra.mxu0 0
      %1349 = vmatprep.subr.bf16.mxu0 0
      %1350 = vmatpush1.bf16.msra.mxu0 0
      %1351 = vmatprep.subr.bf16.mxu0 0
      %1352 = vmatpush1.bf16.msra.mxu0 0
      %1353 = vmatprep.subr.bf16.mxu0 0
      %1354 = vmatpush1.bf16.msra.mxu0 0
      %1355 = vmatprep.subr.bf16.mxu0 0
      %1356 = vmatpush1.bf16.msra.mxu0 0
      %1357 = vmatprep.mubr.bf16.mxu0 0
      %1358 = vmatmul.mubr.bf16.gmra.mrb[0].mxu0 %v1118
      %v1359 = vpop.f32.mrb[0].mxu0
      %v1360 = vadd.f32 0.0, %v1359
      %v1361 = vpop.f32.mrb[0].mxu0
      %v1362 = vadd.f32 0.0, %v1361
      %v1363 = vpop.f32.mrb[0].mxu0
      %v1364 = vpop.f32.mrb[0].mxu0
      %1365 = vdwg.mxu0
      %1366 = vmatprep.subr.bf16.mxu0 %v841
      %1367 = vmatpush1.bf16.msra.mxu0 %v840
      %1368 = vmatprep.subr.bf16.mxu0 %v877
      %1369 = vmatpush1.bf16.msra.mxu0 %v876
      %1370 = vmatprep.subr.bf16.mxu0 %v913
      %1371 = vmatpush1.bf16.msra.mxu0 %v912
      %1372 = vmatprep.subr.bf16.mxu0 %v949
      %1373 = vmatpush1.bf16.msra.mxu0 %v948
      %1374 = vmatprep.subr.bf16.mxu0 0
      %1375 = vmatpush1.bf16.msra.mxu0 0
      %1376 = vmatprep.subr.bf16.mxu0 0
      %1377 = vmatpush1.bf16.msra.mxu0 0
      %1378 = vmatprep.subr.bf16.mxu0 0
      %1379 = vmatpush1.bf16.msra.mxu0 0
      %1380 = vmatprep.subr.bf16.mxu0 0
      %1381 = vmatpush1.bf16.msra.mxu0 0
      %1382 = vmatprep.subr.bf16.mxu0 0
      %1383 = vmatpush1.bf16.msra.mxu0 0
      %1384 = vmatprep.subr.bf16.mxu0 0
      %1385 = vmatpush1.bf16.msra.mxu0 0
      %1386 = vmatprep.subr.bf16.mxu0 0
      %1387 = vmatpush1.bf16.msra.mxu0 0
      %1388 = vmatprep.subr.bf16.mxu0 0
      %1389 = vmatpush1.bf16.msra.mxu0 0
      %1390 = vmatprep.subr.bf16.mxu0 0
      %1391 = vmatpush1.bf16.msra.mxu0 0
      %1392 = vmatprep.subr.bf16.mxu0 0
      %1393 = vmatpush1.bf16.msra.mxu0 0
      %1394 = vmatprep.subr.bf16.mxu0 0
      %1395 = vmatpush1.bf16.msra.mxu0 0
      %1396 = vmatprep.subr.bf16.mxu0 0
      %1397 = vmatpush1.bf16.msra.mxu0 0
      %1398 = vmatprep.mubr.bf16.mxu0 0
      %1399 = vmatmul.mubr.bf16.gmra.mrb[0].mxu0 %v1118
      %v1400 = vpop.f32.mrb[0].mxu0
      %v1401 = vadd.f32 0.0, %v1400
      %v1402 = vpop.f32.mrb[0].mxu0
      %v1403 = vadd.f32 0.0, %v1402
      %v1404 = vpop.f32.mrb[0].mxu0
      %v1405 = vpop.f32.mrb[0].mxu0
      %1406 = vdwg.mxu0
      %1407 = vmatprep.subr.bf16.mxu0 %v843
      %1408 = vmatpush1.bf16.msra.mxu0 %v842
      %1409 = vmatprep.subr.bf16.mxu0 %v879
      %1410 = vmatpush1.bf16.msra.mxu0 %v878
      %1411 = vmatprep.subr.bf16.mxu0 %v915
      %1412 = vmatpush1.bf16.msra.mxu0 %v914
      %1413 = vmatprep.subr.bf16.mxu0 %v951
      %1414 = vmatpush1.bf16.msra.mxu0 %v950
      %1415 = vmatprep.subr.bf16.mxu0 0
      %1416 = vmatpush1.bf16.msra.mxu0 0
      %1417 = vmatprep.subr.bf16.mxu0 0
      %1418 = vmatpush1.bf16.msra.mxu0 0
      %1419 = vmatprep.subr.bf16.mxu0 0
      %1420 = vmatpush1.bf16.msra.mxu0 0
      %1421 = vmatprep.subr.bf16.mxu0 0
      %1422 = vmatpush1.bf16.msra.mxu0 0
      %1423 = vmatprep.subr.bf16.mxu0 0
      %1424 = vmatpush1.bf16.msra.mxu0 0
      %1425 = vmatprep.subr.bf16.mxu0 0
      %1426 = vmatpush1.bf16.msra.mxu0 0
      %1427 = vmatprep.subr.bf16.mxu0 0
      %1428 = vmatpush1.bf16.msra.mxu0 0
      %1429 = vmatprep.subr.bf16.mxu0 0
      %1430 = vmatpush1.bf16.msra.mxu0 0
      %1431 = vmatprep.subr.bf16.mxu0 0
      %1432 = vmatpush1.bf16.msra.mxu0 0
      %1433 = vmatprep.subr.bf16.mxu0 0
      %1434 = vmatpush1.bf16.msra.mxu0 0
      %1435 = vmatprep.subr.bf16.mxu0 0
      %1436 = vmatpush1.bf16.msra.mxu0 0
      %1437 = vmatprep.subr.bf16.mxu0 0
      %1438 = vmatpush1.bf16.msra.mxu0 0
      %1439 = vmatprep.mubr.bf16.mxu0 0
      %1440 = vmatmul.mubr.bf16.gmra.mrb[0].mxu0 %v1118
      %v1441 = vpop.f32.mrb[0].mxu0
      %v1442 = vadd.f32 0.0, %v1441
      %v1443 = vpop.f32.mrb[0].mxu0
      %v1444 = vadd.f32 0.0, %v1443
      %v1445 = vpop.f32.mrb[0].mxu0
      %v1446 = vpop.f32.mrb[0].mxu0
      %1447 = vdwg.mxu0
      %1448 = vmatprep.subr.bf16.mxu0 %v845
      %1449 = vmatpush1.bf16.msra.mxu0 %v844
      %1450 = vmatprep.subr.bf16.mxu0 %v881
      %1451 = vmatpush1.bf16.msra.mxu0 %v880
      %1452 = vmatprep.subr.bf16.mxu0 %v917
      %1453 = vmatpush1.bf16.msra.mxu0 %v916
      %1454 = vmatprep.subr.bf16.mxu0 %v953
      %1455 = vmatpush1.bf16.msra.mxu0 %v952
      %1456 = vmatprep.subr.bf16.mxu0 0
      %1457 = vmatpush1.bf16.msra.mxu0 0
      %1458 = vmatprep.subr.bf16.mxu0 0
      %1459 = vmatpush1.bf16.msra.mxu0 0
      %1460 = vmatprep.subr.bf16.mxu0 0
      %1461 = vmatpush1.bf16.msra.mxu0 0
      %1462 = vmatprep.subr.bf16.mxu0 0
      %1463 = vmatpush1.bf16.msra.mxu0 0
      %1464 = vmatprep.subr.bf16.mxu0 0
      %1465 = vmatpush1.bf16.msra.mxu0 0
      %1466 = vmatprep.subr.bf16.mxu0 0
      %1467 = vmatpush1.bf16.msra.mxu0 0
      %1468 = vmatprep.subr.bf16.mxu0 0
      %1469 = vmatpush1.bf16.msra.mxu0 0
      %1470 = vmatprep.subr.bf16.mxu0 0
      %1471 = vmatpush1.bf16.msra.mxu0 0
      %1472 = vmatprep.subr.bf16.mxu0 0
      %1473 = vmatpush1.bf16.msra.mxu0 0
      %1474 = vmatprep.subr.bf16.mxu0 0
      %1475 = vmatpush1.bf16.msra.mxu0 0
      %1476 = vmatprep.subr.bf16.mxu0 0
      %1477 = vmatpush1.bf16.msra.mxu0 0
      %1478 = vmatprep.subr.bf16.mxu0 0
      %1479 = vmatpush1.bf16.msra.mxu0 0
      %1480 = vmatprep.mubr.bf16.mxu0 0
      %1481 = vmatmul.mubr.bf16.gmra.mrb[0].mxu0 %v1118
      %v1482 = vpop.f32.mrb[0].mxu0
      %v1483 = vadd.f32 0.0, %v1482
      %v1484 = vpop.f32.mrb[0].mxu0
      %v1485 = vadd.f32 0.0, %v1484
      %v1486 = vpop.f32.mrb[0].mxu0
      %v1487 = vpop.f32.mrb[0].mxu0
      %1488 = vdwg.mxu0
      %1489 = vmatprep.subr.bf16.mxu0 %v847
      %1490 = vmatpush1.bf16.msra.mxu0 %v846
      %1491 = vmatprep.subr.bf16.mxu0 %v883
      %1492 = vmatpush1.bf16.msra.mxu0 %v882
      %1493 = vmatprep.subr.bf16.mxu0 %v919
      %1494 = vmatpush1.bf16.msra.mxu0 %v918
      %1495 = vmatprep.subr.bf16.mxu0 %v955
      %1496 = vmatpush1.bf16.msra.mxu0 %v954
      %1497 = vmatprep.subr.bf16.mxu0 0
      %1498 = vmatpush1.bf16.msra.mxu0 0
      %1499 = vmatprep.subr.bf16.mxu0 0
      %1500 = vmatpush1.bf16.msra.mxu0 0
      %1501 = vmatprep.subr.bf16.mxu0 0
      %1502 = vmatpush1.bf16.msra.mxu0 0
      %1503 = vmatprep.subr.bf16.mxu0 0
      %1504 = vmatpush1.bf16.msra.mxu0 0
      %1505 = vmatprep.subr.bf16.mxu0 0
      %1506 = vmatpush1.bf16.msra.mxu0 0
      %1507 = vmatprep.subr.bf16.mxu0 0
      %1508 = vmatpush1.bf16.msra.mxu0 0
      %1509 = vmatprep.subr.bf16.mxu0 0
      %1510 = vmatpush1.bf16.msra.mxu0 0
      %1511 = vmatprep.subr.bf16.mxu0 0
      %1512 = vmatpush1.bf16.msra.mxu0 0
      %1513 = vmatprep.subr.bf16.mxu0 0
      %1514 = vmatpush1.bf16.msra.mxu0 0
      %1515 = vmatprep.subr.bf16.mxu0 0
      %1516 = vmatpush1.bf16.msra.mxu0 0
      %1517 = vmatprep.subr.bf16.mxu0 0
      %1518 = vmatpush1.bf16.msra.mxu0 0
      %1519 = vmatprep.subr.bf16.mxu0 0
      %1520 = vmatpush1.bf16.msra.mxu0 0
      %1521 = vmatprep.mubr.bf16.mxu0 0
      %1522 = vmatmul.mubr.bf16.gmra.mrb[0].mxu0 %v1118
      %v1523 = vpop.f32.mrb[0].mxu0
      %v1524 = vadd.f32 0.0, %v1523
      %v1525 = vpop.f32.mrb[0].mxu0
      %v1526 = vadd.f32 0.0, %v1525
      %v1527 = vpop.f32.mrb[0].mxu0
      %v1528 = vpop.f32.mrb[0].mxu0
      %1529 = vdwg.mxu0
      %1530 = vmatprep.subr.bf16.mxu0 %v849
      %1531 = vmatpush1.bf16.msra.mxu0 %v848
      %1532 = vmatprep.subr.bf16.mxu0 %v885
      %1533 = vmatpush1.bf16.msra.mxu0 %v884
      %1534 = vmatprep.subr.bf16.mxu0 %v921
      %1535 = vmatpush1.bf16.msra.mxu0 %v920
      %1536 = vmatprep.subr.bf16.mxu0 %v957
      %1537 = vmatpush1.bf16.msra.mxu0 %v956
      %1538 = vmatprep.subr.bf16.mxu0 0
      %1539 = vmatpush1.bf16.msra.mxu0 0
      %1540 = vmatprep.subr.bf16.mxu0 0
      %1541 = vmatpush1.bf16.msra.mxu0 0
      %1542 = vmatprep.subr.bf16.mxu0 0
      %1543 = vmatpush1.bf16.msra.mxu0 0
      %1544 = vmatprep.subr.bf16.mxu0 0
      %1545 = vmatpush1.bf16.msra.mxu0 0
      %1546 = vmatprep.subr.bf16.mxu0 0
      %1547 = vmatpush1.bf16.msra.mxu0 0
      %1548 = vmatprep.subr.bf16.mxu0 0
      %1549 = vmatpush1.bf16.msra.mxu0 0
      %1550 = vmatprep.subr.bf16.mxu0 0
      %1551 = vmatpush1.bf16.msra.mxu0 0
      %1552 = vmatprep.subr.bf16.mxu0 0
      %1553 = vmatpush1.bf16.msra.mxu0 0
      %1554 = vmatprep.subr.bf16.mxu0 0
      %1555 = vmatpush1.bf16.msra.mxu0 0
      %1556 = vmatprep.subr.bf16.mxu0 0
      %1557 = vmatpush1.bf16.msra.mxu0 0
      %1558 = vmatprep.subr.bf16.mxu0 0
      %1559 = vmatpush1.bf16.msra.mxu0 0
      %1560 = vmatprep.subr.bf16.mxu0 0
      %1561 = vmatpush1.bf16.msra.mxu0 0
      %1562 = vmatprep.mubr.bf16.mxu0 0
      %1563 = vmatmul.mubr.bf16.gmra.mrb[0].mxu0 %v1118
      %v1564 = vpop.f32.mrb[0].mxu0
      %v1565 = vadd.f32 0.0, %v1564
      %v1566 = vpop.f32.mrb[0].mxu0
      %v1567 = vadd.f32 0.0, %v1566
      %v1568 = vpop.f32.mrb[0].mxu0
      %v1569 = vpop.f32.mrb[0].mxu0
      %1570 = vdwg.mxu0
      %1571 = vmatprep.subr.bf16.mxu0 %v851
      %1572 = vmatpush1.bf16.msra.mxu0 %v850
      %1573 = vmatprep.subr.bf16.mxu0 %v887
      %1574 = vmatpush1.bf16.msra.mxu0 %v886
      %1575 = vmatprep.subr.bf16.mxu0 %v923
      %1576 = vmatpush1.bf16.msra.mxu0 %v922
      %1577 = vmatprep.subr.bf16.mxu0 %v959
      %1578 = vmatpush1.bf16.msra.mxu0 %v958
      %1579 = vmatprep.subr.bf16.mxu0 0
      %1580 = vmatpush1.bf16.msra.mxu0 0
      %1581 = vmatprep.subr.bf16.mxu0 0
      %1582 = vmatpush1.bf16.msra.mxu0 0
      %1583 = vmatprep.subr.bf16.mxu0 0
      %1584 = vmatpush1.bf16.msra.mxu0 0
      %1585 = vmatprep.subr.bf16.mxu0 0
      %1586 = vmatpush1.bf16.msra.mxu0 0
      %1587 = vmatprep.subr.bf16.mxu0 0
      %1588 = vmatpush1.bf16.msra.mxu0 0
      %1589 = vmatprep.subr.bf16.mxu0 0
      %1590 = vmatpush1.bf16.msra.mxu0 0
      %1591 = vmatprep.subr.bf16.mxu0 0
      %1592 = vmatpush1.bf16.msra.mxu0 0
      %1593 = vmatprep.subr.bf16.mxu0 0
      %1594 = vmatpush1.bf16.msra.mxu0 0
      %1595 = vmatprep.subr.bf16.mxu0 0
      %1596 = vmatpush1.bf16.msra.mxu0 0
      %1597 = vmatprep.subr.bf16.mxu0 0
      %1598 = vmatpush1.bf16.msra.mxu0 0
      %1599 = vmatprep.subr.bf16.mxu0 0
      %1600 = vmatpush1.bf16.msra.mxu0 0
      %1601 = vmatprep.subr.bf16.mxu0 0
      %1602 = vmatpush1.bf16.msra.mxu0 0
      %1603 = vmatprep.mubr.bf16.mxu0 0
      %1604 = vmatmul.mubr.bf16.gmra.mrb[0].mxu0 %v1118
      %v1605 = vpop.f32.mrb[0].mxu0
      %v1606 = vadd.f32 0.0, %v1605
      %v1607 = vpop.f32.mrb[0].mxu0
      %v1608 = vadd.f32 0.0, %v1607
      %v1609 = vpop.f32.mrb[0].mxu0
      %v1610 = vpop.f32.mrb[0].mxu0
      %1611 = vdwg.mxu0
      %1612 = vmatprep.subr.bf16.mxu0 %v853
      %1613 = vmatpush1.bf16.msra.mxu0 %v852
      %1614 = vmatprep.subr.bf16.mxu0 %v889
      %1615 = vmatpush1.bf16.msra.mxu0 %v888
      %1616 = vmatprep.subr.bf16.mxu0 %v925
      %1617 = vmatpush1.bf16.msra.mxu0 %v924
      %1618 = vmatprep.subr.bf16.mxu0 %v961
      %1619 = vmatpush1.bf16.msra.mxu0 %v960
      %1620 = vmatprep.subr.bf16.mxu0 0
      %1621 = vmatpush1.bf16.msra.mxu0 0
      %1622 = vmatprep.subr.bf16.mxu0 0
      %1623 = vmatpush1.bf16.msra.mxu0 0
      %1624 = vmatprep.subr.bf16.mxu0 0
      %1625 = vmatpush1.bf16.msra.mxu0 0
      %1626 = vmatprep.subr.bf16.mxu0 0
      %1627 = vmatpush1.bf16.msra.mxu0 0
      %1628 = vmatprep.subr.bf16.mxu0 0
      %1629 = vmatpush1.bf16.msra.mxu0 0
      %1630 = vmatprep.subr.bf16.mxu0 0
      %1631 = vmatpush1.bf16.msra.mxu0 0
      %1632 = vmatprep.subr.bf16.mxu0 0
      %1633 = vmatpush1.bf16.msra.mxu0 0
      %1634 = vmatprep.subr.bf16.mxu0 0
      %1635 = vmatpush1.bf16.msra.mxu0 0
      %1636 = vmatprep.subr.bf16.mxu0 0
      %1637 = vmatpush1.bf16.msra.mxu0 0
      %1638 = vmatprep.subr.bf16.mxu0 0
      %1639 = vmatpush1.bf16.msra.mxu0 0
      %1640 = vmatprep.subr.bf16.mxu0 0
      %1641 = vmatpush1.bf16.msra.mxu0 0
      %1642 = vmatprep.subr.bf16.mxu0 0
      %1643 = vmatpush1.bf16.msra.mxu0 0
      %1644 = vmatprep.mubr.bf16.mxu0 0
      %1645 = vmatmul.mubr.bf16.gmra.mrb[0].mxu0 %v1118
      %v1646 = vpop.f32.mrb[0].mxu0
      %v1647 = vadd.f32 0.0, %v1646
      %v1648 = vpop.f32.mrb[0].mxu0
      %v1649 = vadd.f32 0.0, %v1648
      %v1650 = vpop.f32.mrb[0].mxu0
      %v1651 = vpop.f32.mrb[0].mxu0
      %1652 = vdwg.mxu0
      %1653 = vmatprep.subr.bf16.mxu0 %v855
      %1654 = vmatpush1.bf16.msra.mxu0 %v854
      %1655 = vmatprep.subr.bf16.mxu0 %v891
      %1656 = vmatpush1.bf16.msra.mxu0 %v890
      %1657 = vmatprep.subr.bf16.mxu0 %v927
      %1658 = vmatpush1.bf16.msra.mxu0 %v926
      %1659 = vmatprep.subr.bf16.mxu0 %v963
      %1660 = vmatpush1.bf16.msra.mxu0 %v962
      %1661 = vmatprep.subr.bf16.mxu0 0
      %1662 = vmatpush1.bf16.msra.mxu0 0
      %1663 = vmatprep.subr.bf16.mxu0 0
      %1664 = vmatpush1.bf16.msra.mxu0 0
      %1665 = vmatprep.subr.bf16.mxu0 0
      %1666 = vmatpush1.bf16.msra.mxu0 0
      %1667 = vmatprep.subr.bf16.mxu0 0
      %1668 = vmatpush1.bf16.msra.mxu0 0
      %1669 = vmatprep.subr.bf16.mxu0 0
      %1670 = vmatpush1.bf16.msra.mxu0 0
      %1671 = vmatprep.subr.bf16.mxu0 0
      %1672 = vmatpush1.bf16.msra.mxu0 0
      %1673 = vmatprep.subr.bf16.mxu0 0
      %1674 = vmatpush1.bf16.msra.mxu0 0
      %1675 = vmatprep.subr.bf16.mxu0 0
      %1676 = vmatpush1.bf16.msra.mxu0 0
      %1677 = vmatprep.subr.bf16.mxu0 0
      %1678 = vmatpush1.bf16.msra.mxu0 0
      %1679 = vmatprep.subr.bf16.mxu0 0
      %1680 = vmatpush1.bf16.msra.mxu0 0
      %1681 = vmatprep.subr.bf16.mxu0 0
      %1682 = vmatpush1.bf16.msra.mxu0 0
      %1683 = vmatprep.subr.bf16.mxu0 0
      %1684 = vmatpush1.bf16.msra.mxu0 0
      %1685 = vmatprep.mubr.bf16.mxu0 0
      %1686 = vmatmul.mubr.bf16.gmra.mrb[0].mxu0 %v1118
      %v1687 = vpop.f32.mrb[0].mxu0
      %v1688 = vadd.f32 0.0, %v1687
      %v1689 = vpop.f32.mrb[0].mxu0
      %v1690 = vadd.f32 0.0, %v1689
      %v1691 = vpop.f32.mrb[0].mxu0
      %v1692 = vpop.f32.mrb[0].mxu0
      %1693 = vdwg.mxu0
      %1694 = vmatprep.subr.bf16.mxu0 %v857
      %1695 = vmatpush1.bf16.msra.mxu0 %v856
      %1696 = vmatprep.subr.bf16.mxu0 %v893
      %1697 = vmatpush1.bf16.msra.mxu0 %v892
      %1698 = vmatprep.subr.bf16.mxu0 %v929
      %1699 = vmatpush1.bf16.msra.mxu0 %v928
      %1700 = vmatprep.subr.bf16.mxu0 %v965
      %1701 = vmatpush1.bf16.msra.mxu0 %v964
      %1702 = vmatprep.subr.bf16.mxu0 0
      %1703 = vmatpush1.bf16.msra.mxu0 0
      %1704 = vmatprep.subr.bf16.mxu0 0
      %1705 = vmatpush1.bf16.msra.mxu0 0
      %1706 = vmatprep.subr.bf16.mxu0 0
      %1707 = vmatpush1.bf16.msra.mxu0 0
      %1708 = vmatprep.subr.bf16.mxu0 0
      %1709 = vmatpush1.bf16.msra.mxu0 0
      %1710 = vmatprep.subr.bf16.mxu0 0
      %1711 = vmatpush1.bf16.msra.mxu0 0
      %1712 = vmatprep.subr.bf16.mxu0 0
      %1713 = vmatpush1.bf16.msra.mxu0 0
      %1714 = vmatprep.subr.bf16.mxu0 0
      %1715 = vmatpush1.bf16.msra.mxu0 0
      %1716 = vmatprep.subr.bf16.mxu0 0
      %1717 = vmatpush1.bf16.msra.mxu0 0
      %1718 = vmatprep.subr.bf16.mxu0 0
      %1719 = vmatpush1.bf16.msra.mxu0 0
      %1720 = vmatprep.subr.bf16.mxu0 0
      %1721 = vmatpush1.bf16.msra.mxu0 0
      %1722 = vmatprep.subr.bf16.mxu0 0
      %1723 = vmatpush1.bf16.msra.mxu0 0
      %1724 = vmatprep.subr.bf16.mxu0 0
      %1725 = vmatpush1.bf16.msra.mxu0 0
      %1726 = vmatprep.mubr.bf16.mxu0 0
      %1727 = vmatmul.mubr.bf16.gmra.mrb[0].mxu0 %v1118
      %v1728 = vpop.f32.mrb[0].mxu0
      %v1729 = vadd.f32 0.0, %v1728
      %v1730 = vpop.f32.mrb[0].mxu0
      %v1731 = vadd.f32 0.0, %v1730
      %v1732 = vpop.f32.mrb[0].mxu0
      %v1733 = vpop.f32.mrb[0].mxu0
      %1734 = vdwg.mxu0
      %1735 = vmatprep.subr.bf16.mxu0 %v859
      %1736 = vmatpush1.bf16.msra.mxu0 %v858
      %1737 = vmatprep.subr.bf16.mxu0 %v895
      %1738 = vmatpush1.bf16.msra.mxu0 %v894
      %1739 = vmatprep.subr.bf16.mxu0 %v931
      %1740 = vmatpush1.bf16.msra.mxu0 %v930
      %1741 = vmatprep.subr.bf16.mxu0 %v967
      %1742 = vmatpush1.bf16.msra.mxu0 %v966
      %1743 = vmatprep.subr.bf16.mxu0 0
      %1744 = vmatpush1.bf16.msra.mxu0 0
      %1745 = vmatprep.subr.bf16.mxu0 0
      %1746 = vmatpush1.bf16.msra.mxu0 0
      %1747 = vmatprep.subr.bf16.mxu0 0
      %1748 = vmatpush1.bf16.msra.mxu0 0
      %1749 = vmatprep.subr.bf16.mxu0 0
      %1750 = vmatpush1.bf16.msra.mxu0 0
      %1751 = vmatprep.subr.bf16.mxu0 0
      %1752 = vmatpush1.bf16.msra.mxu0 0
      %1753 = vmatprep.subr.bf16.mxu0 0
      %1754 = vmatpush1.bf16.msra.mxu0 0
      %1755 = vmatprep.subr.bf16.mxu0 0
      %1756 = vmatpush1.bf16.msra.mxu0 0
      %1757 = vmatprep.subr.bf16.mxu0 0
      %1758 = vmatpush1.bf16.msra.mxu0 0
      %1759 = vmatprep.subr.bf16.mxu0 0
      %1760 = vmatpush1.bf16.msra.mxu0 0
      %1761 = vmatprep.subr.bf16.mxu0 0
      %1762 = vmatpush1.bf16.msra.mxu0 0
      %1763 = vmatprep.subr.bf16.mxu0 0
      %1764 = vmatpush1.bf16.msra.mxu0 0
      %1765 = vmatprep.subr.bf16.mxu0 0
      %1766 = vmatpush1.bf16.msra.mxu0 0
      %1767 = vmatprep.mubr.bf16.mxu0 0
      %1768 = vmatmul.mubr.bf16.gmra.mrb[0].mxu0 %v1118
      %v1769 = vpop.f32.mrb[0].mxu0
      %v1770 = vadd.f32 0.0, %v1769
      %v1771 = vpop.f32.mrb[0].mxu0
      %v1772 = vadd.f32 0.0, %v1771
      %v1773 = vpop.f32.mrb[0].mxu0
      %v1774 = vpop.f32.mrb[0].mxu0
      %1775 = vdwg.mxu0
      %1776 = vmatprep.subr.bf16.mxu0 %v861
      %1777 = vmatpush1.bf16.msra.mxu0 %v860
      %1778 = vmatprep.subr.bf16.mxu0 %v897
      %1779 = vmatpush1.bf16.msra.mxu0 %v896
      %1780 = vmatprep.subr.bf16.mxu0 %v933
      %1781 = vmatpush1.bf16.msra.mxu0 %v932
      %1782 = vmatprep.subr.bf16.mxu0 %v969
      %1783 = vmatpush1.bf16.msra.mxu0 %v968
      %1784 = vmatprep.subr.bf16.mxu0 0
      %1785 = vmatpush1.bf16.msra.mxu0 0
      %1786 = vmatprep.subr.bf16.mxu0 0
      %1787 = vmatpush1.bf16.msra.mxu0 0
      %1788 = vmatprep.subr.bf16.mxu0 0
      %1789 = vmatpush1.bf16.msra.mxu0 0
      %1790 = vmatprep.subr.bf16.mxu0 0
      %1791 = vmatpush1.bf16.msra.mxu0 0
      %1792 = vmatprep.subr.bf16.mxu0 0
      %1793 = vmatpush1.bf16.msra.mxu0 0
      %1794 = vmatprep.subr.bf16.mxu0 0
      %1795 = vmatpush1.bf16.msra.mxu0 0
      %1796 = vmatprep.subr.bf16.mxu0 0
      %1797 = vmatpush1.bf16.msra.mxu0 0
      %1798 = vmatprep.subr.bf16.mxu0 0
      %1799 = vmatpush1.bf16.msra.mxu0 0
      %1800 = vmatprep.subr.bf16.mxu0 0
      %1801 = vmatpush1.bf16.msra.mxu0 0
      %1802 = vmatprep.subr.bf16.mxu0 0
      %1803 = vmatpush1.bf16.msra.mxu0 0
      %1804 = vmatprep.subr.bf16.mxu0 0
      %1805 = vmatpush1.bf16.msra.mxu0 0
      %1806 = vmatprep.subr.bf16.mxu0 0
      %1807 = vmatpush1.bf16.msra.mxu0 0
      %1808 = vmatprep.mubr.bf16.mxu0 0
      %1809 = vmatmul.mubr.bf16.gmra.mrb[0].mxu0 %v1118
      %v1810 = vpop.f32.mrb[0].mxu0
      %v1811 = vadd.f32 0.0, %v1810
      %v1812 = vpop.f32.mrb[0].mxu0
      %v1813 = vadd.f32 0.0, %v1812
      %v1814 = vpop.f32.mrb[0].mxu0
      %v1815 = vpop.f32.mrb[0].mxu0
      %1816 = vdwg.mxu0
      %1817 = vmatprep.subr.bf16.mxu0 %v863
      %1818 = vmatpush1.bf16.msra.mxu0 %v862
      %1819 = vmatprep.subr.bf16.mxu0 %v899
      %1820 = vmatpush1.bf16.msra.mxu0 %v898
      %1821 = vmatprep.subr.bf16.mxu0 %v935
      %1822 = vmatpush1.bf16.msra.mxu0 %v934
      %1823 = vmatprep.subr.bf16.mxu0 %v971
      %1824 = vmatpush1.bf16.msra.mxu0 %v970
      %1825 = vmatprep.subr.bf16.mxu0 0
      %1826 = vmatpush1.bf16.msra.mxu0 0
      %1827 = vmatprep.subr.bf16.mxu0 0
      %1828 = vmatpush1.bf16.msra.mxu0 0
      %1829 = vmatprep.subr.bf16.mxu0 0
      %1830 = vmatpush1.bf16.msra.mxu0 0
      %1831 = vmatprep.subr.bf16.mxu0 0
      %1832 = vmatpush1.bf16.msra.mxu0 0
      %1833 = vmatprep.subr.bf16.mxu0 0
      %1834 = vmatpush1.bf16.msra.mxu0 0
      %1835 = vmatprep.subr.bf16.mxu0 0
      %1836 = vmatpush1.bf16.msra.mxu0 0
      %1837 = vmatprep.subr.bf16.mxu0 0
      %1838 = vmatpush1.bf16.msra.mxu0 0
      %1839 = vmatprep.subr.bf16.mxu0 0
      %1840 = vmatpush1.bf16.msra.mxu0 0
      %1841 = vmatprep.subr.bf16.mxu0 0
      %1842 = vmatpush1.bf16.msra.mxu0 0
      %1843 = vmatprep.subr.bf16.mxu0 0
      %1844 = vmatpush1.bf16.msra.mxu0 0
      %1845 = vmatprep.subr.bf16.mxu0 0
      %1846 = vmatpush1.bf16.msra.mxu0 0
      %1847 = vmatprep.subr.bf16.mxu0 0
      %1848 = vmatpush1.bf16.msra.mxu0 0
      %1849 = vmatprep.mubr.bf16.mxu0 0
      %1850 = vmatmul.mubr.bf16.gmra.mrb[0].mxu0 %v1118
      %v1851 = vpop.f32.mrb[0].mxu0
      %v1852 = vadd.f32 0.0, %v1851
      %v1853 = vpop.f32.mrb[0].mxu0
      %v1854 = vadd.f32 0.0, %v1853
      %v1855 = vpop.f32.mrb[0].mxu0
      %v1856 = vpop.f32.mrb[0].mxu0
      %1857 = vdwg.mxu0
      %v1858 = vpack.c.bf16 %v1155, %v1155
      %v1859 = vpack.c.bf16 %v1157, %v1157
      %v1860 = vpack.c.bf16 %v1196, %v1196
      %v1861 = vpack.c.bf16 %v1198, %v1198
      %v1862 = vpack.c.bf16 %v1237, %v1237
      %v1863 = vpack.c.bf16 %v1239, %v1239
      %v1864 = vpack.c.bf16 %v1278, %v1278
      %v1865 = vpack.c.bf16 %v1280, %v1280
      %v1866 = vpack.c.bf16 %v1319, %v1319
      %v1867 = vpack.c.bf16 %v1321, %v1321
      %v1868 = vpack.c.bf16 %v1360, %v1360
      %v1869 = vpack.c.bf16 %v1362, %v1362
      %v1870 = vpack.c.bf16 %v1401, %v1401
      %v1871 = vpack.c.bf16 %v1403, %v1403
      %v1872 = vpack.c.bf16 %v1442, %v1442
      %v1873 = vpack.c.bf16 %v1444, %v1444
      %v1874 = vpack.c.bf16 %v1483, %v1483
      %v1875 = vpack.c.bf16 %v1485, %v1485
      %v1876 = vpack.c.bf16 %v1524, %v1524
      %v1877 = vpack.c.bf16 %v1526, %v1526
      %v1878 = vpack.c.bf16 %v1565, %v1565
      %v1879 = vpack.c.bf16 %v1567, %v1567
      %v1880 = vpack.c.bf16 %v1606, %v1606
      %v1881 = vpack.c.bf16 %v1608, %v1608
      %v1882 = vpack.c.bf16 %v1647, %v1647
      %v1883 = vpack.c.bf16 %v1649, %v1649
      %v1884 = vpack.c.bf16 %v1688, %v1688
      %v1885 = vpack.c.bf16 %v1690, %v1690
      %v1886 = vpack.c.bf16 %v1729, %v1729
      %v1887 = vpack.c.bf16 %v1731, %v1731
      %v1888 = vpack.c.bf16 %v1770, %v1770
      %v1889 = vpack.c.bf16 %v1772, %v1772
      %v1890 = vpack.c.bf16 %v1811, %v1811
      %v1891 = vpack.c.bf16 %v1813, %v1813
      %v1892 = vpack.c.bf16 %v1852, %v1852
      %v1893 = vpack.c.bf16 %v1854, %v1854
      %v1930 = vunpack.c.l.b16 %v1858
      %v1931 = vunpack.c.l.b16 %v1859
      %v1932 = vunpack.c.l.b16 %v1860
      %v1933 = vunpack.c.l.b16 %v1861
      %v1934 = vunpack.c.l.b16 %v1862
      %v1935 = vunpack.c.l.b16 %v1863
      %v1936 = vunpack.c.l.b16 %v1864
      %v1937 = vunpack.c.l.b16 %v1865
      %v1938 = vunpack.c.l.b16 %v1866
      %v1939 = vunpack.c.l.b16 %v1867
      %v1940 = vunpack.c.l.b16 %v1868
      %v1941 = vunpack.c.l.b16 %v1869
      %v1942 = vunpack.c.l.b16 %v1870
      %v1943 = vunpack.c.l.b16 %v1871
      %v1944 = vunpack.c.l.b16 %v1872
      %v1945 = vunpack.c.l.b16 %v1873
      %v1946 = vunpack.c.l.b16 %v1874
      %v1947 = vunpack.c.l.b16 %v1875
      %v1948 = vunpack.c.l.b16 %v1876
      %v1949 = vunpack.c.l.b16 %v1877
      %v1950 = vunpack.c.l.b16 %v1878
      %v1951 = vunpack.c.l.b16 %v1879
      %v1952 = vunpack.c.l.b16 %v1880
      %v1953 = vunpack.c.l.b16 %v1881
      %v1954 = vunpack.c.l.b16 %v1882
      %v1955 = vunpack.c.l.b16 %v1883
      %v1956 = vunpack.c.l.b16 %v1884
      %v1957 = vunpack.c.l.b16 %v1885
      %v1958 = vunpack.c.l.b16 %v1886
      %v1959 = vunpack.c.l.b16 %v1887
      %v1960 = vunpack.c.l.b16 %v1888
      %v1961 = vunpack.c.l.b16 %v1889
      %v1962 = vunpack.c.l.b16 %v1890
      %v1963 = vunpack.c.l.b16 %v1891
      %v1964 = vunpack.c.l.b16 %v1892
      %v1965 = vunpack.c.l.b16 %v1893
      %v1966 = vpack.c.b16 %v1931, %v1930
      %v1967 = vpack.c.b16 %v1933, %v1932
      %v1968 = vpack.c.b16 %v1935, %v1934
      %v1969 = vpack.c.b16 %v1937, %v1936
      %v1970 = vpack.c.b16 %v1939, %v1938
      %v1971 = vpack.c.b16 %v1941, %v1940
      %v1972 = vpack.c.b16 %v1943, %v1942
      %v1973 = vpack.c.b16 %v1945, %v1944
      %v1974 = vpack.c.b16 %v1947, %v1946
      %v1975 = vpack.c.b16 %v1949, %v1948
      %v1976 = vpack.c.b16 %v1951, %v1950
      %v1977 = vpack.c.b16 %v1953, %v1952
      %v1978 = vpack.c.b16 %v1955, %v1954
      %v1979 = vpack.c.b16 %v1957, %v1956
      %v1980 = vpack.c.b16 %v1959, %v1958
      %v1981 = vpack.c.b16 %v1961, %v1960
      %v1982 = vpack.c.b16 %v1963, %v1962
      %v1983 = vpack.c.b16 %v1965, %v1964
      %2002 = vst [vmem:[%s239] sm:$0xff] %v1966
      %2003 = vst [vmem:[%s239 + $0x8] sm:$0xff] %v1967
      %2004 = vst [vmem:[%s239 + $0x10] sm:$0xff] %v1968
      %2005 = vst [vmem:[%s239 + $0x18] sm:$0xff] %v1969
      %2006 = vst [vmem:[%s239 + $0x20] sm:$0xff] %v1970
      %2007 = vst [vmem:[%s239 + $0x28] sm:$0xff] %v1971
      %2008 = vst [vmem:[%s239 + $0x30] sm:$0xff] %v1972
      %2009 = vst [vmem:[%s239 + $0x38] sm:$0xff] %v1973
      %2010 = vst [vmem:[%s239 + $0x40] sm:$0xff] %v1974
      %2011 = vst [vmem:[%s239 + $0x48] sm:$0xff] %v1975
      %2012 = vst [vmem:[%s239 + $0x50] sm:$0xff] %v1976
      %2013 = vst [vmem:[%s239 + $0x58] sm:$0xff] %v1977
      %2014 = vst [vmem:[%s239 + $0x60] sm:$0xff] %v1978
      %2015 = vst [vmem:[%s239 + $0x68] sm:$0xff] %v1979
      %2016 = vst [vmem:[%s239 + $0x70] sm:$0xff] %v1980
      %2017 = vst [vmem:[%s239 + $0x78] sm:$0xff] %v1981
      %2018 = vst [vmem:[%s239 + $0x80] sm:$0xff] %v1982
      %2019 = vst [vmem:[%s239 + $0x88] sm:$0xff] %v1983
      %v2020 = vadd.f32 %v1155, %v1157
      %v2021 = vadd.f32 %v2020, %v1196
      %v2022 = vadd.f32 %v2021, %v1198
      %v2023 = vadd.f32 %v2022, %v1237
      %v2024 = vadd.f32 %v2023, %v1239
      %v2025 = vadd.f32 %v2024, %v1278
      %v2026 = vadd.f32 %v2025, %v1280
      %v2027 = vadd.f32 %v2026, %v1319
      %v2028 = vadd.f32 %v2027, %v1321
      %v2029 = vadd.f32 %v2028, %v1360
      %v2030 = vadd.f32 %v2029, %v1362
      %v2031 = vadd.f32 %v2030, %v1401
      %v2032 = vadd.f32 %v2031, %v1403
      %v2033 = vadd.f32 %v2032, %v1442
      %v2034 = vadd.f32 %v2033, %v1444
      %v2035 = vadd.f32 %v2034, %v1483
      %v2036 = vadd.f32 %v2035, %v1485
      %v2037 = vadd.f32 %v2036, %v1524
      %v2038 = vadd.f32 %v2037, %v1526
      %v2039 = vadd.f32 %v2038, %v1565
      %v2040 = vadd.f32 %v2039, %v1567
      %v2041 = vadd.f32 %v2040, %v1606
      %v2042 = vadd.f32 %v2041, %v1608
      %v2043 = vadd.f32 %v2042, %v1647
      %v2044 = vadd.f32 %v2043, %v1649
      %v2045 = vadd.f32 %v2044, %v1688
      %v2046 = vadd.f32 %v2045, %v1690
      %v2047 = vadd.f32 %v2046, %v1729
      %v2048 = vadd.f32 %v2047, %v1731
      %v2049 = vadd.f32 %v2048, %v1770
      %v2050 = vadd.f32 %v2049, %v1772
      %v2051 = vadd.f32 %v2050, %v1811
      %v2052 = vadd.f32 %v2051, %v1813
      %v2053 = vadd.f32 %v2052, %v1852
      %v2054 = vadd.f32 %v2053, %v1854
      %2055 = vadd.xlane.f32.xlu0 %v2054
      %v2056 = vpop.xlane.xlu0 %2055
      %v2057 = vmul.f32 %v1155, %v1155
      %v2058 = vmul.f32 %v1157, %v1157
      %v2059 = vmul.f32 %v1196, %v1196
      %v2060 = vmul.f32 %v1198, %v1198
      %v2061 = vmul.f32 %v1237, %v1237
      %v2062 = vmul.f32 %v1239, %v1239
      %v2063 = vmul.f32 %v1278, %v1278
      %v2064 = vmul.f32 %v1280, %v1280
      %v2065 = vmul.f32 %v1319, %v1319
      %v2066 = vmul.f32 %v1321, %v1321
      %v2067 = vmul.f32 %v1360, %v1360
      %v2068 = vmul.f32 %v1362, %v1362
      %v2069 = vmul.f32 %v1401, %v1401
      %v2070 = vmul.f32 %v1403, %v1403
      %v2071 = vmul.f32 %v1442, %v1442
      %v2072 = vmul.f32 %v1444, %v1444
      %v2073 = vmul.f32 %v1483, %v1483
      %v2074 = vmul.f32 %v1485, %v1485
      %v2075 = vmul.f32 %v1524, %v1524
      %v2076 = vmul.f32 %v1526, %v1526
      %v2077 = vmul.f32 %v1565, %v1565
      %v2078 = vmul.f32 %v1567, %v1567
      %v2079 = vmul.f32 %v1606, %v1606
      %v2080 = vmul.f32 %v1608, %v1608
      %v2081 = vmul.f32 %v1647, %v1647
      %v2082 = vmul.f32 %v1649, %v1649
      %v2083 = vmul.f32 %v1688, %v1688
      %v2084 = vmul.f32 %v1690, %v1690
      %v2085 = vmul.f32 %v1729, %v1729
      %v2086 = vmul.f32 %v1731, %v1731
      %v2087 = vmul.f32 %v1770, %v1770
      %v2088 = vmul.f32 %v1772, %v1772
      %v2089 = vmul.f32 %v1811, %v1811
      %v2090 = vmul.f32 %v1813, %v1813
      %v2091 = vmul.f32 %v1852, %v1852
      %v2092 = vmul.f32 %v1854, %v1854
      %v2093 = vadd.f32 %v2057, %v2058
      %v2094 = vadd.f32 %v2093, %v2059
      %v2095 = vadd.f32 %v2094, %v2060
      %v2096 = vadd.f32 %v2095, %v2061
      %v2097 = vadd.f32 %v2096, %v2062
      %v2098 = vadd.f32 %v2097, %v2063
      %v2099 = vadd.f32 %v2098, %v2064
      %v2100 = vadd.f32 %v2099, %v2065
      %v2101 = vadd.f32 %v2100, %v2066
      %v2102 = vadd.f32 %v2101, %v2067
      %v2103 = vadd.f32 %v2102, %v2068
      %v2104 = vadd.f32 %v2103, %v2069
      %v2105 = vadd.f32 %v2104, %v2070
      %v2106 = vadd.f32 %v2105, %v2071
      %v2107 = vadd.f32 %v2106, %v2072
      %v2108 = vadd.f32 %v2107, %v2073
      %v2109 = vadd.f32 %v2108, %v2074
      %v2110 = vadd.f32 %v2109, %v2075
      %v2111 = vadd.f32 %v2110, %v2076
      %v2112 = vadd.f32 %v2111, %v2077
      %v2113 = vadd.f32 %v2112, %v2078
      %v2114 = vadd.f32 %v2113, %v2079
      %v2115 = vadd.f32 %v2114, %v2080
      %v2116 = vadd.f32 %v2115, %v2081
      %v2117 = vadd.f32 %v2116, %v2082
      %v2118 = vadd.f32 %v2117, %v2083
      %v2119 = vadd.f32 %v2118, %v2084
      %v2120 = vadd.f32 %v2119, %v2085
      %v2121 = vadd.f32 %v2120, %v2086
      %v2122 = vadd.f32 %v2121, %v2087
      %v2123 = vadd.f32 %v2122, %v2088
      %v2124 = vadd.f32 %v2123, %v2089
      %v2125 = vadd.f32 %v2124, %v2090
      %v2126 = vadd.f32 %v2125, %v2091
      %v2127 = vadd.f32 %v2126, %v2092
      %2128 = vadd.xlane.f32.xlu0 %v2127
      %v2129 = vpop.xlane.xlu0 %2128
      %2131 = vset.pattern.permute.xlu0 0
      %2132 = vperm.xlu0 %2131, %v2056
      %v2133 = vpop.permute.xlu0 %2132
      %2136 = vset.pattern.permute.xlu0 0
      %2137 = vperm.xlu0 %2136, %v2129
      %v2138 = vpop.permute.xlu0 %2137
      %2140 = vst [vmem:[%s249] sm:$0xff] %v2133
      %2141 = vst [vmem:[%s249 + $0x8] sm:$0xff] %v2138
      %s2142 = smul.u32 36, %s20
      %p2143 = scmp.lt.s32.totalorder %s19, 3
      %s2144 = scalar_select %p2143, %s19, 3
      %p2145 = scmp.lt.s32.totalorder %s2142, 35
      %s2146 = scalar_select %p2145, %s2142, 35
      %s2147 = smul.addr %s2144, 36
      %s2148 = sadd.s32 %s2146, %s2147
      %s2149 = smul.addr %s2148, 4
      %s2150 = scalar_lea.vmem %s2, %s2149
      %p2151 = scmp.lt.s32.totalorder %s19, 3
      %s2152 = scalar_select %p2151, %s19, 3
      %p2153 = scmp.lt.s32.totalorder %s20, 0
      %s2154 = scalar_select %p2153, %s20, 0
      %s2155 = smul.addr %s2154, 2
      %s2156 = smul.addr %s2152, 2
      %s2157 = sadd.s32 %s2155, %s2156
      %s2158 = smul.addr %s2157, 8
      %s2159 = scalar_lea.vmem %s3, %s2158
      // Predicated region
      $region29: #{generator_forward.12} parent=27 // pred_check
        %p2160 = pneg %p101
      $region30: #{generator_forward.12} parent=27 // pred_check_branch
        %2162 = sbr.rel (%p2160) target = $region32
      $region31: #{generator_forward.12} parent=27 // pred_region
        %s2163 = smul.u32 36, %s20
      $region32: #{generator_forward.12} parent=27 // pred_fallthru
        _
      // Predicated region
      $region33: #{generator_forward.12} parent=27 // pred_check
        %p2164 = pneg %p129
      $region34: #{generator_forward.12} parent=27 // pred_check_branch
        %2166 = sbr.rel (%p2164) target = $region36
      $region35: #{generator_forward.12} parent=27 // pred_region
        _
      $region36: #{generator_forward.12} parent=27 // pred_fallthru
        _
    $region28: #{generator_forward.12} parent=5 // pred_fallthru
      _
    %p2167 = scmp.le.s32.totalorder 2, %s10
    // Predicated region
    $region37: #{generator_forward.12} parent=5 // pred_check
      %p2168 = pneg %p2167
    $region38: #{generator_forward.12} parent=5 // pred_check_branch
      %2170 = sbr.rel (%p2168) target = $region40
    $region39: #{generator_forward.12} parent=5 // pred_region
      %s2171 = ssub.s32 %s10, 2
      // Predicated region
      $region41: #{generator_forward.12} parent=39 // pred_check
        %p2172 = pneg %p107
      $region42: #{generator_forward.12} parent=39 // pred_check_branch
        %2174 = sbr.rel (%p2172) target = $region44
      $region43: #{generator_forward.12} parent=39 // pred_region
        %s2175 = smul.u32 36, %s22
        %p2176 = scmp.lt.s32.totalorder %s21, 3
        %s2177 = scalar_select %p2176, %s21, 3
        %p2178 = scmp.lt.s32.totalorder %s2175, 35
        %s2179 = scalar_select %p2178, %s2175, 35
        %s2180 = smul.addr %s2177, 36
        %s2181 = sadd.s32 %s2179, %s2180
        %s2182 = smul.addr %s2181, 4
        %s2183 = scalar_lea.vmem %s2, %s2182
      $region44: #{generator_forward.12} parent=39 // pred_fallthru
        _
      // Predicated region
      $region45: #{generator_forward.12} parent=39 // pred_check
        %p2184 = pneg %p135
      $region46: #{generator_forward.12} parent=39 // pred_check_branch
        %2186 = sbr.rel (%p2184) target = $region48
      $region47: #{generator_forward.12} parent=39 // pred_region
        %p2187 = scmp.lt.s32.totalorder %s21, 3
        %s2188 = scalar_select %p2187, %s21, 3
        %p2189 = scmp.lt.s32.totalorder %s22, 0
        %s2190 = scalar_select %p2189, %s22, 0
        %s2191 = smul.addr %s2190, 2
        %s2192 = smul.addr %s2188, 2
        %s2193 = sadd.s32 %s2191, %s2192
        %s2194 = smul.addr %s2193, 8
        %s2195 = scalar_lea.vmem %s3, %s2194
      $region48: #{generator_forward.12} parent=39 // pred_fallthru
        _
    $region40: #{generator_forward.12} parent=5 // pred_fallthru
      _
  $region6: #{generator_forward.12} parent=0 // loop_footer
    %s14 = sadd.s32 1, %s10
  $region7: #{generator_forward.12} parent=0 // loop_footer_branch
    %9 = sbr.rel target = $region3
  $region8: #{generator_forward.12} parent=0 // loop_exit
    _

// kernel: generator_forward.13
$region0: #{generator_forward.13}
  #allocation0 [shape = 'u32[]', space=smem, size = 0x4, offset = 0x4, fixed_abs, tag = 'smem constant byte address 0x4 - core index']
  #allocation1 [shape = 'u32[144,128]{1,0:T(1,128)}', space=vmem, size = 0x12000, scoped, tag = 'internal scratch']
  %s0 = inlined_call_operand.vmem [shape: bf16[4,8,32], index: 0, kind: input, shape index: {}]
  %s1 = inlined_call_operand.vmem [shape: bf16[4,32,18432], index: 1, kind: input, shape index: {}]
  %s2 = inlined_call_operand.vmem [shape: f32[4,8,18432], index: 2, kind: output, shape index: {}]
  %s3 = sld [smem:[#allocation0]]
  $region41: #{generator_forward.13} parent=0
    _
  %s5 = ssub.s32 1, %s3
  %s6 = scalar_select 0, %s5, %s3
  loop: start=0, step=1, limit=6
  $region2: #{generator_forward.13} parent=0 // loop_pre_header
    _
  $region3: #{generator_forward.13} parent=0 // loop_header
    %s8 = sphi 0, %s12
    %p9 = scmp.ge.s32.totalorder %s8, 6
    %s15 = sphi 0, %s27
    %s16 = sphi 0, %s23
    %s17 = sphi 0, %s15
    %s18 = sphi 0, %s16
    %s19 = sphi 0, %s17
    %s20 = sphi 0, %s18
    %s30 = sphi 0, %s32
    %s33 = sphi 0, %s30
    %s34 = sphi 0, %s33
    %s50 = sphi 0, %s34
    %s58 = sphi 0, %s60
    %s61 = sphi 0, %s58
    %s62 = sphi 0, %s61
    %s78 = sphi 0, %s62
    %s86 = sphi 0, %s88
    %s89 = sphi 0, %s86
    %s90 = sphi 0, %s89
    %s106 = sphi 0, %s90
  $region4: #{generator_forward.13} parent=0 // loop_header_branch
    %11 = sbr.rel (%p9) target = $region8
  $region5: #{generator_forward.13} parent=0 // loop_body
    %s13 = ssub.s32 %s8, 1
    %s14 = ssub.s32 %s8, 2
    %s21 = sadd.s32 1, %s16
    %p22 = scmp.ge.s32.totalorder %s21, 1
    %s23 = scalar_select %p22, 0, %s21
    %s24 = sadd.s32 1, %s15
    %s25 = scalar_select %p22, %s24, %s15
    %p26 = scmp.ge.s32.totalorder %s25, 4
    %s27 = scalar_select %p26, 0, %s25
    %s28 = ssub.s32 %s15, %s27
    %p29 = scmp.eq.s32.totalorder %s28, 0
    %s31 = sadd.s32 %s30, 1
    %s32 = scalar_select %p29, %s30, %s31
    %p35 = pneg %p29
    %p36 = scmp.eq.s32.totalorder %s8, 3
    %p37 = por %p35, %p36
    %p38 = scmp.ne.s32.totalorder %s30, %s33
    %p39 = scmp.eq.s32.totalorder %s8, 0
    %p40 = por %p38, %p39
    %p41 = scmp.ne.s32.totalorder %s30, %s33
    %p42 = scmp.eq.s32.totalorder %s13, 3
    %p43 = por %p41, %p42
    %p44 = scmp.ne.s32.totalorder %s33, %s34
    %p45 = scmp.eq.s32.totalorder %s13, 0
    %p46 = por %p44, %p45
    %p47 = scmp.ne.s32.totalorder %s33, %s34
    %p48 = scmp.eq.s32.totalorder %s14, 3
    %p49 = por %p47, %p48
    %p51 = scmp.ne.s32.totalorder %s34, %s50
    %p52 = scmp.eq.s32.totalorder %s14, 0
    %p53 = por %p51, %p52
    %s54 = ssub.s32 %s15, %s27
    %s55 = ssub.s32 %s16, %s23
    %s56 = sor.u32 %s54, %s55
    %p57 = scmp.eq.s32.totalorder %s56, 0
    %s59 = sadd.s32 %s58, 1
    %s60 = scalar_select %p57, %s58, %s59
    %p63 = pneg %p57
    %p64 = scmp.eq.s32.totalorder %s8, 3
    %p65 = por %p63, %p64
    %p66 = scmp.ne.s32.totalorder %s58, %s61
    %p67 = scmp.eq.s32.totalorder %s8, 0
    %p68 = por %p66, %p67
    %p69 = scmp.ne.s32.totalorder %s58, %s61
    %p70 = scmp.eq.s32.totalorder %s13, 3
    %p71 = por %p69, %p70
    %p72 = scmp.ne.s32.totalorder %s61, %s62
    %p73 = scmp.eq.s32.totalorder %s13, 0
    %p74 = por %p72, %p73
    %p75 = scmp.ne.s32.totalorder %s61, %s62
    %p76 = scmp.eq.s32.totalorder %s14, 3
    %p77 = por %p75, %p76
    %p79 = scmp.ne.s32.totalorder %s62, %s78
    %p80 = scmp.eq.s32.totalorder %s14, 0
    %p81 = por %p79, %p80
    %s82 = ssub.s32 %s15, %s27
    %s83 = ssub.s32 %s16, %s23
    %s84 = sor.u32 %s82, %s83
    %p85 = scmp.eq.s32.totalorder %s84, 0
    %s87 = sadd.s32 %s86, 1
    %s88 = scalar_select %p85, %s86, %s87
    %p91 = pneg %p85
    %p92 = scmp.eq.s32.totalorder %s8, 3
    %p93 = por %p91, %p92
    %p94 = scmp.ne.s32.totalorder %s86, %s89
    %p95 = scmp.eq.s32.totalorder %s8, 0
    %p96 = por %p94, %p95
    %p97 = scmp.ne.s32.totalorder %s86, %s89
    %p98 = scmp.eq.s32.totalorder %s13, 3
    %p99 = por %p97, %p98
    %p100 = scmp.ne.s32.totalorder %s89, %s90
    %p101 = scmp.eq.s32.totalorder %s13, 0
    %p102 = por %p100, %p101
    %p103 = scmp.ne.s32.totalorder %s89, %s90
    %p104 = scmp.eq.s32.totalorder %s14, 3
    %p105 = por %p103, %p104
    %p107 = scmp.ne.s32.totalorder %s90, %s106
    %p108 = scmp.eq.s32.totalorder %s14, 0
    %p109 = por %p107, %p108
    %p110 = scmp.le.s32.totalorder 1, %s8
    %p111 = scmp.lt.s32.totalorder %s8, 5
    %p112 = pnand %p110, %p111
    %p113 = pneg %p112
    // Predicated region
    $region9: #{generator_forward.13} parent=5 // pred_check
      _
    $region10: #{generator_forward.13} parent=5 // pred_check_branch
      %115 = sbr.rel (%p112) target = $region12
    $region11: #{generator_forward.13} parent=5 // pred_region
      %s116 = ssub.s32 %s8, 1
    $region12: #{generator_forward.13} parent=5 // pred_fallthru
      _
    %p117 = scmp.lt.s32.totalorder %s8, 4
    // Predicated region
    $region13: #{generator_forward.13} parent=5 // pred_check
      %p118 = pneg %p117
    $region14: #{generator_forward.13} parent=5 // pred_check_branch
      %120 = sbr.rel (%p118) target = $region16
    $region15: #{generator_forward.13} parent=5 // pred_region
      // Predicated region
      $region17: #{generator_forward.13} parent=15 // pred_check
        %p121 = pneg %p40
      $region18: #{generator_forward.13} parent=15 // pred_check_branch
        %123 = sbr.rel (%p121) target = $region20
      $region19: #{generator_forward.13} parent=15 // pred_region
        %p124 = scmp.lt.s32.totalorder %s15, 3
        %s125 = scalar_select %p124, %s15, 3
        %s126 = smul.addr %s125, 4
        %s127 = scalar_lea.vmem %s0, %s126
      $region20: #{generator_forward.13} parent=15 // pred_fallthru
        _
      // Predicated region
      $region21: #{generator_forward.13} parent=15 // pred_check
        %p128 = pneg %p68
      $region22: #{generator_forward.13} parent=15 // pred_check_branch
        %130 = sbr.rel (%p128) target = $region24
      $region23: #{generator_forward.13} parent=15 // pred_region
        %s131 = smul.u32 144, %s16
        %p132 = scmp.lt.s32.totalorder %s15, 3
        %s133 = scalar_select %p132, %s15, 3
        %p134 = scmp.lt.s32.totalorder %s131, 143
        %s135 = scalar_select %p134, %s131, 143
        %s136 = smul.addr %s133, 576
        %s137 = sadd.s32 %s135, %s136
        %s138 = smul.addr %s137, 4
        %s139 = scalar_lea.vmem %s1, %s138
        %s140 = smul.u32 144, %s16
      $region24: #{generator_forward.13} parent=15 // pred_fallthru
        _
    $region16: #{generator_forward.13} parent=5 // pred_fallthru
      _
    %p141 = scmp.le.s32.totalorder 1, %s8
    %p142 = scmp.lt.s32.totalorder %s8, 5
    %p143 = pnand %p141, %p142
    %p144 = pneg %p143
    // Predicated region
    $region25: #{generator_forward.13} parent=5 // pred_check
      _
    $region26: #{generator_forward.13} parent=5 // pred_check_branch
      %146 = sbr.rel (%p143) target = $region28
    $region27: #{generator_forward.13} parent=5 // pred_region
      %s147 = ssub.s32 %s8, 1
      %p148 = scmp.lt.s32.totalorder %s17, 3
      %s149 = scalar_select %p148, %s17, 3
      %s150 = smul.addr %s149, 4
      %s151 = scalar_lea.vmem %s0, %s150
      %p152 = pneg %p46
      %p153 = pneg %p43
      %s154 = smul.u32 144, %s18
      %p155 = scmp.lt.s32.totalorder %s17, 3
      %s156 = scalar_select %p155, %s17, 3
      %p157 = scmp.lt.s32.totalorder %s154, 143
      %s158 = scalar_select %p157, %s154, 143
      %s159 = smul.addr %s156, 576
      %s160 = sadd.s32 %s158, %s159
      %s161 = smul.addr %s160, 4
      %s162 = scalar_lea.vmem %s1, %s161
      %p163 = pneg %p74
      %p164 = pneg %p71
      %p165 = pneg %p102
      %p166 = pneg %p99
      %s167 = smul.u32 144, %s18
      %p168 = scmp.lt.s32.totalorder %s17, 3
      %s169 = scalar_select %p168, %s17, 3
      %p170 = scmp.lt.s32.totalorder %s167, 143
      %s171 = scalar_select %p170, %s167, 143
      %s172 = smul.addr %s169, 144
      %s173 = sadd.s32 %s171, %s172
      %s174 = smul.addr %s173, 8
      %s175 = scalar_lea.vmem %s2, %s174
      %p176 = scmp.lt.s32.totalorder %s17, 3
      %s177 = scalar_select %p176, %s17, 3
      %s178 = smul.addr %s177, 4
      %s179 = scalar_lea.vmem %s0, %s178
      %s180 = smul.u32 144, %s18
      %p181 = scmp.lt.s32.totalorder %s17, 3
      %s182 = scalar_select %p181, %s17, 3
      %p183 = scmp.lt.s32.totalorder %s180, 143
      %s184 = scalar_select %p183, %s180, 143
      %s185 = smul.addr %s182, 576
      %s186 = sadd.s32 %s184, %s185
      %s187 = smul.addr %s186, 4
      %s188 = scalar_lea.vmem %s1, %s187
      %s189 = smul.u32 144, %s18
      %s190 = smul.u32 144, %s18
      %p191 = scmp.lt.s32.totalorder %s17, 3
      %s192 = scalar_select %p191, %s17, 3
      %p193 = scmp.lt.s32.totalorder %s190, 143
      %s194 = scalar_select %p193, %s190, 143
      %s195 = smul.addr %s192, 144
      %s196 = sadd.s32 %s194, %s195
      %s197 = smul.addr %s196, 8
      %s198 = scalar_lea.vmem %s2, %s197
      %s199 = smul.u32 144, %s18
      %v201 = vld [vmem:[%s179] sm:$0xf]
      %v202 = vld [vmem:[%s188] sm:$0xff]
      %v203 = vld [vmem:[%s188 + $0x8] sm:$0xff]
      %v204 = vld [vmem:[%s188 + $0x10] sm:$0xff]
      %v205 = vld [vmem:[%s188 + $0x18] sm:$0xff]
      %v206 = vld [vmem:[%s188 + $0x20] sm:$0xff]
      %v207 = vld [vmem:[%s188 + $0x28] sm:$0xff]
      %v208 = vld [vmem:[%s188 + $0x30] sm:$0xff]
      %v209 = vld [vmem:[%s188 + $0x38] sm:$0xff]
      %v210 = vld [vmem:[%s188 + $0x40] sm:$0xff]
      %v211 = vld [vmem:[%s188 + $0x48] sm:$0xff]
      %v212 = vld [vmem:[%s188 + $0x50] sm:$0xff]
      %v213 = vld [vmem:[%s188 + $0x58] sm:$0xff]
      %v214 = vld [vmem:[%s188 + $0x60] sm:$0xff]
      %v215 = vld [vmem:[%s188 + $0x68] sm:$0xff]
      %v216 = vld [vmem:[%s188 + $0x70] sm:$0xff]
      %v217 = vld [vmem:[%s188 + $0x78] sm:$0xff]
      %v218 = vld [vmem:[%s188 + $0x80] sm:$0xff]
      %v219 = vld [vmem:[%s188 + $0x88] sm:$0xff]
      %v220 = vld [vmem:[%s188 + $0x90] sm:$0xff]
      %v221 = vld [vmem:[%s188 + $0x98] sm:$0xff]
      %v222 = vld [vmem:[%s188 + $0xa0] sm:$0xff]
      %v223 = vld [vmem:[%s188 + $0xa8] sm:$0xff]
      %v224 = vld [vmem:[%s188 + $0xb0] sm:$0xff]
      %v225 = vld [vmem:[%s188 + $0xb8] sm:$0xff]
      %v226 = vld [vmem:[%s188 + $0xc0] sm:$0xff]
      %v227 = vld [vmem:[%s188 + $0xc8] sm:$0xff]
      %v228 = vld [vmem:[%s188 + $0xd0] sm:$0xff]
      %v229 = vld [vmem:[%s188 + $0xd8] sm:$0xff]
      %v230 = vld [vmem:[%s188 + $0xe0] sm:$0xff]
      %v231 = vld [vmem:[%s188 + $0xe8] sm:$0xff]
      %v232 = vld [vmem:[%s188 + $0xf0] sm:$0xff]
      %v233 = vld [vmem:[%s188 + $0xf8] sm:$0xff]
      %v234 = vld [vmem:[%s188 + $0x100] sm:$0xff]
      %v235 = vld [vmem:[%s188 + $0x108] sm:$0xff]
      %v236 = vld [vmem:[%s188 + $0x110] sm:$0xff]
      %v237 = vld [vmem:[%s188 + $0x118] sm:$0xff]
      %v238 = vld [vmem:[%s188 + $0x120] sm:$0xff]
      %v239 = vld [vmem:[%s188 + $0x128] sm:$0xff]
      %v240 = vld [vmem:[%s188 + $0x130] sm:$0xff]
      %v241 = vld [vmem:[%s188 + $0x138] sm:$0xff]
      %v242 = vld [vmem:[%s188 + $0x140] sm:$0xff]
      %v243 = vld [vmem:[%s188 + $0x148] sm:$0xff]
      %v244 = vld [vmem:[%s188 + $0x150] sm:$0xff]
      %v245 = vld [vmem:[%s188 + $0x158] sm:$0xff]
      %v246 = vld [vmem:[%s188 + $0x160] sm:$0xff]
      %v247 = vld [vmem:[%s188 + $0x168] sm:$0xff]
      %v248 = vld [vmem:[%s188 + $0x170] sm:$0xff]
      %v249 = vld [vmem:[%s188 + $0x178] sm:$0xff]
      %v250 = vld [vmem:[%s188 + $0x180] sm:$0xff]
      %v251 = vld [vmem:[%s188 + $0x188] sm:$0xff]
      %v252 = vld [vmem:[%s188 + $0x190] sm:$0xff]
      %v253 = vld [vmem:[%s188 + $0x198] sm:$0xff]
      %v254 = vld [vmem:[%s188 + $0x1a0] sm:$0xff]
      %v255 = vld [vmem:[%s188 + $0x1a8] sm:$0xff]
      %v256 = vld [vmem:[%s188 + $0x1b0] sm:$0xff]
      %v257 = vld [vmem:[%s188 + $0x1b8] sm:$0xff]
      %v258 = vld [vmem:[%s188 + $0x1c0] sm:$0xff]
      %v259 = vld [vmem:[%s188 + $0x1c8] sm:$0xff]
      %v260 = vld [vmem:[%s188 + $0x1d0] sm:$0xff]
      %v261 = vld [vmem:[%s188 + $0x1d8] sm:$0xff]
      %v262 = vld [vmem:[%s188 + $0x1e0] sm:$0xff]
      %v263 = vld [vmem:[%s188 + $0x1e8] sm:$0xff]
      %v264 = vld [vmem:[%s188 + $0x1f0] sm:$0xff]
      %v265 = vld [vmem:[%s188 + $0x1f8] sm:$0xff]
      %v266 = vld [vmem:[%s188 + $0x200] sm:$0xff]
      %v267 = vld [vmem:[%s188 + $0x208] sm:$0xff]
      %v268 = vld [vmem:[%s188 + $0x210] sm:$0xff]
      %v269 = vld [vmem:[%s188 + $0x218] sm:$0xff]
      %v270 = vld [vmem:[%s188 + $0x220] sm:$0xff]
      %v271 = vld [vmem:[%s188 + $0x228] sm:$0xff]
      %v272 = vld [vmem:[%s188 + $0x230] sm:$0xff]
      %v273 = vld [vmem:[%s188 + $0x238] sm:$0xff]
      %v274 = vld [vmem:[%s188 + $0x240] sm:$0xff]
      %v275 = vld [vmem:[%s188 + $0x248] sm:$0xff]
      %v276 = vld [vmem:[%s188 + $0x250] sm:$0xff]
      %v277 = vld [vmem:[%s188 + $0x258] sm:$0xff]
      %v278 = vld [vmem:[%s188 + $0x260] sm:$0xff]
      %v279 = vld [vmem:[%s188 + $0x268] sm:$0xff]
      %v280 = vld [vmem:[%s188 + $0x270] sm:$0xff]
      %v281 = vld [vmem:[%s188 + $0x278] sm:$0xff]
      %v282 = vld [vmem:[%s188 + $0x280] sm:$0xff]
      %v283 = vld [vmem:[%s188 + $0x288] sm:$0xff]
      %v284 = vld [vmem:[%s188 + $0x290] sm:$0xff]
      %v285 = vld [vmem:[%s188 + $0x298] sm:$0xff]
      %v286 = vld [vmem:[%s188 + $0x2a0] sm:$0xff]
      %v287 = vld [vmem:[%s188 + $0x2a8] sm:$0xff]
      %v288 = vld [vmem:[%s188 + $0x2b0] sm:$0xff]
      %v289 = vld [vmem:[%s188 + $0x2b8] sm:$0xff]
      %v290 = vld [vmem:[%s188 + $0x2c0] sm:$0xff]
      %v291 = vld [vmem:[%s188 + $0x2c8] sm:$0xff]
      %v292 = vld [vmem:[%s188 + $0x2d0] sm:$0xff]
      %v293 = vld [vmem:[%s188 + $0x2d8] sm:$0xff]
      %v294 = vld [vmem:[%s188 + $0x2e0] sm:$0xff]
      %v295 = vld [vmem:[%s188 + $0x2e8] sm:$0xff]
      %v296 = vld [vmem:[%s188 + $0x2f0] sm:$0xff]
      %v297 = vld [vmem:[%s188 + $0x2f8] sm:$0xff]
      %v298 = vld [vmem:[%s188 + $0x300] sm:$0xff]
      %v299 = vld [vmem:[%s188 + $0x308] sm:$0xff]
      %v300 = vld [vmem:[%s188 + $0x310] sm:$0xff]
      %v301 = vld [vmem:[%s188 + $0x318] sm:$0xff]
      %v302 = vld [vmem:[%s188 + $0x320] sm:$0xff]
      %v303 = vld [vmem:[%s188 + $0x328] sm:$0xff]
      %v304 = vld [vmem:[%s188 + $0x330] sm:$0xff]
      %v305 = vld [vmem:[%s188 + $0x338] sm:$0xff]
      %v306 = vld [vmem:[%s188 + $0x340] sm:$0xff]
      %v307 = vld [vmem:[%s188 + $0x348] sm:$0xff]
      %v308 = vld [vmem:[%s188 + $0x350] sm:$0xff]
      %v309 = vld [vmem:[%s188 + $0x358] sm:$0xff]
      %v310 = vld [vmem:[%s188 + $0x360] sm:$0xff]
      %v311 = vld [vmem:[%s188 + $0x368] sm:$0xff]
      %v312 = vld [vmem:[%s188 + $0x370] sm:$0xff]
      %v313 = vld [vmem:[%s188 + $0x378] sm:$0xff]
      %v314 = vld [vmem:[%s188 + $0x380] sm:$0xff]
      %v315 = vld [vmem:[%s188 + $0x388] sm:$0xff]
      %v316 = vld [vmem:[%s188 + $0x390] sm:$0xff]
      %v317 = vld [vmem:[%s188 + $0x398] sm:$0xff]
      %v318 = vld [vmem:[%s188 + $0x3a0] sm:$0xff]
      %v319 = vld [vmem:[%s188 + $0x3a8] sm:$0xff]
      %v320 = vld [vmem:[%s188 + $0x3b0] sm:$0xff]
      %v321 = vld [vmem:[%s188 + $0x3b8] sm:$0xff]
      %v322 = vld [vmem:[%s188 + $0x3c0] sm:$0xff]
      %v323 = vld [vmem:[%s188 + $0x3c8] sm:$0xff]
      %v324 = vld [vmem:[%s188 + $0x3d0] sm:$0xff]
      %v325 = vld [vmem:[%s188 + $0x3d8] sm:$0xff]
      %v326 = vld [vmem:[%s188 + $0x3e0] sm:$0xff]
      %v327 = vld [vmem:[%s188 + $0x3e8] sm:$0xff]
      %v328 = vld [vmem:[%s188 + $0x3f0] sm:$0xff]
      %v329 = vld [vmem:[%s188 + $0x3f8] sm:$0xff]
      %v330 = vld [vmem:[%s188 + $0x400] sm:$0xff]
      %v331 = vld [vmem:[%s188 + $0x408] sm:$0xff]
      %v332 = vld [vmem:[%s188 + $0x410] sm:$0xff]
      %v333 = vld [vmem:[%s188 + $0x418] sm:$0xff]
      %v334 = vld [vmem:[%s188 + $0x420] sm:$0xff]
      %v335 = vld [vmem:[%s188 + $0x428] sm:$0xff]
      %v336 = vld [vmem:[%s188 + $0x430] sm:$0xff]
      %v337 = vld [vmem:[%s188 + $0x438] sm:$0xff]
      %v338 = vld [vmem:[%s188 + $0x440] sm:$0xff]
      %v339 = vld [vmem:[%s188 + $0x448] sm:$0xff]
      %v340 = vld [vmem:[%s188 + $0x450] sm:$0xff]
      %v341 = vld [vmem:[%s188 + $0x458] sm:$0xff]
      %v342 = vld [vmem:[%s188 + $0x460] sm:$0xff]
      %v343 = vld [vmem:[%s188 + $0x468] sm:$0xff]
      %v344 = vld [vmem:[%s188 + $0x470] sm:$0xff]
      %v345 = vld [vmem:[%s188 + $0x478] sm:$0xff]
      %v346 = vld [vmem:[%s188 + $0x480] sm:$0xff]
      %v347 = vld [vmem:[%s188 + $0x488] sm:$0xff]
      %v348 = vld [vmem:[%s188 + $0x490] sm:$0xff]
      %v349 = vld [vmem:[%s188 + $0x498] sm:$0xff]
      %v350 = vld [vmem:[%s188 + $0x4a0] sm:$0xff]
      %v351 = vld [vmem:[%s188 + $0x4a8] sm:$0xff]
      %v352 = vld [vmem:[%s188 + $0x4b0] sm:$0xff]
      %v353 = vld [vmem:[%s188 + $0x4b8] sm:$0xff]
      %v354 = vld [vmem:[%s188 + $0x4c0] sm:$0xff]
      %v355 = vld [vmem:[%s188 + $0x4c8] sm:$0xff]
      %v356 = vld [vmem:[%s188 + $0x4d0] sm:$0xff]
      %v357 = vld [vmem:[%s188 + $0x4d8] sm:$0xff]
      %v358 = vld [vmem:[%s188 + $0x4e0] sm:$0xff]
      %v359 = vld [vmem:[%s188 + $0x4e8] sm:$0xff]
      %v360 = vld [vmem:[%s188 + $0x4f0] sm:$0xff]
      %v361 = vld [vmem:[%s188 + $0x4f8] sm:$0xff]
      %v362 = vld [vmem:[%s188 + $0x500] sm:$0xff]
      %v363 = vld [vmem:[%s188 + $0x508] sm:$0xff]
      %v364 = vld [vmem:[%s188 + $0x510] sm:$0xff]
      %v365 = vld [vmem:[%s188 + $0x518] sm:$0xff]
      %v366 = vld [vmem:[%s188 + $0x520] sm:$0xff]
      %v367 = vld [vmem:[%s188 + $0x528] sm:$0xff]
      %v368 = vld [vmem:[%s188 + $0x530] sm:$0xff]
      %v369 = vld [vmem:[%s188 + $0x538] sm:$0xff]
      %v370 = vld [vmem:[%s188 + $0x540] sm:$0xff]
      %v371 = vld [vmem:[%s188 + $0x548] sm:$0xff]
      %v372 = vld [vmem:[%s188 + $0x550] sm:$0xff]
      %v373 = vld [vmem:[%s188 + $0x558] sm:$0xff]
      %v374 = vld [vmem:[%s188 + $0x560] sm:$0xff]
      %v375 = vld [vmem:[%s188 + $0x568] sm:$0xff]
      %v376 = vld [vmem:[%s188 + $0x570] sm:$0xff]
      %v377 = vld [vmem:[%s188 + $0x578] sm:$0xff]
      %v378 = vld [vmem:[%s188 + $0x580] sm:$0xff]
      %v379 = vld [vmem:[%s188 + $0x588] sm:$0xff]
      %v380 = vld [vmem:[%s188 + $0x590] sm:$0xff]
      %v381 = vld [vmem:[%s188 + $0x598] sm:$0xff]
      %v382 = vld [vmem:[%s188 + $0x5a0] sm:$0xff]
      %v383 = vld [vmem:[%s188 + $0x5a8] sm:$0xff]
      %v384 = vld [vmem:[%s188 + $0x5b0] sm:$0xff]
      %v385 = vld [vmem:[%s188 + $0x5b8] sm:$0xff]
      %v386 = vld [vmem:[%s188 + $0x5c0] sm:$0xff]
      %v387 = vld [vmem:[%s188 + $0x5c8] sm:$0xff]
      %v388 = vld [vmem:[%s188 + $0x5d0] sm:$0xff]
      %v389 = vld [vmem:[%s188 + $0x5d8] sm:$0xff]
      %v390 = vld [vmem:[%s188 + $0x5e0] sm:$0xff]
      %v391 = vld [vmem:[%s188 + $0x5e8] sm:$0xff]
      %v392 = vld [vmem:[%s188 + $0x5f0] sm:$0xff]
      %v393 = vld [vmem:[%s188 + $0x5f8] sm:$0xff]
      %v394 = vld [vmem:[%s188 + $0x600] sm:$0xff]
      %v395 = vld [vmem:[%s188 + $0x608] sm:$0xff]
      %v396 = vld [vmem:[%s188 + $0x610] sm:$0xff]
      %v397 = vld [vmem:[%s188 + $0x618] sm:$0xff]
      %v398 = vld [vmem:[%s188 + $0x620] sm:$0xff]
      %v399 = vld [vmem:[%s188 + $0x628] sm:$0xff]
      %v400 = vld [vmem:[%s188 + $0x630] sm:$0xff]
      %v401 = vld [vmem:[%s188 + $0x638] sm:$0xff]
      %v402 = vld [vmem:[%s188 + $0x640] sm:$0xff]
      %v403 = vld [vmem:[%s188 + $0x648] sm:$0xff]
      %v404 = vld [vmem:[%s188 + $0x650] sm:$0xff]
      %v405 = vld [vmem:[%s188 + $0x658] sm:$0xff]
      %v406 = vld [vmem:[%s188 + $0x660] sm:$0xff]
      %v407 = vld [vmem:[%s188 + $0x668] sm:$0xff]
      %v408 = vld [vmem:[%s188 + $0x670] sm:$0xff]
      %v409 = vld [vmem:[%s188 + $0x678] sm:$0xff]
      %v410 = vld [vmem:[%s188 + $0x680] sm:$0xff]
      %v411 = vld [vmem:[%s188 + $0x688] sm:$0xff]
      %v412 = vld [vmem:[%s188 + $0x690] sm:$0xff]
      %v413 = vld [vmem:[%s188 + $0x698] sm:$0xff]
      %v414 = vld [vmem:[%s188 + $0x6a0] sm:$0xff]
      %v415 = vld [vmem:[%s188 + $0x6a8] sm:$0xff]
      %v416 = vld [vmem:[%s188 + $0x6b0] sm:$0xff]
      %v417 = vld [vmem:[%s188 + $0x6b8] sm:$0xff]
      %v418 = vld [vmem:[%s188 + $0x6c0] sm:$0xff]
      %v419 = vld [vmem:[%s188 + $0x6c8] sm:$0xff]
      %v420 = vld [vmem:[%s188 + $0x6d0] sm:$0xff]
      %v421 = vld [vmem:[%s188 + $0x6d8] sm:$0xff]
      %v422 = vld [vmem:[%s188 + $0x6e0] sm:$0xff]
      %v423 = vld [vmem:[%s188 + $0x6e8] sm:$0xff]
      %v424 = vld [vmem:[%s188 + $0x6f0] sm:$0xff]
      %v425 = vld [vmem:[%s188 + $0x6f8] sm:$0xff]
      %v426 = vld [vmem:[%s188 + $0x700] sm:$0xff]
      %v427 = vld [vmem:[%s188 + $0x708] sm:$0xff]
      %v428 = vld [vmem:[%s188 + $0x710] sm:$0xff]
      %v429 = vld [vmem:[%s188 + $0x718] sm:$0xff]
      %v430 = vld [vmem:[%s188 + $0x720] sm:$0xff]
      %v431 = vld [vmem:[%s188 + $0x728] sm:$0xff]
      %v432 = vld [vmem:[%s188 + $0x730] sm:$0xff]
      %v433 = vld [vmem:[%s188 + $0x738] sm:$0xff]
      %v434 = vld [vmem:[%s188 + $0x740] sm:$0xff]
      %v435 = vld [vmem:[%s188 + $0x748] sm:$0xff]
      %v436 = vld [vmem:[%s188 + $0x750] sm:$0xff]
      %v437 = vld [vmem:[%s188 + $0x758] sm:$0xff]
      %v438 = vld [vmem:[%s188 + $0x760] sm:$0xff]
      %v439 = vld [vmem:[%s188 + $0x768] sm:$0xff]
      %v440 = vld [vmem:[%s188 + $0x770] sm:$0xff]
      %v441 = vld [vmem:[%s188 + $0x778] sm:$0xff]
      %v442 = vld [vmem:[%s188 + $0x780] sm:$0xff]
      %v443 = vld [vmem:[%s188 + $0x788] sm:$0xff]
      %v444 = vld [vmem:[%s188 + $0x790] sm:$0xff]
      %v445 = vld [vmem:[%s188 + $0x798] sm:$0xff]
      %v446 = vld [vmem:[%s188 + $0x7a0] sm:$0xff]
      %v447 = vld [vmem:[%s188 + $0x7a8] sm:$0xff]
      %v448 = vld [vmem:[%s188 + $0x7b0] sm:$0xff]
      %v449 = vld [vmem:[%s188 + $0x7b8] sm:$0xff]
      %v450 = vld [vmem:[%s188 + $0x7c0] sm:$0xff]
      %v451 = vld [vmem:[%s188 + $0x7c8] sm:$0xff]
      %v452 = vld [vmem:[%s188 + $0x7d0] sm:$0xff]
      %v453 = vld [vmem:[%s188 + $0x7d8] sm:$0xff]
      %v454 = vld [vmem:[%s188 + $0x7e0] sm:$0xff]
      %v455 = vld [vmem:[%s188 + $0x7e8] sm:$0xff]
      %v456 = vld [vmem:[%s188 + $0x7f0] sm:$0xff]
      %v457 = vld [vmem:[%s188 + $0x7f8] sm:$0xff]
      %v458 = vld [vmem:[%s188 + $0x800] sm:$0xff]
      %v459 = vld [vmem:[%s188 + $0x808] sm:$0xff]
      %v460 = vld [vmem:[%s188 + $0x810] sm:$0xff]
      %v461 = vld [vmem:[%s188 + $0x818] sm:$0xff]
      %v462 = vld [vmem:[%s188 + $0x820] sm:$0xff]
      %v463 = vld [vmem:[%s188 + $0x828] sm:$0xff]
      %v464 = vld [vmem:[%s188 + $0x830] sm:$0xff]
      %v465 = vld [vmem:[%s188 + $0x838] sm:$0xff]
      %v466 = vld [vmem:[%s188 + $0x840] sm:$0xff]
      %v467 = vld [vmem:[%s188 + $0x848] sm:$0xff]
      %v468 = vld [vmem:[%s188 + $0x850] sm:$0xff]
      %v469 = vld [vmem:[%s188 + $0x858] sm:$0xff]
      %v470 = vld [vmem:[%s188 + $0x860] sm:$0xff]
      %v471 = vld [vmem:[%s188 + $0x868] sm:$0xff]
      %v472 = vld [vmem:[%s188 + $0x870] sm:$0xff]
      %v473 = vld [vmem:[%s188 + $0x878] sm:$0xff]
      %v474 = vld [vmem:[%s188 + $0x880] sm:$0xff]
      %v475 = vld [vmem:[%s188 + $0x888] sm:$0xff]
      %v476 = vld [vmem:[%s188 + $0x890] sm:$0xff]
      %v477 = vld [vmem:[%s188 + $0x898] sm:$0xff]
      %v478 = vld [vmem:[%s188 + $0x8a0] sm:$0xff]
      %v479 = vld [vmem:[%s188 + $0x8a8] sm:$0xff]
      %v480 = vld [vmem:[%s188 + $0x8b0] sm:$0xff]
      %v481 = vld [vmem:[%s188 + $0x8b8] sm:$0xff]
      %v482 = vld [vmem:[%s188 + $0x8c0] sm:$0xff]
      %v483 = vld [vmem:[%s188 + $0x8c8] sm:$0xff]
      %v484 = vld [vmem:[%s188 + $0x8d0] sm:$0xff]
      %v485 = vld [vmem:[%s188 + $0x8d8] sm:$0xff]
      %v486 = vld [vmem:[%s188 + $0x8e0] sm:$0xff]
      %v487 = vld [vmem:[%s188 + $0x8e8] sm:$0xff]
      %v488 = vld [vmem:[%s188 + $0x8f0] sm:$0xff]
      %v489 = vld [vmem:[%s188 + $0x8f8] sm:$0xff]
      %v778 = vunpack.c.l.b16 %v202
      %v779 = vunpack.c.h.b16 %v202
      %v780 = vunpack.c.l.b16 %v203
      %v781 = vunpack.c.h.b16 %v203
      %v782 = vunpack.c.l.b16 %v204
      %v783 = vunpack.c.h.b16 %v204
      %v784 = vunpack.c.l.b16 %v205
      %v785 = vunpack.c.h.b16 %v205
      %v786 = vunpack.c.l.b16 %v206
      %v787 = vunpack.c.h.b16 %v206
      %v788 = vunpack.c.l.b16 %v207
      %v789 = vunpack.c.h.b16 %v207
      %v790 = vunpack.c.l.b16 %v208
      %v791 = vunpack.c.h.b16 %v208
      %v792 = vunpack.c.l.b16 %v209
      %v793 = vunpack.c.h.b16 %v209
      %v794 = vunpack.c.l.b16 %v210
      %v795 = vunpack.c.h.b16 %v210
      %v796 = vunpack.c.l.b16 %v211
      %v797 = vunpack.c.h.b16 %v211
      %v798 = vunpack.c.l.b16 %v212
      %v799 = vunpack.c.h.b16 %v212
      %v800 = vunpack.c.l.b16 %v213
      %v801 = vunpack.c.h.b16 %v213
      %v802 = vunpack.c.l.b16 %v214
      %v803 = vunpack.c.h.b16 %v214
      %v804 = vunpack.c.l.b16 %v215
      %v805 = vunpack.c.h.b16 %v215
      %v806 = vunpack.c.l.b16 %v216
      %v807 = vunpack.c.h.b16 %v216
      %v808 = vunpack.c.l.b16 %v217
      %v809 = vunpack.c.h.b16 %v217
      %v810 = vunpack.c.l.b16 %v218
      %v811 = vunpack.c.h.b16 %v218
      %v812 = vunpack.c.l.b16 %v219
      %v813 = vunpack.c.h.b16 %v219
      %v814 = vunpack.c.l.b16 %v220
      %v815 = vunpack.c.h.b16 %v220
      %v816 = vunpack.c.l.b16 %v221
      %v817 = vunpack.c.h.b16 %v221
      %v818 = vunpack.c.l.b16 %v222
      %v819 = vunpack.c.h.b16 %v222
      %v820 = vunpack.c.l.b16 %v223
      %v821 = vunpack.c.h.b16 %v223
      %v822 = vunpack.c.l.b16 %v224
      %v823 = vunpack.c.h.b16 %v224
      %v824 = vunpack.c.l.b16 %v225
      %v825 = vunpack.c.h.b16 %v225
      %v826 = vunpack.c.l.b16 %v226
      %v827 = vunpack.c.h.b16 %v226
      %v828 = vunpack.c.l.b16 %v227
      %v829 = vunpack.c.h.b16 %v227
      %v830 = vunpack.c.l.b16 %v228
      %v831 = vunpack.c.h.b16 %v228
      %v832 = vunpack.c.l.b16 %v229
      %v833 = vunpack.c.h.b16 %v229
      %v834 = vunpack.c.l.b16 %v230
      %v835 = vunpack.c.h.b16 %v230
      %v836 = vunpack.c.l.b16 %v231
      %v837 = vunpack.c.h.b16 %v231
      %v838 = vunpack.c.l.b16 %v232
      %v839 = vunpack.c.h.b16 %v232
      %v840 = vunpack.c.l.b16 %v233
      %v841 = vunpack.c.h.b16 %v233
      %v842 = vunpack.c.l.b16 %v234
      %v843 = vunpack.c.h.b16 %v234
      %v844 = vunpack.c.l.b16 %v235
      %v845 = vunpack.c.h.b16 %v235
      %v846 = vunpack.c.l.b16 %v236
      %v847 = vunpack.c.h.b16 %v236
      %v848 = vunpack.c.l.b16 %v237
      %v849 = vunpack.c.h.b16 %v237
      %v850 = vunpack.c.l.b16 %v238
      %v851 = vunpack.c.h.b16 %v238
      %v852 = vunpack.c.l.b16 %v239
      %v853 = vunpack.c.h.b16 %v239
      %v854 = vunpack.c.l.b16 %v240
      %v855 = vunpack.c.h.b16 %v240
      %v856 = vunpack.c.l.b16 %v241
      %v857 = vunpack.c.h.b16 %v241
      %v858 = vunpack.c.l.b16 %v242
      %v859 = vunpack.c.h.b16 %v242
      %v860 = vunpack.c.l.b16 %v243
      %v861 = vunpack.c.h.b16 %v243
      %v862 = vunpack.c.l.b16 %v244
      %v863 = vunpack.c.h.b16 %v244
      %v864 = vunpack.c.l.b16 %v245
      %v865 = vunpack.c.h.b16 %v245
      %v866 = vunpack.c.l.b16 %v246
      %v867 = vunpack.c.h.b16 %v246
      %v868 = vunpack.c.l.b16 %v247
      %v869 = vunpack.c.h.b16 %v247
      %v870 = vunpack.c.l.b16 %v248
      %v871 = vunpack.c.h.b16 %v248
      %v872 = vunpack.c.l.b16 %v249
      %v873 = vunpack.c.h.b16 %v249
      %v874 = vunpack.c.l.b16 %v250
      %v875 = vunpack.c.h.b16 %v250
      %v876 = vunpack.c.l.b16 %v251
      %v877 = vunpack.c.h.b16 %v251
      %v878 = vunpack.c.l.b16 %v252
      %v879 = vunpack.c.h.b16 %v252
      %v880 = vunpack.c.l.b16 %v253
      %v881 = vunpack.c.h.b16 %v253
      %v882 = vunpack.c.l.b16 %v254
      %v883 = vunpack.c.h.b16 %v254
      %v884 = vunpack.c.l.b16 %v255
      %v885 = vunpack.c.h.b16 %v255
      %v886 = vunpack.c.l.b16 %v256
      %v887 = vunpack.c.h.b16 %v256
      %v888 = vunpack.c.l.b16 %v257
      %v889 = vunpack.c.h.b16 %v257
      %v890 = vunpack.c.l.b16 %v258
      %v891 = vunpack.c.h.b16 %v258
      %v892 = vunpack.c.l.b16 %v259
      %v893 = vunpack.c.h.b16 %v259
      %v894 = vunpack.c.l.b16 %v260
      %v895 = vunpack.c.h.b16 %v260
      %v896 = vunpack.c.l.b16 %v261
      %v897 = vunpack.c.h.b16 %v261
      %v898 = vunpack.c.l.b16 %v262
      %v899 = vunpack.c.h.b16 %v262
      %v900 = vunpack.c.l.b16 %v263
      %v901 = vunpack.c.h.b16 %v263
      %v902 = vunpack.c.l.b16 %v264
      %v903 = vunpack.c.h.b16 %v264
      %v904 = vunpack.c.l.b16 %v265
      %v905 = vunpack.c.h.b16 %v265
      %v906 = vunpack.c.l.b16 %v266
      %v907 = vunpack.c.h.b16 %v266
      %v908 = vunpack.c.l.b16 %v267
      %v909 = vunpack.c.h.b16 %v267
      %v910 = vunpack.c.l.b16 %v268
      %v911 = vunpack.c.h.b16 %v268
      %v912 = vunpack.c.l.b16 %v269
      %v913 = vunpack.c.h.b16 %v269
      %v914 = vunpack.c.l.b16 %v270
      %v915 = vunpack.c.h.b16 %v270
      %v916 = vunpack.c.l.b16 %v271
      %v917 = vunpack.c.h.b16 %v271
      %v918 = vunpack.c.l.b16 %v272
      %v919 = vunpack.c.h.b16 %v272
      %v920 = vunpack.c.l.b16 %v273
      %v921 = vunpack.c.h.b16 %v273
      %v922 = vunpack.c.l.b16 %v274
      %v923 = vunpack.c.h.b16 %v274
      %v924 = vunpack.c.l.b16 %v275
      %v925 = vunpack.c.h.b16 %v275
      %v926 = vunpack.c.l.b16 %v276
      %v927 = vunpack.c.h.b16 %v276
      %v928 = vunpack.c.l.b16 %v277
      %v929 = vunpack.c.h.b16 %v277
      %v930 = vunpack.c.l.b16 %v278
      %v931 = vunpack.c.h.b16 %v278
      %v932 = vunpack.c.l.b16 %v279
      %v933 = vunpack.c.h.b16 %v279
      %v934 = vunpack.c.l.b16 %v280
      %v935 = vunpack.c.h.b16 %v280
      %v936 = vunpack.c.l.b16 %v281
      %v937 = vunpack.c.h.b16 %v281
      %v938 = vunpack.c.l.b16 %v282
      %v939 = vunpack.c.h.b16 %v282
      %v940 = vunpack.c.l.b16 %v283
      %v941 = vunpack.c.h.b16 %v283
      %v942 = vunpack.c.l.b16 %v284
      %v943 = vunpack.c.h.b16 %v284
      %v944 = vunpack.c.l.b16 %v285
      %v945 = vunpack.c.h.b16 %v285
      %v946 = vunpack.c.l.b16 %v286
      %v947 = vunpack.c.h.b16 %v286
      %v948 = vunpack.c.l.b16 %v287
      %v949 = vunpack.c.h.b16 %v287
      %v950 = vunpack.c.l.b16 %v288
      %v951 = vunpack.c.h.b16 %v288
      %v952 = vunpack.c.l.b16 %v289
      %v953 = vunpack.c.h.b16 %v289
      %v954 = vunpack.c.l.b16 %v290
      %v955 = vunpack.c.h.b16 %v290
      %v956 = vunpack.c.l.b16 %v291
      %v957 = vunpack.c.h.b16 %v291
      %v958 = vunpack.c.l.b16 %v292
      %v959 = vunpack.c.h.b16 %v292
      %v960 = vunpack.c.l.b16 %v293
      %v961 = vunpack.c.h.b16 %v293
      %v962 = vunpack.c.l.b16 %v294
      %v963 = vunpack.c.h.b16 %v294
      %v964 = vunpack.c.l.b16 %v295
      %v965 = vunpack.c.h.b16 %v295
      %v966 = vunpack.c.l.b16 %v296
      %v967 = vunpack.c.h.b16 %v296
      %v968 = vunpack.c.l.b16 %v297
      %v969 = vunpack.c.h.b16 %v297
      %v970 = vunpack.c.l.b16 %v298
      %v971 = vunpack.c.h.b16 %v298
      %v972 = vunpack.c.l.b16 %v299
      %v973 = vunpack.c.h.b16 %v299
      %v974 = vunpack.c.l.b16 %v300
      %v975 = vunpack.c.h.b16 %v300
      %v976 = vunpack.c.l.b16 %v301
      %v977 = vunpack.c.h.b16 %v301
      %v978 = vunpack.c.l.b16 %v302
      %v979 = vunpack.c.h.b16 %v302
      %v980 = vunpack.c.l.b16 %v303
      %v981 = vunpack.c.h.b16 %v303
      %v982 = vunpack.c.l.b16 %v304
      %v983 = vunpack.c.h.b16 %v304
      %v984 = vunpack.c.l.b16 %v305
      %v985 = vunpack.c.h.b16 %v305
      %v986 = vunpack.c.l.b16 %v306
      %v987 = vunpack.c.h.b16 %v306
      %v988 = vunpack.c.l.b16 %v307
      %v989 = vunpack.c.h.b16 %v307
      %v990 = vunpack.c.l.b16 %v308
      %v991 = vunpack.c.h.b16 %v308
      %v992 = vunpack.c.l.b16 %v309
      %v993 = vunpack.c.h.b16 %v309
      %v994 = vunpack.c.l.b16 %v310
      %v995 = vunpack.c.h.b16 %v310
      %v996 = vunpack.c.l.b16 %v311
      %v997 = vunpack.c.h.b16 %v311
      %v998 = vunpack.c.l.b16 %v312
      %v999 = vunpack.c.h.b16 %v312
      %v1000 = vunpack.c.l.b16 %v313
      %v1001 = vunpack.c.h.b16 %v313
      %v1002 = vunpack.c.l.b16 %v314
      %v1003 = vunpack.c.h.b16 %v314
      %v1004 = vunpack.c.l.b16 %v315
      %v1005 = vunpack.c.h.b16 %v315
      %v1006 = vunpack.c.l.b16 %v316
      %v1007 = vunpack.c.h.b16 %v316
      %v1008 = vunpack.c.l.b16 %v317
      %v1009 = vunpack.c.h.b16 %v317
      %v1010 = vunpack.c.l.b16 %v318
      %v1011 = vunpack.c.h.b16 %v318
      %v1012 = vunpack.c.l.b16 %v319
      %v1013 = vunpack.c.h.b16 %v319
      %v1014 = vunpack.c.l.b16 %v320
      %v1015 = vunpack.c.h.b16 %v320
      %v1016 = vunpack.c.l.b16 %v321
      %v1017 = vunpack.c.h.b16 %v321
      %v1018 = vunpack.c.l.b16 %v322
      %v1019 = vunpack.c.h.b16 %v322
      %v1020 = vunpack.c.l.b16 %v323
      %v1021 = vunpack.c.h.b16 %v323
      %v1022 = vunpack.c.l.b16 %v324
      %v1023 = vunpack.c.h.b16 %v324
      %v1024 = vunpack.c.l.b16 %v325
      %v1025 = vunpack.c.h.b16 %v325
      %v1026 = vunpack.c.l.b16 %v326
      %v1027 = vunpack.c.h.b16 %v326
      %v1028 = vunpack.c.l.b16 %v327
      %v1029 = vunpack.c.h.b16 %v327
      %v1030 = vunpack.c.l.b16 %v328
      %v1031 = vunpack.c.h.b16 %v328
      %v1032 = vunpack.c.l.b16 %v329
      %v1033 = vunpack.c.h.b16 %v329
      %v1034 = vunpack.c.l.b16 %v330
      %v1035 = vunpack.c.h.b16 %v330
      %v1036 = vunpack.c.l.b16 %v331
      %v1037 = vunpack.c.h.b16 %v331
      %v1038 = vunpack.c.l.b16 %v332
      %v1039 = vunpack.c.h.b16 %v332
      %v1040 = vunpack.c.l.b16 %v333
      %v1041 = vunpack.c.h.b16 %v333
      %v1042 = vunpack.c.l.b16 %v334
      %v1043 = vunpack.c.h.b16 %v334
      %v1044 = vunpack.c.l.b16 %v335
      %v1045 = vunpack.c.h.b16 %v335
      %v1046 = vunpack.c.l.b16 %v336
      %v1047 = vunpack.c.h.b16 %v336
      %v1048 = vunpack.c.l.b16 %v337
      %v1049 = vunpack.c.h.b16 %v337
      %v1050 = vunpack.c.l.b16 %v338
      %v1051 = vunpack.c.h.b16 %v338
      %v1052 = vunpack.c.l.b16 %v339
      %v1053 = vunpack.c.h.b16 %v339
      %v1054 = vunpack.c.l.b16 %v340
      %v1055 = vunpack.c.h.b16 %v340
      %v1056 = vunpack.c.l.b16 %v341
      %v1057 = vunpack.c.h.b16 %v341
      %v1058 = vunpack.c.l.b16 %v342
      %v1059 = vunpack.c.h.b16 %v342
      %v1060 = vunpack.c.l.b16 %v343
      %v1061 = vunpack.c.h.b16 %v343
      %v1062 = vunpack.c.l.b16 %v344
      %v1063 = vunpack.c.h.b16 %v344
      %v1064 = vunpack.c.l.b16 %v345
      %v1065 = vunpack.c.h.b16 %v345
      %v1066 = vunpack.c.l.b16 %v346
      %v1067 = vunpack.c.h.b16 %v346
      %v1068 = vunpack.c.l.b16 %v347
      %v1069 = vunpack.c.h.b16 %v347
      %v1070 = vunpack.c.l.b16 %v348
      %v1071 = vunpack.c.h.b16 %v348
      %v1072 = vunpack.c.l.b16 %v349
      %v1073 = vunpack.c.h.b16 %v349
      %v1074 = vunpack.c.l.b16 %v350
      %v1075 = vunpack.c.h.b16 %v350
      %v1076 = vunpack.c.l.b16 %v351
      %v1077 = vunpack.c.h.b16 %v351
      %v1078 = vunpack.c.l.b16 %v352
      %v1079 = vunpack.c.h.b16 %v352
      %v1080 = vunpack.c.l.b16 %v353
      %v1081 = vunpack.c.h.b16 %v353
      %v1082 = vunpack.c.l.b16 %v354
      %v1083 = vunpack.c.h.b16 %v354
      %v1084 = vunpack.c.l.b16 %v355
      %v1085 = vunpack.c.h.b16 %v355
      %v1086 = vunpack.c.l.b16 %v356
      %v1087 = vunpack.c.h.b16 %v356
      %v1088 = vunpack.c.l.b16 %v357
      %v1089 = vunpack.c.h.b16 %v357
      %v1090 = vunpack.c.l.b16 %v358
      %v1091 = vunpack.c.h.b16 %v358
      %v1092 = vunpack.c.l.b16 %v359
      %v1093 = vunpack.c.h.b16 %v359
      %v1094 = vunpack.c.l.b16 %v360
      %v1095 = vunpack.c.h.b16 %v360
      %v1096 = vunpack.c.l.b16 %v361
      %v1097 = vunpack.c.h.b16 %v361
      %v1098 = vunpack.c.l.b16 %v362
      %v1099 = vunpack.c.h.b16 %v362
      %v1100 = vunpack.c.l.b16 %v363
      %v1101 = vunpack.c.h.b16 %v363
      %v1102 = vunpack.c.l.b16 %v364
      %v1103 = vunpack.c.h.b16 %v364
      %v1104 = vunpack.c.l.b16 %v365
      %v1105 = vunpack.c.h.b16 %v365
      %v1106 = vunpack.c.l.b16 %v366
      %v1107 = vunpack.c.h.b16 %v366
      %v1108 = vunpack.c.l.b16 %v367
      %v1109 = vunpack.c.h.b16 %v367
      %v1110 = vunpack.c.l.b16 %v368
      %v1111 = vunpack.c.h.b16 %v368
      %v1112 = vunpack.c.l.b16 %v369
      %v1113 = vunpack.c.h.b16 %v369
      %v1114 = vunpack.c.l.b16 %v370
      %v1115 = vunpack.c.h.b16 %v370
      %v1116 = vunpack.c.l.b16 %v371
      %v1117 = vunpack.c.h.b16 %v371
      %v1118 = vunpack.c.l.b16 %v372
      %v1119 = vunpack.c.h.b16 %v372
      %v1120 = vunpack.c.l.b16 %v373
      %v1121 = vunpack.c.h.b16 %v373
      %v1122 = vunpack.c.l.b16 %v374
      %v1123 = vunpack.c.h.b16 %v374
      %v1124 = vunpack.c.l.b16 %v375
      %v1125 = vunpack.c.h.b16 %v375
      %v1126 = vunpack.c.l.b16 %v376
      %v1127 = vunpack.c.h.b16 %v376
      %v1128 = vunpack.c.l.b16 %v377
      %v1129 = vunpack.c.h.b16 %v377
      %v1130 = vunpack.c.l.b16 %v378
      %v1131 = vunpack.c.h.b16 %v378
      %v1132 = vunpack.c.l.b16 %v379
      %v1133 = vunpack.c.h.b16 %v379
      %v1134 = vunpack.c.l.b16 %v380
      %v1135 = vunpack.c.h.b16 %v380
      %v1136 = vunpack.c.l.b16 %v381
      %v1137 = vunpack.c.h.b16 %v381
      %v1138 = vunpack.c.l.b16 %v382
      %v1139 = vunpack.c.h.b16 %v382
      %v1140 = vunpack.c.l.b16 %v383
      %v1141 = vunpack.c.h.b16 %v383
      %v1142 = vunpack.c.l.b16 %v384
      %v1143 = vunpack.c.h.b16 %v384
      %v1144 = vunpack.c.l.b16 %v385
      %v1145 = vunpack.c.h.b16 %v385
      %v1146 = vunpack.c.l.b16 %v386
      %v1147 = vunpack.c.h.b16 %v386
      %v1148 = vunpack.c.l.b16 %v387
      %v1149 = vunpack.c.h.b16 %v387
      %v1150 = vunpack.c.l.b16 %v388
      %v1151 = vunpack.c.h.b16 %v388
      %v1152 = vunpack.c.l.b16 %v389
      %v1153 = vunpack.c.h.b16 %v389
      %v1154 = vunpack.c.l.b16 %v390
      %v1155 = vunpack.c.h.b16 %v390
      %v1156 = vunpack.c.l.b16 %v391
      %v1157 = vunpack.c.h.b16 %v391
      %v1158 = vunpack.c.l.b16 %v392
      %v1159 = vunpack.c.h.b16 %v392
      %v1160 = vunpack.c.l.b16 %v393
      %v1161 = vunpack.c.h.b16 %v393
      %v1162 = vunpack.c.l.b16 %v394
      %v1163 = vunpack.c.h.b16 %v394
      %v1164 = vunpack.c.l.b16 %v395
      %v1165 = vunpack.c.h.b16 %v395
      %v1166 = vunpack.c.l.b16 %v396
      %v1167 = vunpack.c.h.b16 %v396
      %v1168 = vunpack.c.l.b16 %v397
      %v1169 = vunpack.c.h.b16 %v397
      %v1170 = vunpack.c.l.b16 %v398
      %v1171 = vunpack.c.h.b16 %v398
      %v1172 = vunpack.c.l.b16 %v399
      %v1173 = vunpack.c.h.b16 %v399
      %v1174 = vunpack.c.l.b16 %v400
      %v1175 = vunpack.c.h.b16 %v400
      %v1176 = vunpack.c.l.b16 %v401
      %v1177 = vunpack.c.h.b16 %v401
      %v1178 = vunpack.c.l.b16 %v402
      %v1179 = vunpack.c.h.b16 %v402
      %v1180 = vunpack.c.l.b16 %v403
      %v1181 = vunpack.c.h.b16 %v403
      %v1182 = vunpack.c.l.b16 %v404
      %v1183 = vunpack.c.h.b16 %v404
      %v1184 = vunpack.c.l.b16 %v405
      %v1185 = vunpack.c.h.b16 %v405
      %v1186 = vunpack.c.l.b16 %v406
      %v1187 = vunpack.c.h.b16 %v406
      %v1188 = vunpack.c.l.b16 %v407
      %v1189 = vunpack.c.h.b16 %v407
      %v1190 = vunpack.c.l.b16 %v408
      %v1191 = vunpack.c.h.b16 %v408
      %v1192 = vunpack.c.l.b16 %v409
      %v1193 = vunpack.c.h.b16 %v409
      %v1194 = vunpack.c.l.b16 %v410
      %v1195 = vunpack.c.h.b16 %v410
      %v1196 = vunpack.c.l.b16 %v411
      %v1197 = vunpack.c.h.b16 %v411
      %v1198 = vunpack.c.l.b16 %v412
      %v1199 = vunpack.c.h.b16 %v412
      %v1200 = vunpack.c.l.b16 %v413
      %v1201 = vunpack.c.h.b16 %v413
      %v1202 = vunpack.c.l.b16 %v414
      %v1203 = vunpack.c.h.b16 %v414
      %v1204 = vunpack.c.l.b16 %v415
      %v1205 = vunpack.c.h.b16 %v415
      %v1206 = vunpack.c.l.b16 %v416
      %v1207 = vunpack.c.h.b16 %v416
      %v1208 = vunpack.c.l.b16 %v417
      %v1209 = vunpack.c.h.b16 %v417
      %v1210 = vunpack.c.l.b16 %v418
      %v1211 = vunpack.c.h.b16 %v418
      %v1212 = vunpack.c.l.b16 %v419
      %v1213 = vunpack.c.h.b16 %v419
      %v1214 = vunpack.c.l.b16 %v420
      %v1215 = vunpack.c.h.b16 %v420
      %v1216 = vunpack.c.l.b16 %v421
      %v1217 = vunpack.c.h.b16 %v421
      %v1218 = vunpack.c.l.b16 %v422
      %v1219 = vunpack.c.h.b16 %v422
      %v1220 = vunpack.c.l.b16 %v423
      %v1221 = vunpack.c.h.b16 %v423
      %v1222 = vunpack.c.l.b16 %v424
      %v1223 = vunpack.c.h.b16 %v424
      %v1224 = vunpack.c.l.b16 %v425
      %v1225 = vunpack.c.h.b16 %v425
      %v1226 = vunpack.c.l.b16 %v426
      %v1227 = vunpack.c.h.b16 %v426
      %v1228 = vunpack.c.l.b16 %v427
      %v1229 = vunpack.c.h.b16 %v427
      %v1230 = vunpack.c.l.b16 %v428
      %v1231 = vunpack.c.h.b16 %v428
      %v1232 = vunpack.c.l.b16 %v429
      %v1233 = vunpack.c.h.b16 %v429
      %v1234 = vunpack.c.l.b16 %v430
      %v1235 = vunpack.c.h.b16 %v430
      %v1236 = vunpack.c.l.b16 %v431
      %v1237 = vunpack.c.h.b16 %v431
      %v1238 = vunpack.c.l.b16 %v432
      %v1239 = vunpack.c.h.b16 %v432
      %v1240 = vunpack.c.l.b16 %v433
      %v1241 = vunpack.c.h.b16 %v433
      %v1242 = vunpack.c.l.b16 %v434
      %v1243 = vunpack.c.h.b16 %v434
      %v1244 = vunpack.c.l.b16 %v435
      %v1245 = vunpack.c.h.b16 %v435
      %v1246 = vunpack.c.l.b16 %v436
      %v1247 = vunpack.c.h.b16 %v436
      %v1248 = vunpack.c.l.b16 %v437
      %v1249 = vunpack.c.h.b16 %v437
      %v1250 = vunpack.c.l.b16 %v438
      %v1251 = vunpack.c.h.b16 %v438
      %v1252 = vunpack.c.l.b16 %v439
      %v1253 = vunpack.c.h.b16 %v439
      %v1254 = vunpack.c.l.b16 %v440
      %v1255 = vunpack.c.h.b16 %v440
      %v1256 = vunpack.c.l.b16 %v441
      %v1257 = vunpack.c.h.b16 %v441
      %v1258 = vunpack.c.l.b16 %v442
      %v1259 = vunpack.c.h.b16 %v442
      %v1260 = vunpack.c.l.b16 %v443
      %v1261 = vunpack.c.h.b16 %v443
      %v1262 = vunpack.c.l.b16 %v444
      %v1263 = vunpack.c.h.b16 %v444
      %v1264 = vunpack.c.l.b16 %v445
      %v1265 = vunpack.c.h.b16 %v445
      %v1266 = vunpack.c.l.b16 %v446
      %v1267 = vunpack.c.h.b16 %v446
      %v1268 = vunpack.c.l.b16 %v447
      %v1269 = vunpack.c.h.b16 %v447
      %v1270 = vunpack.c.l.b16 %v448
      %v1271 = vunpack.c.h.b16 %v448
      %v1272 = vunpack.c.l.b16 %v449
      %v1273 = vunpack.c.h.b16 %v449
      %v1274 = vunpack.c.l.b16 %v450
      %v1275 = vunpack.c.h.b16 %v450
      %v1276 = vunpack.c.l.b16 %v451
      %v1277 = vunpack.c.h.b16 %v451
      %v1278 = vunpack.c.l.b16 %v452
      %v1279 = vunpack.c.h.b16 %v452
      %v1280 = vunpack.c.l.b16 %v453
      %v1281 = vunpack.c.h.b16 %v453
      %v1282 = vunpack.c.l.b16 %v454
      %v1283 = vunpack.c.h.b16 %v454
      %v1284 = vunpack.c.l.b16 %v455
      %v1285 = vunpack.c.h.b16 %v455
      %v1286 = vunpack.c.l.b16 %v456
      %v1287 = vunpack.c.h.b16 %v456
      %v1288 = vunpack.c.l.b16 %v457
      %v1289 = vunpack.c.h.b16 %v457
      %v1290 = vunpack.c.l.b16 %v458
      %v1291 = vunpack.c.h.b16 %v458
      %v1292 = vunpack.c.l.b16 %v459
      %v1293 = vunpack.c.h.b16 %v459
      %v1294 = vunpack.c.l.b16 %v460
      %v1295 = vunpack.c.h.b16 %v460
      %v1296 = vunpack.c.l.b16 %v461
      %v1297 = vunpack.c.h.b16 %v461
      %v1298 = vunpack.c.l.b16 %v462
      %v1299 = vunpack.c.h.b16 %v462
      %v1300 = vunpack.c.l.b16 %v463
      %v1301 = vunpack.c.h.b16 %v463
      %v1302 = vunpack.c.l.b16 %v464
      %v1303 = vunpack.c.h.b16 %v464
      %v1304 = vunpack.c.l.b16 %v465
      %v1305 = vunpack.c.h.b16 %v465
      %v1306 = vunpack.c.l.b16 %v466
      %v1307 = vunpack.c.h.b16 %v466
      %v1308 = vunpack.c.l.b16 %v467
      %v1309 = vunpack.c.h.b16 %v467
      %v1310 = vunpack.c.l.b16 %v468
      %v1311 = vunpack.c.h.b16 %v468
      %v1312 = vunpack.c.l.b16 %v469
      %v1313 = vunpack.c.h.b16 %v469
      %v1314 = vunpack.c.l.b16 %v470
      %v1315 = vunpack.c.h.b16 %v470
      %v1316 = vunpack.c.l.b16 %v471
      %v1317 = vunpack.c.h.b16 %v471
      %v1318 = vunpack.c.l.b16 %v472
      %v1319 = vunpack.c.h.b16 %v472
      %v1320 = vunpack.c.l.b16 %v473
      %v1321 = vunpack.c.h.b16 %v473
      %v1322 = vunpack.c.l.b16 %v474
      %v1323 = vunpack.c.h.b16 %v474
      %v1324 = vunpack.c.l.b16 %v475
      %v1325 = vunpack.c.h.b16 %v475
      %v1326 = vunpack.c.l.b16 %v476
      %v1327 = vunpack.c.h.b16 %v476
      %v1328 = vunpack.c.l.b16 %v477
      %v1329 = vunpack.c.h.b16 %v477
      %v1330 = vunpack.c.l.b16 %v478
      %v1331 = vunpack.c.h.b16 %v478
      %v1332 = vunpack.c.l.b16 %v479
      %v1333 = vunpack.c.h.b16 %v479
      %v1334 = vunpack.c.l.b16 %v480
      %v1335 = vunpack.c.h.b16 %v480
      %v1336 = vunpack.c.l.b16 %v481
      %v1337 = vunpack.c.h.b16 %v481
      %v1338 = vunpack.c.l.b16 %v482
      %v1339 = vunpack.c.h.b16 %v482
      %v1340 = vunpack.c.l.b16 %v483
      %v1341 = vunpack.c.h.b16 %v483
      %v1342 = vunpack.c.l.b16 %v484
      %v1343 = vunpack.c.h.b16 %v484
      %v1344 = vunpack.c.l.b16 %v485
      %v1345 = vunpack.c.h.b16 %v485
      %v1346 = vunpack.c.l.b16 %v486
      %v1347 = vunpack.c.h.b16 %v486
      %v1348 = vunpack.c.l.b16 %v487
      %v1349 = vunpack.c.h.b16 %v487
      %v1350 = vunpack.c.l.b16 %v488
      %v1351 = vunpack.c.h.b16 %v488
      %v1352 = vunpack.c.l.b16 %v489
      %v1353 = vunpack.c.h.b16 %v489
      %v1354 = vpack.c.b16 %v922, %v778
      %v1355 = vpack.c.b16 %v923, %v779
      %v1356 = vpack.c.b16 %v924, %v780
      %v1357 = vpack.c.b16 %v925, %v781
      %v1358 = vpack.c.b16 %v926, %v782
      %v1359 = vpack.c.b16 %v927, %v783
      %v1360 = vpack.c.b16 %v928, %v784
      %v1361 = vpack.c.b16 %v929, %v785
      %v1362 = vpack.c.b16 %v930, %v786
      %v1363 = vpack.c.b16 %v931, %v787
      %v1364 = vpack.c.b16 %v932, %v788
      %v1365 = vpack.c.b16 %v933, %v789
      %v1366 = vpack.c.b16 %v934, %v790
      %v1367 = vpack.c.b16 %v935, %v791
      %v1368 = vpack.c.b16 %v936, %v792
      %v1369 = vpack.c.b16 %v937, %v793
      %v1370 = vpack.c.b16 %v938, %v794
      %v1371 = vpack.c.b16 %v939, %v795
      %v1372 = vpack.c.b16 %v940, %v796
      %v1373 = vpack.c.b16 %v941, %v797
      %v1374 = vpack.c.b16 %v942, %v798
      %v1375 = vpack.c.b16 %v943, %v799
      %v1376 = vpack.c.b16 %v944, %v800
      %v1377 = vpack.c.b16 %v945, %v801
      %v1378 = vpack.c.b16 %v946, %v802
      %v1379 = vpack.c.b16 %v947, %v803
      %v1380 = vpack.c.b16 %v948, %v804
      %v1381 = vpack.c.b16 %v949, %v805
      %v1382 = vpack.c.b16 %v950, %v806
      %v1383 = vpack.c.b16 %v951, %v807
      %v1384 = vpack.c.b16 %v952, %v808
      %v1385 = vpack.c.b16 %v953, %v809
      %v1386 = vpack.c.b16 %v954, %v810
      %v1387 = vpack.c.b16 %v955, %v811
      %v1388 = vpack.c.b16 %v956, %v812
      %v1389 = vpack.c.b16 %v957, %v813
      %v1390 = vpack.c.b16 %v958, %v814
      %v1391 = vpack.c.b16 %v959, %v815
      %v1392 = vpack.c.b16 %v960, %v816
      %v1393 = vpack.c.b16 %v961, %v817
      %v1394 = vpack.c.b16 %v962, %v818
      %v1395 = vpack.c.b16 %v963, %v819
      %v1396 = vpack.c.b16 %v964, %v820
      %v1397 = vpack.c.b16 %v965, %v821
      %v1398 = vpack.c.b16 %v966, %v822
      %v1399 = vpack.c.b16 %v967, %v823
      %v1400 = vpack.c.b16 %v968, %v824
      %v1401 = vpack.c.b16 %v969, %v825
      %v1402 = vpack.c.b16 %v970, %v826
      %v1403 = vpack.c.b16 %v971, %v827
      %v1404 = vpack.c.b16 %v972, %v828
      %v1405 = vpack.c.b16 %v973, %v829
      %v1406 = vpack.c.b16 %v974, %v830
      %v1407 = vpack.c.b16 %v975, %v831
      %v1408 = vpack.c.b16 %v976, %v832
      %v1409 = vpack.c.b16 %v977, %v833
      %v1410 = vpack.c.b16 %v978, %v834
      %v1411 = vpack.c.b16 %v979, %v835
      %v1412 = vpack.c.b16 %v980, %v836
      %v1413 = vpack.c.b16 %v981, %v837
      %v1414 = vpack.c.b16 %v982, %v838
      %v1415 = vpack.c.b16 %v983, %v839
      %v1416 = vpack.c.b16 %v984, %v840
      %v1417 = vpack.c.b16 %v985, %v841
      %v1418 = vpack.c.b16 %v986, %v842
      %v1419 = vpack.c.b16 %v987, %v843
      %v1420 = vpack.c.b16 %v988, %v844
      %v1421 = vpack.c.b16 %v989, %v845
      %v1422 = vpack.c.b16 %v990, %v846
      %v1423 = vpack.c.b16 %v991, %v847
      %v1424 = vpack.c.b16 %v992, %v848
      %v1425 = vpack.c.b16 %v993, %v849
      %v1426 = vpack.c.b16 %v994, %v850
      %v1427 = vpack.c.b16 %v995, %v851
      %v1428 = vpack.c.b16 %v996, %v852
      %v1429 = vpack.c.b16 %v997, %v853
      %v1430 = vpack.c.b16 %v998, %v854
      %v1431 = vpack.c.b16 %v999, %v855
      %v1432 = vpack.c.b16 %v1000, %v856
      %v1433 = vpack.c.b16 %v1001, %v857
      %v1434 = vpack.c.b16 %v1002, %v858
      %v1435 = vpack.c.b16 %v1003, %v859
      %v1436 = vpack.c.b16 %v1004, %v860
      %v1437 = vpack.c.b16 %v1005, %v861
      %v1438 = vpack.c.b16 %v1006, %v862
      %v1439 = vpack.c.b16 %v1007, %v863
      %v1440 = vpack.c.b16 %v1008, %v864
      %v1441 = vpack.c.b16 %v1009, %v865
      %v1442 = vpack.c.b16 %v1010, %v866
      %v1443 = vpack.c.b16 %v1011, %v867
      %v1444 = vpack.c.b16 %v1012, %v868
      %v1445 = vpack.c.b16 %v1013, %v869
      %v1446 = vpack.c.b16 %v1014, %v870
      %v1447 = vpack.c.b16 %v1015, %v871
      %v1448 = vpack.c.b16 %v1016, %v872
      %v1449 = vpack.c.b16 %v1017, %v873
      %v1450 = vpack.c.b16 %v1018, %v874
      %v1451 = vpack.c.b16 %v1019, %v875
      %v1452 = vpack.c.b16 %v1020, %v876
      %v1453 = vpack.c.b16 %v1021, %v877
      %v1454 = vpack.c.b16 %v1022, %v878
      %v1455 = vpack.c.b16 %v1023, %v879
      %v1456 = vpack.c.b16 %v1024, %v880
      %v1457 = vpack.c.b16 %v1025, %v881
      %v1458 = vpack.c.b16 %v1026, %v882
      %v1459 = vpack.c.b16 %v1027, %v883
      %v1460 = vpack.c.b16 %v1028, %v884
      %v1461 = vpack.c.b16 %v1029, %v885
      %v1462 = vpack.c.b16 %v1030, %v886
      %v1463 = vpack.c.b16 %v1031, %v887
      %v1464 = vpack.c.b16 %v1032, %v888
      %v1465 = vpack.c.b16 %v1033, %v889
      %v1466 = vpack.c.b16 %v1034, %v890
      %v1467 = vpack.c.b16 %v1035, %v891
      %v1468 = vpack.c.b16 %v1036, %v892
      %v1469 = vpack.c.b16 %v1037, %v893
      %v1470 = vpack.c.b16 %v1038, %v894
      %v1471 = vpack.c.b16 %v1039, %v895
      %v1472 = vpack.c.b16 %v1040, %v896
      %v1473 = vpack.c.b16 %v1041, %v897
      %v1474 = vpack.c.b16 %v1042, %v898
      %v1475 = vpack.c.b16 %v1043, %v899
      %v1476 = vpack.c.b16 %v1044, %v900
      %v1477 = vpack.c.b16 %v1045, %v901
      %v1478 = vpack.c.b16 %v1046, %v902
      %v1479 = vpack.c.b16 %v1047, %v903
      %v1480 = vpack.c.b16 %v1048, %v904
      %v1481 = vpack.c.b16 %v1049, %v905
      %v1482 = vpack.c.b16 %v1050, %v906
      %v1483 = vpack.c.b16 %v1051, %v907
      %v1484 = vpack.c.b16 %v1052, %v908
      %v1485 = vpack.c.b16 %v1053, %v909
      %v1486 = vpack.c.b16 %v1054, %v910
      %v1487 = vpack.c.b16 %v1055, %v911
      %v1488 = vpack.c.b16 %v1056, %v912
      %v1489 = vpack.c.b16 %v1057, %v913
      %v1490 = vpack.c.b16 %v1058, %v914
      %v1491 = vpack.c.b16 %v1059, %v915
      %v1492 = vpack.c.b16 %v1060, %v916
      %v1493 = vpack.c.b16 %v1061, %v917
      %v1494 = vpack.c.b16 %v1062, %v918
      %v1495 = vpack.c.b16 %v1063, %v919
      %v1496 = vpack.c.b16 %v1064, %v920
      %v1497 = vpack.c.b16 %v1065, %v921
      %v1498 = vpack.c.b16 %v1210, %v1066
      %v1499 = vpack.c.b16 %v1211, %v1067
      %v1500 = vpack.c.b16 %v1212, %v1068
      %v1501 = vpack.c.b16 %v1213, %v1069
      %v1502 = vpack.c.b16 %v1214, %v1070
      %v1503 = vpack.c.b16 %v1215, %v1071
      %v1504 = vpack.c.b16 %v1216, %v1072
      %v1505 = vpack.c.b16 %v1217, %v1073
      %v1506 = vpack.c.b16 %v1218, %v1074
      %v1507 = vpack.c.b16 %v1219, %v1075
      %v1508 = vpack.c.b16 %v1220, %v1076
      %v1509 = vpack.c.b16 %v1221, %v1077
      %v1510 = vpack.c.b16 %v1222, %v1078
      %v1511 = vpack.c.b16 %v1223, %v1079
      %v1512 = vpack.c.b16 %v1224, %v1080
      %v1513 = vpack.c.b16 %v1225, %v1081
      %v1514 = vpack.c.b16 %v1226, %v1082
      %v1515 = vpack.c.b16 %v1227, %v1083
      %v1516 = vpack.c.b16 %v1228, %v1084
      %v1517 = vpack.c.b16 %v1229, %v1085
      %v1518 = vpack.c.b16 %v1230, %v1086
      %v1519 = vpack.c.b16 %v1231, %v1087
      %v1520 = vpack.c.b16 %v1232, %v1088
      %v1521 = vpack.c.b16 %v1233, %v1089
      %v1522 = vpack.c.b16 %v1234, %v1090
      %v1523 = vpack.c.b16 %v1235, %v1091
      %v1524 = vpack.c.b16 %v1236, %v1092
      %v1525 = vpack.c.b16 %v1237, %v1093
      %v1526 = vpack.c.b16 %v1238, %v1094
      %v1527 = vpack.c.b16 %v1239, %v1095
      %v1528 = vpack.c.b16 %v1240, %v1096
      %v1529 = vpack.c.b16 %v1241, %v1097
      %v1530 = vpack.c.b16 %v1242, %v1098
      %v1531 = vpack.c.b16 %v1243, %v1099
      %v1532 = vpack.c.b16 %v1244, %v1100
      %v1533 = vpack.c.b16 %v1245, %v1101
      %v1534 = vpack.c.b16 %v1246, %v1102
      %v1535 = vpack.c.b16 %v1247, %v1103
      %v1536 = vpack.c.b16 %v1248, %v1104
      %v1537 = vpack.c.b16 %v1249, %v1105
      %v1538 = vpack.c.b16 %v1250, %v1106
      %v1539 = vpack.c.b16 %v1251, %v1107
      %v1540 = vpack.c.b16 %v1252, %v1108
      %v1541 = vpack.c.b16 %v1253, %v1109
      %v1542 = vpack.c.b16 %v1254, %v1110
      %v1543 = vpack.c.b16 %v1255, %v1111
      %v1544 = vpack.c.b16 %v1256, %v1112
      %v1545 = vpack.c.b16 %v1257, %v1113
      %v1546 = vpack.c.b16 %v1258, %v1114
      %v1547 = vpack.c.b16 %v1259, %v1115
      %v1548 = vpack.c.b16 %v1260, %v1116
      %v1549 = vpack.c.b16 %v1261, %v1117
      %v1550 = vpack.c.b16 %v1262, %v1118
      %v1551 = vpack.c.b16 %v1263, %v1119
      %v1552 = vpack.c.b16 %v1264, %v1120
      %v1553 = vpack.c.b16 %v1265, %v1121
      %v1554 = vpack.c.b16 %v1266, %v1122
      %v1555 = vpack.c.b16 %v1267, %v1123
      %v1556 = vpack.c.b16 %v1268, %v1124
      %v1557 = vpack.c.b16 %v1269, %v1125
      %v1558 = vpack.c.b16 %v1270, %v1126
      %v1559 = vpack.c.b16 %v1271, %v1127
      %v1560 = vpack.c.b16 %v1272, %v1128
      %v1561 = vpack.c.b16 %v1273, %v1129
      %v1562 = vpack.c.b16 %v1274, %v1130
      %v1563 = vpack.c.b16 %v1275, %v1131
      %v1564 = vpack.c.b16 %v1276, %v1132
      %v1565 = vpack.c.b16 %v1277, %v1133
      %v1566 = vpack.c.b16 %v1278, %v1134
      %v1567 = vpack.c.b16 %v1279, %v1135
      %v1568 = vpack.c.b16 %v1280, %v1136
      %v1569 = vpack.c.b16 %v1281, %v1137
      %v1570 = vpack.c.b16 %v1282, %v1138
      %v1571 = vpack.c.b16 %v1283, %v1139
      %v1572 = vpack.c.b16 %v1284, %v1140
      %v1573 = vpack.c.b16 %v1285, %v1141
      %v1574 = vpack.c.b16 %v1286, %v1142
      %v1575 = vpack.c.b16 %v1287, %v1143
      %v1576 = vpack.c.b16 %v1288, %v1144
      %v1577 = vpack.c.b16 %v1289, %v1145
      %v1578 = vpack.c.b16 %v1290, %v1146
      %v1579 = vpack.c.b16 %v1291, %v1147
      %v1580 = vpack.c.b16 %v1292, %v1148
      %v1581 = vpack.c.b16 %v1293, %v1149
      %v1582 = vpack.c.b16 %v1294, %v1150
      %v1583 = vpack.c.b16 %v1295, %v1151
      %v1584 = vpack.c.b16 %v1296, %v1152
      %v1585 = vpack.c.b16 %v1297, %v1153
      %v1586 = vpack.c.b16 %v1298, %v1154
      %v1587 = vpack.c.b16 %v1299, %v1155
      %v1588 = vpack.c.b16 %v1300, %v1156
      %v1589 = vpack.c.b16 %v1301, %v1157
      %v1590 = vpack.c.b16 %v1302, %v1158
      %v1591 = vpack.c.b16 %v1303, %v1159
      %v1592 = vpack.c.b16 %v1304, %v1160
      %v1593 = vpack.c.b16 %v1305, %v1161
      %v1594 = vpack.c.b16 %v1306, %v1162
      %v1595 = vpack.c.b16 %v1307, %v1163
      %v1596 = vpack.c.b16 %v1308, %v1164
      %v1597 = vpack.c.b16 %v1309, %v1165
      %v1598 = vpack.c.b16 %v1310, %v1166
      %v1599 = vpack.c.b16 %v1311, %v1167
      %v1600 = vpack.c.b16 %v1312, %v1168
      %v1601 = vpack.c.b16 %v1313, %v1169
      %v1602 = vpack.c.b16 %v1314, %v1170
      %v1603 = vpack.c.b16 %v1315, %v1171
      %v1604 = vpack.c.b16 %v1316, %v1172
      %v1605 = vpack.c.b16 %v1317, %v1173
      %v1606 = vpack.c.b16 %v1318, %v1174
      %v1607 = vpack.c.b16 %v1319, %v1175
      %v1608 = vpack.c.b16 %v1320, %v1176
      %v1609 = vpack.c.b16 %v1321, %v1177
      %v1610 = vpack.c.b16 %v1322, %v1178
      %v1611 = vpack.c.b16 %v1323, %v1179
      %v1612 = vpack.c.b16 %v1324, %v1180
      %v1613 = vpack.c.b16 %v1325, %v1181
      %v1614 = vpack.c.b16 %v1326, %v1182
      %v1615 = vpack.c.b16 %v1327, %v1183
      %v1616 = vpack.c.b16 %v1328, %v1184
      %v1617 = vpack.c.b16 %v1329, %v1185
      %v1618 = vpack.c.b16 %v1330, %v1186
      %v1619 = vpack.c.b16 %v1331, %v1187
      %v1620 = vpack.c.b16 %v1332, %v1188
      %v1621 = vpack.c.b16 %v1333, %v1189
      %v1622 = vpack.c.b16 %v1334, %v1190
      %v1623 = vpack.c.b16 %v1335, %v1191
      %v1624 = vpack.c.b16 %v1336, %v1192
      %v1625 = vpack.c.b16 %v1337, %v1193
      %v1626 = vpack.c.b16 %v1338, %v1194
      %v1627 = vpack.c.b16 %v1339, %v1195
      %v1628 = vpack.c.b16 %v1340, %v1196
      %v1629 = vpack.c.b16 %v1341, %v1197
      %v1630 = vpack.c.b16 %v1342, %v1198
      %v1631 = vpack.c.b16 %v1343, %v1199
      %v1632 = vpack.c.b16 %v1344, %v1200
      %v1633 = vpack.c.b16 %v1345, %v1201
      %v1634 = vpack.c.b16 %v1346, %v1202
      %v1635 = vpack.c.b16 %v1347, %v1203
      %v1636 = vpack.c.b16 %v1348, %v1204
      %v1637 = vpack.c.b16 %v1349, %v1205
      %v1638 = vpack.c.b16 %v1350, %v1206
      %v1639 = vpack.c.b16 %v1351, %v1207
      %v1640 = vpack.c.b16 %v1352, %v1208
      %v1641 = vpack.c.b16 %v1353, %v1209
      %vm1930 = vcmask 261120
      %v1932 = vsel %vm1930, %v201, 0
      %1934 = vmatprep.subr.bf16.mxu0 %v1355
      %1935 = vmatpush1.bf16.msra.mxu0 %v1354
      %1936 = vmatprep.subr.bf16.mxu0 %v1499
      %1937 = vmatpush1.bf16.msra.mxu0 %v1498
      %1938 = vmatprep.subr.bf16.mxu0 0
      %1939 = vmatpush1.bf16.msra.mxu0 0
      %1940 = vmatprep.subr.bf16.mxu0 0
      %1941 = vmatpush1.bf16.msra.mxu0 0
      %1942 = vmatprep.subr.bf16.mxu0 0
      %1943 = vmatpush1.bf16.msra.mxu0 0
      %1944 = vmatprep.subr.bf16.mxu0 0
      %1945 = vmatpush1.bf16.msra.mxu0 0
      %1946 = vmatprep.subr.bf16.mxu0 0
      %1947 = vmatpush1.bf16.msra.mxu0 0
      %1948 = vmatprep.subr.bf16.mxu0 0
      %1949 = vmatpush1.bf16.msra.mxu0 0
      %1950 = vmatprep.subr.bf16.mxu0 0
      %1951 = vmatpush1.bf16.msra.mxu0 0
      %1952 = vmatprep.subr.bf16.mxu0 0
      %1953 = vmatpush1.bf16.msra.mxu0 0
      %1954 = vmatprep.subr.bf16.mxu0 0
      %1955 = vmatpush1.bf16.msra.mxu0 0
      %1956 = vmatprep.subr.bf16.mxu0 0
      %1957 = vmatpush1.bf16.msra.mxu0 0
      %1958 = vmatprep.subr.bf16.mxu0 0
      %1959 = vmatpush1.bf16.msra.mxu0 0
      %1960 = vmatprep.subr.bf16.mxu0 0
      %1961 = vmatpush1.bf16.msra.mxu0 0
      %1962 = vmatprep.subr.bf16.mxu0 0
      %1963 = vmatpush1.bf16.msra.mxu0 0
      %1964 = vmatprep.subr.bf16.mxu0 0
      %1965 = vmatpush1.bf16.msra.mxu0 0
      %1966 = vmatprep.mubr.bf16.mxu0 0
      %1967 = vmatmul.mubr.bf16.gmra.mrb[0].mxu0 %v1932
      %v1968 = vpop.f32.mrb[0].mxu0
      %v1969 = vadd.f32 0.0, %v1968
      %v1970 = vpop.f32.mrb[0].mxu0
      %v1971 = vadd.f32 0.0, %v1970
      %v1972 = vpop.f32.mrb[0].mxu0
      %v1973 = vpop.f32.mrb[0].mxu0
      %1974 = vdwg.mxu0
      %1975 = vmatprep.subr.bf16.mxu0 %v1357
      %1976 = vmatpush1.bf16.msra.mxu0 %v1356
      %1977 = vmatprep.subr.bf16.mxu0 %v1501
      %1978 = vmatpush1.bf16.msra.mxu0 %v1500
      %1979 = vmatprep.subr.bf16.mxu0 0
      %1980 = vmatpush1.bf16.msra.mxu0 0
      %1981 = vmatprep.subr.bf16.mxu0 0
      %1982 = vmatpush1.bf16.msra.mxu0 0
      %1983 = vmatprep.subr.bf16.mxu0 0
      %1984 = vmatpush1.bf16.msra.mxu0 0
      %1985 = vmatprep.subr.bf16.mxu0 0
      %1986 = vmatpush1.bf16.msra.mxu0 0
      %1987 = vmatprep.subr.bf16.mxu0 0
      %1988 = vmatpush1.bf16.msra.mxu0 0
      %1989 = vmatprep.subr.bf16.mxu0 0
      %1990 = vmatpush1.bf16.msra.mxu0 0
      %1991 = vmatprep.subr.bf16.mxu0 0
      %1992 = vmatpush1.bf16.msra.mxu0 0
      %1993 = vmatprep.subr.bf16.mxu0 0
      %1994 = vmatpush1.bf16.msra.mxu0 0
      %1995 = vmatprep.subr.bf16.mxu0 0
      %1996 = vmatpush1.bf16.msra.mxu0 0
      %1997 = vmatprep.subr.bf16.mxu0 0
      %1998 = vmatpush1.bf16.msra.mxu0 0
      %1999 = vmatprep.subr.bf16.mxu0 0
      %2000 = vmatpush1.bf16.msra.mxu0 0
      %2001 = vmatprep.subr.bf16.mxu0 0
      %2002 = vmatpush1.bf16.msra.mxu0 0
      %2003 = vmatprep.subr.bf16.mxu0 0
      %2004 = vmatpush1.bf16.msra.mxu0 0
      %2005 = vmatprep.subr.bf16.mxu0 0
      %2006 = vmatpush1.bf16.msra.mxu0 0
      %2007 = vmatprep.mubr.bf16.mxu0 0
      %2008 = vmatmul.mubr.bf16.gmra.mrb[0].mxu0 %v1932
      %v2009 = vpop.f32.mrb[0].mxu0
      %v2010 = vadd.f32 0.0, %v2009
      %v2011 = vpop.f32.mrb[0].mxu0
      %v2012 = vadd.f32 0.0, %v2011
      %v2013 = vpop.f32.mrb[0].mxu0
      %v2014 = vpop.f32.mrb[0].mxu0
      %2015 = vdwg.mxu0
      %2016 = vmatprep.subr.bf16.mxu0 %v1359
      %2017 = vmatpush1.bf16.msra.mxu0 %v1358
      %2018 = vmatprep.subr.bf16.mxu0 %v1503
      %2019 = vmatpush1.bf16.msra.mxu0 %v1502
      %2020 = vmatprep.subr.bf16.mxu0 0
      %2021 = vmatpush1.bf16.msra.mxu0 0
      %2022 = vmatprep.subr.bf16.mxu0 0
      %2023 = vmatpush1.bf16.msra.mxu0 0
      %2024 = vmatprep.subr.bf16.mxu0 0
      %2025 = vmatpush1.bf16.msra.mxu0 0
      %2026 = vmatprep.subr.bf16.mxu0 0
      %2027 = vmatpush1.bf16.msra.mxu0 0
      %2028 = vmatprep.subr.bf16.mxu0 0
      %2029 = vmatpush1.bf16.msra.mxu0 0
      %2030 = vmatprep.subr.bf16.mxu0 0
      %2031 = vmatpush1.bf16.msra.mxu0 0
      %2032 = vmatprep.subr.bf16.mxu0 0
      %2033 = vmatpush1.bf16.msra.mxu0 0
      %2034 = vmatprep.subr.bf16.mxu0 0
      %2035 = vmatpush1.bf16.msra.mxu0 0
      %2036 = vmatprep.subr.bf16.mxu0 0
      %2037 = vmatpush1.bf16.msra.mxu0 0
      %2038 = vmatprep.subr.bf16.mxu0 0
      %2039 = vmatpush1.bf16.msra.mxu0 0
      %2040 = vmatprep.subr.bf16.mxu0 0
      %2041 = vmatpush1.bf16.msra.mxu0 0
      %2042 = vmatprep.subr.bf16.mxu0 0
      %2043 = vmatpush1.bf16.msra.mxu0 0
      %2044 = vmatprep.subr.bf16.mxu0 0
      %2045 = vmatpush1.bf16.msra.mxu0 0
      %2046 = vmatprep.subr.bf16.mxu0 0
      %2047 = vmatpush1.bf16.msra.mxu0 0
      %2048 = vmatprep.mubr.bf16.mxu0 0
      %2049 = vmatmul.mubr.bf16.gmra.mrb[0].mxu0 %v1932
      %v2050 = vpop.f32.mrb[0].mxu0
      %v2051 = vadd.f32 0.0, %v2050
      %v2052 = vpop.f32.mrb[0].mxu0
      %v2053 = vadd.f32 0.0, %v2052
      %v2054 = vpop.f32.mrb[0].mxu0
      %v2055 = vpop.f32.mrb[0].mxu0
      %2056 = vdwg.mxu0
      %2057 = vmatprep.subr.bf16.mxu0 %v1361
      %2058 = vmatpush1.bf16.msra.mxu0 %v1360
      %2059 = vmatprep.subr.bf16.mxu0 %v1505
      %2060 = vmatpush1.bf16.msra.mxu0 %v1504
      %2061 = vmatprep.subr.bf16.mxu0 0
      %2062 = vmatpush1.bf16.msra.mxu0 0
      %2063 = vmatprep.subr.bf16.mxu0 0
      %2064 = vmatpush1.bf16.msra.mxu0 0
      %2065 = vmatprep.subr.bf16.mxu0 0
      %2066 = vmatpush1.bf16.msra.mxu0 0
      %2067 = vmatprep.subr.bf16.mxu0 0
      %2068 = vmatpush1.bf16.msra.mxu0 0
      %2069 = vmatprep.subr.bf16.mxu0 0
      %2070 = vmatpush1.bf16.msra.mxu0 0
      %2071 = vmatprep.subr.bf16.mxu0 0
      %2072 = vmatpush1.bf16.msra.mxu0 0
      %2073 = vmatprep.subr.bf16.mxu0 0
      %2074 = vmatpush1.bf16.msra.mxu0 0
      %2075 = vmatprep.subr.bf16.mxu0 0
      %2076 = vmatpush1.bf16.msra.mxu0 0
      %2077 = vmatprep.subr.bf16.mxu0 0
      %2078 = vmatpush1.bf16.msra.mxu0 0
      %2079 = vmatprep.subr.bf16.mxu0 0
      %2080 = vmatpush1.bf16.msra.mxu0 0
      %2081 = vmatprep.subr.bf16.mxu0 0
      %2082 = vmatpush1.bf16.msra.mxu0 0
      %2083 = vmatprep.subr.bf16.mxu0 0
      %2084 = vmatpush1.bf16.msra.mxu0 0
      %2085 = vmatprep.subr.bf16.mxu0 0
      %2086 = vmatpush1.bf16.msra.mxu0 0
      %2087 = vmatprep.subr.bf16.mxu0 0
      %2088 = vmatpush1.bf16.msra.mxu0 0
      %2089 = vmatprep.mubr.bf16.mxu0 0
      %2090 = vmatmul.mubr.bf16.gmra.mrb[0].mxu0 %v1932
      %v2091 = vpop.f32.mrb[0].mxu0
      %v2092 = vadd.f32 0.0, %v2091
      %v2093 = vpop.f32.mrb[0].mxu0
      %v2094 = vadd.f32 0.0, %v2093
      %v2095 = vpop.f32.mrb[0].mxu0
      %v2096 = vpop.f32.mrb[0].mxu0
      %2097 = vdwg.mxu0
      %2098 = vmatprep.subr.bf16.mxu0 %v1363
      %2099 = vmatpush1.bf16.msra.mxu0 %v1362
      %2100 = vmatprep.subr.bf16.mxu0 %v1507
      %2101 = vmatpush1.bf16.msra.mxu0 %v1506
      %2102 = vmatprep.subr.bf16.mxu0 0
      %2103 = vmatpush1.bf16.msra.mxu0 0
      %2104 = vmatprep.subr.bf16.mxu0 0
      %2105 = vmatpush1.bf16.msra.mxu0 0
      %2106 = vmatprep.subr.bf16.mxu0 0
      %2107 = vmatpush1.bf16.msra.mxu0 0
      %2108 = vmatprep.subr.bf16.mxu0 0
      %2109 = vmatpush1.bf16.msra.mxu0 0
      %2110 = vmatprep.subr.bf16.mxu0 0
      %2111 = vmatpush1.bf16.msra.mxu0 0
      %2112 = vmatprep.subr.bf16.mxu0 0
      %2113 = vmatpush1.bf16.msra.mxu0 0
      %2114 = vmatprep.subr.bf16.mxu0 0
      %2115 = vmatpush1.bf16.msra.mxu0 0
      %2116 = vmatprep.subr.bf16.mxu0 0
      %2117 = vmatpush1.bf16.msra.mxu0 0
      %2118 = vmatprep.subr.bf16.mxu0 0
      %2119 = vmatpush1.bf16.msra.mxu0 0
      %2120 = vmatprep.subr.bf16.mxu0 0
      %2121 = vmatpush1.bf16.msra.mxu0 0
      %2122 = vmatprep.subr.bf16.mxu0 0
      %2123 = vmatpush1.bf16.msra.mxu0 0
      %2124 = vmatprep.subr.bf16.mxu0 0
      %2125 = vmatpush1.bf16.msra.mxu0 0
      %2126 = vmatprep.subr.bf16.mxu0 0
      %2127 = vmatpush1.bf16.msra.mxu0 0
      %2128 = vmatprep.subr.bf16.mxu0 0
      %2129 = vmatpush1.bf16.msra.mxu0 0
      %2130 = vmatprep.mubr.bf16.mxu0 0
      %2131 = vmatmul.mubr.bf16.gmra.mrb[0].mxu0 %v1932
      %v2132 = vpop.f32.mrb[0].mxu0
      %v2133 = vadd.f32 0.0, %v2132
      %v2134 = vpop.f32.mrb[0].mxu0
      %v2135 = vadd.f32 0.0, %v2134
      %v2136 = vpop.f32.mrb[0].mxu0
      %v2137 = vpop.f32.mrb[0].mxu0
      %2138 = vdwg.mxu0
      %2139 = vmatprep.subr.bf16.mxu0 %v1365
      %2140 = vmatpush1.bf16.msra.mxu0 %v1364
      %2141 = vmatprep.subr.bf16.mxu0 %v1509
      %2142 = vmatpush1.bf16.msra.mxu0 %v1508
      %2143 = vmatprep.subr.bf16.mxu0 0
      %2144 = vmatpush1.bf16.msra.mxu0 0
      %2145 = vmatprep.subr.bf16.mxu0 0
      %2146 = vmatpush1.bf16.msra.mxu0 0
      %2147 = vmatprep.subr.bf16.mxu0 0
      %2148 = vmatpush1.bf16.msra.mxu0 0
      %2149 = vmatprep.subr.bf16.mxu0 0
      %2150 = vmatpush1.bf16.msra.mxu0 0
      %2151 = vmatprep.subr.bf16.mxu0 0
      %2152 = vmatpush1.bf16.msra.mxu0 0
      %2153 = vmatprep.subr.bf16.mxu0 0
      %2154 = vmatpush1.bf16.msra.mxu0 0
      %2155 = vmatprep.subr.bf16.mxu0 0
      %2156 = vmatpush1.bf16.msra.mxu0 0
      %2157 = vmatprep.subr.bf16.mxu0 0
      %2158 = vmatpush1.bf16.msra.mxu0 0
      %2159 = vmatprep.subr.bf16.mxu0 0
      %2160 = vmatpush1.bf16.msra.mxu0 0
      %2161 = vmatprep.subr.bf16.mxu0 0
      %2162 = vmatpush1.bf16.msra.mxu0 0
      %2163 = vmatprep.subr.bf16.mxu0 0
      %2164 = vmatpush1.bf16.msra.mxu0 0
      %2165 = vmatprep.subr.bf16.mxu0 0
      %2166 = vmatpush1.bf16.msra.mxu0 0
      %2167 = vmatprep.subr.bf16.mxu0 0
      %2168 = vmatpush1.bf16.msra.mxu0 0
      %2169 = vmatprep.subr.bf16.mxu0 0
      %2170 = vmatpush1.bf16.msra.mxu0 0
      %2171 = vmatprep.mubr.bf16.mxu0 0
      %2172 = vmatmul.mubr.bf16.gmra.mrb[0].mxu0 %v1932
      %v2173 = vpop.f32.mrb[0].mxu0
      %v2174 = vadd.f32 0.0, %v2173
      %v2175 = vpop.f32.mrb[0].mxu0
      %v2176 = vadd.f32 0.0, %v2175
      %v2177 = vpop.f32.mrb[0].mxu0
      %v2178 = vpop.f32.mrb[0].mxu0
      %2179 = vdwg.mxu0
      %2180 = vmatprep.subr.bf16.mxu0 %v1367
      %2181 = vmatpush1.bf16.msra.mxu0 %v1366
      %2182 = vmatprep.subr.bf16.mxu0 %v1511
      %2183 = vmatpush1.bf16.msra.mxu0 %v1510
      %2184 = vmatprep.subr.bf16.mxu0 0
      %2185 = vmatpush1.bf16.msra.mxu0 0
      %2186 = vmatprep.subr.bf16.mxu0 0
      %2187 = vmatpush1.bf16.msra.mxu0 0
      %2188 = vmatprep.subr.bf16.mxu0 0
      %2189 = vmatpush1.bf16.msra.mxu0 0
      %2190 = vmatprep.subr.bf16.mxu0 0
      %2191 = vmatpush1.bf16.msra.mxu0 0
      %2192 = vmatprep.subr.bf16.mxu0 0
      %2193 = vmatpush1.bf16.msra.mxu0 0
      %2194 = vmatprep.subr.bf16.mxu0 0
      %2195 = vmatpush1.bf16.msra.mxu0 0
      %2196 = vmatprep.subr.bf16.mxu0 0
      %2197 = vmatpush1.bf16.msra.mxu0 0
      %2198 = vmatprep.subr.bf16.mxu0 0
      %2199 = vmatpush1.bf16.msra.mxu0 0
      %2200 = vmatprep.subr.bf16.mxu0 0
      %2201 = vmatpush1.bf16.msra.mxu0 0
      %2202 = vmatprep.subr.bf16.mxu0 0
      %2203 = vmatpush1.bf16.msra.mxu0 0
      %2204 = vmatprep.subr.bf16.mxu0 0
      %2205 = vmatpush1.bf16.msra.mxu0 0
      %2206 = vmatprep.subr.bf16.mxu0 0
      %2207 = vmatpush1.bf16.msra.mxu0 0
      %2208 = vmatprep.subr.bf16.mxu0 0
      %2209 = vmatpush1.bf16.msra.mxu0 0
      %2210 = vmatprep.subr.bf16.mxu0 0
      %2211 = vmatpush1.bf16.msra.mxu0 0
      %2212 = vmatprep.mubr.bf16.mxu0 0
      %2213 = vmatmul.mubr.bf16.gmra.mrb[0].mxu0 %v1932
      %v2214 = vpop.f32.mrb[0].mxu0
      %v2215 = vadd.f32 0.0, %v2214
      %v2216 = vpop.f32.mrb[0].mxu0
      %v2217 = vadd.f32 0.0, %v2216
      %v2218 = vpop.f32.mrb[0].mxu0
      %v2219 = vpop.f32.mrb[0].mxu0
      %2220 = vdwg.mxu0
      %2221 = vmatprep.subr.bf16.mxu0 %v1369
      %2222 = vmatpush1.bf16.msra.mxu0 %v1368
      %2223 = vmatprep.subr.bf16.mxu0 %v1513
      %2224 = vmatpush1.bf16.msra.mxu0 %v1512
      %2225 = vmatprep.subr.bf16.mxu0 0
      %2226 = vmatpush1.bf16.msra.mxu0 0
      %2227 = vmatprep.subr.bf16.mxu0 0
      %2228 = vmatpush1.bf16.msra.mxu0 0
      %2229 = vmatprep.subr.bf16.mxu0 0
      %2230 = vmatpush1.bf16.msra.mxu0 0
      %2231 = vmatprep.subr.bf16.mxu0 0
      %2232 = vmatpush1.bf16.msra.mxu0 0
      %2233 = vmatprep.subr.bf16.mxu0 0
      %2234 = vmatpush1.bf16.msra.mxu0 0
      %2235 = vmatprep.subr.bf16.mxu0 0
      %2236 = vmatpush1.bf16.msra.mxu0 0
      %2237 = vmatprep.subr.bf16.mxu0 0
      %2238 = vmatpush1.bf16.msra.mxu0 0
      %2239 = vmatprep.subr.bf16.mxu0 0
      %2240 = vmatpush1.bf16.msra.mxu0 0
      %2241 = vmatprep.subr.bf16.mxu0 0
      %2242 = vmatpush1.bf16.msra.mxu0 0
      %2243 = vmatprep.subr.bf16.mxu0 0
      %2244 = vmatpush1.bf16.msra.mxu0 0
      %2245 = vmatprep.subr.bf16.mxu0 0
      %2246 = vmatpush1.bf16.msra.mxu0 0
      %2247 = vmatprep.subr.bf16.mxu0 0
      %2248 = vmatpush1.bf16.msra.mxu0 0
      %2249 = vmatprep.subr.bf16.mxu0 0
      %2250 = vmatpush1.bf16.msra.mxu0 0
      %2251 = vmatprep.subr.bf16.mxu0 0
      %2252 = vmatpush1.bf16.msra.mxu0 0
      %2253 = vmatprep.mubr.bf16.mxu0 0
      %2254 = vmatmul.mubr.bf16.gmra.mrb[0].mxu0 %v1932
      %v2255 = vpop.f32.mrb[0].mxu0
      %v2256 = vadd.f32 0.0, %v2255
      %v2257 = vpop.f32.mrb[0].mxu0
      %v2258 = vadd.f32 0.0, %v2257
      %v2259 = vpop.f32.mrb[0].mxu0
      %v2260 = vpop.f32.mrb[0].mxu0
      %2261 = vdwg.mxu0
      %2262 = vmatprep.subr.bf16.mxu0 %v1371
      %2263 = vmatpush1.bf16.msra.mxu0 %v1370
      %2264 = vmatprep.subr.bf16.mxu0 %v1515
      %2265 = vmatpush1.bf16.msra.mxu0 %v1514
      %2266 = vmatprep.subr.bf16.mxu0 0
      %2267 = vmatpush1.bf16.msra.mxu0 0
      %2268 = vmatprep.subr.bf16.mxu0 0
      %2269 = vmatpush1.bf16.msra.mxu0 0
      %2270 = vmatprep.subr.bf16.mxu0 0
      %2271 = vmatpush1.bf16.msra.mxu0 0
      %2272 = vmatprep.subr.bf16.mxu0 0
      %2273 = vmatpush1.bf16.msra.mxu0 0
      %2274 = vmatprep.subr.bf16.mxu0 0
      %2275 = vmatpush1.bf16.msra.mxu0 0
      %2276 = vmatprep.subr.bf16.mxu0 0
      %2277 = vmatpush1.bf16.msra.mxu0 0
      %2278 = vmatprep.subr.bf16.mxu0 0
      %2279 = vmatpush1.bf16.msra.mxu0 0
      %2280 = vmatprep.subr.bf16.mxu0 0
      %2281 = vmatpush1.bf16.msra.mxu0 0
      %2282 = vmatprep.subr.bf16.mxu0 0
      %2283 = vmatpush1.bf16.msra.mxu0 0
      %2284 = vmatprep.subr.bf16.mxu0 0
      %2285 = vmatpush1.bf16.msra.mxu0 0
      %2286 = vmatprep.subr.bf16.mxu0 0
      %2287 = vmatpush1.bf16.msra.mxu0 0
      %2288 = vmatprep.subr.bf16.mxu0 0
      %2289 = vmatpush1.bf16.msra.mxu0 0
      %2290 = vmatprep.subr.bf16.mxu0 0
      %2291 = vmatpush1.bf16.msra.mxu0 0
      %2292 = vmatprep.subr.bf16.mxu0 0
      %2293 = vmatpush1.bf16.msra.mxu0 0
      %2294 = vmatprep.mubr.bf16.mxu0 0
      %2295 = vmatmul.mubr.bf16.gmra.mrb[0].mxu0 %v1932
      %v2296 = vpop.f32.mrb[0].mxu0
      %v2297 = vadd.f32 0.0, %v2296
      %v2298 = vpop.f32.mrb[0].mxu0
      %v2299 = vadd.f32 0.0, %v2298
      %v2300 = vpop.f32.mrb[0].mxu0
      %v2301 = vpop.f32.mrb[0].mxu0
      %2302 = vdwg.mxu0
      %2303 = vmatprep.subr.bf16.mxu0 %v1373
      %2304 = vmatpush1.bf16.msra.mxu0 %v1372
      %2305 = vmatprep.subr.bf16.mxu0 %v1517
      %2306 = vmatpush1.bf16.msra.mxu0 %v1516
      %2307 = vmatprep.subr.bf16.mxu0 0
      %2308 = vmatpush1.bf16.msra.mxu0 0
      %2309 = vmatprep.subr.bf16.mxu0 0
      %2310 = vmatpush1.bf16.msra.mxu0 0
      %2311 = vmatprep.subr.bf16.mxu0 0
      %2312 = vmatpush1.bf16.msra.mxu0 0
      %2313 = vmatprep.subr.bf16.mxu0 0
      %2314 = vmatpush1.bf16.msra.mxu0 0
      %2315 = vmatprep.subr.bf16.mxu0 0
      %2316 = vmatpush1.bf16.msra.mxu0 0
      %2317 = vmatprep.subr.bf16.mxu0 0
      %2318 = vmatpush1.bf16.msra.mxu0 0
      %2319 = vmatprep.subr.bf16.mxu0 0
      %2320 = vmatpush1.bf16.msra.mxu0 0
      %2321 = vmatprep.subr.bf16.mxu0 0
      %2322 = vmatpush1.bf16.msra.mxu0 0
      %2323 = vmatprep.subr.bf16.mxu0 0
      %2324 = vmatpush1.bf16.msra.mxu0 0
      %2325 = vmatprep.subr.bf16.mxu0 0
      %2326 = vmatpush1.bf16.msra.mxu0 0
      %2327 = vmatprep.subr.bf16.mxu0 0
      %2328 = vmatpush1.bf16.msra.mxu0 0
      %2329 = vmatprep.subr.bf16.mxu0 0
      %2330 = vmatpush1.bf16.msra.mxu0 0
      %2331 = vmatprep.subr.bf16.mxu0 0
      %2332 = vmatpush1.bf16.msra.mxu0 0
      %2333 = vmatprep.subr.bf16.mxu0 0
      %2334 = vmatpush1.bf16.msra.mxu0 0
      %2335 = vmatprep.mubr.bf16.mxu0 0
      %2336 = vmatmul.mubr.bf16.gmra.mrb[0].mxu0 %v1932
      %v2337 = vpop.f32.mrb[0].mxu0
      %v2338 = vadd.f32 0.0, %v2337
      %v2339 = vpop.f32.mrb[0].mxu0
      %v2340 = vadd.f32 0.0, %v2339
      %v2341 = vpop.f32.mrb[0].mxu0
      %v2342 = vpop.f32.mrb[0].mxu0
      %2343 = vdwg.mxu0
      %2344 = vmatprep.subr.bf16.mxu0 %v1375
      %2345 = vmatpush1.bf16.msra.mxu0 %v1374
      %2346 = vmatprep.subr.bf16.mxu0 %v1519
      %2347 = vmatpush1.bf16.msra.mxu0 %v1518
      %2348 = vmatprep.subr.bf16.mxu0 0
      %2349 = vmatpush1.bf16.msra.mxu0 0
      %2350 = vmatprep.subr.bf16.mxu0 0
      %2351 = vmatpush1.bf16.msra.mxu0 0
      %2352 = vmatprep.subr.bf16.mxu0 0
      %2353 = vmatpush1.bf16.msra.mxu0 0
      %2354 = vmatprep.subr.bf16.mxu0 0
      %2355 = vmatpush1.bf16.msra.mxu0 0
      %2356 = vmatprep.subr.bf16.mxu0 0
      %2357 = vmatpush1.bf16.msra.mxu0 0
      %2358 = vmatprep.subr.bf16.mxu0 0
      %2359 = vmatpush1.bf16.msra.mxu0 0
      %2360 = vmatprep.subr.bf16.mxu0 0
      %2361 = vmatpush1.bf16.msra.mxu0 0
      %2362 = vmatprep.subr.bf16.mxu0 0
      %2363 = vmatpush1.bf16.msra.mxu0 0
      %2364 = vmatprep.subr.bf16.mxu0 0
      %2365 = vmatpush1.bf16.msra.mxu0 0
      %2366 = vmatprep.subr.bf16.mxu0 0
      %2367 = vmatpush1.bf16.msra.mxu0 0
      %2368 = vmatprep.subr.bf16.mxu0 0
      %2369 = vmatpush1.bf16.msra.mxu0 0
      %2370 = vmatprep.subr.bf16.mxu0 0
      %2371 = vmatpush1.bf16.msra.mxu0 0
      %2372 = vmatprep.subr.bf16.mxu0 0
      %2373 = vmatpush1.bf16.msra.mxu0 0
      %2374 = vmatprep.subr.bf16.mxu0 0
      %2375 = vmatpush1.bf16.msra.mxu0 0
      %2376 = vmatprep.mubr.bf16.mxu0 0
      %2377 = vmatmul.mubr.bf16.gmra.mrb[0].mxu0 %v1932
      %v2378 = vpop.f32.mrb[0].mxu0
      %v2379 = vadd.f32 0.0, %v2378
      %v2380 = vpop.f32.mrb[0].mxu0
      %v2381 = vadd.f32 0.0, %v2380
      %v2382 = vpop.f32.mrb[0].mxu0
      %v2383 = vpop.f32.mrb[0].mxu0
      %2384 = vdwg.mxu0
      %2385 = vmatprep.subr.bf16.mxu0 %v1377
      %2386 = vmatpush1.bf16.msra.mxu0 %v1376
      %2387 = vmatprep.subr.bf16.mxu0 %v1521
      %2388 = vmatpush1.bf16.msra.mxu0 %v1520
      %2389 = vmatprep.subr.bf16.mxu0 0
      %2390 = vmatpush1.bf16.msra.mxu0 0
      %2391 = vmatprep.subr.bf16.mxu0 0
      %2392 = vmatpush1.bf16.msra.mxu0 0
      %2393 = vmatprep.subr.bf16.mxu0 0
      %2394 = vmatpush1.bf16.msra.mxu0 0
      %2395 = vmatprep.subr.bf16.mxu0 0
      %2396 = vmatpush1.bf16.msra.mxu0 0
      %2397 = vmatprep.subr.bf16.mxu0 0
      %2398 = vmatpush1.bf16.msra.mxu0 0
      %2399 = vmatprep.subr.bf16.mxu0 0
      %2400 = vmatpush1.bf16.msra.mxu0 0
      %2401 = vmatprep.subr.bf16.mxu0 0
      %2402 = vmatpush1.bf16.msra.mxu0 0
      %2403 = vmatprep.subr.bf16.mxu0 0
      %2404 = vmatpush1.bf16.msra.mxu0 0
      %2405 = vmatprep.subr.bf16.mxu0 0
      %2406 = vmatpush1.bf16.msra.mxu0 0
      %2407 = vmatprep.subr.bf16.mxu0 0
      %2408 = vmatpush1.bf16.msra.mxu0 0
      %2409 = vmatprep.subr.bf16.mxu0 0
      %2410 = vmatpush1.bf16.msra.mxu0 0
      %2411 = vmatprep.subr.bf16.mxu0 0
      %2412 = vmatpush1.bf16.msra.mxu0 0
      %2413 = vmatprep.subr.bf16.mxu0 0
      %2414 = vmatpush1.bf16.msra.mxu0 0
      %2415 = vmatprep.subr.bf16.mxu0 0
      %2416 = vmatpush1.bf16.msra.mxu0 0
      %2417 = vmatprep.mubr.bf16.mxu0 0
      %2418 = vmatmul.mubr.bf16.gmra.mrb[0].mxu0 %v1932
      %v2419 = vpop.f32.mrb[0].mxu0
      %v2420 = vadd.f32 0.0, %v2419
      %v2421 = vpop.f32.mrb[0].mxu0
      %v2422 = vadd.f32 0.0, %v2421
      %v2423 = vpop.f32.mrb[0].mxu0
      %v2424 = vpop.f32.mrb[0].mxu0
      %2425 = vdwg.mxu0
      %2426 = vmatprep.subr.bf16.mxu0 %v1379
      %2427 = vmatpush1.bf16.msra.mxu0 %v1378
      %2428 = vmatprep.subr.bf16.mxu0 %v1523
      %2429 = vmatpush1.bf16.msra.mxu0 %v1522
      %2430 = vmatprep.subr.bf16.mxu0 0
      %2431 = vmatpush1.bf16.msra.mxu0 0
      %2432 = vmatprep.subr.bf16.mxu0 0
      %2433 = vmatpush1.bf16.msra.mxu0 0
      %2434 = vmatprep.subr.bf16.mxu0 0
      %2435 = vmatpush1.bf16.msra.mxu0 0
      %2436 = vmatprep.subr.bf16.mxu0 0
      %2437 = vmatpush1.bf16.msra.mxu0 0
      %2438 = vmatprep.subr.bf16.mxu0 0
      %2439 = vmatpush1.bf16.msra.mxu0 0
      %2440 = vmatprep.subr.bf16.mxu0 0
      %2441 = vmatpush1.bf16.msra.mxu0 0
      %2442 = vmatprep.subr.bf16.mxu0 0
      %2443 = vmatpush1.bf16.msra.mxu0 0
      %2444 = vmatprep.subr.bf16.mxu0 0
      %2445 = vmatpush1.bf16.msra.mxu0 0
      %2446 = vmatprep.subr.bf16.mxu0 0
      %2447 = vmatpush1.bf16.msra.mxu0 0
      %2448 = vmatprep.subr.bf16.mxu0 0
      %2449 = vmatpush1.bf16.msra.mxu0 0
      %2450 = vmatprep.subr.bf16.mxu0 0
      %2451 = vmatpush1.bf16.msra.mxu0 0
      %2452 = vmatprep.subr.bf16.mxu0 0
      %2453 = vmatpush1.bf16.msra.mxu0 0
      %2454 = vmatprep.subr.bf16.mxu0 0
      %2455 = vmatpush1.bf16.msra.mxu0 0
      %2456 = vmatprep.subr.bf16.mxu0 0
      %2457 = vmatpush1.bf16.msra.mxu0 0
      %2458 = vmatprep.mubr.bf16.mxu0 0
      %2459 = vmatmul.mubr.bf16.gmra.mrb[0].mxu0 %v1932
      %v2460 = vpop.f32.mrb[0].mxu0
      %v2461 = vadd.f32 0.0, %v2460
      %v2462 = vpop.f32.mrb[0].mxu0
      %v2463 = vadd.f32 0.0, %v2462
      %v2464 = vpop.f32.mrb[0].mxu0
      %v2465 = vpop.f32.mrb[0].mxu0
      %2466 = vdwg.mxu0
      %2467 = vmatprep.subr.bf16.mxu0 %v1381
      %2468 = vmatpush1.bf16.msra.mxu0 %v1380
      %2469 = vmatprep.subr.bf16.mxu0 %v1525
      %2470 = vmatpush1.bf16.msra.mxu0 %v1524
      %2471 = vmatprep.subr.bf16.mxu0 0
      %2472 = vmatpush1.bf16.msra.mxu0 0
      %2473 = vmatprep.subr.bf16.mxu0 0
      %2474 = vmatpush1.bf16.msra.mxu0 0
      %2475 = vmatprep.subr.bf16.mxu0 0
      %2476 = vmatpush1.bf16.msra.mxu0 0
      %2477 = vmatprep.subr.bf16.mxu0 0
      %2478 = vmatpush1.bf16.msra.mxu0 0
      %2479 = vmatprep.subr.bf16.mxu0 0
      %2480 = vmatpush1.bf16.msra.mxu0 0
      %2481 = vmatprep.subr.bf16.mxu0 0
      %2482 = vmatpush1.bf16.msra.mxu0 0
      %2483 = vmatprep.subr.bf16.mxu0 0
      %2484 = vmatpush1.bf16.msra.mxu0 0
      %2485 = vmatprep.subr.bf16.mxu0 0
      %2486 = vmatpush1.bf16.msra.mxu0 0
      %2487 = vmatprep.subr.bf16.mxu0 0
      %2488 = vmatpush1.bf16.msra.mxu0 0
      %2489 = vmatprep.subr.bf16.mxu0 0
      %2490 = vmatpush1.bf16.msra.mxu0 0
      %2491 = vmatprep.subr.bf16.mxu0 0
      %2492 = vmatpush1.bf16.msra.mxu0 0
      %2493 = vmatprep.subr.bf16.mxu0 0
      %2494 = vmatpush1.bf16.msra.mxu0 0
      %2495 = vmatprep.subr.bf16.mxu0 0
      %2496 = vmatpush1.bf16.msra.mxu0 0
      %2497 = vmatprep.subr.bf16.mxu0 0
      %2498 = vmatpush1.bf16.msra.mxu0 0
      %2499 = vmatprep.mubr.bf16.mxu0 0
      %2500 = vmatmul.mubr.bf16.gmra.mrb[0].mxu0 %v1932
      %v2501 = vpop.f32.mrb[0].mxu0
      %v2502 = vadd.f32 0.0, %v2501
      %v2503 = vpop.f32.mrb[0].mxu0
      %v2504 = vadd.f32 0.0, %v2503
      %v2505 = vpop.f32.mrb[0].mxu0
      %v2506 = vpop.f32.mrb[0].mxu0
      %2507 = vdwg.mxu0
      %2508 = vmatprep.subr.bf16.mxu0 %v1383
      %2509 = vmatpush1.bf16.msra.mxu0 %v1382
      %2510 = vmatprep.subr.bf16.mxu0 %v1527
      %2511 = vmatpush1.bf16.msra.mxu0 %v1526
      %2512 = vmatprep.subr.bf16.mxu0 0
      %2513 = vmatpush1.bf16.msra.mxu0 0
      %2514 = vmatprep.subr.bf16.mxu0 0
      %2515 = vmatpush1.bf16.msra.mxu0 0
      %2516 = vmatprep.subr.bf16.mxu0 0
      %2517 = vmatpush1.bf16.msra.mxu0 0
      %2518 = vmatprep.subr.bf16.mxu0 0
      %2519 = vmatpush1.bf16.msra.mxu0 0
      %2520 = vmatprep.subr.bf16.mxu0 0
      %2521 = vmatpush1.bf16.msra.mxu0 0
      %2522 = vmatprep.subr.bf16.mxu0 0
      %2523 = vmatpush1.bf16.msra.mxu0 0
      %2524 = vmatprep.subr.bf16.mxu0 0
      %2525 = vmatpush1.bf16.msra.mxu0 0
      %2526 = vmatprep.subr.bf16.mxu0 0
      %2527 = vmatpush1.bf16.msra.mxu0 0
      %2528 = vmatprep.subr.bf16.mxu0 0
      %2529 = vmatpush1.bf16.msra.mxu0 0
      %2530 = vmatprep.subr.bf16.mxu0 0
      %2531 = vmatpush1.bf16.msra.mxu0 0
      %2532 = vmatprep.subr.bf16.mxu0 0
      %2533 = vmatpush1.bf16.msra.mxu0 0
      %2534 = vmatprep.subr.bf16.mxu0 0
      %2535 = vmatpush1.bf16.msra.mxu0 0
      %2536 = vmatprep.subr.bf16.mxu0 0
      %2537 = vmatpush1.bf16.msra.mxu0 0
      %2538 = vmatprep.subr.bf16.mxu0 0
      %2539 = vmatpush1.bf16.msra.mxu0 0
      %2540 = vmatprep.mubr.bf16.mxu0 0
      %2541 = vmatmul.mubr.bf16.gmra.mrb[0].mxu0 %v1932
      %v2542 = vpop.f32.mrb[0].mxu0
      %v2543 = vadd.f32 0.0, %v2542
      %v2544 = vpop.f32.mrb[0].mxu0
      %v2545 = vadd.f32 0.0, %v2544
      %v2546 = vpop.f32.mrb[0].mxu0
      %v2547 = vpop.f32.mrb[0].mxu0
      %2548 = vdwg.mxu0
      %2549 = vmatprep.subr.bf16.mxu0 %v1385
      %2550 = vmatpush1.bf16.msra.mxu0 %v1384
      %2551 = vmatprep.subr.bf16.mxu0 %v1529
      %2552 = vmatpush1.bf16.msra.mxu0 %v1528
      %2553 = vmatprep.subr.bf16.mxu0 0
      %2554 = vmatpush1.bf16.msra.mxu0 0
      %2555 = vmatprep.subr.bf16.mxu0 0
      %2556 = vmatpush1.bf16.msra.mxu0 0
      %2557 = vmatprep.subr.bf16.mxu0 0
      %2558 = vmatpush1.bf16.msra.mxu0 0
      %2559 = vmatprep.subr.bf16.mxu0 0
      %2560 = vmatpush1.bf16.msra.mxu0 0
      %2561 = vmatprep.subr.bf16.mxu0 0
      %2562 = vmatpush1.bf16.msra.mxu0 0
      %2563 = vmatprep.subr.bf16.mxu0 0
      %2564 = vmatpush1.bf16.msra.mxu0 0
      %2565 = vmatprep.subr.bf16.mxu0 0
      %2566 = vmatpush1.bf16.msra.mxu0 0
      %2567 = vmatprep.subr.bf16.mxu0 0
      %2568 = vmatpush1.bf16.msra.mxu0 0
      %2569 = vmatprep.subr.bf16.mxu0 0
      %2570 = vmatpush1.bf16.msra.mxu0 0
      %2571 = vmatprep.subr.bf16.mxu0 0
      %2572 = vmatpush1.bf16.msra.mxu0 0
      %2573 = vmatprep.subr.bf16.mxu0 0
      %2574 = vmatpush1.bf16.msra.mxu0 0
      %2575 = vmatprep.subr.bf16.mxu0 0
      %2576 = vmatpush1.bf16.msra.mxu0 0
      %2577 = vmatprep.subr.bf16.mxu0 0
      %2578 = vmatpush1.bf16.msra.mxu0 0
      %2579 = vmatprep.subr.bf16.mxu0 0
      %2580 = vmatpush1.bf16.msra.mxu0 0
      %2581 = vmatprep.mubr.bf16.mxu0 0
      %2582 = vmatmul.mubr.bf16.gmra.mrb[0].mxu0 %v1932
      %v2583 = vpop.f32.mrb[0].mxu0
      %v2584 = vadd.f32 0.0, %v2583
      %v2585 = vpop.f32.mrb[0].mxu0
      %v2586 = vadd.f32 0.0, %v2585
      %v2587 = vpop.f32.mrb[0].mxu0
      %v2588 = vpop.f32.mrb[0].mxu0
      %2589 = vdwg.mxu0
      %2590 = vmatprep.subr.bf16.mxu0 %v1387
      %2591 = vmatpush1.bf16.msra.mxu0 %v1386
      %2592 = vmatprep.subr.bf16.mxu0 %v1531
      %2593 = vmatpush1.bf16.msra.mxu0 %v1530
      %2594 = vmatprep.subr.bf16.mxu0 0
      %2595 = vmatpush1.bf16.msra.mxu0 0
      %2596 = vmatprep.subr.bf16.mxu0 0
      %2597 = vmatpush1.bf16.msra.mxu0 0
      %2598 = vmatprep.subr.bf16.mxu0 0
      %2599 = vmatpush1.bf16.msra.mxu0 0
      %2600 = vmatprep.subr.bf16.mxu0 0
      %2601 = vmatpush1.bf16.msra.mxu0 0
      %2602 = vmatprep.subr.bf16.mxu0 0
      %2603 = vmatpush1.bf16.msra.mxu0 0
      %2604 = vmatprep.subr.bf16.mxu0 0
      %2605 = vmatpush1.bf16.msra.mxu0 0
      %2606 = vmatprep.subr.bf16.mxu0 0
      %2607 = vmatpush1.bf16.msra.mxu0 0
      %2608 = vmatprep.subr.bf16.mxu0 0
      %2609 = vmatpush1.bf16.msra.mxu0 0
      %2610 = vmatprep.subr.bf16.mxu0 0
      %2611 = vmatpush1.bf16.msra.mxu0 0
      %2612 = vmatprep.subr.bf16.mxu0 0
      %2613 = vmatpush1.bf16.msra.mxu0 0
      %2614 = vmatprep.subr.bf16.mxu0 0
      %2615 = vmatpush1.bf16.msra.mxu0 0
      %2616 = vmatprep.subr.bf16.mxu0 0
      %2617 = vmatpush1.bf16.msra.mxu0 0
      %2618 = vmatprep.subr.bf16.mxu0 0
      %2619 = vmatpush1.bf16.msra.mxu0 0
      %2620 = vmatprep.subr.bf16.mxu0 0
      %2621 = vmatpush1.bf16.msra.mxu0 0
      %2622 = vmatprep.mubr.bf16.mxu0 0
      %2623 = vmatmul.mubr.bf16.gmra.mrb[0].mxu0 %v1932
      %v2624 = vpop.f32.mrb[0].mxu0
      %v2625 = vadd.f32 0.0, %v2624
      %v2626 = vpop.f32.mrb[0].mxu0
      %v2627 = vadd.f32 0.0, %v2626
      %v2628 = vpop.f32.mrb[0].mxu0
      %v2629 = vpop.f32.mrb[0].mxu0
      %2630 = vdwg.mxu0
      %2631 = vmatprep.subr.bf16.mxu0 %v1389
      %2632 = vmatpush1.bf16.msra.mxu0 %v1388
      %2633 = vmatprep.subr.bf16.mxu0 %v1533
      %2634 = vmatpush1.bf16.msra.mxu0 %v1532
      %2635 = vmatprep.subr.bf16.mxu0 0
      %2636 = vmatpush1.bf16.msra.mxu0 0
      %2637 = vmatprep.subr.bf16.mxu0 0
      %2638 = vmatpush1.bf16.msra.mxu0 0
      %2639 = vmatprep.subr.bf16.mxu0 0
      %2640 = vmatpush1.bf16.msra.mxu0 0
      %2641 = vmatprep.subr.bf16.mxu0 0
      %2642 = vmatpush1.bf16.msra.mxu0 0
      %2643 = vmatprep.subr.bf16.mxu0 0
      %2644 = vmatpush1.bf16.msra.mxu0 0
      %2645 = vmatprep.subr.bf16.mxu0 0
      %2646 = vmatpush1.bf16.msra.mxu0 0
      %2647 = vmatprep.subr.bf16.mxu0 0
      %2648 = vmatpush1.bf16.msra.mxu0 0
      %2649 = vmatprep.subr.bf16.mxu0 0
      %2650 = vmatpush1.bf16.msra.mxu0 0
      %2651 = vmatprep.subr.bf16.mxu0 0
      %2652 = vmatpush1.bf16.msra.mxu0 0
      %2653 = vmatprep.subr.bf16.mxu0 0
      %2654 = vmatpush1.bf16.msra.mxu0 0
      %2655 = vmatprep.subr.bf16.mxu0 0
      %2656 = vmatpush1.bf16.msra.mxu0 0
      %2657 = vmatprep.subr.bf16.mxu0 0
      %2658 = vmatpush1.bf16.msra.mxu0 0
      %2659 = vmatprep.subr.bf16.mxu0 0
      %2660 = vmatpush1.bf16.msra.mxu0 0
      %2661 = vmatprep.subr.bf16.mxu0 0
      %2662 = vmatpush1.bf16.msra.mxu0 0
      %2663 = vmatprep.mubr.bf16.mxu0 0
      %2664 = vmatmul.mubr.bf16.gmra.mrb[0].mxu0 %v1932
      %v2665 = vpop.f32.mrb[0].mxu0
      %v2666 = vadd.f32 0.0, %v2665
      %v2667 = vpop.f32.mrb[0].mxu0
      %v2668 = vadd.f32 0.0, %v2667
      %v2669 = vpop.f32.mrb[0].mxu0
      %v2670 = vpop.f32.mrb[0].mxu0
      %2671 = vdwg.mxu0
      %2672 = vmatprep.subr.bf16.mxu0 %v1391
      %2673 = vmatpush1.bf16.msra.mxu0 %v1390
      %2674 = vmatprep.subr.bf16.mxu0 %v1535
      %2675 = vmatpush1.bf16.msra.mxu0 %v1534
      %2676 = vmatprep.subr.bf16.mxu0 0
      %2677 = vmatpush1.bf16.msra.mxu0 0
      %2678 = vmatprep.subr.bf16.mxu0 0
      %2679 = vmatpush1.bf16.msra.mxu0 0
      %2680 = vmatprep.subr.bf16.mxu0 0
      %2681 = vmatpush1.bf16.msra.mxu0 0
      %2682 = vmatprep.subr.bf16.mxu0 0
      %2683 = vmatpush1.bf16.msra.mxu0 0
      %2684 = vmatprep.subr.bf16.mxu0 0
      %2685 = vmatpush1.bf16.msra.mxu0 0
      %2686 = vmatprep.subr.bf16.mxu0 0
      %2687 = vmatpush1.bf16.msra.mxu0 0
      %2688 = vmatprep.subr.bf16.mxu0 0
      %2689 = vmatpush1.bf16.msra.mxu0 0
      %2690 = vmatprep.subr.bf16.mxu0 0
      %2691 = vmatpush1.bf16.msra.mxu0 0
      %2692 = vmatprep.subr.bf16.mxu0 0
      %2693 = vmatpush1.bf16.msra.mxu0 0
      %2694 = vmatprep.subr.bf16.mxu0 0
      %2695 = vmatpush1.bf16.msra.mxu0 0
      %2696 = vmatprep.subr.bf16.mxu0 0
      %2697 = vmatpush1.bf16.msra.mxu0 0
      %2698 = vmatprep.subr.bf16.mxu0 0
      %2699 = vmatpush1.bf16.msra.mxu0 0
      %2700 = vmatprep.subr.bf16.mxu0 0
      %2701 = vmatpush1.bf16.msra.mxu0 0
      %2702 = vmatprep.subr.bf16.mxu0 0
      %2703 = vmatpush1.bf16.msra.mxu0 0
      %2704 = vmatprep.mubr.bf16.mxu0 0
      %2705 = vmatmul.mubr.bf16.gmra.mrb[0].mxu0 %v1932
      %v2706 = vpop.f32.mrb[0].mxu0
      %v2707 = vadd.f32 0.0, %v2706
      %v2708 = vpop.f32.mrb[0].mxu0
      %v2709 = vadd.f32 0.0, %v2708
      %v2710 = vpop.f32.mrb[0].mxu0
      %v2711 = vpop.f32.mrb[0].mxu0
      %2712 = vdwg.mxu0
      %2713 = vmatprep.subr.bf16.mxu0 %v1393
      %2714 = vmatpush1.bf16.msra.mxu0 %v1392
      %2715 = vmatprep.subr.bf16.mxu0 %v1537
      %2716 = vmatpush1.bf16.msra.mxu0 %v1536
      %2717 = vmatprep.subr.bf16.mxu0 0
      %2718 = vmatpush1.bf16.msra.mxu0 0
      %2719 = vmatprep.subr.bf16.mxu0 0
      %2720 = vmatpush1.bf16.msra.mxu0 0
      %2721 = vmatprep.subr.bf16.mxu0 0
      %2722 = vmatpush1.bf16.msra.mxu0 0
      %2723 = vmatprep.subr.bf16.mxu0 0
      %2724 = vmatpush1.bf16.msra.mxu0 0
      %2725 = vmatprep.subr.bf16.mxu0 0
      %2726 = vmatpush1.bf16.msra.mxu0 0
      %2727 = vmatprep.subr.bf16.mxu0 0
      %2728 = vmatpush1.bf16.msra.mxu0 0
      %2729 = vmatprep.subr.bf16.mxu0 0
      %2730 = vmatpush1.bf16.msra.mxu0 0
      %2731 = vmatprep.subr.bf16.mxu0 0
      %2732 = vmatpush1.bf16.msra.mxu0 0
      %2733 = vmatprep.subr.bf16.mxu0 0
      %2734 = vmatpush1.bf16.msra.mxu0 0
      %2735 = vmatprep.subr.bf16.mxu0 0
      %2736 = vmatpush1.bf16.msra.mxu0 0
      %2737 = vmatprep.subr.bf16.mxu0 0
      %2738 = vmatpush1.bf16.msra.mxu0 0
      %2739 = vmatprep.subr.bf16.mxu0 0
      %2740 = vmatpush1.bf16.msra.mxu0 0
      %2741 = vmatprep.subr.bf16.mxu0 0
      %2742 = vmatpush1.bf16.msra.mxu0 0
      %2743 = vmatprep.subr.bf16.mxu0 0
      %2744 = vmatpush1.bf16.msra.mxu0 0
      %2745 = vmatprep.mubr.bf16.mxu0 0
      %2746 = vmatmul.mubr.bf16.gmra.mrb[0].mxu0 %v1932
      %v2747 = vpop.f32.mrb[0].mxu0
      %v2748 = vadd.f32 0.0, %v2747
      %v2749 = vpop.f32.mrb[0].mxu0
      %v2750 = vadd.f32 0.0, %v2749
      %v2751 = vpop.f32.mrb[0].mxu0
      %v2752 = vpop.f32.mrb[0].mxu0
      %2753 = vdwg.mxu0
      %2754 = vmatprep.subr.bf16.mxu0 %v1395
      %2755 = vmatpush1.bf16.msra.mxu0 %v1394
      %2756 = vmatprep.subr.bf16.mxu0 %v1539
      %2757 = vmatpush1.bf16.msra.mxu0 %v1538
      %2758 = vmatprep.subr.bf16.mxu0 0
      %2759 = vmatpush1.bf16.msra.mxu0 0
      %2760 = vmatprep.subr.bf16.mxu0 0
      %2761 = vmatpush1.bf16.msra.mxu0 0
      %2762 = vmatprep.subr.bf16.mxu0 0
      %2763 = vmatpush1.bf16.msra.mxu0 0
      %2764 = vmatprep.subr.bf16.mxu0 0
      %2765 = vmatpush1.bf16.msra.mxu0 0
      %2766 = vmatprep.subr.bf16.mxu0 0
      %2767 = vmatpush1.bf16.msra.mxu0 0
      %2768 = vmatprep.subr.bf16.mxu0 0
      %2769 = vmatpush1.bf16.msra.mxu0 0
      %2770 = vmatprep.subr.bf16.mxu0 0
      %2771 = vmatpush1.bf16.msra.mxu0 0
      %2772 = vmatprep.subr.bf16.mxu0 0
      %2773 = vmatpush1.bf16.msra.mxu0 0
      %2774 = vmatprep.subr.bf16.mxu0 0
      %2775 = vmatpush1.bf16.msra.mxu0 0
      %2776 = vmatprep.subr.bf16.mxu0 0
      %2777 = vmatpush1.bf16.msra.mxu0 0
      %2778 = vmatprep.subr.bf16.mxu0 0
      %2779 = vmatpush1.bf16.msra.mxu0 0
      %2780 = vmatprep.subr.bf16.mxu0 0
      %2781 = vmatpush1.bf16.msra.mxu0 0
      %2782 = vmatprep.subr.bf16.mxu0 0
      %2783 = vmatpush1.bf16.msra.mxu0 0
      %2784 = vmatprep.subr.bf16.mxu0 0
      %2785 = vmatpush1.bf16.msra.mxu0 0
      %2786 = vmatprep.mubr.bf16.mxu0 0
      %2787 = vmatmul.mubr.bf16.gmra.mrb[0].mxu0 %v1932
      %v2788 = vpop.f32.mrb[0].mxu0
      %v2789 = vadd.f32 0.0, %v2788
      %v2790 = vpop.f32.mrb[0].mxu0
      %v2791 = vadd.f32 0.0, %v2790
      %v2792 = vpop.f32.mrb[0].mxu0
      %v2793 = vpop.f32.mrb[0].mxu0
      %2794 = vdwg.mxu0
      %2795 = vmatprep.subr.bf16.mxu0 %v1397
      %2796 = vmatpush1.bf16.msra.mxu0 %v1396
      %2797 = vmatprep.subr.bf16.mxu0 %v1541
      %2798 = vmatpush1.bf16.msra.mxu0 %v1540
      %2799 = vmatprep.subr.bf16.mxu0 0
      %2800 = vmatpush1.bf16.msra.mxu0 0
      %2801 = vmatprep.subr.bf16.mxu0 0
      %2802 = vmatpush1.bf16.msra.mxu0 0
      %2803 = vmatprep.subr.bf16.mxu0 0
      %2804 = vmatpush1.bf16.msra.mxu0 0
      %2805 = vmatprep.subr.bf16.mxu0 0
      %2806 = vmatpush1.bf16.msra.mxu0 0
      %2807 = vmatprep.subr.bf16.mxu0 0
      %2808 = vmatpush1.bf16.msra.mxu0 0
      %2809 = vmatprep.subr.bf16.mxu0 0
      %2810 = vmatpush1.bf16.msra.mxu0 0
      %2811 = vmatprep.subr.bf16.mxu0 0
      %2812 = vmatpush1.bf16.msra.mxu0 0
      %2813 = vmatprep.subr.bf16.mxu0 0
      %2814 = vmatpush1.bf16.msra.mxu0 0
      %2815 = vmatprep.subr.bf16.mxu0 0
      %2816 = vmatpush1.bf16.msra.mxu0 0
      %2817 = vmatprep.subr.bf16.mxu0 0
      %2818 = vmatpush1.bf16.msra.mxu0 0
      %2819 = vmatprep.subr.bf16.mxu0 0
      %2820 = vmatpush1.bf16.msra.mxu0 0
      %2821 = vmatprep.subr.bf16.mxu0 0
      %2822 = vmatpush1.bf16.msra.mxu0 0
      %2823 = vmatprep.subr.bf16.mxu0 0
      %2824 = vmatpush1.bf16.msra.mxu0 0
      %2825 = vmatprep.subr.bf16.mxu0 0
      %2826 = vmatpush1.bf16.msra.mxu0 0
      %2827 = vmatprep.mubr.bf16.mxu0 0
      %2828 = vmatmul.mubr.bf16.gmra.mrb[0].mxu0 %v1932
      %v2829 = vpop.f32.mrb[0].mxu0
      %v2830 = vadd.f32 0.0, %v2829
      %v2831 = vpop.f32.mrb[0].mxu0
      %v2832 = vadd.f32 0.0, %v2831
      %v2833 = vpop.f32.mrb[0].mxu0
      %v2834 = vpop.f32.mrb[0].mxu0
      %2835 = vdwg.mxu0
      %2836 = vmatprep.subr.bf16.mxu0 %v1399
      %2837 = vmatpush1.bf16.msra.mxu0 %v1398
      %2838 = vmatprep.subr.bf16.mxu0 %v1543
      %2839 = vmatpush1.bf16.msra.mxu0 %v1542
      %2840 = vmatprep.subr.bf16.mxu0 0
      %2841 = vmatpush1.bf16.msra.mxu0 0
      %2842 = vmatprep.subr.bf16.mxu0 0
      %2843 = vmatpush1.bf16.msra.mxu0 0
      %2844 = vmatprep.subr.bf16.mxu0 0
      %2845 = vmatpush1.bf16.msra.mxu0 0
      %2846 = vmatprep.subr.bf16.mxu0 0
      %2847 = vmatpush1.bf16.msra.mxu0 0
      %2848 = vmatprep.subr.bf16.mxu0 0
      %2849 = vmatpush1.bf16.msra.mxu0 0
      %2850 = vmatprep.subr.bf16.mxu0 0
      %2851 = vmatpush1.bf16.msra.mxu0 0
      %2852 = vmatprep.subr.bf16.mxu0 0
      %2853 = vmatpush1.bf16.msra.mxu0 0
      %2854 = vmatprep.subr.bf16.mxu0 0
      %2855 = vmatpush1.bf16.msra.mxu0 0
      %2856 = vmatprep.subr.bf16.mxu0 0
      %2857 = vmatpush1.bf16.msra.mxu0 0
      %2858 = vmatprep.subr.bf16.mxu0 0
      %2859 = vmatpush1.bf16.msra.mxu0 0
      %2860 = vmatprep.subr.bf16.mxu0 0
      %2861 = vmatpush1.bf16.msra.mxu0 0
      %2862 = vmatprep.subr.bf16.mxu0 0
      %2863 = vmatpush1.bf16.msra.mxu0 0
      %2864 = vmatprep.subr.bf16.mxu0 0
      %2865 = vmatpush1.bf16.msra.mxu0 0
      %2866 = vmatprep.subr.bf16.mxu0 0
      %2867 = vmatpush1.bf16.msra.mxu0 0
      %2868 = vmatprep.mubr.bf16.mxu0 0
      %2869 = vmatmul.mubr.bf16.gmra.mrb[0].mxu0 %v1932
      %v2870 = vpop.f32.mrb[0].mxu0
      %v2871 = vadd.f32 0.0, %v2870
      %v2872 = vpop.f32.mrb[0].mxu0
      %v2873 = vadd.f32 0.0, %v2872
      %v2874 = vpop.f32.mrb[0].mxu0
      %v2875 = vpop.f32.mrb[0].mxu0
      %2876 = vdwg.mxu0
      %2877 = vmatprep.subr.bf16.mxu0 %v1401
      %2878 = vmatpush1.bf16.msra.mxu0 %v1400
      %2879 = vmatprep.subr.bf16.mxu0 %v1545
      %2880 = vmatpush1.bf16.msra.mxu0 %v1544
      %2881 = vmatprep.subr.bf16.mxu0 0
      %2882 = vmatpush1.bf16.msra.mxu0 0
      %2883 = vmatprep.subr.bf16.mxu0 0
      %2884 = vmatpush1.bf16.msra.mxu0 0
      %2885 = vmatprep.subr.bf16.mxu0 0
      %2886 = vmatpush1.bf16.msra.mxu0 0
      %2887 = vmatprep.subr.bf16.mxu0 0
      %2888 = vmatpush1.bf16.msra.mxu0 0
      %2889 = vmatprep.subr.bf16.mxu0 0
      %2890 = vmatpush1.bf16.msra.mxu0 0
      %2891 = vmatprep.subr.bf16.mxu0 0
      %2892 = vmatpush1.bf16.msra.mxu0 0
      %2893 = vmatprep.subr.bf16.mxu0 0
      %2894 = vmatpush1.bf16.msra.mxu0 0
      %2895 = vmatprep.subr.bf16.mxu0 0
      %2896 = vmatpush1.bf16.msra.mxu0 0
      %2897 = vmatprep.subr.bf16.mxu0 0
      %2898 = vmatpush1.bf16.msra.mxu0 0
      %2899 = vmatprep.subr.bf16.mxu0 0
      %2900 = vmatpush1.bf16.msra.mxu0 0
      %2901 = vmatprep.subr.bf16.mxu0 0
      %2902 = vmatpush1.bf16.msra.mxu0 0
      %2903 = vmatprep.subr.bf16.mxu0 0
      %2904 = vmatpush1.bf16.msra.mxu0 0
      %2905 = vmatprep.subr.bf16.mxu0 0
      %2906 = vmatpush1.bf16.msra.mxu0 0
      %2907 = vmatprep.subr.bf16.mxu0 0
      %2908 = vmatpush1.bf16.msra.mxu0 0
      %2909 = vmatprep.mubr.bf16.mxu0 0
      %2910 = vmatmul.mubr.bf16.gmra.mrb[0].mxu0 %v1932
      %v2911 = vpop.f32.mrb[0].mxu0
      %v2912 = vadd.f32 0.0, %v2911
      %v2913 = vpop.f32.mrb[0].mxu0
      %v2914 = vadd.f32 0.0, %v2913
      %v2915 = vpop.f32.mrb[0].mxu0
      %v2916 = vpop.f32.mrb[0].mxu0
      %2917 = vdwg.mxu0
      %2918 = vmatprep.subr.bf16.mxu0 %v1403
      %2919 = vmatpush1.bf16.msra.mxu0 %v1402
      %2920 = vmatprep.subr.bf16.mxu0 %v1547
      %2921 = vmatpush1.bf16.msra.mxu0 %v1546
      %2922 = vmatprep.subr.bf16.mxu0 0
      %2923 = vmatpush1.bf16.msra.mxu0 0
      %2924 = vmatprep.subr.bf16.mxu0 0
      %2925 = vmatpush1.bf16.msra.mxu0 0
      %2926 = vmatprep.subr.bf16.mxu0 0
      %2927 = vmatpush1.bf16.msra.mxu0 0
      %2928 = vmatprep.subr.bf16.mxu0 0
      %2929 = vmatpush1.bf16.msra.mxu0 0
      %2930 = vmatprep.subr.bf16.mxu0 0
      %2931 = vmatpush1.bf16.msra.mxu0 0
      %2932 = vmatprep.subr.bf16.mxu0 0
      %2933 = vmatpush1.bf16.msra.mxu0 0
      %2934 = vmatprep.subr.bf16.mxu0 0
      %2935 = vmatpush1.bf16.msra.mxu0 0
      %2936 = vmatprep.subr.bf16.mxu0 0
      %2937 = vmatpush1.bf16.msra.mxu0 0
      %2938 = vmatprep.subr.bf16.mxu0 0
      %2939 = vmatpush1.bf16.msra.mxu0 0
      %2940 = vmatprep.subr.bf16.mxu0 0
      %2941 = vmatpush1.bf16.msra.mxu0 0
      %2942 = vmatprep.subr.bf16.mxu0 0
      %2943 = vmatpush1.bf16.msra.mxu0 0
      %2944 = vmatprep.subr.bf16.mxu0 0
      %2945 = vmatpush1.bf16.msra.mxu0 0
      %2946 = vmatprep.subr.bf16.mxu0 0
      %2947 = vmatpush1.bf16.msra.mxu0 0
      %2948 = vmatprep.subr.bf16.mxu0 0
      %2949 = vmatpush1.bf16.msra.mxu0 0
      %2950 = vmatprep.mubr.bf16.mxu0 0
      %2951 = vmatmul.mubr.bf16.gmra.mrb[0].mxu0 %v1932
      %v2952 = vpop.f32.mrb[0].mxu0
      %v2953 = vadd.f32 0.0, %v2952
      %v2954 = vpop.f32.mrb[0].mxu0
      %v2955 = vadd.f32 0.0, %v2954
      %v2956 = vpop.f32.mrb[0].mxu0
      %v2957 = vpop.f32.mrb[0].mxu0
      %2958 = vdwg.mxu0
      %2959 = vmatprep.subr.bf16.mxu0 %v1405
      %2960 = vmatpush1.bf16.msra.mxu0 %v1404
      %2961 = vmatprep.subr.bf16.mxu0 %v1549
      %2962 = vmatpush1.bf16.msra.mxu0 %v1548
      %2963 = vmatprep.subr.bf16.mxu0 0
      %2964 = vmatpush1.bf16.msra.mxu0 0
      %2965 = vmatprep.subr.bf16.mxu0 0
      %2966 = vmatpush1.bf16.msra.mxu0 0
      %2967 = vmatprep.subr.bf16.mxu0 0
      %2968 = vmatpush1.bf16.msra.mxu0 0
      %2969 = vmatprep.subr.bf16.mxu0 0
      %2970 = vmatpush1.bf16.msra.mxu0 0
      %2971 = vmatprep.subr.bf16.mxu0 0
      %2972 = vmatpush1.bf16.msra.mxu0 0
      %2973 = vmatprep.subr.bf16.mxu0 0
      %2974 = vmatpush1.bf16.msra.mxu0 0
      %2975 = vmatprep.subr.bf16.mxu0 0
      %2976 = vmatpush1.bf16.msra.mxu0 0
      %2977 = vmatprep.subr.bf16.mxu0 0
      %2978 = vmatpush1.bf16.msra.mxu0 0
      %2979 = vmatprep.subr.bf16.mxu0 0
      %2980 = vmatpush1.bf16.msra.mxu0 0
      %2981 = vmatprep.subr.bf16.mxu0 0
      %2982 = vmatpush1.bf16.msra.mxu0 0
      %2983 = vmatprep.subr.bf16.mxu0 0
      %2984 = vmatpush1.bf16.msra.mxu0 0
      %2985 = vmatprep.subr.bf16.mxu0 0
      %2986 = vmatpush1.bf16.msra.mxu0 0
      %2987 = vmatprep.subr.bf16.mxu0 0
      %2988 = vmatpush1.bf16.msra.mxu0 0
      %2989 = vmatprep.subr.bf16.mxu0 0
      %2990 = vmatpush1.bf16.msra.mxu0 0
      %2991 = vmatprep.mubr.bf16.mxu0 0
      %2992 = vmatmul.mubr.bf16.gmra.mrb[0].mxu0 %v1932
      %v2993 = vpop.f32.mrb[0].mxu0
      %v2994 = vadd.f32 0.0, %v2993
      %v2995 = vpop.f32.mrb[0].mxu0
      %v2996 = vadd.f32 0.0, %v2995
      %v2997 = vpop.f32.mrb[0].mxu0
      %v2998 = vpop.f32.mrb[0].mxu0
      %2999 = vdwg.mxu0
      %3000 = vmatprep.subr.bf16.mxu0 %v1407
      %3001 = vmatpush1.bf16.msra.mxu0 %v1406
      %3002 = vmatprep.subr.bf16.mxu0 %v1551
      %3003 = vmatpush1.bf16.msra.mxu0 %v1550
      %3004 = vmatprep.subr.bf16.mxu0 0
      %3005 = vmatpush1.bf16.msra.mxu0 0
      %3006 = vmatprep.subr.bf16.mxu0 0
      %3007 = vmatpush1.bf16.msra.mxu0 0
      %3008 = vmatprep.subr.bf16.mxu0 0
      %3009 = vmatpush1.bf16.msra.mxu0 0
      %3010 = vmatprep.subr.bf16.mxu0 0
      %3011 = vmatpush1.bf16.msra.mxu0 0
      %3012 = vmatprep.subr.bf16.mxu0 0
      %3013 = vmatpush1.bf16.msra.mxu0 0
      %3014 = vmatprep.subr.bf16.mxu0 0
      %3015 = vmatpush1.bf16.msra.mxu0 0
      %3016 = vmatprep.subr.bf16.mxu0 0
      %3017 = vmatpush1.bf16.msra.mxu0 0
      %3018 = vmatprep.subr.bf16.mxu0 0
      %3019 = vmatpush1.bf16.msra.mxu0 0
      %3020 = vmatprep.subr.bf16.mxu0 0
      %3021 = vmatpush1.bf16.msra.mxu0 0
      %3022 = vmatprep.subr.bf16.mxu0 0
      %3023 = vmatpush1.bf16.msra.mxu0 0
      %3024 = vmatprep.subr.bf16.mxu0 0
      %3025 = vmatpush1.bf16.msra.mxu0 0
      %3026 = vmatprep.subr.bf16.mxu0 0
      %3027 = vmatpush1.bf16.msra.mxu0 0
      %3028 = vmatprep.subr.bf16.mxu0 0
      %3029 = vmatpush1.bf16.msra.mxu0 0
      %3030 = vmatprep.subr.bf16.mxu0 0
      %3031 = vmatpush1.bf16.msra.mxu0 0
      %3032 = vmatprep.mubr.bf16.mxu0 0
      %3033 = vmatmul.mubr.bf16.gmra.mrb[0].mxu0 %v1932
      %v3034 = vpop.f32.mrb[0].mxu0
      %v3035 = vadd.f32 0.0, %v3034
      %v3036 = vpop.f32.mrb[0].mxu0
      %v3037 = vadd.f32 0.0, %v3036
      %v3038 = vpop.f32.mrb[0].mxu0
      %v3039 = vpop.f32.mrb[0].mxu0
      %3040 = vdwg.mxu0
      %3041 = vmatprep.subr.bf16.mxu0 %v1409
      %3042 = vmatpush1.bf16.msra.mxu0 %v1408
      %3043 = vmatprep.subr.bf16.mxu0 %v1553
      %3044 = vmatpush1.bf16.msra.mxu0 %v1552
      %3045 = vmatprep.subr.bf16.mxu0 0
      %3046 = vmatpush1.bf16.msra.mxu0 0
      %3047 = vmatprep.subr.bf16.mxu0 0
      %3048 = vmatpush1.bf16.msra.mxu0 0
      %3049 = vmatprep.subr.bf16.mxu0 0
      %3050 = vmatpush1.bf16.msra.mxu0 0
      %3051 = vmatprep.subr.bf16.mxu0 0
      %3052 = vmatpush1.bf16.msra.mxu0 0
      %3053 = vmatprep.subr.bf16.mxu0 0
      %3054 = vmatpush1.bf16.msra.mxu0 0
      %3055 = vmatprep.subr.bf16.mxu0 0
      %3056 = vmatpush1.bf16.msra.mxu0 0
      %3057 = vmatprep.subr.bf16.mxu0 0
      %3058 = vmatpush1.bf16.msra.mxu0 0
      %3059 = vmatprep.subr.bf16.mxu0 0
      %3060 = vmatpush1.bf16.msra.mxu0 0
      %3061 = vmatprep.subr.bf16.mxu0 0
      %3062 = vmatpush1.bf16.msra.mxu0 0
      %3063 = vmatprep.subr.bf16.mxu0 0
      %3064 = vmatpush1.bf16.msra.mxu0 0
      %3065 = vmatprep.subr.bf16.mxu0 0
      %3066 = vmatpush1.bf16.msra.mxu0 0
      %3067 = vmatprep.subr.bf16.mxu0 0
      %3068 = vmatpush1.bf16.msra.mxu0 0
      %3069 = vmatprep.subr.bf16.mxu0 0
      %3070 = vmatpush1.bf16.msra.mxu0 0
      %3071 = vmatprep.subr.bf16.mxu0 0
      %3072 = vmatpush1.bf16.msra.mxu0 0
      %3073 = vmatprep.mubr.bf16.mxu0 0
      %3074 = vmatmul.mubr.bf16.gmra.mrb[0].mxu0 %v1932
      %v3075 = vpop.f32.mrb[0].mxu0
      %v3076 = vadd.f32 0.0, %v3075
      %v3077 = vpop.f32.mrb[0].mxu0
      %v3078 = vadd.f32 0.0, %v3077
      %v3079 = vpop.f32.mrb[0].mxu0
      %v3080 = vpop.f32.mrb[0].mxu0
      %3081 = vdwg.mxu0
      %3082 = vmatprep.subr.bf16.mxu0 %v1411
      %3083 = vmatpush1.bf16.msra.mxu0 %v1410
      %3084 = vmatprep.subr.bf16.mxu0 %v1555
      %3085 = vmatpush1.bf16.msra.mxu0 %v1554
      %3086 = vmatprep.subr.bf16.mxu0 0
      %3087 = vmatpush1.bf16.msra.mxu0 0
      %3088 = vmatprep.subr.bf16.mxu0 0
      %3089 = vmatpush1.bf16.msra.mxu0 0
      %3090 = vmatprep.subr.bf16.mxu0 0
      %3091 = vmatpush1.bf16.msra.mxu0 0
      %3092 = vmatprep.subr.bf16.mxu0 0
      %3093 = vmatpush1.bf16.msra.mxu0 0
      %3094 = vmatprep.subr.bf16.mxu0 0
      %3095 = vmatpush1.bf16.msra.mxu0 0
      %3096 = vmatprep.subr.bf16.mxu0 0
      %3097 = vmatpush1.bf16.msra.mxu0 0
      %3098 = vmatprep.subr.bf16.mxu0 0
      %3099 = vmatpush1.bf16.msra.mxu0 0
      %3100 = vmatprep.subr.bf16.mxu0 0
      %3101 = vmatpush1.bf16.msra.mxu0 0
      %3102 = vmatprep.subr.bf16.mxu0 0
      %3103 = vmatpush1.bf16.msra.mxu0 0
      %3104 = vmatprep.subr.bf16.mxu0 0
      %3105 = vmatpush1.bf16.msra.mxu0 0
      %3106 = vmatprep.subr.bf16.mxu0 0
      %3107 = vmatpush1.bf16.msra.mxu0 0
      %3108 = vmatprep.subr.bf16.mxu0 0
      %3109 = vmatpush1.bf16.msra.mxu0 0
      %3110 = vmatprep.subr.bf16.mxu0 0
      %3111 = vmatpush1.bf16.msra.mxu0 0
      %3112 = vmatprep.subr.bf16.mxu0 0
      %3113 = vmatpush1.bf16.msra.mxu0 0
      %3114 = vmatprep.mubr.bf16.mxu0 0
      %3115 = vmatmul.mubr.bf16.gmra.mrb[0].mxu0 %v1932
      %v3116 = vpop.f32.mrb[0].mxu0
      %v3117 = vadd.f32 0.0, %v3116
      %v3118 = vpop.f32.mrb[0].mxu0
      %v3119 = vadd.f32 0.0, %v3118
      %v3120 = vpop.f32.mrb[0].mxu0
      %v3121 = vpop.f32.mrb[0].mxu0
      %3122 = vdwg.mxu0
      %3123 = vmatprep.subr.bf16.mxu0 %v1413
      %3124 = vmatpush1.bf16.msra.mxu0 %v1412
      %3125 = vmatprep.subr.bf16.mxu0 %v1557
      %3126 = vmatpush1.bf16.msra.mxu0 %v1556
      %3127 = vmatprep.subr.bf16.mxu0 0
      %3128 = vmatpush1.bf16.msra.mxu0 0
      %3129 = vmatprep.subr.bf16.mxu0 0
      %3130 = vmatpush1.bf16.msra.mxu0 0
      %3131 = vmatprep.subr.bf16.mxu0 0
      %3132 = vmatpush1.bf16.msra.mxu0 0
      %3133 = vmatprep.subr.bf16.mxu0 0
      %3134 = vmatpush1.bf16.msra.mxu0 0
      %3135 = vmatprep.subr.bf16.mxu0 0
      %3136 = vmatpush1.bf16.msra.mxu0 0
      %3137 = vmatprep.subr.bf16.mxu0 0
      %3138 = vmatpush1.bf16.msra.mxu0 0
      %3139 = vmatprep.subr.bf16.mxu0 0
      %3140 = vmatpush1.bf16.msra.mxu0 0
      %3141 = vmatprep.subr.bf16.mxu0 0
      %3142 = vmatpush1.bf16.msra.mxu0 0
      %3143 = vmatprep.subr.bf16.mxu0 0
      %3144 = vmatpush1.bf16.msra.mxu0 0
      %3145 = vmatprep.subr.bf16.mxu0 0
      %3146 = vmatpush1.bf16.msra.mxu0 0
      %3147 = vmatprep.subr.bf16.mxu0 0
      %3148 = vmatpush1.bf16.msra.mxu0 0
      %3149 = vmatprep.subr.bf16.mxu0 0
      %3150 = vmatpush1.bf16.msra.mxu0 0
      %3151 = vmatprep.subr.bf16.mxu0 0
      %3152 = vmatpush1.bf16.msra.mxu0 0
      %3153 = vmatprep.subr.bf16.mxu0 0
      %3154 = vmatpush1.bf16.msra.mxu0 0
      %3155 = vmatprep.mubr.bf16.mxu0 0
      %3156 = vmatmul.mubr.bf16.gmra.mrb[0].mxu0 %v1932
      %v3157 = vpop.f32.mrb[0].mxu0
      %v3158 = vadd.f32 0.0, %v3157
      %v3159 = vpop.f32.mrb[0].mxu0
      %v3160 = vadd.f32 0.0, %v3159
      %v3161 = vpop.f32.mrb[0].mxu0
      %v3162 = vpop.f32.mrb[0].mxu0
      %3163 = vdwg.mxu0
      %3164 = vmatprep.subr.bf16.mxu0 %v1415
      %3165 = vmatpush1.bf16.msra.mxu0 %v1414
      %3166 = vmatprep.subr.bf16.mxu0 %v1559
      %3167 = vmatpush1.bf16.msra.mxu0 %v1558
      %3168 = vmatprep.subr.bf16.mxu0 0
      %3169 = vmatpush1.bf16.msra.mxu0 0
      %3170 = vmatprep.subr.bf16.mxu0 0
      %3171 = vmatpush1.bf16.msra.mxu0 0
      %3172 = vmatprep.subr.bf16.mxu0 0
      %3173 = vmatpush1.bf16.msra.mxu0 0
      %3174 = vmatprep.subr.bf16.mxu0 0
      %3175 = vmatpush1.bf16.msra.mxu0 0
      %3176 = vmatprep.subr.bf16.mxu0 0
      %3177 = vmatpush1.bf16.msra.mxu0 0
      %3178 = vmatprep.subr.bf16.mxu0 0
      %3179 = vmatpush1.bf16.msra.mxu0 0
      %3180 = vmatprep.subr.bf16.mxu0 0
      %3181 = vmatpush1.bf16.msra.mxu0 0
      %3182 = vmatprep.subr.bf16.mxu0 0
      %3183 = vmatpush1.bf16.msra.mxu0 0
      %3184 = vmatprep.subr.bf16.mxu0 0
      %3185 = vmatpush1.bf16.msra.mxu0 0
      %3186 = vmatprep.subr.bf16.mxu0 0
      %3187 = vmatpush1.bf16.msra.mxu0 0
      %3188 = vmatprep.subr.bf16.mxu0 0
      %3189 = vmatpush1.bf16.msra.mxu0 0
      %3190 = vmatprep.subr.bf16.mxu0 0
      %3191 = vmatpush1.bf16.msra.mxu0 0
      %3192 = vmatprep.subr.bf16.mxu0 0
      %3193 = vmatpush1.bf16.msra.mxu0 0
      %3194 = vmatprep.subr.bf16.mxu0 0
      %3195 = vmatpush1.bf16.msra.mxu0 0
      %3196 = vmatprep.mubr.bf16.mxu0 0
      %3197 = vmatmul.mubr.bf16.gmra.mrb[0].mxu0 %v1932
      %v3198 = vpop.f32.mrb[0].mxu0
      %v3199 = vadd.f32 0.0, %v3198
      %v3200 = vpop.f32.mrb[0].mxu0
      %v3201 = vadd.f32 0.0, %v3200
      %v3202 = vpop.f32.mrb[0].mxu0
      %v3203 = vpop.f32.mrb[0].mxu0
      %3204 = vdwg.mxu0
      %3205 = vmatprep.subr.bf16.mxu0 %v1417
      %3206 = vmatpush1.bf16.msra.mxu0 %v1416
      %3207 = vmatprep.subr.bf16.mxu0 %v1561
      %3208 = vmatpush1.bf16.msra.mxu0 %v1560
      %3209 = vmatprep.subr.bf16.mxu0 0
      %3210 = vmatpush1.bf16.msra.mxu0 0
      %3211 = vmatprep.subr.bf16.mxu0 0
      %3212 = vmatpush1.bf16.msra.mxu0 0
      %3213 = vmatprep.subr.bf16.mxu0 0
      %3214 = vmatpush1.bf16.msra.mxu0 0
      %3215 = vmatprep.subr.bf16.mxu0 0
      %3216 = vmatpush1.bf16.msra.mxu0 0
      %3217 = vmatprep.subr.bf16.mxu0 0
      %3218 = vmatpush1.bf16.msra.mxu0 0
      %3219 = vmatprep.subr.bf16.mxu0 0
      %3220 = vmatpush1.bf16.msra.mxu0 0
      %3221 = vmatprep.subr.bf16.mxu0 0
      %3222 = vmatpush1.bf16.msra.mxu0 0
      %3223 = vmatprep.subr.bf16.mxu0 0
      %3224 = vmatpush1.bf16.msra.mxu0 0
      %3225 = vmatprep.subr.bf16.mxu0 0
      %3226 = vmatpush1.bf16.msra.mxu0 0
      %3227 = vmatprep.subr.bf16.mxu0 0
      %3228 = vmatpush1.bf16.msra.mxu0 0
      %3229 = vmatprep.subr.bf16.mxu0 0
      %3230 = vmatpush1.bf16.msra.mxu0 0
      %3231 = vmatprep.subr.bf16.mxu0 0
      %3232 = vmatpush1.bf16.msra.mxu0 0
      %3233 = vmatprep.subr.bf16.mxu0 0
      %3234 = vmatpush1.bf16.msra.mxu0 0
      %3235 = vmatprep.subr.bf16.mxu0 0
      %3236 = vmatpush1.bf16.msra.mxu0 0
      %3237 = vmatprep.mubr.bf16.mxu0 0
      %3238 = vmatmul.mubr.bf16.gmra.mrb[0].mxu0 %v1932
      %v3239 = vpop.f32.mrb[0].mxu0
      %v3240 = vadd.f32 0.0, %v3239
      %v3241 = vpop.f32.mrb[0].mxu0
      %v3242 = vadd.f32 0.0, %v3241
      %v3243 = vpop.f32.mrb[0].mxu0
      %v3244 = vpop.f32.mrb[0].mxu0
      %3245 = vdwg.mxu0
      %3246 = vmatprep.subr.bf16.mxu0 %v1419
      %3247 = vmatpush1.bf16.msra.mxu0 %v1418
      %3248 = vmatprep.subr.bf16.mxu0 %v1563
      %3249 = vmatpush1.bf16.msra.mxu0 %v1562
      %3250 = vmatprep.subr.bf16.mxu0 0
      %3251 = vmatpush1.bf16.msra.mxu0 0
      %3252 = vmatprep.subr.bf16.mxu0 0
      %3253 = vmatpush1.bf16.msra.mxu0 0
      %3254 = vmatprep.subr.bf16.mxu0 0
      %3255 = vmatpush1.bf16.msra.mxu0 0
      %3256 = vmatprep.subr.bf16.mxu0 0
      %3257 = vmatpush1.bf16.msra.mxu0 0
      %3258 = vmatprep.subr.bf16.mxu0 0
      %3259 = vmatpush1.bf16.msra.mxu0 0
      %3260 = vmatprep.subr.bf16.mxu0 0
      %3261 = vmatpush1.bf16.msra.mxu0 0
      %3262 = vmatprep.subr.bf16.mxu0 0
      %3263 = vmatpush1.bf16.msra.mxu0 0
      %3264 = vmatprep.subr.bf16.mxu0 0
      %3265 = vmatpush1.bf16.msra.mxu0 0
      %3266 = vmatprep.subr.bf16.mxu0 0
      %3267 = vmatpush1.bf16.msra.mxu0 0
      %3268 = vmatprep.subr.bf16.mxu0 0
      %3269 = vmatpush1.bf16.msra.mxu0 0
      %3270 = vmatprep.subr.bf16.mxu0 0
      %3271 = vmatpush1.bf16.msra.mxu0 0
      %3272 = vmatprep.subr.bf16.mxu0 0
      %3273 = vmatpush1.bf16.msra.mxu0 0
      %3274 = vmatprep.subr.bf16.mxu0 0
      %3275 = vmatpush1.bf16.msra.mxu0 0
      %3276 = vmatprep.subr.bf16.mxu0 0
      %3277 = vmatpush1.bf16.msra.mxu0 0
      %3278 = vmatprep.mubr.bf16.mxu0 0
      %3279 = vmatmul.mubr.bf16.gmra.mrb[0].mxu0 %v1932
      %v3280 = vpop.f32.mrb[0].mxu0
      %v3281 = vadd.f32 0.0, %v3280
      %v3282 = vpop.f32.mrb[0].mxu0
      %v3283 = vadd.f32 0.0, %v3282
      %v3284 = vpop.f32.mrb[0].mxu0
      %v3285 = vpop.f32.mrb[0].mxu0
      %3286 = vdwg.mxu0
      %3287 = vmatprep.subr.bf16.mxu0 %v1421
      %3288 = vmatpush1.bf16.msra.mxu0 %v1420
      %3289 = vmatprep.subr.bf16.mxu0 %v1565
      %3290 = vmatpush1.bf16.msra.mxu0 %v1564
      %3291 = vmatprep.subr.bf16.mxu0 0
      %3292 = vmatpush1.bf16.msra.mxu0 0
      %3293 = vmatprep.subr.bf16.mxu0 0
      %3294 = vmatpush1.bf16.msra.mxu0 0
      %3295 = vmatprep.subr.bf16.mxu0 0
      %3296 = vmatpush1.bf16.msra.mxu0 0
      %3297 = vmatprep.subr.bf16.mxu0 0
      %3298 = vmatpush1.bf16.msra.mxu0 0
      %3299 = vmatprep.subr.bf16.mxu0 0
      %3300 = vmatpush1.bf16.msra.mxu0 0
      %3301 = vmatprep.subr.bf16.mxu0 0
      %3302 = vmatpush1.bf16.msra.mxu0 0
      %3303 = vmatprep.subr.bf16.mxu0 0
      %3304 = vmatpush1.bf16.msra.mxu0 0
      %3305 = vmatprep.subr.bf16.mxu0 0
      %3306 = vmatpush1.bf16.msra.mxu0 0
      %3307 = vmatprep.subr.bf16.mxu0 0
      %3308 = vmatpush1.bf16.msra.mxu0 0
      %3309 = vmatprep.subr.bf16.mxu0 0
      %3310 = vmatpush1.bf16.msra.mxu0 0
      %3311 = vmatprep.subr.bf16.mxu0 0
      %3312 = vmatpush1.bf16.msra.mxu0 0
      %3313 = vmatprep.subr.bf16.mxu0 0
      %3314 = vmatpush1.bf16.msra.mxu0 0
      %3315 = vmatprep.subr.bf16.mxu0 0
      %3316 = vmatpush1.bf16.msra.mxu0 0
      %3317 = vmatprep.subr.bf16.mxu0 0
      %3318 = vmatpush1.bf16.msra.mxu0 0
      %3319 = vmatprep.mubr.bf16.mxu0 0
      %3320 = vmatmul.mubr.bf16.gmra.mrb[0].mxu0 %v1932
      %v3321 = vpop.f32.mrb[0].mxu0
      %v3322 = vadd.f32 0.0, %v3321
      %v3323 = vpop.f32.mrb[0].mxu0
      %v3324 = vadd.f32 0.0, %v3323
      %v3325 = vpop.f32.mrb[0].mxu0
      %v3326 = vpop.f32.mrb[0].mxu0
      %3327 = vdwg.mxu0
      %3328 = vmatprep.subr.bf16.mxu0 %v1423
      %3329 = vmatpush1.bf16.msra.mxu0 %v1422
      %3330 = vmatprep.subr.bf16.mxu0 %v1567
      %3331 = vmatpush1.bf16.msra.mxu0 %v1566
      %3332 = vmatprep.subr.bf16.mxu0 0
      %3333 = vmatpush1.bf16.msra.mxu0 0
      %3334 = vmatprep.subr.bf16.mxu0 0
      %3335 = vmatpush1.bf16.msra.mxu0 0
      %3336 = vmatprep.subr.bf16.mxu0 0
      %3337 = vmatpush1.bf16.msra.mxu0 0
      %3338 = vmatprep.subr.bf16.mxu0 0
      %3339 = vmatpush1.bf16.msra.mxu0 0
      %3340 = vmatprep.subr.bf16.mxu0 0
      %3341 = vmatpush1.bf16.msra.mxu0 0
      %3342 = vmatprep.subr.bf16.mxu0 0
      %3343 = vmatpush1.bf16.msra.mxu0 0
      %3344 = vmatprep.subr.bf16.mxu0 0
      %3345 = vmatpush1.bf16.msra.mxu0 0
      %3346 = vmatprep.subr.bf16.mxu0 0
      %3347 = vmatpush1.bf16.msra.mxu0 0
      %3348 = vmatprep.subr.bf16.mxu0 0
      %3349 = vmatpush1.bf16.msra.mxu0 0
      %3350 = vmatprep.subr.bf16.mxu0 0
      %3351 = vmatpush1.bf16.msra.mxu0 0
      %3352 = vmatprep.subr.bf16.mxu0 0
      %3353 = vmatpush1.bf16.msra.mxu0 0
      %3354 = vmatprep.subr.bf16.mxu0 0
      %3355 = vmatpush1.bf16.msra.mxu0 0
      %3356 = vmatprep.subr.bf16.mxu0 0
      %3357 = vmatpush1.bf16.msra.mxu0 0
      %3358 = vmatprep.subr.bf16.mxu0 0
      %3359 = vmatpush1.bf16.msra.mxu0 0
      %3360 = vmatprep.mubr.bf16.mxu0 0
      %3361 = vmatmul.mubr.bf16.gmra.mrb[0].mxu0 %v1932
      %v3362 = vpop.f32.mrb[0].mxu0
      %v3363 = vadd.f32 0.0, %v3362
      %v3364 = vpop.f32.mrb[0].mxu0
      %v3365 = vadd.f32 0.0, %v3364
      %v3366 = vpop.f32.mrb[0].mxu0
      %v3367 = vpop.f32.mrb[0].mxu0
      %3368 = vdwg.mxu0
      %3369 = vmatprep.subr.bf16.mxu0 %v1425
      %3370 = vmatpush1.bf16.msra.mxu0 %v1424
      %3371 = vmatprep.subr.bf16.mxu0 %v1569
      %3372 = vmatpush1.bf16.msra.mxu0 %v1568
      %3373 = vmatprep.subr.bf16.mxu0 0
      %3374 = vmatpush1.bf16.msra.mxu0 0
      %3375 = vmatprep.subr.bf16.mxu0 0
      %3376 = vmatpush1.bf16.msra.mxu0 0
      %3377 = vmatprep.subr.bf16.mxu0 0
      %3378 = vmatpush1.bf16.msra.mxu0 0
      %3379 = vmatprep.subr.bf16.mxu0 0
      %3380 = vmatpush1.bf16.msra.mxu0 0
      %3381 = vmatprep.subr.bf16.mxu0 0
      %3382 = vmatpush1.bf16.msra.mxu0 0
      %3383 = vmatprep.subr.bf16.mxu0 0
      %3384 = vmatpush1.bf16.msra.mxu0 0
      %3385 = vmatprep.subr.bf16.mxu0 0
      %3386 = vmatpush1.bf16.msra.mxu0 0
      %3387 = vmatprep.subr.bf16.mxu0 0
      %3388 = vmatpush1.bf16.msra.mxu0 0
      %3389 = vmatprep.subr.bf16.mxu0 0
      %3390 = vmatpush1.bf16.msra.mxu0 0
      %3391 = vmatprep.subr.bf16.mxu0 0
      %3392 = vmatpush1.bf16.msra.mxu0 0
      %3393 = vmatprep.subr.bf16.mxu0 0
      %3394 = vmatpush1.bf16.msra.mxu0 0
      %3395 = vmatprep.subr.bf16.mxu0 0
      %3396 = vmatpush1.bf16.msra.mxu0 0
      %3397 = vmatprep.subr.bf16.mxu0 0
      %3398 = vmatpush1.bf16.msra.mxu0 0
      %3399 = vmatprep.subr.bf16.mxu0 0
      %3400 = vmatpush1.bf16.msra.mxu0 0
      %3401 = vmatprep.mubr.bf16.mxu0 0
      %3402 = vmatmul.mubr.bf16.gmra.mrb[0].mxu0 %v1932
      %v3403 = vpop.f32.mrb[0].mxu0
      %v3404 = vadd.f32 0.0, %v3403
      %v3405 = vpop.f32.mrb[0].mxu0
      %v3406 = vadd.f32 0.0, %v3405
      %v3407 = vpop.f32.mrb[0].mxu0
      %v3408 = vpop.f32.mrb[0].mxu0
      %3409 = vdwg.mxu0
      %3410 = vmatprep.subr.bf16.mxu0 %v1427
      %3411 = vmatpush1.bf16.msra.mxu0 %v1426
      %3412 = vmatprep.subr.bf16.mxu0 %v1571
      %3413 = vmatpush1.bf16.msra.mxu0 %v1570
      %3414 = vmatprep.subr.bf16.mxu0 0
      %3415 = vmatpush1.bf16.msra.mxu0 0
      %3416 = vmatprep.subr.bf16.mxu0 0
      %3417 = vmatpush1.bf16.msra.mxu0 0
      %3418 = vmatprep.subr.bf16.mxu0 0
      %3419 = vmatpush1.bf16.msra.mxu0 0
      %3420 = vmatprep.subr.bf16.mxu0 0
      %3421 = vmatpush1.bf16.msra.mxu0 0
      %3422 = vmatprep.subr.bf16.mxu0 0
      %3423 = vmatpush1.bf16.msra.mxu0 0
      %3424 = vmatprep.subr.bf16.mxu0 0
      %3425 = vmatpush1.bf16.msra.mxu0 0
      %3426 = vmatprep.subr.bf16.mxu0 0
      %3427 = vmatpush1.bf16.msra.mxu0 0
      %3428 = vmatprep.subr.bf16.mxu0 0
      %3429 = vmatpush1.bf16.msra.mxu0 0
      %3430 = vmatprep.subr.bf16.mxu0 0
      %3431 = vmatpush1.bf16.msra.mxu0 0
      %3432 = vmatprep.subr.bf16.mxu0 0
      %3433 = vmatpush1.bf16.msra.mxu0 0
      %3434 = vmatprep.subr.bf16.mxu0 0
      %3435 = vmatpush1.bf16.msra.mxu0 0
      %3436 = vmatprep.subr.bf16.mxu0 0
      %3437 = vmatpush1.bf16.msra.mxu0 0
      %3438 = vmatprep.subr.bf16.mxu0 0
      %3439 = vmatpush1.bf16.msra.mxu0 0
      %3440 = vmatprep.subr.bf16.mxu0 0
      %3441 = vmatpush1.bf16.msra.mxu0 0
      %3442 = vmatprep.mubr.bf16.mxu0 0
      %3443 = vmatmul.mubr.bf16.gmra.mrb[0].mxu0 %v1932
      %v3444 = vpop.f32.mrb[0].mxu0
      %v3445 = vadd.f32 0.0, %v3444
      %v3446 = vpop.f32.mrb[0].mxu0
      %v3447 = vadd.f32 0.0, %v3446
      %v3448 = vpop.f32.mrb[0].mxu0
      %v3449 = vpop.f32.mrb[0].mxu0
      %3450 = vdwg.mxu0
      %3451 = vmatprep.subr.bf16.mxu0 %v1429
      %3452 = vmatpush1.bf16.msra.mxu0 %v1428
      %3453 = vmatprep.subr.bf16.mxu0 %v1573
      %3454 = vmatpush1.bf16.msra.mxu0 %v1572
      %3455 = vmatprep.subr.bf16.mxu0 0
      %3456 = vmatpush1.bf16.msra.mxu0 0
      %3457 = vmatprep.subr.bf16.mxu0 0
      %3458 = vmatpush1.bf16.msra.mxu0 0
      %3459 = vmatprep.subr.bf16.mxu0 0
      %3460 = vmatpush1.bf16.msra.mxu0 0
      %3461 = vmatprep.subr.bf16.mxu0 0
      %3462 = vmatpush1.bf16.msra.mxu0 0
      %3463 = vmatprep.subr.bf16.mxu0 0
      %3464 = vmatpush1.bf16.msra.mxu0 0
      %3465 = vmatprep.subr.bf16.mxu0 0
      %3466 = vmatpush1.bf16.msra.mxu0 0
      %3467 = vmatprep.subr.bf16.mxu0 0
      %3468 = vmatpush1.bf16.msra.mxu0 0
      %3469 = vmatprep.subr.bf16.mxu0 0
      %3470 = vmatpush1.bf16.msra.mxu0 0
      %3471 = vmatprep.subr.bf16.mxu0 0
      %3472 = vmatpush1.bf16.msra.mxu0 0
      %3473 = vmatprep.subr.bf16.mxu0 0
      %3474 = vmatpush1.bf16.msra.mxu0 0
      %3475 = vmatprep.subr.bf16.mxu0 0
      %3476 = vmatpush1.bf16.msra.mxu0 0
      %3477 = vmatprep.subr.bf16.mxu0 0
      %3478 = vmatpush1.bf16.msra.mxu0 0
      %3479 = vmatprep.subr.bf16.mxu0 0
      %3480 = vmatpush1.bf16.msra.mxu0 0
      %3481 = vmatprep.subr.bf16.mxu0 0
      %3482 = vmatpush1.bf16.msra.mxu0 0
      %3483 = vmatprep.mubr.bf16.mxu0 0
      %3484 = vmatmul.mubr.bf16.gmra.mrb[0].mxu0 %v1932
      %v3485 = vpop.f32.mrb[0].mxu0
      %v3486 = vadd.f32 0.0, %v3485
      %v3487 = vpop.f32.mrb[0].mxu0
      %v3488 = vadd.f32 0.0, %v3487
      %v3489 = vpop.f32.mrb[0].mxu0
      %v3490 = vpop.f32.mrb[0].mxu0
      %3491 = vdwg.mxu0
      %3492 = vmatprep.subr.bf16.mxu0 %v1431
      %3493 = vmatpush1.bf16.msra.mxu0 %v1430
      %3494 = vmatprep.subr.bf16.mxu0 %v1575
      %3495 = vmatpush1.bf16.msra.mxu0 %v1574
      %3496 = vmatprep.subr.bf16.mxu0 0
      %3497 = vmatpush1.bf16.msra.mxu0 0
      %3498 = vmatprep.subr.bf16.mxu0 0
      %3499 = vmatpush1.bf16.msra.mxu0 0
      %3500 = vmatprep.subr.bf16.mxu0 0
      %3501 = vmatpush1.bf16.msra.mxu0 0
      %3502 = vmatprep.subr.bf16.mxu0 0
      %3503 = vmatpush1.bf16.msra.mxu0 0
      %3504 = vmatprep.subr.bf16.mxu0 0
      %3505 = vmatpush1.bf16.msra.mxu0 0
      %3506 = vmatprep.subr.bf16.mxu0 0
      %3507 = vmatpush1.bf16.msra.mxu0 0
      %3508 = vmatprep.subr.bf16.mxu0 0
      %3509 = vmatpush1.bf16.msra.mxu0 0
      %3510 = vmatprep.subr.bf16.mxu0 0
      %3511 = vmatpush1.bf16.msra.mxu0 0
      %3512 = vmatprep.subr.bf16.mxu0 0
      %3513 = vmatpush1.bf16.msra.mxu0 0
      %3514 = vmatprep.subr.bf16.mxu0 0
      %3515 = vmatpush1.bf16.msra.mxu0 0
      %3516 = vmatprep.subr.bf16.mxu0 0
      %3517 = vmatpush1.bf16.msra.mxu0 0
      %3518 = vmatprep.subr.bf16.mxu0 0
      %3519 = vmatpush1.bf16.msra.mxu0 0
      %3520 = vmatprep.subr.bf16.mxu0 0
      %3521 = vmatpush1.bf16.msra.mxu0 0
      %3522 = vmatprep.subr.bf16.mxu0 0
      %3523 = vmatpush1.bf16.msra.mxu0 0
      %3524 = vmatprep.mubr.bf16.mxu0 0
      %3525 = vmatmul.mubr.bf16.gmra.mrb[0].mxu0 %v1932
      %v3526 = vpop.f32.mrb[0].mxu0
      %v3527 = vadd.f32 0.0, %v3526
      %v3528 = vpop.f32.mrb[0].mxu0
      %v3529 = vadd.f32 0.0, %v3528
      %v3530 = vpop.f32.mrb[0].mxu0
      %v3531 = vpop.f32.mrb[0].mxu0
      %3532 = vdwg.mxu0
      %3533 = vmatprep.subr.bf16.mxu0 %v1433
      %3534 = vmatpush1.bf16.msra.mxu0 %v1432
      %3535 = vmatprep.subr.bf16.mxu0 %v1577
      %3536 = vmatpush1.bf16.msra.mxu0 %v1576
      %3537 = vmatprep.subr.bf16.mxu0 0
      %3538 = vmatpush1.bf16.msra.mxu0 0
      %3539 = vmatprep.subr.bf16.mxu0 0
      %3540 = vmatpush1.bf16.msra.mxu0 0
      %3541 = vmatprep.subr.bf16.mxu0 0
      %3542 = vmatpush1.bf16.msra.mxu0 0
      %3543 = vmatprep.subr.bf16.mxu0 0
      %3544 = vmatpush1.bf16.msra.mxu0 0
      %3545 = vmatprep.subr.bf16.mxu0 0
      %3546 = vmatpush1.bf16.msra.mxu0 0
      %3547 = vmatprep.subr.bf16.mxu0 0
      %3548 = vmatpush1.bf16.msra.mxu0 0
      %3549 = vmatprep.subr.bf16.mxu0 0
      %3550 = vmatpush1.bf16.msra.mxu0 0
      %3551 = vmatprep.subr.bf16.mxu0 0
      %3552 = vmatpush1.bf16.msra.mxu0 0
      %3553 = vmatprep.subr.bf16.mxu0 0
      %3554 = vmatpush1.bf16.msra.mxu0 0
      %3555 = vmatprep.subr.bf16.mxu0 0
      %3556 = vmatpush1.bf16.msra.mxu0 0
      %3557 = vmatprep.subr.bf16.mxu0 0
      %3558 = vmatpush1.bf16.msra.mxu0 0
      %3559 = vmatprep.subr.bf16.mxu0 0
      %3560 = vmatpush1.bf16.msra.mxu0 0
      %3561 = vmatprep.subr.bf16.mxu0 0
      %3562 = vmatpush1.bf16.msra.mxu0 0
      %3563 = vmatprep.subr.bf16.mxu0 0
      %3564 = vmatpush1.bf16.msra.mxu0 0
      %3565 = vmatprep.mubr.bf16.mxu0 0
      %3566 = vmatmul.mubr.bf16.gmra.mrb[0].mxu0 %v1932
      %v3567 = vpop.f32.mrb[0].mxu0
      %v3568 = vadd.f32 0.0, %v3567
      %v3569 = vpop.f32.mrb[0].mxu0
      %v3570 = vadd.f32 0.0, %v3569
      %v3571 = vpop.f32.mrb[0].mxu0
      %v3572 = vpop.f32.mrb[0].mxu0
      %3573 = vdwg.mxu0
      %3574 = vmatprep.subr.bf16.mxu0 %v1435
      %3575 = vmatpush1.bf16.msra.mxu0 %v1434
      %3576 = vmatprep.subr.bf16.mxu0 %v1579
      %3577 = vmatpush1.bf16.msra.mxu0 %v1578
      %3578 = vmatprep.subr.bf16.mxu0 0
      %3579 = vmatpush1.bf16.msra.mxu0 0
      %3580 = vmatprep.subr.bf16.mxu0 0
      %3581 = vmatpush1.bf16.msra.mxu0 0
      %3582 = vmatprep.subr.bf16.mxu0 0
      %3583 = vmatpush1.bf16.msra.mxu0 0
      %3584 = vmatprep.subr.bf16.mxu0 0
      %3585 = vmatpush1.bf16.msra.mxu0 0
      %3586 = vmatprep.subr.bf16.mxu0 0
      %3587 = vmatpush1.bf16.msra.mxu0 0
      %3588 = vmatprep.subr.bf16.mxu0 0
      %3589 = vmatpush1.bf16.msra.mxu0 0
      %3590 = vmatprep.subr.bf16.mxu0 0
      %3591 = vmatpush1.bf16.msra.mxu0 0
      %3592 = vmatprep.subr.bf16.mxu0 0
      %3593 = vmatpush1.bf16.msra.mxu0 0
      %3594 = vmatprep.subr.bf16.mxu0 0
      %3595 = vmatpush1.bf16.msra.mxu0 0
      %3596 = vmatprep.subr.bf16.mxu0 0
      %3597 = vmatpush1.bf16.msra.mxu0 0
      %3598 = vmatprep.subr.bf16.mxu0 0
      %3599 = vmatpush1.bf16.msra.mxu0 0
      %3600 = vmatprep.subr.bf16.mxu0 0
      %3601 = vmatpush1.bf16.msra.mxu0 0
      %3602 = vmatprep.subr.bf16.mxu0 0
      %3603 = vmatpush1.bf16.msra.mxu0 0
      %3604 = vmatprep.subr.bf16.mxu0 0
      %3605 = vmatpush1.bf16.msra.mxu0 0
      %3606 = vmatprep.mubr.bf16.mxu0 0
      %3607 = vmatmul.mubr.bf16.gmra.mrb[0].mxu0 %v1932
      %v3608 = vpop.f32.mrb[0].mxu0
      %v3609 = vadd.f32 0.0, %v3608
      %v3610 = vpop.f32.mrb[0].mxu0
      %v3611 = vadd.f32 0.0, %v3610
      %v3612 = vpop.f32.mrb[0].mxu0
      %v3613 = vpop.f32.mrb[0].mxu0
      %3614 = vdwg.mxu0
      %3615 = vmatprep.subr.bf16.mxu0 %v1437
      %3616 = vmatpush1.bf16.msra.mxu0 %v1436
      %3617 = vmatprep.subr.bf16.mxu0 %v1581
      %3618 = vmatpush1.bf16.msra.mxu0 %v1580
      %3619 = vmatprep.subr.bf16.mxu0 0
      %3620 = vmatpush1.bf16.msra.mxu0 0
      %3621 = vmatprep.subr.bf16.mxu0 0
      %3622 = vmatpush1.bf16.msra.mxu0 0
      %3623 = vmatprep.subr.bf16.mxu0 0
      %3624 = vmatpush1.bf16.msra.mxu0 0
      %3625 = vmatprep.subr.bf16.mxu0 0
      %3626 = vmatpush1.bf16.msra.mxu0 0
      %3627 = vmatprep.subr.bf16.mxu0 0
      %3628 = vmatpush1.bf16.msra.mxu0 0
      %3629 = vmatprep.subr.bf16.mxu0 0
      %3630 = vmatpush1.bf16.msra.mxu0 0
      %3631 = vmatprep.subr.bf16.mxu0 0
      %3632 = vmatpush1.bf16.msra.mxu0 0
      %3633 = vmatprep.subr.bf16.mxu0 0
      %3634 = vmatpush1.bf16.msra.mxu0 0
      %3635 = vmatprep.subr.bf16.mxu0 0
      %3636 = vmatpush1.bf16.msra.mxu0 0
      %3637 = vmatprep.subr.bf16.mxu0 0
      %3638 = vmatpush1.bf16.msra.mxu0 0
      %3639 = vmatprep.subr.bf16.mxu0 0
      %3640 = vmatpush1.bf16.msra.mxu0 0
      %3641 = vmatprep.subr.bf16.mxu0 0
      %3642 = vmatpush1.bf16.msra.mxu0 0
      %3643 = vmatprep.subr.bf16.mxu0 0
      %3644 = vmatpush1.bf16.msra.mxu0 0
      %3645 = vmatprep.subr.bf16.mxu0 0
      %3646 = vmatpush1.bf16.msra.mxu0 0
      %3647 = vmatprep.mubr.bf16.mxu0 0
      %3648 = vmatmul.mubr.bf16.gmra.mrb[0].mxu0 %v1932
      %v3649 = vpop.f32.mrb[0].mxu0
      %v3650 = vadd.f32 0.0, %v3649
      %v3651 = vpop.f32.mrb[0].mxu0
      %v3652 = vadd.f32 0.0, %v3651
      %v3653 = vpop.f32.mrb[0].mxu0
      %v3654 = vpop.f32.mrb[0].mxu0
      %3655 = vdwg.mxu0
      %3656 = vmatprep.subr.bf16.mxu0 %v1439
      %3657 = vmatpush1.bf16.msra.mxu0 %v1438
      %3658 = vmatprep.subr.bf16.mxu0 %v1583
      %3659 = vmatpush1.bf16.msra.mxu0 %v1582
      %3660 = vmatprep.subr.bf16.mxu0 0
      %3661 = vmatpush1.bf16.msra.mxu0 0
      %3662 = vmatprep.subr.bf16.mxu0 0
      %3663 = vmatpush1.bf16.msra.mxu0 0
      %3664 = vmatprep.subr.bf16.mxu0 0
      %3665 = vmatpush1.bf16.msra.mxu0 0
      %3666 = vmatprep.subr.bf16.mxu0 0
      %3667 = vmatpush1.bf16.msra.mxu0 0
      %3668 = vmatprep.subr.bf16.mxu0 0
      %3669 = vmatpush1.bf16.msra.mxu0 0
      %3670 = vmatprep.subr.bf16.mxu0 0
      %3671 = vmatpush1.bf16.msra.mxu0 0
      %3672 = vmatprep.subr.bf16.mxu0 0
      %3673 = vmatpush1.bf16.msra.mxu0 0
      %3674 = vmatprep.subr.bf16.mxu0 0
      %3675 = vmatpush1.bf16.msra.mxu0 0
      %3676 = vmatprep.subr.bf16.mxu0 0
      %3677 = vmatpush1.bf16.msra.mxu0 0
      %3678 = vmatprep.subr.bf16.mxu0 0
      %3679 = vmatpush1.bf16.msra.mxu0 0
      %3680 = vmatprep.subr.bf16.mxu0 0
      %3681 = vmatpush1.bf16.msra.mxu0 0
      %3682 = vmatprep.subr.bf16.mxu0 0
      %3683 = vmatpush1.bf16.msra.mxu0 0
      %3684 = vmatprep.subr.bf16.mxu0 0
      %3685 = vmatpush1.bf16.msra.mxu0 0
      %3686 = vmatprep.subr.bf16.mxu0 0
      %3687 = vmatpush1.bf16.msra.mxu0 0
      %3688 = vmatprep.mubr.bf16.mxu0 0
      %3689 = vmatmul.mubr.bf16.gmra.mrb[0].mxu0 %v1932
      %v3690 = vpop.f32.mrb[0].mxu0
      %v3691 = vadd.f32 0.0, %v3690
      %v3692 = vpop.f32.mrb[0].mxu0
      %v3693 = vadd.f32 0.0, %v3692
      %v3694 = vpop.f32.mrb[0].mxu0
      %v3695 = vpop.f32.mrb[0].mxu0
      %3696 = vdwg.mxu0
      %3697 = vmatprep.subr.bf16.mxu0 %v1441
      %3698 = vmatpush1.bf16.msra.mxu0 %v1440
      %3699 = vmatprep.subr.bf16.mxu0 %v1585
      %3700 = vmatpush1.bf16.msra.mxu0 %v1584
      %3701 = vmatprep.subr.bf16.mxu0 0
      %3702 = vmatpush1.bf16.msra.mxu0 0
      %3703 = vmatprep.subr.bf16.mxu0 0
      %3704 = vmatpush1.bf16.msra.mxu0 0
      %3705 = vmatprep.subr.bf16.mxu0 0
      %3706 = vmatpush1.bf16.msra.mxu0 0
      %3707 = vmatprep.subr.bf16.mxu0 0
      %3708 = vmatpush1.bf16.msra.mxu0 0
      %3709 = vmatprep.subr.bf16.mxu0 0
      %3710 = vmatpush1.bf16.msra.mxu0 0
      %3711 = vmatprep.subr.bf16.mxu0 0
      %3712 = vmatpush1.bf16.msra.mxu0 0
      %3713 = vmatprep.subr.bf16.mxu0 0
      %3714 = vmatpush1.bf16.msra.mxu0 0
      %3715 = vmatprep.subr.bf16.mxu0 0
      %3716 = vmatpush1.bf16.msra.mxu0 0
      %3717 = vmatprep.subr.bf16.mxu0 0
      %3718 = vmatpush1.bf16.msra.mxu0 0
      %3719 = vmatprep.subr.bf16.mxu0 0
      %3720 = vmatpush1.bf16.msra.mxu0 0
      %3721 = vmatprep.subr.bf16.mxu0 0
      %3722 = vmatpush1.bf16.msra.mxu0 0
      %3723 = vmatprep.subr.bf16.mxu0 0
      %3724 = vmatpush1.bf16.msra.mxu0 0
      %3725 = vmatprep.subr.bf16.mxu0 0
      %3726 = vmatpush1.bf16.msra.mxu0 0
      %3727 = vmatprep.subr.bf16.mxu0 0
      %3728 = vmatpush1.bf16.msra.mxu0 0
      %3729 = vmatprep.mubr.bf16.mxu0 0
      %3730 = vmatmul.mubr.bf16.gmra.mrb[0].mxu0 %v1932
      %v3731 = vpop.f32.mrb[0].mxu0
      %v3732 = vadd.f32 0.0, %v3731
      %v3733 = vpop.f32.mrb[0].mxu0
      %v3734 = vadd.f32 0.0, %v3733
      %v3735 = vpop.f32.mrb[0].mxu0
      %v3736 = vpop.f32.mrb[0].mxu0
      %3737 = vdwg.mxu0
      %3738 = vmatprep.subr.bf16.mxu0 %v1443
      %3739 = vmatpush1.bf16.msra.mxu0 %v1442
      %3740 = vmatprep.subr.bf16.mxu0 %v1587
      %3741 = vmatpush1.bf16.msra.mxu0 %v1586
      %3742 = vmatprep.subr.bf16.mxu0 0
      %3743 = vmatpush1.bf16.msra.mxu0 0
      %3744 = vmatprep.subr.bf16.mxu0 0
      %3745 = vmatpush1.bf16.msra.mxu0 0
      %3746 = vmatprep.subr.bf16.mxu0 0
      %3747 = vmatpush1.bf16.msra.mxu0 0
      %3748 = vmatprep.subr.bf16.mxu0 0
      %3749 = vmatpush1.bf16.msra.mxu0 0
      %3750 = vmatprep.subr.bf16.mxu0 0
      %3751 = vmatpush1.bf16.msra.mxu0 0
      %3752 = vmatprep.subr.bf16.mxu0 0
      %3753 = vmatpush1.bf16.msra.mxu0 0
      %3754 = vmatprep.subr.bf16.mxu0 0
      %3755 = vmatpush1.bf16.msra.mxu0 0
      %3756 = vmatprep.subr.bf16.mxu0 0
      %3757 = vmatpush1.bf16.msra.mxu0 0
      %3758 = vmatprep.subr.bf16.mxu0 0
      %3759 = vmatpush1.bf16.msra.mxu0 0
      %3760 = vmatprep.subr.bf16.mxu0 0
      %3761 = vmatpush1.bf16.msra.mxu0 0
      %3762 = vmatprep.subr.bf16.mxu0 0
      %3763 = vmatpush1.bf16.msra.mxu0 0
      %3764 = vmatprep.subr.bf16.mxu0 0
      %3765 = vmatpush1.bf16.msra.mxu0 0
      %3766 = vmatprep.subr.bf16.mxu0 0
      %3767 = vmatpush1.bf16.msra.mxu0 0
      %3768 = vmatprep.subr.bf16.mxu0 0
      %3769 = vmatpush1.bf16.msra.mxu0 0
      %3770 = vmatprep.mubr.bf16.mxu0 0
      %3771 = vmatmul.mubr.bf16.gmra.mrb[0].mxu0 %v1932
      %v3772 = vpop.f32.mrb[0].mxu0
      %v3773 = vadd.f32 0.0, %v3772
      %v3774 = vpop.f32.mrb[0].mxu0
      %v3775 = vadd.f32 0.0, %v3774
      %v3776 = vpop.f32.mrb[0].mxu0
      %v3777 = vpop.f32.mrb[0].mxu0
      %3778 = vdwg.mxu0
      %3779 = vmatprep.subr.bf16.mxu0 %v1445
      %3780 = vmatpush1.bf16.msra.mxu0 %v1444
      %3781 = vmatprep.subr.bf16.mxu0 %v1589
      %3782 = vmatpush1.bf16.msra.mxu0 %v1588
      %3783 = vmatprep.subr.bf16.mxu0 0
      %3784 = vmatpush1.bf16.msra.mxu0 0
      %3785 = vmatprep.subr.bf16.mxu0 0
      %3786 = vmatpush1.bf16.msra.mxu0 0
      %3787 = vmatprep.subr.bf16.mxu0 0
      %3788 = vmatpush1.bf16.msra.mxu0 0
      %3789 = vmatprep.subr.bf16.mxu0 0
      %3790 = vmatpush1.bf16.msra.mxu0 0
      %3791 = vmatprep.subr.bf16.mxu0 0
      %3792 = vmatpush1.bf16.msra.mxu0 0
      %3793 = vmatprep.subr.bf16.mxu0 0
      %3794 = vmatpush1.bf16.msra.mxu0 0
      %3795 = vmatprep.subr.bf16.mxu0 0
      %3796 = vmatpush1.bf16.msra.mxu0 0
      %3797 = vmatprep.subr.bf16.mxu0 0
      %3798 = vmatpush1.bf16.msra.mxu0 0
      %3799 = vmatprep.subr.bf16.mxu0 0
      %3800 = vmatpush1.bf16.msra.mxu0 0
      %3801 = vmatprep.subr.bf16.mxu0 0
      %3802 = vmatpush1.bf16.msra.mxu0 0
      %3803 = vmatprep.subr.bf16.mxu0 0
      %3804 = vmatpush1.bf16.msra.mxu0 0
      %3805 = vmatprep.subr.bf16.mxu0 0
      %3806 = vmatpush1.bf16.msra.mxu0 0
      %3807 = vmatprep.subr.bf16.mxu0 0
      %3808 = vmatpush1.bf16.msra.mxu0 0
      %3809 = vmatprep.subr.bf16.mxu0 0
      %3810 = vmatpush1.bf16.msra.mxu0 0
      %3811 = vmatprep.mubr.bf16.mxu0 0
      %3812 = vmatmul.mubr.bf16.gmra.mrb[0].mxu0 %v1932
      %v3813 = vpop.f32.mrb[0].mxu0
      %v3814 = vadd.f32 0.0, %v3813
      %v3815 = vpop.f32.mrb[0].mxu0
      %v3816 = vadd.f32 0.0, %v3815
      %v3817 = vpop.f32.mrb[0].mxu0
      %v3818 = vpop.f32.mrb[0].mxu0
      %3819 = vdwg.mxu0
      %3820 = vmatprep.subr.bf16.mxu0 %v1447
      %3821 = vmatpush1.bf16.msra.mxu0 %v1446
      %3822 = vmatprep.subr.bf16.mxu0 %v1591
      %3823 = vmatpush1.bf16.msra.mxu0 %v1590
      %3824 = vmatprep.subr.bf16.mxu0 0
      %3825 = vmatpush1.bf16.msra.mxu0 0
      %3826 = vmatprep.subr.bf16.mxu0 0
      %3827 = vmatpush1.bf16.msra.mxu0 0
      %3828 = vmatprep.subr.bf16.mxu0 0
      %3829 = vmatpush1.bf16.msra.mxu0 0
      %3830 = vmatprep.subr.bf16.mxu0 0
      %3831 = vmatpush1.bf16.msra.mxu0 0
      %3832 = vmatprep.subr.bf16.mxu0 0
      %3833 = vmatpush1.bf16.msra.mxu0 0
      %3834 = vmatprep.subr.bf16.mxu0 0
      %3835 = vmatpush1.bf16.msra.mxu0 0
      %3836 = vmatprep.subr.bf16.mxu0 0
      %3837 = vmatpush1.bf16.msra.mxu0 0
      %3838 = vmatprep.subr.bf16.mxu0 0
      %3839 = vmatpush1.bf16.msra.mxu0 0
      %3840 = vmatprep.subr.bf16.mxu0 0
      %3841 = vmatpush1.bf16.msra.mxu0 0
      %3842 = vmatprep.subr.bf16.mxu0 0
      %3843 = vmatpush1.bf16.msra.mxu0 0
      %3844 = vmatprep.subr.bf16.mxu0 0
      %3845 = vmatpush1.bf16.msra.mxu0 0
      %3846 = vmatprep.subr.bf16.mxu0 0
      %3847 = vmatpush1.bf16.msra.mxu0 0
      %3848 = vmatprep.subr.bf16.mxu0 0
      %3849 = vmatpush1.bf16.msra.mxu0 0
      %3850 = vmatprep.subr.bf16.mxu0 0
      %3851 = vmatpush1.bf16.msra.mxu0 0
      %3852 = vmatprep.mubr.bf16.mxu0 0
      %3853 = vmatmul.mubr.bf16.gmra.mrb[0].mxu0 %v1932
      %v3854 = vpop.f32.mrb[0].mxu0
      %v3855 = vadd.f32 0.0, %v3854
      %v3856 = vpop.f32.mrb[0].mxu0
      %v3857 = vadd.f32 0.0, %v3856
      %v3858 = vpop.f32.mrb[0].mxu0
      %v3859 = vpop.f32.mrb[0].mxu0
      %3860 = vdwg.mxu0
      %3861 = vmatprep.subr.bf16.mxu0 %v1449
      %3862 = vmatpush1.bf16.msra.mxu0 %v1448
      %3863 = vmatprep.subr.bf16.mxu0 %v1593
      %3864 = vmatpush1.bf16.msra.mxu0 %v1592
      %3865 = vmatprep.subr.bf16.mxu0 0
      %3866 = vmatpush1.bf16.msra.mxu0 0
      %3867 = vmatprep.subr.bf16.mxu0 0
      %3868 = vmatpush1.bf16.msra.mxu0 0
      %3869 = vmatprep.subr.bf16.mxu0 0
      %3870 = vmatpush1.bf16.msra.mxu0 0
      %3871 = vmatprep.subr.bf16.mxu0 0
      %3872 = vmatpush1.bf16.msra.mxu0 0
      %3873 = vmatprep.subr.bf16.mxu0 0
      %3874 = vmatpush1.bf16.msra.mxu0 0
      %3875 = vmatprep.subr.bf16.mxu0 0
      %3876 = vmatpush1.bf16.msra.mxu0 0
      %3877 = vmatprep.subr.bf16.mxu0 0
      %3878 = vmatpush1.bf16.msra.mxu0 0
      %3879 = vmatprep.subr.bf16.mxu0 0
      %3880 = vmatpush1.bf16.msra.mxu0 0
      %3881 = vmatprep.subr.bf16.mxu0 0
      %3882 = vmatpush1.bf16.msra.mxu0 0
      %3883 = vmatprep.subr.bf16.mxu0 0
      %3884 = vmatpush1.bf16.msra.mxu0 0
      %3885 = vmatprep.subr.bf16.mxu0 0
      %3886 = vmatpush1.bf16.msra.mxu0 0
      %3887 = vmatprep.subr.bf16.mxu0 0
      %3888 = vmatpush1.bf16.msra.mxu0 0
      %3889 = vmatprep.subr.bf16.mxu0 0
      %3890 = vmatpush1.bf16.msra.mxu0 0
      %3891 = vmatprep.subr.bf16.mxu0 0
      %3892 = vmatpush1.bf16.msra.mxu0 0
      %3893 = vmatprep.mubr.bf16.mxu0 0
      %3894 = vmatmul.mubr.bf16.gmra.mrb[0].mxu0 %v1932
      %v3895 = vpop.f32.mrb[0].mxu0
      %v3896 = vadd.f32 0.0, %v3895
      %v3897 = vpop.f32.mrb[0].mxu0
      %v3898 = vadd.f32 0.0, %v3897
      %v3899 = vpop.f32.mrb[0].mxu0
      %v3900 = vpop.f32.mrb[0].mxu0
      %3901 = vdwg.mxu0
      %3902 = vmatprep.subr.bf16.mxu0 %v1451
      %3903 = vmatpush1.bf16.msra.mxu0 %v1450
      %3904 = vmatprep.subr.bf16.mxu0 %v1595
      %3905 = vmatpush1.bf16.msra.mxu0 %v1594
      %3906 = vmatprep.subr.bf16.mxu0 0
      %3907 = vmatpush1.bf16.msra.mxu0 0
      %3908 = vmatprep.subr.bf16.mxu0 0
      %3909 = vmatpush1.bf16.msra.mxu0 0
      %3910 = vmatprep.subr.bf16.mxu0 0
      %3911 = vmatpush1.bf16.msra.mxu0 0
      %3912 = vmatprep.subr.bf16.mxu0 0
      %3913 = vmatpush1.bf16.msra.mxu0 0
      %3914 = vmatprep.subr.bf16.mxu0 0
      %3915 = vmatpush1.bf16.msra.mxu0 0
      %3916 = vmatprep.subr.bf16.mxu0 0
      %3917 = vmatpush1.bf16.msra.mxu0 0
      %3918 = vmatprep.subr.bf16.mxu0 0
      %3919 = vmatpush1.bf16.msra.mxu0 0
      %3920 = vmatprep.subr.bf16.mxu0 0
      %3921 = vmatpush1.bf16.msra.mxu0 0
      %3922 = vmatprep.subr.bf16.mxu0 0
      %3923 = vmatpush1.bf16.msra.mxu0 0
      %3924 = vmatprep.subr.bf16.mxu0 0
      %3925 = vmatpush1.bf16.msra.mxu0 0
      %3926 = vmatprep.subr.bf16.mxu0 0
      %3927 = vmatpush1.bf16.msra.mxu0 0
      %3928 = vmatprep.subr.bf16.mxu0 0
      %3929 = vmatpush1.bf16.msra.mxu0 0
      %3930 = vmatprep.subr.bf16.mxu0 0
      %3931 = vmatpush1.bf16.msra.mxu0 0
      %3932 = vmatprep.subr.bf16.mxu0 0
      %3933 = vmatpush1.bf16.msra.mxu0 0
      %3934 = vmatprep.mubr.bf16.mxu0 0
      %3935 = vmatmul.mubr.bf16.gmra.mrb[0].mxu0 %v1932
      %v3936 = vpop.f32.mrb[0].mxu0
      %v3937 = vadd.f32 0.0, %v3936
      %v3938 = vpop.f32.mrb[0].mxu0
      %v3939 = vadd.f32 0.0, %v3938
      %v3940 = vpop.f32.mrb[0].mxu0
      %v3941 = vpop.f32.mrb[0].mxu0
      %3942 = vdwg.mxu0
      %3943 = vmatprep.subr.bf16.mxu0 %v1453
      %3944 = vmatpush1.bf16.msra.mxu0 %v1452
      %3945 = vmatprep.subr.bf16.mxu0 %v1597
      %3946 = vmatpush1.bf16.msra.mxu0 %v1596
      %3947 = vmatprep.subr.bf16.mxu0 0
      %3948 = vmatpush1.bf16.msra.mxu0 0
      %3949 = vmatprep.subr.bf16.mxu0 0
      %3950 = vmatpush1.bf16.msra.mxu0 0
      %3951 = vmatprep.subr.bf16.mxu0 0
      %3952 = vmatpush1.bf16.msra.mxu0 0
      %3953 = vmatprep.subr.bf16.mxu0 0
      %3954 = vmatpush1.bf16.msra.mxu0 0
      %3955 = vmatprep.subr.bf16.mxu0 0
      %3956 = vmatpush1.bf16.msra.mxu0 0
      %3957 = vmatprep.subr.bf16.mxu0 0
      %3958 = vmatpush1.bf16.msra.mxu0 0
      %3959 = vmatprep.subr.bf16.mxu0 0
      %3960 = vmatpush1.bf16.msra.mxu0 0
      %3961 = vmatprep.subr.bf16.mxu0 0
      %3962 = vmatpush1.bf16.msra.mxu0 0
      %3963 = vmatprep.subr.bf16.mxu0 0
      %3964 = vmatpush1.bf16.msra.mxu0 0
      %3965 = vmatprep.subr.bf16.mxu0 0
      %3966 = vmatpush1.bf16.msra.mxu0 0
      %3967 = vmatprep.subr.bf16.mxu0 0
      %3968 = vmatpush1.bf16.msra.mxu0 0
      %3969 = vmatprep.subr.bf16.mxu0 0
      %3970 = vmatpush1.bf16.msra.mxu0 0
      %3971 = vmatprep.subr.bf16.mxu0 0
      %3972 = vmatpush1.bf16.msra.mxu0 0
      %3973 = vmatprep.subr.bf16.mxu0 0
      %3974 = vmatpush1.bf16.msra.mxu0 0
      %3975 = vmatprep.mubr.bf16.mxu0 0
      %3976 = vmatmul.mubr.bf16.gmra.mrb[0].mxu0 %v1932
      %v3977 = vpop.f32.mrb[0].mxu0
      %v3978 = vadd.f32 0.0, %v3977
      %v3979 = vpop.f32.mrb[0].mxu0
      %v3980 = vadd.f32 0.0, %v3979
      %v3981 = vpop.f32.mrb[0].mxu0
      %v3982 = vpop.f32.mrb[0].mxu0
      %3983 = vdwg.mxu0
      %3984 = vmatprep.subr.bf16.mxu0 %v1455
      %3985 = vmatpush1.bf16.msra.mxu0 %v1454
      %3986 = vmatprep.subr.bf16.mxu0 %v1599
      %3987 = vmatpush1.bf16.msra.mxu0 %v1598
      %3988 = vmatprep.subr.bf16.mxu0 0
      %3989 = vmatpush1.bf16.msra.mxu0 0
      %3990 = vmatprep.subr.bf16.mxu0 0
      %3991 = vmatpush1.bf16.msra.mxu0 0
      %3992 = vmatprep.subr.bf16.mxu0 0
      %3993 = vmatpush1.bf16.msra.mxu0 0
      %3994 = vmatprep.subr.bf16.mxu0 0
      %3995 = vmatpush1.bf16.msra.mxu0 0
      %3996 = vmatprep.subr.bf16.mxu0 0
      %3997 = vmatpush1.bf16.msra.mxu0 0
      %3998 = vmatprep.subr.bf16.mxu0 0
      %3999 = vmatpush1.bf16.msra.mxu0 0
      %4000 = vmatprep.subr.bf16.mxu0 0
      %4001 = vmatpush1.bf16.msra.mxu0 0
      %4002 = vmatprep.subr.bf16.mxu0 0
      %4003 = vmatpush1.bf16.msra.mxu0 0
      %4004 = vmatprep.subr.bf16.mxu0 0
      %4005 = vmatpush1.bf16.msra.mxu0 0
      %4006 = vmatprep.subr.bf16.mxu0 0
      %4007 = vmatpush1.bf16.msra.mxu0 0
      %4008 = vmatprep.subr.bf16.mxu0 0
      %4009 = vmatpush1.bf16.msra.mxu0 0
      %4010 = vmatprep.subr.bf16.mxu0 0
      %4011 = vmatpush1.bf16.msra.mxu0 0
      %4012 = vmatprep.subr.bf16.mxu0 0
      %4013 = vmatpush1.bf16.msra.mxu0 0
      %4014 = vmatprep.subr.bf16.mxu0 0
      %4015 = vmatpush1.bf16.msra.mxu0 0
      %4016 = vmatprep.mubr.bf16.mxu0 0
      %4017 = vmatmul.mubr.bf16.gmra.mrb[0].mxu0 %v1932
      %v4018 = vpop.f32.mrb[0].mxu0
      %v4019 = vadd.f32 0.0, %v4018
      %v4020 = vpop.f32.mrb[0].mxu0
      %v4021 = vadd.f32 0.0, %v4020
      %v4022 = vpop.f32.mrb[0].mxu0
      %v4023 = vpop.f32.mrb[0].mxu0
      %4024 = vdwg.mxu0
      %4025 = vmatprep.subr.bf16.mxu0 %v1457
      %4026 = vmatpush1.bf16.msra.mxu0 %v1456
      %4027 = vmatprep.subr.bf16.mxu0 %v1601
      %4028 = vmatpush1.bf16.msra.mxu0 %v1600
      %4029 = vmatprep.subr.bf16.mxu0 0
      %4030 = vmatpush1.bf16.msra.mxu0 0
      %4031 = vmatprep.subr.bf16.mxu0 0
      %4032 = vmatpush1.bf16.msra.mxu0 0
      %4033 = vmatprep.subr.bf16.mxu0 0
      %4034 = vmatpush1.bf16.msra.mxu0 0
      %4035 = vmatprep.subr.bf16.mxu0 0
      %4036 = vmatpush1.bf16.msra.mxu0 0
      %4037 = vmatprep.subr.bf16.mxu0 0
      %4038 = vmatpush1.bf16.msra.mxu0 0
      %4039 = vmatprep.subr.bf16.mxu0 0
      %4040 = vmatpush1.bf16.msra.mxu0 0
      %4041 = vmatprep.subr.bf16.mxu0 0
      %4042 = vmatpush1.bf16.msra.mxu0 0
      %4043 = vmatprep.subr.bf16.mxu0 0
      %4044 = vmatpush1.bf16.msra.mxu0 0
      %4045 = vmatprep.subr.bf16.mxu0 0
      %4046 = vmatpush1.bf16.msra.mxu0 0
      %4047 = vmatprep.subr.bf16.mxu0 0
      %4048 = vmatpush1.bf16.msra.mxu0 0
      %4049 = vmatprep.subr.bf16.mxu0 0
      %4050 = vmatpush1.bf16.msra.mxu0 0
      %4051 = vmatprep.subr.bf16.mxu0 0
      %4052 = vmatpush1.bf16.msra.mxu0 0
      %4053 = vmatprep.subr.bf16.mxu0 0
      %4054 = vmatpush1.bf16.msra.mxu0 0
      %4055 = vmatprep.subr.bf16.mxu0 0
      %4056 = vmatpush1.bf16.msra.mxu0 0
      %4057 = vmatprep.mubr.bf16.mxu0 0
      %4058 = vmatmul.mubr.bf16.gmra.mrb[0].mxu0 %v1932
      %v4059 = vpop.f32.mrb[0].mxu0
      %v4060 = vadd.f32 0.0, %v4059
      %v4061 = vpop.f32.mrb[0].mxu0
      %v4062 = vadd.f32 0.0, %v4061
      %v4063 = vpop.f32.mrb[0].mxu0
      %v4064 = vpop.f32.mrb[0].mxu0
      %4065 = vdwg.mxu0
      %4066 = vmatprep.subr.bf16.mxu0 %v1459
      %4067 = vmatpush1.bf16.msra.mxu0 %v1458
      %4068 = vmatprep.subr.bf16.mxu0 %v1603
      %4069 = vmatpush1.bf16.msra.mxu0 %v1602
      %4070 = vmatprep.subr.bf16.mxu0 0
      %4071 = vmatpush1.bf16.msra.mxu0 0
      %4072 = vmatprep.subr.bf16.mxu0 0
      %4073 = vmatpush1.bf16.msra.mxu0 0
      %4074 = vmatprep.subr.bf16.mxu0 0
      %4075 = vmatpush1.bf16.msra.mxu0 0
      %4076 = vmatprep.subr.bf16.mxu0 0
      %4077 = vmatpush1.bf16.msra.mxu0 0
      %4078 = vmatprep.subr.bf16.mxu0 0
      %4079 = vmatpush1.bf16.msra.mxu0 0
      %4080 = vmatprep.subr.bf16.mxu0 0
      %4081 = vmatpush1.bf16.msra.mxu0 0
      %4082 = vmatprep.subr.bf16.mxu0 0
      %4083 = vmatpush1.bf16.msra.mxu0 0
      %4084 = vmatprep.subr.bf16.mxu0 0
      %4085 = vmatpush1.bf16.msra.mxu0 0
      %4086 = vmatprep.subr.bf16.mxu0 0
      %4087 = vmatpush1.bf16.msra.mxu0 0
      %4088 = vmatprep.subr.bf16.mxu0 0
      %4089 = vmatpush1.bf16.msra.mxu0 0
      %4090 = vmatprep.subr.bf16.mxu0 0
      %4091 = vmatpush1.bf16.msra.mxu0 0
      %4092 = vmatprep.subr.bf16.mxu0 0
      %4093 = vmatpush1.bf16.msra.mxu0 0
      %4094 = vmatprep.subr.bf16.mxu0 0
      %4095 = vmatpush1.bf16.msra.mxu0 0
      %4096 = vmatprep.subr.bf16.mxu0 0
      %4097 = vmatpush1.bf16.msra.mxu0 0
      %4098 = vmatprep.mubr.bf16.mxu0 0
      %4099 = vmatmul.mubr.bf16.gmra.mrb[0].mxu0 %v1932
      %v4100 = vpop.f32.mrb[0].mxu0
      %v4101 = vadd.f32 0.0, %v4100
      %v4102 = vpop.f32.mrb[0].mxu0
      %v4103 = vadd.f32 0.0, %v4102
      %v4104 = vpop.f32.mrb[0].mxu0
      %v4105 = vpop.f32.mrb[0].mxu0
      %4106 = vdwg.mxu0
      %4107 = vmatprep.subr.bf16.mxu0 %v1461
      %4108 = vmatpush1.bf16.msra.mxu0 %v1460
      %4109 = vmatprep.subr.bf16.mxu0 %v1605
      %4110 = vmatpush1.bf16.msra.mxu0 %v1604
      %4111 = vmatprep.subr.bf16.mxu0 0
      %4112 = vmatpush1.bf16.msra.mxu0 0
      %4113 = vmatprep.subr.bf16.mxu0 0
      %4114 = vmatpush1.bf16.msra.mxu0 0
      %4115 = vmatprep.subr.bf16.mxu0 0
      %4116 = vmatpush1.bf16.msra.mxu0 0
      %4117 = vmatprep.subr.bf16.mxu0 0
      %4118 = vmatpush1.bf16.msra.mxu0 0
      %4119 = vmatprep.subr.bf16.mxu0 0
      %4120 = vmatpush1.bf16.msra.mxu0 0
      %4121 = vmatprep.subr.bf16.mxu0 0
      %4122 = vmatpush1.bf16.msra.mxu0 0
      %4123 = vmatprep.subr.bf16.mxu0 0
      %4124 = vmatpush1.bf16.msra.mxu0 0
      %4125 = vmatprep.subr.bf16.mxu0 0
      %4126 = vmatpush1.bf16.msra.mxu0 0
      %4127 = vmatprep.subr.bf16.mxu0 0
      %4128 = vmatpush1.bf16.msra.mxu0 0
      %4129 = vmatprep.subr.bf16.mxu0 0
      %4130 = vmatpush1.bf16.msra.mxu0 0
      %4131 = vmatprep.subr.bf16.mxu0 0
      %4132 = vmatpush1.bf16.msra.mxu0 0
      %4133 = vmatprep.subr.bf16.mxu0 0
      %4134 = vmatpush1.bf16.msra.mxu0 0
      %4135 = vmatprep.subr.bf16.mxu0 0
      %4136 = vmatpush1.bf16.msra.mxu0 0
      %4137 = vmatprep.subr.bf16.mxu0 0
      %4138 = vmatpush1.bf16.msra.mxu0 0
      %4139 = vmatprep.mubr.bf16.mxu0 0
      %4140 = vmatmul.mubr.bf16.gmra.mrb[0].mxu0 %v1932
      %v4141 = vpop.f32.mrb[0].mxu0
      %v4142 = vadd.f32 0.0, %v4141
      %v4143 = vpop.f32.mrb[0].mxu0
      %v4144 = vadd.f32 0.0, %v4143
      %v4145 = vpop.f32.mrb[0].mxu0
      %v4146 = vpop.f32.mrb[0].mxu0
      %4147 = vdwg.mxu0
      %4148 = vmatprep.subr.bf16.mxu0 %v1463
      %4149 = vmatpush1.bf16.msra.mxu0 %v1462
      %4150 = vmatprep.subr.bf16.mxu0 %v1607
      %4151 = vmatpush1.bf16.msra.mxu0 %v1606
      %4152 = vmatprep.subr.bf16.mxu0 0
      %4153 = vmatpush1.bf16.msra.mxu0 0
      %4154 = vmatprep.subr.bf16.mxu0 0
      %4155 = vmatpush1.bf16.msra.mxu0 0
      %4156 = vmatprep.subr.bf16.mxu0 0
      %4157 = vmatpush1.bf16.msra.mxu0 0
      %4158 = vmatprep.subr.bf16.mxu0 0
      %4159 = vmatpush1.bf16.msra.mxu0 0
      %4160 = vmatprep.subr.bf16.mxu0 0
      %4161 = vmatpush1.bf16.msra.mxu0 0
      %4162 = vmatprep.subr.bf16.mxu0 0
      %4163 = vmatpush1.bf16.msra.mxu0 0
      %4164 = vmatprep.subr.bf16.mxu0 0
      %4165 = vmatpush1.bf16.msra.mxu0 0
      %4166 = vmatprep.subr.bf16.mxu0 0
      %4167 = vmatpush1.bf16.msra.mxu0 0
      %4168 = vmatprep.subr.bf16.mxu0 0
      %4169 = vmatpush1.bf16.msra.mxu0 0
      %4170 = vmatprep.subr.bf16.mxu0 0
      %4171 = vmatpush1.bf16.msra.mxu0 0
      %4172 = vmatprep.subr.bf16.mxu0 0
      %4173 = vmatpush1.bf16.msra.mxu0 0
      %4174 = vmatprep.subr.bf16.mxu0 0
      %4175 = vmatpush1.bf16.msra.mxu0 0
      %4176 = vmatprep.subr.bf16.mxu0 0
      %4177 = vmatpush1.bf16.msra.mxu0 0
      %4178 = vmatprep.subr.bf16.mxu0 0
      %4179 = vmatpush1.bf16.msra.mxu0 0
      %4180 = vmatprep.mubr.bf16.mxu0 0
      %4181 = vmatmul.mubr.bf16.gmra.mrb[0].mxu0 %v1932
      %v4182 = vpop.f32.mrb[0].mxu0
      %v4183 = vadd.f32 0.0, %v4182
      %v4184 = vpop.f32.mrb[0].mxu0
      %v4185 = vadd.f32 0.0, %v4184
      %v4186 = vpop.f32.mrb[0].mxu0
      %v4187 = vpop.f32.mrb[0].mxu0
      %4188 = vdwg.mxu0
      %4189 = vmatprep.subr.bf16.mxu0 %v1465
      %4190 = vmatpush1.bf16.msra.mxu0 %v1464
      %4191 = vmatprep.subr.bf16.mxu0 %v1609
      %4192 = vmatpush1.bf16.msra.mxu0 %v1608
      %4193 = vmatprep.subr.bf16.mxu0 0
      %4194 = vmatpush1.bf16.msra.mxu0 0
      %4195 = vmatprep.subr.bf16.mxu0 0
      %4196 = vmatpush1.bf16.msra.mxu0 0
      %4197 = vmatprep.subr.bf16.mxu0 0
      %4198 = vmatpush1.bf16.msra.mxu0 0
      %4199 = vmatprep.subr.bf16.mxu0 0
      %4200 = vmatpush1.bf16.msra.mxu0 0
      %4201 = vmatprep.subr.bf16.mxu0 0
      %4202 = vmatpush1.bf16.msra.mxu0 0
      %4203 = vmatprep.subr.bf16.mxu0 0
      %4204 = vmatpush1.bf16.msra.mxu0 0
      %4205 = vmatprep.subr.bf16.mxu0 0
      %4206 = vmatpush1.bf16.msra.mxu0 0
      %4207 = vmatprep.subr.bf16.mxu0 0
      %4208 = vmatpush1.bf16.msra.mxu0 0
      %4209 = vmatprep.subr.bf16.mxu0 0
      %4210 = vmatpush1.bf16.msra.mxu0 0
      %4211 = vmatprep.subr.bf16.mxu0 0
      %4212 = vmatpush1.bf16.msra.mxu0 0
      %4213 = vmatprep.subr.bf16.mxu0 0
      %4214 = vmatpush1.bf16.msra.mxu0 0
      %4215 = vmatprep.subr.bf16.mxu0 0
      %4216 = vmatpush1.bf16.msra.mxu0 0
      %4217 = vmatprep.subr.bf16.mxu0 0
      %4218 = vmatpush1.bf16.msra.mxu0 0
      %4219 = vmatprep.subr.bf16.mxu0 0
      %4220 = vmatpush1.bf16.msra.mxu0 0
      %4221 = vmatprep.mubr.bf16.mxu0 0
      %4222 = vmatmul.mubr.bf16.gmra.mrb[0].mxu0 %v1932
      %v4223 = vpop.f32.mrb[0].mxu0
      %v4224 = vadd.f32 0.0, %v4223
      %v4225 = vpop.f32.mrb[0].mxu0
      %v4226 = vadd.f32 0.0, %v4225
      %v4227 = vpop.f32.mrb[0].mxu0
      %v4228 = vpop.f32.mrb[0].mxu0
      %4229 = vdwg.mxu0
      %4230 = vmatprep.subr.bf16.mxu0 %v1467
      %4231 = vmatpush1.bf16.msra.mxu0 %v1466
      %4232 = vmatprep.subr.bf16.mxu0 %v1611
      %4233 = vmatpush1.bf16.msra.mxu0 %v1610
      %4234 = vmatprep.subr.bf16.mxu0 0
      %4235 = vmatpush1.bf16.msra.mxu0 0
      %4236 = vmatprep.subr.bf16.mxu0 0
      %4237 = vmatpush1.bf16.msra.mxu0 0
      %4238 = vmatprep.subr.bf16.mxu0 0
      %4239 = vmatpush1.bf16.msra.mxu0 0
      %4240 = vmatprep.subr.bf16.mxu0 0
      %4241 = vmatpush1.bf16.msra.mxu0 0
      %4242 = vmatprep.subr.bf16.mxu0 0
      %4243 = vmatpush1.bf16.msra.mxu0 0
      %4244 = vmatprep.subr.bf16.mxu0 0
      %4245 = vmatpush1.bf16.msra.mxu0 0
      %4246 = vmatprep.subr.bf16.mxu0 0
      %4247 = vmatpush1.bf16.msra.mxu0 0
      %4248 = vmatprep.subr.bf16.mxu0 0
      %4249 = vmatpush1.bf16.msra.mxu0 0
      %4250 = vmatprep.subr.bf16.mxu0 0
      %4251 = vmatpush1.bf16.msra.mxu0 0
      %4252 = vmatprep.subr.bf16.mxu0 0
      %4253 = vmatpush1.bf16.msra.mxu0 0
      %4254 = vmatprep.subr.bf16.mxu0 0
      %4255 = vmatpush1.bf16.msra.mxu0 0
      %4256 = vmatprep.subr.bf16.mxu0 0
      %4257 = vmatpush1.bf16.msra.mxu0 0
      %4258 = vmatprep.subr.bf16.mxu0 0
      %4259 = vmatpush1.bf16.msra.mxu0 0
      %4260 = vmatprep.subr.bf16.mxu0 0
      %4261 = vmatpush1.bf16.msra.mxu0 0
      %4262 = vmatprep.mubr.bf16.mxu0 0
      %4263 = vmatmul.mubr.bf16.gmra.mrb[0].mxu0 %v1932
      %v4264 = vpop.f32.mrb[0].mxu0
      %v4265 = vadd.f32 0.0, %v4264
      %v4266 = vpop.f32.mrb[0].mxu0
      %v4267 = vadd.f32 0.0, %v4266
      %v4268 = vpop.f32.mrb[0].mxu0
      %v4269 = vpop.f32.mrb[0].mxu0
      %4270 = vdwg.mxu0
      %4271 = vmatprep.subr.bf16.mxu0 %v1469
      %4272 = vmatpush1.bf16.msra.mxu0 %v1468
      %4273 = vmatprep.subr.bf16.mxu0 %v1613
      %4274 = vmatpush1.bf16.msra.mxu0 %v1612
      %4275 = vmatprep.subr.bf16.mxu0 0
      %4276 = vmatpush1.bf16.msra.mxu0 0
      %4277 = vmatprep.subr.bf16.mxu0 0
      %4278 = vmatpush1.bf16.msra.mxu0 0
      %4279 = vmatprep.subr.bf16.mxu0 0
      %4280 = vmatpush1.bf16.msra.mxu0 0
      %4281 = vmatprep.subr.bf16.mxu0 0
      %4282 = vmatpush1.bf16.msra.mxu0 0
      %4283 = vmatprep.subr.bf16.mxu0 0
      %4284 = vmatpush1.bf16.msra.mxu0 0
      %4285 = vmatprep.subr.bf16.mxu0 0
      %4286 = vmatpush1.bf16.msra.mxu0 0
      %4287 = vmatprep.subr.bf16.mxu0 0
      %4288 = vmatpush1.bf16.msra.mxu0 0
      %4289 = vmatprep.subr.bf16.mxu0 0
      %4290 = vmatpush1.bf16.msra.mxu0 0
      %4291 = vmatprep.subr.bf16.mxu0 0
      %4292 = vmatpush1.bf16.msra.mxu0 0
      %4293 = vmatprep.subr.bf16.mxu0 0
      %4294 = vmatpush1.bf16.msra.mxu0 0
      %4295 = vmatprep.subr.bf16.mxu0 0
      %4296 = vmatpush1.bf16.msra.mxu0 0
      %4297 = vmatprep.subr.bf16.mxu0 0
      %4298 = vmatpush1.bf16.msra.mxu0 0
      %4299 = vmatprep.subr.bf16.mxu0 0
      %4300 = vmatpush1.bf16.msra.mxu0 0
      %4301 = vmatprep.subr.bf16.mxu0 0
      %4302 = vmatpush1.bf16.msra.mxu0 0
      %4303 = vmatprep.mubr.bf16.mxu0 0
      %4304 = vmatmul.mubr.bf16.gmra.mrb[0].mxu0 %v1932
      %v4305 = vpop.f32.mrb[0].mxu0
      %v4306 = vadd.f32 0.0, %v4305
      %v4307 = vpop.f32.mrb[0].mxu0
      %v4308 = vadd.f32 0.0, %v4307
      %v4309 = vpop.f32.mrb[0].mxu0
      %v4310 = vpop.f32.mrb[0].mxu0
      %4311 = vdwg.mxu0
      %4312 = vmatprep.subr.bf16.mxu0 %v1471
      %4313 = vmatpush1.bf16.msra.mxu0 %v1470
      %4314 = vmatprep.subr.bf16.mxu0 %v1615
      %4315 = vmatpush1.bf16.msra.mxu0 %v1614
      %4316 = vmatprep.subr.bf16.mxu0 0
      %4317 = vmatpush1.bf16.msra.mxu0 0
      %4318 = vmatprep.subr.bf16.mxu0 0
      %4319 = vmatpush1.bf16.msra.mxu0 0
      %4320 = vmatprep.subr.bf16.mxu0 0
      %4321 = vmatpush1.bf16.msra.mxu0 0
      %4322 = vmatprep.subr.bf16.mxu0 0
      %4323 = vmatpush1.bf16.msra.mxu0 0
      %4324 = vmatprep.subr.bf16.mxu0 0
      %4325 = vmatpush1.bf16.msra.mxu0 0
      %4326 = vmatprep.subr.bf16.mxu0 0
      %4327 = vmatpush1.bf16.msra.mxu0 0
      %4328 = vmatprep.subr.bf16.mxu0 0
      %4329 = vmatpush1.bf16.msra.mxu0 0
      %4330 = vmatprep.subr.bf16.mxu0 0
      %4331 = vmatpush1.bf16.msra.mxu0 0
      %4332 = vmatprep.subr.bf16.mxu0 0
      %4333 = vmatpush1.bf16.msra.mxu0 0
      %4334 = vmatprep.subr.bf16.mxu0 0
      %4335 = vmatpush1.bf16.msra.mxu0 0
      %4336 = vmatprep.subr.bf16.mxu0 0
      %4337 = vmatpush1.bf16.msra.mxu0 0
      %4338 = vmatprep.subr.bf16.mxu0 0
      %4339 = vmatpush1.bf16.msra.mxu0 0
      %4340 = vmatprep.subr.bf16.mxu0 0
      %4341 = vmatpush1.bf16.msra.mxu0 0
      %4342 = vmatprep.subr.bf16.mxu0 0
      %4343 = vmatpush1.bf16.msra.mxu0 0
      %4344 = vmatprep.mubr.bf16.mxu0 0
      %4345 = vmatmul.mubr.bf16.gmra.mrb[0].mxu0 %v1932
      %v4346 = vpop.f32.mrb[0].mxu0
      %v4347 = vadd.f32 0.0, %v4346
      %v4348 = vpop.f32.mrb[0].mxu0
      %v4349 = vadd.f32 0.0, %v4348
      %v4350 = vpop.f32.mrb[0].mxu0
      %v4351 = vpop.f32.mrb[0].mxu0
      %4352 = vdwg.mxu0
      %4353 = vmatprep.subr.bf16.mxu0 %v1473
      %4354 = vmatpush1.bf16.msra.mxu0 %v1472
      %4355 = vmatprep.subr.bf16.mxu0 %v1617
      %4356 = vmatpush1.bf16.msra.mxu0 %v1616
      %4357 = vmatprep.subr.bf16.mxu0 0
      %4358 = vmatpush1.bf16.msra.mxu0 0
      %4359 = vmatprep.subr.bf16.mxu0 0
      %4360 = vmatpush1.bf16.msra.mxu0 0
      %4361 = vmatprep.subr.bf16.mxu0 0
      %4362 = vmatpush1.bf16.msra.mxu0 0
      %4363 = vmatprep.subr.bf16.mxu0 0
      %4364 = vmatpush1.bf16.msra.mxu0 0
      %4365 = vmatprep.subr.bf16.mxu0 0
      %4366 = vmatpush1.bf16.msra.mxu0 0
      %4367 = vmatprep.subr.bf16.mxu0 0
      %4368 = vmatpush1.bf16.msra.mxu0 0
      %4369 = vmatprep.subr.bf16.mxu0 0
      %4370 = vmatpush1.bf16.msra.mxu0 0
      %4371 = vmatprep.subr.bf16.mxu0 0
      %4372 = vmatpush1.bf16.msra.mxu0 0
      %4373 = vmatprep.subr.bf16.mxu0 0
      %4374 = vmatpush1.bf16.msra.mxu0 0
      %4375 = vmatprep.subr.bf16.mxu0 0
      %4376 = vmatpush1.bf16.msra.mxu0 0
      %4377 = vmatprep.subr.bf16.mxu0 0
      %4378 = vmatpush1.bf16.msra.mxu0 0
      %4379 = vmatprep.subr.bf16.mxu0 0
      %4380 = vmatpush1.bf16.msra.mxu0 0
      %4381 = vmatprep.subr.bf16.mxu0 0
      %4382 = vmatpush1.bf16.msra.mxu0 0
      %4383 = vmatprep.subr.bf16.mxu0 0
      %4384 = vmatpush1.bf16.msra.mxu0 0
      %4385 = vmatprep.mubr.bf16.mxu0 0
      %4386 = vmatmul.mubr.bf16.gmra.mrb[0].mxu0 %v1932
      %v4387 = vpop.f32.mrb[0].mxu0
      %v4388 = vadd.f32 0.0, %v4387
      %v4389 = vpop.f32.mrb[0].mxu0
      %v4390 = vadd.f32 0.0, %v4389
      %v4391 = vpop.f32.mrb[0].mxu0
      %v4392 = vpop.f32.mrb[0].mxu0
      %4393 = vdwg.mxu0
      %4394 = vmatprep.subr.bf16.mxu0 %v1475
      %4395 = vmatpush1.bf16.msra.mxu0 %v1474
      %4396 = vmatprep.subr.bf16.mxu0 %v1619
      %4397 = vmatpush1.bf16.msra.mxu0 %v1618
      %4398 = vmatprep.subr.bf16.mxu0 0
      %4399 = vmatpush1.bf16.msra.mxu0 0
      %4400 = vmatprep.subr.bf16.mxu0 0
      %4401 = vmatpush1.bf16.msra.mxu0 0
      %4402 = vmatprep.subr.bf16.mxu0 0
      %4403 = vmatpush1.bf16.msra.mxu0 0
      %4404 = vmatprep.subr.bf16.mxu0 0
      %4405 = vmatpush1.bf16.msra.mxu0 0
      %4406 = vmatprep.subr.bf16.mxu0 0
      %4407 = vmatpush1.bf16.msra.mxu0 0
      %4408 = vmatprep.subr.bf16.mxu0 0
      %4409 = vmatpush1.bf16.msra.mxu0 0
      %4410 = vmatprep.subr.bf16.mxu0 0
      %4411 = vmatpush1.bf16.msra.mxu0 0
      %4412 = vmatprep.subr.bf16.mxu0 0
      %4413 = vmatpush1.bf16.msra.mxu0 0
      %4414 = vmatprep.subr.bf16.mxu0 0
      %4415 = vmatpush1.bf16.msra.mxu0 0
      %4416 = vmatprep.subr.bf16.mxu0 0
      %4417 = vmatpush1.bf16.msra.mxu0 0
      %4418 = vmatprep.subr.bf16.mxu0 0
      %4419 = vmatpush1.bf16.msra.mxu0 0
      %4420 = vmatprep.subr.bf16.mxu0 0
      %4421 = vmatpush1.bf16.msra.mxu0 0
      %4422 = vmatprep.subr.bf16.mxu0 0
      %4423 = vmatpush1.bf16.msra.mxu0 0
      %4424 = vmatprep.subr.bf16.mxu0 0
      %4425 = vmatpush1.bf16.msra.mxu0 0
      %4426 = vmatprep.mubr.bf16.mxu0 0
      %4427 = vmatmul.mubr.bf16.gmra.mrb[0].mxu0 %v1932
      %v4428 = vpop.f32.mrb[0].mxu0
      %v4429 = vadd.f32 0.0, %v4428
      %v4430 = vpop.f32.mrb[0].mxu0
      %v4431 = vadd.f32 0.0, %v4430
      %v4432 = vpop.f32.mrb[0].mxu0
      %v4433 = vpop.f32.mrb[0].mxu0
      %4434 = vdwg.mxu0
      %4435 = vmatprep.subr.bf16.mxu0 %v1477
      %4436 = vmatpush1.bf16.msra.mxu0 %v1476
      %4437 = vmatprep.subr.bf16.mxu0 %v1621
      %4438 = vmatpush1.bf16.msra.mxu0 %v1620
      %4439 = vmatprep.subr.bf16.mxu0 0
      %4440 = vmatpush1.bf16.msra.mxu0 0
      %4441 = vmatprep.subr.bf16.mxu0 0
      %4442 = vmatpush1.bf16.msra.mxu0 0
      %4443 = vmatprep.subr.bf16.mxu0 0
      %4444 = vmatpush1.bf16.msra.mxu0 0
      %4445 = vmatprep.subr.bf16.mxu0 0
      %4446 = vmatpush1.bf16.msra.mxu0 0
      %4447 = vmatprep.subr.bf16.mxu0 0
      %4448 = vmatpush1.bf16.msra.mxu0 0
      %4449 = vmatprep.subr.bf16.mxu0 0
      %4450 = vmatpush1.bf16.msra.mxu0 0
      %4451 = vmatprep.subr.bf16.mxu0 0
      %4452 = vmatpush1.bf16.msra.mxu0 0
      %4453 = vmatprep.subr.bf16.mxu0 0
      %4454 = vmatpush1.bf16.msra.mxu0 0
      %4455 = vmatprep.subr.bf16.mxu0 0
      %4456 = vmatpush1.bf16.msra.mxu0 0
      %4457 = vmatprep.subr.bf16.mxu0 0
      %4458 = vmatpush1.bf16.msra.mxu0 0
      %4459 = vmatprep.subr.bf16.mxu0 0
      %4460 = vmatpush1.bf16.msra.mxu0 0
      %4461 = vmatprep.subr.bf16.mxu0 0
      %4462 = vmatpush1.bf16.msra.mxu0 0
      %4463 = vmatprep.subr.bf16.mxu0 0
      %4464 = vmatpush1.bf16.msra.mxu0 0
      %4465 = vmatprep.subr.bf16.mxu0 0
      %4466 = vmatpush1.bf16.msra.mxu0 0
      %4467 = vmatprep.mubr.bf16.mxu0 0
      %4468 = vmatmul.mubr.bf16.gmra.mrb[0].mxu0 %v1932
      %v4469 = vpop.f32.mrb[0].mxu0
      %v4470 = vadd.f32 0.0, %v4469
      %v4471 = vpop.f32.mrb[0].mxu0
      %v4472 = vadd.f32 0.0, %v4471
      %v4473 = vpop.f32.mrb[0].mxu0
      %v4474 = vpop.f32.mrb[0].mxu0
      %4475 = vdwg.mxu0
      %4476 = vmatprep.subr.bf16.mxu0 %v1479
      %4477 = vmatpush1.bf16.msra.mxu0 %v1478
      %4478 = vmatprep.subr.bf16.mxu0 %v1623
      %4479 = vmatpush1.bf16.msra.mxu0 %v1622
      %4480 = vmatprep.subr.bf16.mxu0 0
      %4481 = vmatpush1.bf16.msra.mxu0 0
      %4482 = vmatprep.subr.bf16.mxu0 0
      %4483 = vmatpush1.bf16.msra.mxu0 0
      %4484 = vmatprep.subr.bf16.mxu0 0
      %4485 = vmatpush1.bf16.msra.mxu0 0
      %4486 = vmatprep.subr.bf16.mxu0 0
      %4487 = vmatpush1.bf16.msra.mxu0 0
      %4488 = vmatprep.subr.bf16.mxu0 0
      %4489 = vmatpush1.bf16.msra.mxu0 0
      %4490 = vmatprep.subr.bf16.mxu0 0
      %4491 = vmatpush1.bf16.msra.mxu0 0
      %4492 = vmatprep.subr.bf16.mxu0 0
      %4493 = vmatpush1.bf16.msra.mxu0 0
      %4494 = vmatprep.subr.bf16.mxu0 0
      %4495 = vmatpush1.bf16.msra.mxu0 0
      %4496 = vmatprep.subr.bf16.mxu0 0
      %4497 = vmatpush1.bf16.msra.mxu0 0
      %4498 = vmatprep.subr.bf16.mxu0 0
      %4499 = vmatpush1.bf16.msra.mxu0 0
      %4500 = vmatprep.subr.bf16.mxu0 0
      %4501 = vmatpush1.bf16.msra.mxu0 0
      %4502 = vmatprep.subr.bf16.mxu0 0
      %4503 = vmatpush1.bf16.msra.mxu0 0
      %4504 = vmatprep.subr.bf16.mxu0 0
      %4505 = vmatpush1.bf16.msra.mxu0 0
      %4506 = vmatprep.subr.bf16.mxu0 0
      %4507 = vmatpush1.bf16.msra.mxu0 0
      %4508 = vmatprep.mubr.bf16.mxu0 0
      %4509 = vmatmul.mubr.bf16.gmra.mrb[0].mxu0 %v1932
      %v4510 = vpop.f32.mrb[0].mxu0
      %v4511 = vadd.f32 0.0, %v4510
      %v4512 = vpop.f32.mrb[0].mxu0
      %v4513 = vadd.f32 0.0, %v4512
      %v4514 = vpop.f32.mrb[0].mxu0
      %v4515 = vpop.f32.mrb[0].mxu0
      %4516 = vdwg.mxu0
      %4517 = vmatprep.subr.bf16.mxu0 %v1481
      %4518 = vmatpush1.bf16.msra.mxu0 %v1480
      %4519 = vmatprep.subr.bf16.mxu0 %v1625
      %4520 = vmatpush1.bf16.msra.mxu0 %v1624
      %4521 = vmatprep.subr.bf16.mxu0 0
      %4522 = vmatpush1.bf16.msra.mxu0 0
      %4523 = vmatprep.subr.bf16.mxu0 0
      %4524 = vmatpush1.bf16.msra.mxu0 0
      %4525 = vmatprep.subr.bf16.mxu0 0
      %4526 = vmatpush1.bf16.msra.mxu0 0
      %4527 = vmatprep.subr.bf16.mxu0 0
      %4528 = vmatpush1.bf16.msra.mxu0 0
      %4529 = vmatprep.subr.bf16.mxu0 0
      %4530 = vmatpush1.bf16.msra.mxu0 0
      %4531 = vmatprep.subr.bf16.mxu0 0
      %4532 = vmatpush1.bf16.msra.mxu0 0
      %4533 = vmatprep.subr.bf16.mxu0 0
      %4534 = vmatpush1.bf16.msra.mxu0 0
      %4535 = vmatprep.subr.bf16.mxu0 0
      %4536 = vmatpush1.bf16.msra.mxu0 0
      %4537 = vmatprep.subr.bf16.mxu0 0
      %4538 = vmatpush1.bf16.msra.mxu0 0
      %4539 = vmatprep.subr.bf16.mxu0 0
      %4540 = vmatpush1.bf16.msra.mxu0 0
      %4541 = vmatprep.subr.bf16.mxu0 0
      %4542 = vmatpush1.bf16.msra.mxu0 0
      %4543 = vmatprep.subr.bf16.mxu0 0
      %4544 = vmatpush1.bf16.msra.mxu0 0
      %4545 = vmatprep.subr.bf16.mxu0 0
      %4546 = vmatpush1.bf16.msra.mxu0 0
      %4547 = vmatprep.subr.bf16.mxu0 0
      %4548 = vmatpush1.bf16.msra.mxu0 0
      %4549 = vmatprep.mubr.bf16.mxu0 0
      %4550 = vmatmul.mubr.bf16.gmra.mrb[0].mxu0 %v1932
      %v4551 = vpop.f32.mrb[0].mxu0
      %v4552 = vadd.f32 0.0, %v4551
      %v4553 = vpop.f32.mrb[0].mxu0
      %v4554 = vadd.f32 0.0, %v4553
      %v4555 = vpop.f32.mrb[0].mxu0
      %v4556 = vpop.f32.mrb[0].mxu0
      %4557 = vdwg.mxu0
      %4558 = vmatprep.subr.bf16.mxu0 %v1483
      %4559 = vmatpush1.bf16.msra.mxu0 %v1482
      %4560 = vmatprep.subr.bf16.mxu0 %v1627
      %4561 = vmatpush1.bf16.msra.mxu0 %v1626
      %4562 = vmatprep.subr.bf16.mxu0 0
      %4563 = vmatpush1.bf16.msra.mxu0 0
      %4564 = vmatprep.subr.bf16.mxu0 0
      %4565 = vmatpush1.bf16.msra.mxu0 0
      %4566 = vmatprep.subr.bf16.mxu0 0
      %4567 = vmatpush1.bf16.msra.mxu0 0
      %4568 = vmatprep.subr.bf16.mxu0 0
      %4569 = vmatpush1.bf16.msra.mxu0 0
      %4570 = vmatprep.subr.bf16.mxu0 0
      %4571 = vmatpush1.bf16.msra.mxu0 0
      %4572 = vmatprep.subr.bf16.mxu0 0
      %4573 = vmatpush1.bf16.msra.mxu0 0
      %4574 = vmatprep.subr.bf16.mxu0 0
      %4575 = vmatpush1.bf16.msra.mxu0 0
      %4576 = vmatprep.subr.bf16.mxu0 0
      %4577 = vmatpush1.bf16.msra.mxu0 0
      %4578 = vmatprep.subr.bf16.mxu0 0
      %4579 = vmatpush1.bf16.msra.mxu0 0
      %4580 = vmatprep.subr.bf16.mxu0 0
      %4581 = vmatpush1.bf16.msra.mxu0 0
      %4582 = vmatprep.subr.bf16.mxu0 0
      %4583 = vmatpush1.bf16.msra.mxu0 0
      %4584 = vmatprep.subr.bf16.mxu0 0
      %4585 = vmatpush1.bf16.msra.mxu0 0
      %4586 = vmatprep.subr.bf16.mxu0 0
      %4587 = vmatpush1.bf16.msra.mxu0 0
      %4588 = vmatprep.subr.bf16.mxu0 0
      %4589 = vmatpush1.bf16.msra.mxu0 0
      %4590 = vmatprep.mubr.bf16.mxu0 0
      %4591 = vmatmul.mubr.bf16.gmra.mrb[0].mxu0 %v1932
      %v4592 = vpop.f32.mrb[0].mxu0
      %v4593 = vadd.f32 0.0, %v4592
      %v4594 = vpop.f32.mrb[0].mxu0
      %v4595 = vadd.f32 0.0, %v4594
      %v4596 = vpop.f32.mrb[0].mxu0
      %v4597 = vpop.f32.mrb[0].mxu0
      %4598 = vdwg.mxu0
      %4599 = vmatprep.subr.bf16.mxu0 %v1485
      %4600 = vmatpush1.bf16.msra.mxu0 %v1484
      %4601 = vmatprep.subr.bf16.mxu0 %v1629
      %4602 = vmatpush1.bf16.msra.mxu0 %v1628
      %4603 = vmatprep.subr.bf16.mxu0 0
      %4604 = vmatpush1.bf16.msra.mxu0 0
      %4605 = vmatprep.subr.bf16.mxu0 0
      %4606 = vmatpush1.bf16.msra.mxu0 0
      %4607 = vmatprep.subr.bf16.mxu0 0
      %4608 = vmatpush1.bf16.msra.mxu0 0
      %4609 = vmatprep.subr.bf16.mxu0 0
      %4610 = vmatpush1.bf16.msra.mxu0 0
      %4611 = vmatprep.subr.bf16.mxu0 0
      %4612 = vmatpush1.bf16.msra.mxu0 0
      %4613 = vmatprep.subr.bf16.mxu0 0
      %4614 = vmatpush1.bf16.msra.mxu0 0
      %4615 = vmatprep.subr.bf16.mxu0 0
      %4616 = vmatpush1.bf16.msra.mxu0 0
      %4617 = vmatprep.subr.bf16.mxu0 0
      %4618 = vmatpush1.bf16.msra.mxu0 0
      %4619 = vmatprep.subr.bf16.mxu0 0
      %4620 = vmatpush1.bf16.msra.mxu0 0
      %4621 = vmatprep.subr.bf16.mxu0 0
      %4622 = vmatpush1.bf16.msra.mxu0 0
      %4623 = vmatprep.subr.bf16.mxu0 0
      %4624 = vmatpush1.bf16.msra.mxu0 0
      %4625 = vmatprep.subr.bf16.mxu0 0
      %4626 = vmatpush1.bf16.msra.mxu0 0
      %4627 = vmatprep.subr.bf16.mxu0 0
      %4628 = vmatpush1.bf16.msra.mxu0 0
      %4629 = vmatprep.subr.bf16.mxu0 0
      %4630 = vmatpush1.bf16.msra.mxu0 0
      %4631 = vmatprep.mubr.bf16.mxu0 0
      %4632 = vmatmul.mubr.bf16.gmra.mrb[0].mxu0 %v1932
      %v4633 = vpop.f32.mrb[0].mxu0
      %v4634 = vadd.f32 0.0, %v4633
      %v4635 = vpop.f32.mrb[0].mxu0
      %v4636 = vadd.f32 0.0, %v4635
      %v4637 = vpop.f32.mrb[0].mxu0
      %v4638 = vpop.f32.mrb[0].mxu0
      %4639 = vdwg.mxu0
      %4640 = vmatprep.subr.bf16.mxu0 %v1487
      %4641 = vmatpush1.bf16.msra.mxu0 %v1486
      %4642 = vmatprep.subr.bf16.mxu0 %v1631
      %4643 = vmatpush1.bf16.msra.mxu0 %v1630
      %4644 = vmatprep.subr.bf16.mxu0 0
      %4645 = vmatpush1.bf16.msra.mxu0 0
      %4646 = vmatprep.subr.bf16.mxu0 0
      %4647 = vmatpush1.bf16.msra.mxu0 0
      %4648 = vmatprep.subr.bf16.mxu0 0
      %4649 = vmatpush1.bf16.msra.mxu0 0
      %4650 = vmatprep.subr.bf16.mxu0 0
      %4651 = vmatpush1.bf16.msra.mxu0 0
      %4652 = vmatprep.subr.bf16.mxu0 0
      %4653 = vmatpush1.bf16.msra.mxu0 0
      %4654 = vmatprep.subr.bf16.mxu0 0
      %4655 = vmatpush1.bf16.msra.mxu0 0
      %4656 = vmatprep.subr.bf16.mxu0 0
      %4657 = vmatpush1.bf16.msra.mxu0 0
      %4658 = vmatprep.subr.bf16.mxu0 0
      %4659 = vmatpush1.bf16.msra.mxu0 0
      %4660 = vmatprep.subr.bf16.mxu0 0
      %4661 = vmatpush1.bf16.msra.mxu0 0
      %4662 = vmatprep.subr.bf16.mxu0 0
      %4663 = vmatpush1.bf16.msra.mxu0 0
      %4664 = vmatprep.subr.bf16.mxu0 0
      %4665 = vmatpush1.bf16.msra.mxu0 0
      %4666 = vmatprep.subr.bf16.mxu0 0
      %4667 = vmatpush1.bf16.msra.mxu0 0
      %4668 = vmatprep.subr.bf16.mxu0 0
      %4669 = vmatpush1.bf16.msra.mxu0 0
      %4670 = vmatprep.subr.bf16.mxu0 0
      %4671 = vmatpush1.bf16.msra.mxu0 0
      %4672 = vmatprep.mubr.bf16.mxu0 0
      %4673 = vmatmul.mubr.bf16.gmra.mrb[0].mxu0 %v1932
      %v4674 = vpop.f32.mrb[0].mxu0
      %v4675 = vadd.f32 0.0, %v4674
      %v4676 = vpop.f32.mrb[0].mxu0
      %v4677 = vadd.f32 0.0, %v4676
      %v4678 = vpop.f32.mrb[0].mxu0
      %v4679 = vpop.f32.mrb[0].mxu0
      %4680 = vdwg.mxu0
      %4681 = vmatprep.subr.bf16.mxu0 %v1489
      %4682 = vmatpush1.bf16.msra.mxu0 %v1488
      %4683 = vmatprep.subr.bf16.mxu0 %v1633
      %4684 = vmatpush1.bf16.msra.mxu0 %v1632
      %4685 = vmatprep.subr.bf16.mxu0 0
      %4686 = vmatpush1.bf16.msra.mxu0 0
      %4687 = vmatprep.subr.bf16.mxu0 0
      %4688 = vmatpush1.bf16.msra.mxu0 0
      %4689 = vmatprep.subr.bf16.mxu0 0
      %4690 = vmatpush1.bf16.msra.mxu0 0
      %4691 = vmatprep.subr.bf16.mxu0 0
      %4692 = vmatpush1.bf16.msra.mxu0 0
      %4693 = vmatprep.subr.bf16.mxu0 0
      %4694 = vmatpush1.bf16.msra.mxu0 0
      %4695 = vmatprep.subr.bf16.mxu0 0
      %4696 = vmatpush1.bf16.msra.mxu0 0
      %4697 = vmatprep.subr.bf16.mxu0 0
      %4698 = vmatpush1.bf16.msra.mxu0 0
      %4699 = vmatprep.subr.bf16.mxu0 0
      %4700 = vmatpush1.bf16.msra.mxu0 0
      %4701 = vmatprep.subr.bf16.mxu0 0
      %4702 = vmatpush1.bf16.msra.mxu0 0
      %4703 = vmatprep.subr.bf16.mxu0 0
      %4704 = vmatpush1.bf16.msra.mxu0 0
      %4705 = vmatprep.subr.bf16.mxu0 0
      %4706 = vmatpush1.bf16.msra.mxu0 0
      %4707 = vmatprep.subr.bf16.mxu0 0
      %4708 = vmatpush1.bf16.msra.mxu0 0
      %4709 = vmatprep.subr.bf16.mxu0 0
      %4710 = vmatpush1.bf16.msra.mxu0 0
      %4711 = vmatprep.subr.bf16.mxu0 0
      %4712 = vmatpush1.bf16.msra.mxu0 0
      %4713 = vmatprep.mubr.bf16.mxu0 0
      %4714 = vmatmul.mubr.bf16.gmra.mrb[0].mxu0 %v1932
      %v4715 = vpop.f32.mrb[0].mxu0
      %v4716 = vadd.f32 0.0, %v4715
      %v4717 = vpop.f32.mrb[0].mxu0
      %v4718 = vadd.f32 0.0, %v4717
      %v4719 = vpop.f32.mrb[0].mxu0
      %v4720 = vpop.f32.mrb[0].mxu0
      %4721 = vdwg.mxu0
      %4722 = vmatprep.subr.bf16.mxu0 %v1491
      %4723 = vmatpush1.bf16.msra.mxu0 %v1490
      %4724 = vmatprep.subr.bf16.mxu0 %v1635
      %4725 = vmatpush1.bf16.msra.mxu0 %v1634
      %4726 = vmatprep.subr.bf16.mxu0 0
      %4727 = vmatpush1.bf16.msra.mxu0 0
      %4728 = vmatprep.subr.bf16.mxu0 0
      %4729 = vmatpush1.bf16.msra.mxu0 0
      %4730 = vmatprep.subr.bf16.mxu0 0
      %4731 = vmatpush1.bf16.msra.mxu0 0
      %4732 = vmatprep.subr.bf16.mxu0 0
      %4733 = vmatpush1.bf16.msra.mxu0 0
      %4734 = vmatprep.subr.bf16.mxu0 0
      %4735 = vmatpush1.bf16.msra.mxu0 0
      %4736 = vmatprep.subr.bf16.mxu0 0
      %4737 = vmatpush1.bf16.msra.mxu0 0
      %4738 = vmatprep.subr.bf16.mxu0 0
      %4739 = vmatpush1.bf16.msra.mxu0 0
      %4740 = vmatprep.subr.bf16.mxu0 0
      %4741 = vmatpush1.bf16.msra.mxu0 0
      %4742 = vmatprep.subr.bf16.mxu0 0
      %4743 = vmatpush1.bf16.msra.mxu0 0
      %4744 = vmatprep.subr.bf16.mxu0 0
      %4745 = vmatpush1.bf16.msra.mxu0 0
      %4746 = vmatprep.subr.bf16.mxu0 0
      %4747 = vmatpush1.bf16.msra.mxu0 0
      %4748 = vmatprep.subr.bf16.mxu0 0
      %4749 = vmatpush1.bf16.msra.mxu0 0
      %4750 = vmatprep.subr.bf16.mxu0 0
      %4751 = vmatpush1.bf16.msra.mxu0 0
      %4752 = vmatprep.subr.bf16.mxu0 0
      %4753 = vmatpush1.bf16.msra.mxu0 0
      %4754 = vmatprep.mubr.bf16.mxu0 0
      %4755 = vmatmul.mubr.bf16.gmra.mrb[0].mxu0 %v1932
      %v4756 = vpop.f32.mrb[0].mxu0
      %v4757 = vadd.f32 0.0, %v4756
      %v4758 = vpop.f32.mrb[0].mxu0
      %v4759 = vadd.f32 0.0, %v4758
      %v4760 = vpop.f32.mrb[0].mxu0
      %v4761 = vpop.f32.mrb[0].mxu0
      %4762 = vdwg.mxu0
      %4763 = vmatprep.subr.bf16.mxu0 %v1493
      %4764 = vmatpush1.bf16.msra.mxu0 %v1492
      %4765 = vmatprep.subr.bf16.mxu0 %v1637
      %4766 = vmatpush1.bf16.msra.mxu0 %v1636
      %4767 = vmatprep.subr.bf16.mxu0 0
      %4768 = vmatpush1.bf16.msra.mxu0 0
      %4769 = vmatprep.subr.bf16.mxu0 0
      %4770 = vmatpush1.bf16.msra.mxu0 0
      %4771 = vmatprep.subr.bf16.mxu0 0
      %4772 = vmatpush1.bf16.msra.mxu0 0
      %4773 = vmatprep.subr.bf16.mxu0 0
      %4774 = vmatpush1.bf16.msra.mxu0 0
      %4775 = vmatprep.subr.bf16.mxu0 0
      %4776 = vmatpush1.bf16.msra.mxu0 0
      %4777 = vmatprep.subr.bf16.mxu0 0
      %4778 = vmatpush1.bf16.msra.mxu0 0
      %4779 = vmatprep.subr.bf16.mxu0 0
      %4780 = vmatpush1.bf16.msra.mxu0 0
      %4781 = vmatprep.subr.bf16.mxu0 0
      %4782 = vmatpush1.bf16.msra.mxu0 0
      %4783 = vmatprep.subr.bf16.mxu0 0
      %4784 = vmatpush1.bf16.msra.mxu0 0
      %4785 = vmatprep.subr.bf16.mxu0 0
      %4786 = vmatpush1.bf16.msra.mxu0 0
      %4787 = vmatprep.subr.bf16.mxu0 0
      %4788 = vmatpush1.bf16.msra.mxu0 0
      %4789 = vmatprep.subr.bf16.mxu0 0
      %4790 = vmatpush1.bf16.msra.mxu0 0
      %4791 = vmatprep.subr.bf16.mxu0 0
      %4792 = vmatpush1.bf16.msra.mxu0 0
      %4793 = vmatprep.subr.bf16.mxu0 0
      %4794 = vmatpush1.bf16.msra.mxu0 0
      %4795 = vmatprep.mubr.bf16.mxu0 0
      %4796 = vmatmul.mubr.bf16.gmra.mrb[0].mxu0 %v1932
      %v4797 = vpop.f32.mrb[0].mxu0
      %v4798 = vadd.f32 0.0, %v4797
      %v4799 = vpop.f32.mrb[0].mxu0
      %v4800 = vadd.f32 0.0, %v4799
      %v4801 = vpop.f32.mrb[0].mxu0
      %v4802 = vpop.f32.mrb[0].mxu0
      %4803 = vdwg.mxu0
      %4804 = vmatprep.subr.bf16.mxu0 %v1495
      %4805 = vmatpush1.bf16.msra.mxu0 %v1494
      %4806 = vmatprep.subr.bf16.mxu0 %v1639
      %4807 = vmatpush1.bf16.msra.mxu0 %v1638
      %4808 = vmatprep.subr.bf16.mxu0 0
      %4809 = vmatpush1.bf16.msra.mxu0 0
      %4810 = vmatprep.subr.bf16.mxu0 0
      %4811 = vmatpush1.bf16.msra.mxu0 0
      %4812 = vmatprep.subr.bf16.mxu0 0
      %4813 = vmatpush1.bf16.msra.mxu0 0
      %4814 = vmatprep.subr.bf16.mxu0 0
      %4815 = vmatpush1.bf16.msra.mxu0 0
      %4816 = vmatprep.subr.bf16.mxu0 0
      %4817 = vmatpush1.bf16.msra.mxu0 0
      %4818 = vmatprep.subr.bf16.mxu0 0
      %4819 = vmatpush1.bf16.msra.mxu0 0
      %4820 = vmatprep.subr.bf16.mxu0 0
      %4821 = vmatpush1.bf16.msra.mxu0 0
      %4822 = vmatprep.subr.bf16.mxu0 0
      %4823 = vmatpush1.bf16.msra.mxu0 0
      %4824 = vmatprep.subr.bf16.mxu0 0
      %4825 = vmatpush1.bf16.msra.mxu0 0
      %4826 = vmatprep.subr.bf16.mxu0 0
      %4827 = vmatpush1.bf16.msra.mxu0 0
      %4828 = vmatprep.subr.bf16.mxu0 0
      %4829 = vmatpush1.bf16.msra.mxu0 0
      %4830 = vmatprep.subr.bf16.mxu0 0
      %4831 = vmatpush1.bf16.msra.mxu0 0
      %4832 = vmatprep.subr.bf16.mxu0 0
      %4833 = vmatpush1.bf16.msra.mxu0 0
      %4834 = vmatprep.subr.bf16.mxu0 0
      %4835 = vmatpush1.bf16.msra.mxu0 0
      %4836 = vmatprep.mubr.bf16.mxu0 0
      %4837 = vmatmul.mubr.bf16.gmra.mrb[0].mxu0 %v1932
      %v4838 = vpop.f32.mrb[0].mxu0
      %v4839 = vadd.f32 0.0, %v4838
      %v4840 = vpop.f32.mrb[0].mxu0
      %v4841 = vadd.f32 0.0, %v4840
      %v4842 = vpop.f32.mrb[0].mxu0
      %v4843 = vpop.f32.mrb[0].mxu0
      %4844 = vdwg.mxu0
      %4845 = vmatprep.subr.bf16.mxu0 %v1497
      %4846 = vmatpush1.bf16.msra.mxu0 %v1496
      %4847 = vmatprep.subr.bf16.mxu0 %v1641
      %4848 = vmatpush1.bf16.msra.mxu0 %v1640
      %4849 = vmatprep.subr.bf16.mxu0 0
      %4850 = vmatpush1.bf16.msra.mxu0 0
      %4851 = vmatprep.subr.bf16.mxu0 0
      %4852 = vmatpush1.bf16.msra.mxu0 0
      %4853 = vmatprep.subr.bf16.mxu0 0
      %4854 = vmatpush1.bf16.msra.mxu0 0
      %4855 = vmatprep.subr.bf16.mxu0 0
      %4856 = vmatpush1.bf16.msra.mxu0 0
      %4857 = vmatprep.subr.bf16.mxu0 0
      %4858 = vmatpush1.bf16.msra.mxu0 0
      %4859 = vmatprep.subr.bf16.mxu0 0
      %4860 = vmatpush1.bf16.msra.mxu0 0
      %4861 = vmatprep.subr.bf16.mxu0 0
      %4862 = vmatpush1.bf16.msra.mxu0 0
      %4863 = vmatprep.subr.bf16.mxu0 0
      %4864 = vmatpush1.bf16.msra.mxu0 0
      %4865 = vmatprep.subr.bf16.mxu0 0
      %4866 = vmatpush1.bf16.msra.mxu0 0
      %4867 = vmatprep.subr.bf16.mxu0 0
      %4868 = vmatpush1.bf16.msra.mxu0 0
      %4869 = vmatprep.subr.bf16.mxu0 0
      %4870 = vmatpush1.bf16.msra.mxu0 0
      %4871 = vmatprep.subr.bf16.mxu0 0
      %4872 = vmatpush1.bf16.msra.mxu0 0
      %4873 = vmatprep.subr.bf16.mxu0 0
      %4874 = vmatpush1.bf16.msra.mxu0 0
      %4875 = vmatprep.subr.bf16.mxu0 0
      %4876 = vmatpush1.bf16.msra.mxu0 0
      %4877 = vmatprep.mubr.bf16.mxu0 0
      %4878 = vmatmul.mubr.bf16.gmra.mrb[0].mxu0 %v1932
      %v4879 = vpop.f32.mrb[0].mxu0
      %v4880 = vadd.f32 0.0, %v4879
      %v4881 = vpop.f32.mrb[0].mxu0
      %v4882 = vadd.f32 0.0, %v4881
      %v4883 = vpop.f32.mrb[0].mxu0
      %v4884 = vpop.f32.mrb[0].mxu0
      %4885 = vdwg.mxu0
      %v4886 = vtanh.pop %v1969
      %v4887 = vtanh.pop %v1971
      %v4888 = vtanh.pop %v2010
      %v4889 = vtanh.pop %v2012
      %v4890 = vtanh.pop %v2051
      %v4891 = vtanh.pop %v2053
      %v4892 = vtanh.pop %v2092
      %v4893 = vtanh.pop %v2094
      %v4894 = vtanh.pop %v2133
      %v4895 = vtanh.pop %v2135
      %v4896 = vtanh.pop %v2174
      %v4897 = vtanh.pop %v2176
      %v4898 = vtanh.pop %v2215
      %v4899 = vtanh.pop %v2217
      %v4900 = vtanh.pop %v2256
      %v4901 = vtanh.pop %v2258
      %v4902 = vtanh.pop %v2297
      %v4903 = vtanh.pop %v2299
      %v4904 = vtanh.pop %v2338
      %v4905 = vtanh.pop %v2340
      %v4906 = vtanh.pop %v2379
      %v4907 = vtanh.pop %v2381
      %v4908 = vtanh.pop %v2420
      %v4909 = vtanh.pop %v2422
      %v4910 = vtanh.pop %v2461
      %v4911 = vtanh.pop %v2463
      %v4912 = vtanh.pop %v2502
      %v4913 = vtanh.pop %v2504
      %v4914 = vtanh.pop %v2543
      %v4915 = vtanh.pop %v2545
      %v4916 = vtanh.pop %v2584
      %v4917 = vtanh.pop %v2586
      %v4918 = vtanh.pop %v2625
      %v4919 = vtanh.pop %v2627
      %v4920 = vtanh.pop %v2666
      %v4921 = vtanh.pop %v2668
      %v4922 = vtanh.pop %v2707
      %v4923 = vtanh.pop %v2709
      %v4924 = vtanh.pop %v2748
      %v4925 = vtanh.pop %v2750
      %v4926 = vtanh.pop %v2789
      %v4927 = vtanh.pop %v2791
      %v4928 = vtanh.pop %v2830
      %v4929 = vtanh.pop %v2832
      %v4930 = vtanh.pop %v2871
      %v4931 = vtanh.pop %v2873
      %v4932 = vtanh.pop %v2912
      %v4933 = vtanh.pop %v2914
      %v4934 = vtanh.pop %v2953
      %v4935 = vtanh.pop %v2955
      %v4936 = vtanh.pop %v2994
      %v4937 = vtanh.pop %v2996
      %v4938 = vtanh.pop %v3035
      %v4939 = vtanh.pop %v3037
      %v4940 = vtanh.pop %v3076
      %v4941 = vtanh.pop %v3078
      %v4942 = vtanh.pop %v3117
      %v4943 = vtanh.pop %v3119
      %v4944 = vtanh.pop %v3158
      %v4945 = vtanh.pop %v3160
      %v4946 = vtanh.pop %v3199
      %v4947 = vtanh.pop %v3201
      %v4948 = vtanh.pop %v3240
      %v4949 = vtanh.pop %v3242
      %v4950 = vtanh.pop %v3281
      %v4951 = vtanh.pop %v3283
      %v4952 = vtanh.pop %v3322
      %v4953 = vtanh.pop %v3324
      %v4954 = vtanh.pop %v3363
      %v4955 = vtanh.pop %v3365
      %v4956 = vtanh.pop %v3404
      %v4957 = vtanh.pop %v3406
      %v4958 = vtanh.pop %v3445
      %v4959 = vtanh.pop %v3447
      %v4960 = vtanh.pop %v3486
      %v4961 = vtanh.pop %v3488
      %v4962 = vtanh.pop %v3527
      %v4963 = vtanh.pop %v3529
      %v4964 = vtanh.pop %v3568
      %v4965 = vtanh.pop %v3570
      %v4966 = vtanh.pop %v3609
      %v4967 = vtanh.pop %v3611
      %v4968 = vtanh.pop %v3650
      %v4969 = vtanh.pop %v3652
      %v4970 = vtanh.pop %v3691
      %v4971 = vtanh.pop %v3693
      %v4972 = vtanh.pop %v3732
      %v4973 = vtanh.pop %v3734
      %v4974 = vtanh.pop %v3773
      %v4975 = vtanh.pop %v3775
      %v4976 = vtanh.pop %v3814
      %v4977 = vtanh.pop %v3816
      %v4978 = vtanh.pop %v3855
      %v4979 = vtanh.pop %v3857
      %v4980 = vtanh.pop %v3896
      %v4981 = vtanh.pop %v3898
      %v4982 = vtanh.pop %v3937
      %v4983 = vtanh.pop %v3939
      %v4984 = vtanh.pop %v3978
      %v4985 = vtanh.pop %v3980
      %v4986 = vtanh.pop %v4019
      %v4987 = vtanh.pop %v4021
      %v4988 = vtanh.pop %v4060
      %v4989 = vtanh.pop %v4062
      %v4990 = vtanh.pop %v4101
      %v4991 = vtanh.pop %v4103
      %v4992 = vtanh.pop %v4142
      %v4993 = vtanh.pop %v4144
      %v4994 = vtanh.pop %v4183
      %v4995 = vtanh.pop %v4185
      %v4996 = vtanh.pop %v4224
      %v4997 = vtanh.pop %v4226
      %v4998 = vtanh.pop %v4265
      %v4999 = vtanh.pop %v4267
      %v5000 = vtanh.pop %v4306
      %v5001 = vtanh.pop %v4308
      %v5002 = vtanh.pop %v4347
      %v5003 = vtanh.pop %v4349
      %v5004 = vtanh.pop %v4388
      %v5005 = vtanh.pop %v4390
      %v5006 = vtanh.pop %v4429
      %v5007 = vtanh.pop %v4431
      %v5008 = vtanh.pop %v4470
      %v5009 = vtanh.pop %v4472
      %v5010 = vtanh.pop %v4511
      %v5011 = vtanh.pop %v4513
      %v5012 = vtanh.pop %v4552
      %v5013 = vtanh.pop %v4554
      %v5014 = vtanh.pop %v4593
      %v5015 = vtanh.pop %v4595
      %v5016 = vtanh.pop %v4634
      %v5017 = vtanh.pop %v4636
      %v5018 = vtanh.pop %v4675
      %v5019 = vtanh.pop %v4677
      %v5020 = vtanh.pop %v4716
      %v5021 = vtanh.pop %v4718
      %v5022 = vtanh.pop %v4757
      %v5023 = vtanh.pop %v4759
      %v5024 = vtanh.pop %v4798
      %v5025 = vtanh.pop %v4800
      %v5026 = vtanh.pop %v4839
      %v5027 = vtanh.pop %v4841
      %v5028 = vtanh.pop %v4880
      %v5029 = vtanh.pop %v4882
      %5030 = vst [vmem:[%s198] sm:$0xff] %v4886
      %5031 = vst [vmem:[%s198 + $0x8] sm:$0xff] %v4887
      %5032 = vst [vmem:[%s198 + $0x10] sm:$0xff] %v4888
      %5033 = vst [vmem:[%s198 + $0x18] sm:$0xff] %v4889
      %5034 = vst [vmem:[%s198 + $0x20] sm:$0xff] %v4890
      %5035 = vst [vmem:[%s198 + $0x28] sm:$0xff] %v4891
      %5036 = vst [vmem:[%s198 + $0x30] sm:$0xff] %v4892
      %5037 = vst [vmem:[%s198 + $0x38] sm:$0xff] %v4893
      %5038 = vst [vmem:[%s198 + $0x40] sm:$0xff] %v4894
      %5039 = vst [vmem:[%s198 + $0x48] sm:$0xff] %v4895
      %5040 = vst [vmem:[%s198 + $0x50] sm:$0xff] %v4896
      %5041 = vst [vmem:[%s198 + $0x58] sm:$0xff] %v4897
      %5042 = vst [vmem:[%s198 + $0x60] sm:$0xff] %v4898
      %5043 = vst [vmem:[%s198 + $0x68] sm:$0xff] %v4899
      %5044 = vst [vmem:[%s198 + $0x70] sm:$0xff] %v4900
      %5045 = vst [vmem:[%s198 + $0x78] sm:$0xff] %v4901
      %5046 = vst [vmem:[%s198 + $0x80] sm:$0xff] %v4902
      %5047 = vst [vmem:[%s198 + $0x88] sm:$0xff] %v4903
      %5048 = vst [vmem:[%s198 + $0x90] sm:$0xff] %v4904
      %5049 = vst [vmem:[%s198 + $0x98] sm:$0xff] %v4905
      %5050 = vst [vmem:[%s198 + $0xa0] sm:$0xff] %v4906
      %5051 = vst [vmem:[%s198 + $0xa8] sm:$0xff] %v4907
      %5052 = vst [vmem:[%s198 + $0xb0] sm:$0xff] %v4908
      %5053 = vst [vmem:[%s198 + $0xb8] sm:$0xff] %v4909
      %5054 = vst [vmem:[%s198 + $0xc0] sm:$0xff] %v4910
      %5055 = vst [vmem:[%s198 + $0xc8] sm:$0xff] %v4911
      %5056 = vst [vmem:[%s198 + $0xd0] sm:$0xff] %v4912
      %5057 = vst [vmem:[%s198 + $0xd8] sm:$0xff] %v4913
      %5058 = vst [vmem:[%s198 + $0xe0] sm:$0xff] %v4914
      %5059 = vst [vmem:[%s198 + $0xe8] sm:$0xff] %v4915
      %5060 = vst [vmem:[%s198 + $0xf0] sm:$0xff] %v4916
      %5061 = vst [vmem:[%s198 + $0xf8] sm:$0xff] %v4917
      %5062 = vst [vmem:[%s198 + $0x100] sm:$0xff] %v4918
      %5063 = vst [vmem:[%s198 + $0x108] sm:$0xff] %v4919
      %5064 = vst [vmem:[%s198 + $0x110] sm:$0xff] %v4920
      %5065 = vst [vmem:[%s198 + $0x118] sm:$0xff] %v4921
      %5066 = vst [vmem:[%s198 + $0x120] sm:$0xff] %v4922
      %5067 = vst [vmem:[%s198 + $0x128] sm:$0xff] %v4923
      %5068 = vst [vmem:[%s198 + $0x130] sm:$0xff] %v4924
      %5069 = vst [vmem:[%s198 + $0x138] sm:$0xff] %v4925
      %5070 = vst [vmem:[%s198 + $0x140] sm:$0xff] %v4926
      %5071 = vst [vmem:[%s198 + $0x148] sm:$0xff] %v4927
      %5072 = vst [vmem:[%s198 + $0x150] sm:$0xff] %v4928
      %5073 = vst [vmem:[%s198 + $0x158] sm:$0xff] %v4929
      %5074 = vst [vmem:[%s198 + $0x160] sm:$0xff] %v4930
      %5075 = vst [vmem:[%s198 + $0x168] sm:$0xff] %v4931
      %5076 = vst [vmem:[%s198 + $0x170] sm:$0xff] %v4932
      %5077 = vst [vmem:[%s198 + $0x178] sm:$0xff] %v4933
      %5078 = vst [vmem:[%s198 + $0x180] sm:$0xff] %v4934
      %5079 = vst [vmem:[%s198 + $0x188] sm:$0xff] %v4935
      %5080 = vst [vmem:[%s198 + $0x190] sm:$0xff] %v4936
      %5081 = vst [vmem:[%s198 + $0x198] sm:$0xff] %v4937
      %5082 = vst [vmem:[%s198 + $0x1a0] sm:$0xff] %v4938
      %5083 = vst [vmem:[%s198 + $0x1a8] sm:$0xff] %v4939
      %5084 = vst [vmem:[%s198 + $0x1b0] sm:$0xff] %v4940
      %5085 = vst [vmem:[%s198 + $0x1b8] sm:$0xff] %v4941
      %5086 = vst [vmem:[%s198 + $0x1c0] sm:$0xff] %v4942
      %5087 = vst [vmem:[%s198 + $0x1c8] sm:$0xff] %v4943
      %5088 = vst [vmem:[%s198 + $0x1d0] sm:$0xff] %v4944
      %5089 = vst [vmem:[%s198 + $0x1d8] sm:$0xff] %v4945
      %5090 = vst [vmem:[%s198 + $0x1e0] sm:$0xff] %v4946
      %5091 = vst [vmem:[%s198 + $0x1e8] sm:$0xff] %v4947
      %5092 = vst [vmem:[%s198 + $0x1f0] sm:$0xff] %v4948
      %5093 = vst [vmem:[%s198 + $0x1f8] sm:$0xff] %v4949
      %5094 = vst [vmem:[%s198 + $0x200] sm:$0xff] %v4950
      %5095 = vst [vmem:[%s198 + $0x208] sm:$0xff] %v4951
      %5096 = vst [vmem:[%s198 + $0x210] sm:$0xff] %v4952
      %5097 = vst [vmem:[%s198 + $0x218] sm:$0xff] %v4953
      %5098 = vst [vmem:[%s198 + $0x220] sm:$0xff] %v4954
      %5099 = vst [vmem:[%s198 + $0x228] sm:$0xff] %v4955
      %5100 = vst [vmem:[%s198 + $0x230] sm:$0xff] %v4956
      %5101 = vst [vmem:[%s198 + $0x238] sm:$0xff] %v4957
      %5102 = vst [vmem:[%s198 + $0x240] sm:$0xff] %v4958
      %5103 = vst [vmem:[%s198 + $0x248] sm:$0xff] %v4959
      %5104 = vst [vmem:[%s198 + $0x250] sm:$0xff] %v4960
      %5105 = vst [vmem:[%s198 + $0x258] sm:$0xff] %v4961
      %5106 = vst [vmem:[%s198 + $0x260] sm:$0xff] %v4962
      %5107 = vst [vmem:[%s198 + $0x268] sm:$0xff] %v4963
      %5108 = vst [vmem:[%s198 + $0x270] sm:$0xff] %v4964
      %5109 = vst [vmem:[%s198 + $0x278] sm:$0xff] %v4965
      %5110 = vst [vmem:[%s198 + $0x280] sm:$0xff] %v4966
      %5111 = vst [vmem:[%s198 + $0x288] sm:$0xff] %v4967
      %5112 = vst [vmem:[%s198 + $0x290] sm:$0xff] %v4968
      %5113 = vst [vmem:[%s198 + $0x298] sm:$0xff] %v4969
      %5114 = vst [vmem:[%s198 + $0x2a0] sm:$0xff] %v4970
      %5115 = vst [vmem:[%s198 + $0x2a8] sm:$0xff] %v4971
      %5116 = vst [vmem:[%s198 + $0x2b0] sm:$0xff] %v4972
      %5117 = vst [vmem:[%s198 + $0x2b8] sm:$0xff] %v4973
      %5118 = vst [vmem:[%s198 + $0x2c0] sm:$0xff] %v4974
      %5119 = vst [vmem:[%s198 + $0x2c8] sm:$0xff] %v4975
      %5120 = vst [vmem:[%s198 + $0x2d0] sm:$0xff] %v4976
      %5121 = vst [vmem:[%s198 + $0x2d8] sm:$0xff] %v4977
      %5122 = vst [vmem:[%s198 + $0x2e0] sm:$0xff] %v4978
      %5123 = vst [vmem:[%s198 + $0x2e8] sm:$0xff] %v4979
      %5124 = vst [vmem:[%s198 + $0x2f0] sm:$0xff] %v4980
      %5125 = vst [vmem:[%s198 + $0x2f8] sm:$0xff] %v4981
      %5126 = vst [vmem:[%s198 + $0x300] sm:$0xff] %v4982
      %5127 = vst [vmem:[%s198 + $0x308] sm:$0xff] %v4983
      %5128 = vst [vmem:[%s198 + $0x310] sm:$0xff] %v4984
      %5129 = vst [vmem:[%s198 + $0x318] sm:$0xff] %v4985
      %5130 = vst [vmem:[%s198 + $0x320] sm:$0xff] %v4986
      %5131 = vst [vmem:[%s198 + $0x328] sm:$0xff] %v4987
      %5132 = vst [vmem:[%s198 + $0x330] sm:$0xff] %v4988
      %5133 = vst [vmem:[%s198 + $0x338] sm:$0xff] %v4989
      %5134 = vst [vmem:[%s198 + $0x340] sm:$0xff] %v4990
      %5135 = vst [vmem:[%s198 + $0x348] sm:$0xff] %v4991
      %5136 = vst [vmem:[%s198 + $0x350] sm:$0xff] %v4992
      %5137 = vst [vmem:[%s198 + $0x358] sm:$0xff] %v4993
      %5138 = vst [vmem:[%s198 + $0x360] sm:$0xff] %v4994
      %5139 = vst [vmem:[%s198 + $0x368] sm:$0xff] %v4995
      %5140 = vst [vmem:[%s198 + $0x370] sm:$0xff] %v4996
      %5141 = vst [vmem:[%s198 + $0x378] sm:$0xff] %v4997
      %5142 = vst [vmem:[%s198 + $0x380] sm:$0xff] %v4998
      %5143 = vst [vmem:[%s198 + $0x388] sm:$0xff] %v4999
      %5144 = vst [vmem:[%s198 + $0x390] sm:$0xff] %v5000
      %5145 = vst [vmem:[%s198 + $0x398] sm:$0xff] %v5001
      %5146 = vst [vmem:[%s198 + $0x3a0] sm:$0xff] %v5002
      %5147 = vst [vmem:[%s198 + $0x3a8] sm:$0xff] %v5003
      %5148 = vst [vmem:[%s198 + $0x3b0] sm:$0xff] %v5004
      %5149 = vst [vmem:[%s198 + $0x3b8] sm:$0xff] %v5005
      %5150 = vst [vmem:[%s198 + $0x3c0] sm:$0xff] %v5006
      %5151 = vst [vmem:[%s198 + $0x3c8] sm:$0xff] %v5007
      %5152 = vst [vmem:[%s198 + $0x3d0] sm:$0xff] %v5008
      %5153 = vst [vmem:[%s198 + $0x3d8] sm:$0xff] %v5009
      %5154 = vst [vmem:[%s198 + $0x3e0] sm:$0xff] %v5010
      %5155 = vst [vmem:[%s198 + $0x3e8] sm:$0xff] %v5011
      %5156 = vst [vmem:[%s198 + $0x3f0] sm:$0xff] %v5012
      %5157 = vst [vmem:[%s198 + $0x3f8] sm:$0xff] %v5013
      %5158 = vst [vmem:[%s198 + $0x400] sm:$0xff] %v5014
      %5159 = vst [vmem:[%s198 + $0x408] sm:$0xff] %v5015
      %5160 = vst [vmem:[%s198 + $0x410] sm:$0xff] %v5016
      %5161 = vst [vmem:[%s198 + $0x418] sm:$0xff] %v5017
      %5162 = vst [vmem:[%s198 + $0x420] sm:$0xff] %v5018
      %5163 = vst [vmem:[%s198 + $0x428] sm:$0xff] %v5019
      %5164 = vst [vmem:[%s198 + $0x430] sm:$0xff] %v5020
      %5165 = vst [vmem:[%s198 + $0x438] sm:$0xff] %v5021
      %5166 = vst [vmem:[%s198 + $0x440] sm:$0xff] %v5022
      %5167 = vst [vmem:[%s198 + $0x448] sm:$0xff] %v5023
      %5168 = vst [vmem:[%s198 + $0x450] sm:$0xff] %v5024
      %5169 = vst [vmem:[%s198 + $0x458] sm:$0xff] %v5025
      %5170 = vst [vmem:[%s198 + $0x460] sm:$0xff] %v5026
      %5171 = vst [vmem:[%s198 + $0x468] sm:$0xff] %v5027
      %5172 = vst [vmem:[%s198 + $0x470] sm:$0xff] %v5028
      %5173 = vst [vmem:[%s198 + $0x478] sm:$0xff] %v5029
      %s5174 = smul.u32 144, %s18
      %p5175 = scmp.lt.s32.totalorder %s17, 3
      %s5176 = scalar_select %p5175, %s17, 3
      %p5177 = scmp.lt.s32.totalorder %s5174, 143
      %s5178 = scalar_select %p5177, %s5174, 143
      %s5179 = smul.addr %s5176, 144
      %s5180 = sadd.s32 %s5178, %s5179
      %s5181 = smul.addr %s5180, 8
      %s5182 = scalar_lea.vmem %s2, %s5181
      // Predicated region
      $region29: #{generator_forward.13} parent=27 // pred_check
        %p5183 = pneg %p99
      $region30: #{generator_forward.13} parent=27 // pred_check_branch
        %5185 = sbr.rel (%p5183) target = $region32
      $region31: #{generator_forward.13} parent=27 // pred_region
        %s5186 = smul.u32 144, %s18
      $region32: #{generator_forward.13} parent=27 // pred_fallthru
        _
    $region28: #{generator_forward.13} parent=5 // pred_fallthru
      _
    %p5187 = scmp.le.s32.totalorder 2, %s8
    // Predicated region
    $region33: #{generator_forward.13} parent=5 // pred_check
      %p5188 = pneg %p5187
    $region34: #{generator_forward.13} parent=5 // pred_check_branch
      %5190 = sbr.rel (%p5188) target = $region36
    $region35: #{generator_forward.13} parent=5 // pred_region
      %s5191 = ssub.s32 %s8, 2
      // Predicated region
      $region37: #{generator_forward.13} parent=35 // pred_check
        %p5192 = pneg %p105
      $region38: #{generator_forward.13} parent=35 // pred_check_branch
        %5194 = sbr.rel (%p5192) target = $region40
      $region39: #{generator_forward.13} parent=35 // pred_region
        %s5195 = smul.u32 144, %s20
        %p5196 = scmp.lt.s32.totalorder %s19, 3
        %s5197 = scalar_select %p5196, %s19, 3
        %p5198 = scmp.lt.s32.totalorder %s5195, 143
        %s5199 = scalar_select %p5198, %s5195, 143
        %s5200 = smul.addr %s5197, 144
        %s5201 = sadd.s32 %s5199, %s5200
        %s5202 = smul.addr %s5201, 8
        %s5203 = scalar_lea.vmem %s2, %s5202
      $region40: #{generator_forward.13} parent=35 // pred_fallthru
        _
    $region36: #{generator_forward.13} parent=5 // pred_fallthru
      _
  $region6: #{generator_forward.13} parent=0 // loop_footer
    %s12 = sadd.s32 1, %s8
  $region7: #{generator_forward.13} parent=0 // loop_footer_branch
    %7 = sbr.rel target = $region3
  $region8: #{generator_forward.13} parent=0 // loop_exit
    _

</llo_original>
